<compile_context>
chip_gen: v5e
topology: v5e:2x2
jax: 0.10.0
libtpu: 0.0.40
codegen_flags: <defaults>
</compile_context>

<pallas_src>
import functools

import jax
import jax.numpy as jnp
from jax.experimental import pallas as pl
from jax.experimental.pallas import tpu as pltpu

EPS = 1e-5


# ----------------------------------------------------------------------------
# fused kernel: one grid step == one batch sample, channel-major (C, H*W)
# ----------------------------------------------------------------------------
def up_fused_kernel(x1_ref, x2_ref, wt_ref, upb_ref, scat_ref, nprm_ref, pn_ref,
                    w1_ref, dprm_ref, pd_ref, w2_ref, cmask_ref, o_ref,
                    *, W, eps, norm_cnt, dc_cnt, use_bf16):
    f32 = jnp.float32
    hi = jax.lax.Precision.HIGHEST
    C, HW = x2_ref.shape[1], x2_ref.shape[2]

    def exact_dot(a, b):  # exact f32 matmul (permutation / group-sum matrices)
        return jnp.dot(a, b, preferred_element_type=f32, precision=hi)

    def mxu_dot(a, b):    # fast path: bf16 operands, f32 accumulation
        if use_bf16:
            return jnp.dot(a.astype(jnp.bfloat16), b.astype(jnp.bfloat16),
                           preferred_element_type=f32)
        return exact_dot(a, b)

    # ---- ConvTranspose2d(k=2, s=2), fused ---------------------------------
    # tap (di,dj): y_tap = W_tap^T @ x1 (C, H1*W1); a one-hot permutation
    # matmul scatters it onto the strided output positions of (C, H*W).
    x1 = x1_ref[0].astype(f32)                                   # (Cin, H1*W1)
    up = None
    for tap in range(4):
        y_tap = mxu_dot(wt_ref[tap], x1)                         # (C, H1*W1)
        contrib = exact_dot(y_tap, scat_ref[tap])                # (C, H*W)
        up = contrib if up is None else up + contrib
    up = up + upb_ref[...]                                       # (C, 1) bias

    # ---- GroupNorm, channel-major ------------------------------------------
    # pmat (c, c): 1 where channels share a group -> group sums broadcast back
    # to channels via one matmul; stats are lane reductions.
    def group_norm(x, pmat, gamma, beta, cnt):
        gx = exact_dot(pmat, x)                                  # (c, HW)
        gxx = exact_dot(pmat, x * x)                             # (c, HW)
        mean = jnp.sum(gx, axis=1, keepdims=True) / cnt          # (c, 1)
        ex2 = jnp.sum(gxx, axis=1, keepdims=True) / cnt
        var = jnp.maximum(ex2 - mean * mean, 0.0)                # biased, clamped
        inv = jax.lax.rsqrt(var + eps)
        return (x - mean) * (inv * gamma) + beta

    nprm = nprm_ref[...]                 # (C, 4): n1_g, n1_b, n2_g, n2_b columns
    pn = pn_ref[...]
    x2 = x2_ref[0].astype(f32)                                   # (C, H*W)
    x = (group_norm(x2, pn, nprm[:, 0:1], nprm[:, 1:2], norm_cnt)
         + group_norm(up, pn, nprm[:, 2:3], nprm[:, 3:4], norm_cnt))

    # ---- 3x3 conv (padding=1, bias=False): roll+mask im2col, one matmul ----
    cmask = cmask_ref[...]                                       # (9, H*W)

    def conv3x3(xin, w_ref):
        patches = []
        for ky in range(3):
            for kx in range(3):
                k = ky * 3 + kx
                off = (ky - 1) * W + (kx - 1)
                if off == 0:                         # center tap: identity, mask==1
                    p = xin
                else:
                    # patch[p] = xin[p + off] (valid positions), 0 at borders.
                    p = pltpu.roll(xin, shift=(-off) % HW, axis=1) * cmask[k:k + 1, :]
                patches.append(p.astype(jnp.bfloat16) if use_bf16 else p)
        im2col = jnp.concatenate(patches, axis=0)                # (9*cin, H*W)
        return mxu_dot(w_ref[...], im2col)                       # (cout, H*W)

    dprm = dprm_ref[...]                 # (Cm, 4): gn1_g, gn1_b, gn2_g, gn2_b
    pd = pd_ref[...]

    h = conv3x3(x, w1_ref)
    h = jnp.maximum(group_norm(h, pd, dprm[:, 0:1], dprm[:, 1:2], dc_cnt), 0.0)
    y = conv3x3(h, w2_ref)
    y = jnp.maximum(group_norm(y, pd, dprm[:, 2:3], dprm[:, 3:4], dc_cnt), 0.0)

    o_ref[0] = y                                                 # lane-dense (Co, 256)


# ----------------------------------------------------------------------------
# wrapper: constant prep (all tiny, traced once under jit) + pallas_call
# ----------------------------------------------------------------------------
def _group_sum_matrix(channels, groups):
    cg = channels // groups
    gid = jnp.arange(channels) // cg
    return (gid[:, None] == gid[None, :]).astype(jnp.float32)    # (C, C)


def _scatter_matrices(H1, W1):
    H, W = 2 * H1, 2 * W1
    q_i = jnp.arange(H1 * W1) // W1
    q_j = jnp.arange(H1 * W1) % W1
    p = jnp.arange(H * W)
    mats = []
    for di in range(2):
        for dj in range(2):
            tgt = (2 * q_i + di) * W + (2 * q_j + dj)
            mats.append((tgt[:, None] == p[None, :]).astype(jnp.float32))
    return jnp.stack(mats)                                       # (4, H1*W1, H*W)


def _conv_masks(H, W):
    py = jnp.arange(H * W) // W
    px = jnp.arange(H * W) % W
    masks = []
    for ky in range(3):
        for kx in range(3):
            dy, dx = ky - 1, kx - 1
            ok = (py + dy >= 0) & (py + dy < H) & (px + dx >= 0) & (px + dx < W)
            masks.append(ok.astype(jnp.float32))
    return jnp.stack(masks)                                      # (9, H*W)


def up_forward(params, x1_nchw, x2_nchw, norm_groups, dc_groups, use_bf16=True):
    """Up.forward: x1 = ConvTranspose2d(x1); x = GN(x2) + GN(x1); DoubleConv(x)."""
    N, Cin, H1, W1 = x1_nchw.shape
    C = params["up_w"].shape[1]                                  # channels after upsample
    H, W = 2 * H1, 2 * W1
    HW1, HW = H1 * W1, H * W
    Cm = params["c1_w"].shape[0]
    Co = params["c2_w"].shape[0]
    assert Cm == Co                      # DoubleConv default (mid_channels == out)
    assert x2_nchw.shape == (N, C, H, W)

    wdt = jnp.bfloat16 if use_bf16 else jnp.float32

    # channel-major activations: NCHW -> (N, C, H*W) is a free reshape.
    x1 = x1_nchw.reshape(N, Cin, HW1)
    x2 = x2_nchw.reshape(N, C, HW)

    # ConvTranspose2d weight (Cin, Cout, 2, 2) -> tap-major (4, Cout, Cin).
    wt = jnp.transpose(params["up_w"], (2, 3, 1, 0)).reshape(4, C, Cin).astype(wdt)
    upb = params["up_b"].reshape(C, 1)
    scat = _scatter_matrices(H1, W1)                             # (4, HW1, HW)

    # Conv2d weights (Cout, Cin, 3, 3) -> (Cout, 9*Cin), columns = tap*Cin + cin.
    w1 = jnp.transpose(params["c1_w"], (0, 2, 3, 1)).reshape(Cm, 9 * C).astype(wdt)
    w2 = jnp.transpose(params["c2_w"], (0, 2, 3, 1)).reshape(Co, 9 * Cm).astype(wdt)
    cmask = _conv_masks(H, W)                                    # (9, HW)

    nprm = jnp.stack([params["n1_g"], params["n1_b"],
                      params["n2_g"], params["n2_b"]], axis=1)   # (C, 4)
    dprm = jnp.stack([params["gn1_g"], params["gn1_b"],
                      params["gn2_g"], params["gn2_b"]], axis=1)  # (Cm, 4)
    pn = _group_sum_matrix(C, norm_groups)
    pd = _group_sum_matrix(Cm, dc_groups)

    kern = functools.partial(
        up_fused_kernel, W=W, eps=EPS,
        norm_cnt=float(HW * (C // norm_groups)),
        dc_cnt=float(HW * (Cm // dc_groups)),
        use_bf16=use_bf16)

    out = pl.pallas_call(
        kern,
        out_shape=jax.ShapeDtypeStruct((N, Co, HW), jnp.float32),
        grid=(N,),
        in_specs=[
            pl.BlockSpec((1, Cin, HW1), lambda n: (n, 0, 0)),    # x1 (pre-upsample)
            pl.BlockSpec((1, C, HW), lambda n: (n, 0, 0)),       # x2 (skip)
            pl.BlockSpec((4, C, Cin), lambda n: (0, 0, 0)),      # transpose-conv weights
            pl.BlockSpec((C, 1), lambda n: (0, 0)),              # transpose-conv bias
            pl.BlockSpec((4, HW1, HW), lambda n: (0, 0, 0)),     # tap scatter matrices
            pl.BlockSpec((C, 4), lambda n: (0, 0)),              # norm1/norm2 gamma,beta
            pl.BlockSpec((C, C), lambda n: (0, 0)),              # group-sum matrix (norm)
            pl.BlockSpec((Cm, 9 * C), lambda n: (0, 0)),         # conv1 weight
            pl.BlockSpec((Cm, 4), lambda n: (0, 0)),             # DC GroupNorm gamma,beta
            pl.BlockSpec((Cm, Cm), lambda n: (0, 0)),            # group-sum matrix (DC)
            pl.BlockSpec((Co, 9 * Cm), lambda n: (0, 0)),        # conv2 weight
            pl.BlockSpec((9, HW), lambda n: (0, 0)),             # conv boundary masks
        ],
        out_specs=pl.BlockSpec((1, Co, HW), lambda n: (n, 0, 0)),
        compiler_params=pltpu.CompilerParams(
            dimension_semantics=("parallel",)),
    )(x1, x2, wt, upb, scat, nprm, pn, w1, dprm, pd, w2, cmask)

    # already channel-major == NCHW; final reshape is free.
    return out.reshape(N, Co, H, W)


up_forward_jit = jax.jit(up_forward,
                         static_argnames=("norm_groups", "dc_groups", "use_bf16"))


# ----------------------------------------------------------------------------
# main
# ----------------------------------------------------------------------------
if __name__ == "__main__":
    # module config: Up(in_channels=64, out_channels=32, factor=2, group_channel=32)
    in_channels, out_channels, factor, group_channel = 64, 32, 2, 32
    cup = in_channels // factor                                  # 32
    norm_groups = cup // group_channel                           # 1
    dc_groups = 16                                               # DoubleConv default
    N, H1, W1 = 2, 8, 8
    H2, W2 = 2 * H1, 2 * W1

    ks = jax.random.split(jax.random.PRNGKey(0), 14)
    params = {
        # ConvTranspose2d(in, in//2, k=2, s=2) -- torch weight layout (Cin, Cout, 2, 2)
        "up_w": 0.05 * jax.random.normal(ks[0], (in_channels, cup, 2, 2), jnp.float32),
        "up_b": 0.05 * jax.random.normal(ks[1], (cup,), jnp.float32),
        # norm1 / norm2: GroupNorm(cup // 32, cup)
        "n1_g": 1.0 + 0.1 * jax.random.normal(ks[2], (cup,), jnp.float32),
        "n1_b": 0.1 * jax.random.normal(ks[3], (cup,), jnp.float32),
        "n2_g": 1.0 + 0.1 * jax.random.normal(ks[4], (cup,), jnp.float32),
        "n2_b": 0.1 * jax.random.normal(ks[5], (cup,), jnp.float32),
        # DoubleConv: Conv2d(cup, out, 3, pad=1, bias=False) x2, GroupNorm(16, out)
        "c1_w": 0.05 * jax.random.normal(ks[6], (out_channels, cup, 3, 3), jnp.float32),
        "gn1_g": 1.0 + 0.1 * jax.random.normal(ks[7], (out_channels,), jnp.float32),
        "gn1_b": 0.1 * jax.random.normal(ks[8], (out_channels,), jnp.float32),
        "c2_w": 0.05 * jax.random.normal(ks[9], (out_channels, out_channels, 3, 3), jnp.float32),
        "gn2_g": 1.0 + 0.1 * jax.random.normal(ks[10], (out_channels,), jnp.float32),
        "gn2_b": 0.1 * jax.random.normal(ks[11], (out_channels,), jnp.float32),
    }

    x1 = jax.random.normal(ks[12], (N, in_channels, H1, W1), jnp.float32)
    x2 = jax.random.normal(ks[13], (N, cup, H2, W2), jnp.float32)

    out = up_forward_jit(params, x1, x2, norm_groups=norm_groups,
                         dc_groups=dc_groups, use_bf16=True)
    out = jax.block_until_ready(out)
    assert out.shape == (N, out_channels, H2, W2), out.shape
    assert bool(jnp.all(jnp.isfinite(out)))
    print("KERNEL_OK")
</pallas_src>

<mosaic_0001>
module attributes {stable_mosaic.version = 11 : i64} {
  func.func @up_fused_kernel(%arg0: i32, %arg1: memref<1x64x64xf32, #tpu.memory_space<vmem>>, %arg2: memref<1x32x256xf32, #tpu.memory_space<vmem>>, %arg3: memref<4x32x64xbf16, #tpu.memory_space<vmem>>, %arg4: memref<32x1xf32, #tpu.memory_space<vmem>>, %arg5: memref<4x64x256xf32, #tpu.memory_space<vmem>>, %arg6: memref<32x4xf32, #tpu.memory_space<vmem>>, %arg7: memref<32x32xf32, #tpu.memory_space<vmem>>, %arg8: memref<32x288xbf16, #tpu.memory_space<vmem>>, %arg9: memref<32x4xf32, #tpu.memory_space<vmem>>, %arg10: memref<32x32xf32, #tpu.memory_space<vmem>>, %arg11: memref<32x288xbf16, #tpu.memory_space<vmem>>, %arg12: memref<9x256xf32, #tpu.memory_space<vmem>>, %arg13: memref<1x32x256xf32, #tpu.memory_space<vmem>>) attributes {dimension_semantics = [#tpu.dimension_semantics<parallel>], iteration_bounds = array<i64: 2>, scalar_prefetch = 0 : i64, scratch_operands = 0 : i64, tpu.core_type = #tpu.core_type<tc>, window_params = [{transform_indices = @transform_0, window_bounds = array<i64: 1, 64, 64>}, {transform_indices = @transform_1, window_bounds = array<i64: 1, 32, 256>}, {pipeline_mode = #tpu.pipeline_mode<synchronous>, transform_indices = @transform_2, window_bounds = array<i64: 4, 32, 64>}, {pipeline_mode = #tpu.pipeline_mode<synchronous>, transform_indices = @transform_3, window_bounds = array<i64: 32, 1>}, {pipeline_mode = #tpu.pipeline_mode<synchronous>, transform_indices = @transform_4, window_bounds = array<i64: 4, 64, 256>}, {pipeline_mode = #tpu.pipeline_mode<synchronous>, transform_indices = @transform_5, window_bounds = array<i64: 32, 4>}, {pipeline_mode = #tpu.pipeline_mode<synchronous>, transform_indices = @transform_6, window_bounds = array<i64: 32, 32>}, {pipeline_mode = #tpu.pipeline_mode<synchronous>, transform_indices = @transform_7, window_bounds = array<i64: 32, 288>}, {pipeline_mode = #tpu.pipeline_mode<synchronous>, transform_indices = @transform_8, window_bounds = array<i64: 32, 4>}, {pipeline_mode = #tpu.pipeline_mode<synchronous>, transform_indices = @transform_9, window_bounds = array<i64: 32, 32>}, {pipeline_mode = #tpu.pipeline_mode<synchronous>, transform_indices = @transform_10, window_bounds = array<i64: 32, 288>}, {pipeline_mode = #tpu.pipeline_mode<synchronous>, transform_indices = @transform_11, window_bounds = array<i64: 9, 256>}, {transform_indices = @transform_12, window_bounds = array<i64: 1, 32, 256>}]} {
    %c0 = arith.constant 0 : index
    %c0_0 = arith.constant 0 : index
    %c0_1 = arith.constant 0 : index
    %0 = vector.load %arg1[%c0, %c0_0, %c0_1] : memref<1x64x64xf32, #tpu.memory_space<vmem>>, vector<1x64x64xf32>
    %1 = vector.shape_cast %0 : vector<1x64x64xf32> to vector<64x64xf32>
    %c0_2 = arith.constant 0 : index
    %c0_3 = arith.constant 0 : index
    %c0_4 = arith.constant 0 : index
    %2 = vector.load %arg3[%c0_2, %c0_3, %c0_4] : memref<4x32x64xbf16, #tpu.memory_space<vmem>>, vector<1x32x64xbf16>
    %3 = vector.shape_cast %2 : vector<1x32x64xbf16> to vector<32x64xbf16>
    %4 = arith.truncf %1 : vector<64x64xf32> to vector<64x64xbf16>
    %cst = arith.constant dense<0.000000e+00> : vector<32x64xf32>
    %5 = tpu.matmul %3, %4, %cst {dimension_numbers = #tpu.dot_dimension_numbers<[1], [0], [0], [1], [0, 0, 1, 1], [], []>} : vector<32x64xbf16>, vector<64x64xbf16>, vector<32x64xf32> -> vector<32x64xf32>
    %c0_5 = arith.constant 0 : index
    %c0_6 = arith.constant 0 : index
    %c0_7 = arith.constant 0 : index
    %6 = vector.load %arg5[%c0_5, %c0_6, %c0_7] : memref<4x64x256xf32, #tpu.memory_space<vmem>>, vector<1x64x256xf32>
    %7 = vector.shape_cast %6 : vector<1x64x256xf32> to vector<64x256xf32>
    %cst_8 = arith.constant dense<0.000000e+00> : vector<32x256xf32>
    %8 = tpu.matmul %5, %7, %cst_8 {dimension_numbers = #tpu.dot_dimension_numbers<[1], [0], [0], [1], [0, 0, 1, 1], [], []>, precision = #tpu.contract_precision<fp32>} : vector<32x64xf32>, vector<64x256xf32>, vector<32x256xf32> -> vector<32x256xf32>
    %c1 = arith.constant 1 : index
    %c0_9 = arith.constant 0 : index
    %c0_10 = arith.constant 0 : index
    %9 = vector.load %arg3[%c1, %c0_9, %c0_10] : memref<4x32x64xbf16, #tpu.memory_space<vmem>>, vector<1x32x64xbf16>
    %10 = vector.shape_cast %9 : vector<1x32x64xbf16> to vector<32x64xbf16>
    %11 = arith.truncf %1 : vector<64x64xf32> to vector<64x64xbf16>
    %cst_11 = arith.constant dense<0.000000e+00> : vector<32x64xf32>
    %12 = tpu.matmul %10, %11, %cst_11 {dimension_numbers = #tpu.dot_dimension_numbers<[1], [0], [0], [1], [0, 0, 1, 1], [], []>} : vector<32x64xbf16>, vector<64x64xbf16>, vector<32x64xf32> -> vector<32x64xf32>
    %c1_12 = arith.constant 1 : index
    %c0_13 = arith.constant 0 : index
    %c0_14 = arith.constant 0 : index
    %13 = vector.load %arg5[%c1_12, %c0_13, %c0_14] : memref<4x64x256xf32, #tpu.memory_space<vmem>>, vector<1x64x256xf32>
    %14 = vector.shape_cast %13 : vector<1x64x256xf32> to vector<64x256xf32>
    %cst_15 = arith.constant dense<0.000000e+00> : vector<32x256xf32>
    %15 = tpu.matmul %12, %14, %cst_15 {dimension_numbers = #tpu.dot_dimension_numbers<[1], [0], [0], [1], [0, 0, 1, 1], [], []>, precision = #tpu.contract_precision<fp32>} : vector<32x64xf32>, vector<64x256xf32>, vector<32x256xf32> -> vector<32x256xf32>
    %16 = arith.addf %8, %15 : vector<32x256xf32>
    %c2 = arith.constant 2 : index
    %c0_16 = arith.constant 0 : index
    %c0_17 = arith.constant 0 : index
    %17 = vector.load %arg3[%c2, %c0_16, %c0_17] : memref<4x32x64xbf16, #tpu.memory_space<vmem>>, vector<1x32x64xbf16>
    %18 = vector.shape_cast %17 : vector<1x32x64xbf16> to vector<32x64xbf16>
    %19 = arith.truncf %1 : vector<64x64xf32> to vector<64x64xbf16>
    %cst_18 = arith.constant dense<0.000000e+00> : vector<32x64xf32>
    %20 = tpu.matmul %18, %19, %cst_18 {dimension_numbers = #tpu.dot_dimension_numbers<[1], [0], [0], [1], [0, 0, 1, 1], [], []>} : vector<32x64xbf16>, vector<64x64xbf16>, vector<32x64xf32> -> vector<32x64xf32>
    %c2_19 = arith.constant 2 : index
    %c0_20 = arith.constant 0 : index
    %c0_21 = arith.constant 0 : index
    %21 = vector.load %arg5[%c2_19, %c0_20, %c0_21] : memref<4x64x256xf32, #tpu.memory_space<vmem>>, vector<1x64x256xf32>
    %22 = vector.shape_cast %21 : vector<1x64x256xf32> to vector<64x256xf32>
    %cst_22 = arith.constant dense<0.000000e+00> : vector<32x256xf32>
    %23 = tpu.matmul %20, %22, %cst_22 {dimension_numbers = #tpu.dot_dimension_numbers<[1], [0], [0], [1], [0, 0, 1, 1], [], []>, precision = #tpu.contract_precision<fp32>} : vector<32x64xf32>, vector<64x256xf32>, vector<32x256xf32> -> vector<32x256xf32>
    %24 = arith.addf %16, %23 : vector<32x256xf32>
    %c3 = arith.constant 3 : index
    %c0_23 = arith.constant 0 : index
    %c0_24 = arith.constant 0 : index
    %25 = vector.load %arg3[%c3, %c0_23, %c0_24] : memref<4x32x64xbf16, #tpu.memory_space<vmem>>, vector<1x32x64xbf16>
    %26 = vector.shape_cast %25 : vector<1x32x64xbf16> to vector<32x64xbf16>
    %27 = arith.truncf %1 : vector<64x64xf32> to vector<64x64xbf16>
    %cst_25 = arith.constant dense<0.000000e+00> : vector<32x64xf32>
    %28 = tpu.matmul %26, %27, %cst_25 {dimension_numbers = #tpu.dot_dimension_numbers<[1], [0], [0], [1], [0, 0, 1, 1], [], []>} : vector<32x64xbf16>, vector<64x64xbf16>, vector<32x64xf32> -> vector<32x64xf32>
    %c3_26 = arith.constant 3 : index
    %c0_27 = arith.constant 0 : index
    %c0_28 = arith.constant 0 : index
    %29 = vector.load %arg5[%c3_26, %c0_27, %c0_28] : memref<4x64x256xf32, #tpu.memory_space<vmem>>, vector<1x64x256xf32>
    %30 = vector.shape_cast %29 : vector<1x64x256xf32> to vector<64x256xf32>
    %cst_29 = arith.constant dense<0.000000e+00> : vector<32x256xf32>
    %31 = tpu.matmul %28, %30, %cst_29 {dimension_numbers = #tpu.dot_dimension_numbers<[1], [0], [0], [1], [0, 0, 1, 1], [], []>, precision = #tpu.contract_precision<fp32>} : vector<32x64xf32>, vector<64x256xf32>, vector<32x256xf32> -> vector<32x256xf32>
    %32 = arith.addf %24, %31 : vector<32x256xf32>
    %c0_30 = arith.constant 0 : index
    %c0_31 = arith.constant 0 : index
    %33 = vector.load %arg4[%c0_30, %c0_31] : memref<32x1xf32, #tpu.memory_space<vmem>>, vector<32x1xf32>
    %34 = vector.broadcast %33 : vector<32x1xf32> to vector<32x256xf32>
    %35 = arith.addf %32, %34 : vector<32x256xf32>
    %c0_32 = arith.constant 0 : index
    %c0_33 = arith.constant 0 : index
    %36 = vector.load %arg6[%c0_32, %c0_33] : memref<32x4xf32, #tpu.memory_space<vmem>>, vector<32x4xf32>
    %c0_34 = arith.constant 0 : index
    %c0_35 = arith.constant 0 : index
    %37 = vector.load %arg7[%c0_34, %c0_35] : memref<32x32xf32, #tpu.memory_space<vmem>>, vector<32x32xf32>
    %c0_36 = arith.constant 0 : index
    %c0_37 = arith.constant 0 : index
    %c0_38 = arith.constant 0 : index
    %38 = vector.load %arg2[%c0_36, %c0_37, %c0_38] : memref<1x32x256xf32, #tpu.memory_space<vmem>>, vector<1x32x256xf32>
    %39 = vector.shape_cast %38 : vector<1x32x256xf32> to vector<32x256xf32>
    %40 = vector.extract_strided_slice %36 {offsets = [0, 0], sizes = [32, 1], strides = [1, 1]} : vector<32x4xf32> to vector<32x1xf32>
    %41 = vector.extract_strided_slice %36 {offsets = [0, 1], sizes = [32, 1], strides = [1, 1]} : vector<32x4xf32> to vector<32x1xf32>
    %cst_39 = arith.constant dense<0.000000e+00> : vector<32x256xf32>
    %42 = tpu.matmul %37, %39, %cst_39 {dimension_numbers = #tpu.dot_dimension_numbers<[1], [0], [0], [1], [0, 0, 1, 1], [], []>, precision = #tpu.contract_precision<fp32>} : vector<32x32xf32>, vector<32x256xf32>, vector<32x256xf32> -> vector<32x256xf32>
    %43 = arith.mulf %39, %39 : vector<32x256xf32>
    %cst_40 = arith.constant dense<0.000000e+00> : vector<32x256xf32>
    %44 = tpu.matmul %37, %43, %cst_40 {dimension_numbers = #tpu.dot_dimension_numbers<[1], [0], [0], [1], [0, 0, 1, 1], [], []>, precision = #tpu.contract_precision<fp32>} : vector<32x32xf32>, vector<32x256xf32>, vector<32x256xf32> -> vector<32x256xf32>
    %cst_41 = arith.constant dense<0.000000e+00> : vector<32xf32>
    %45 = vector.multi_reduction <add>, %42, %cst_41 [1] : vector<32x256xf32> to vector<32xf32>
    %46 = vector.shape_cast %45 : vector<32xf32> to vector<32x1xf32>
    %cst_42 = arith.constant 8.192000e+03 : f32
    %47 = vector.broadcast %cst_42 : f32 to vector<32x1xf32>
    %48 = arith.divf %46, %47 : vector<32x1xf32>
    %cst_43 = arith.constant dense<0.000000e+00> : vector<32xf32>
    %49 = vector.multi_reduction <add>, %44, %cst_43 [1] : vector<32x256xf32> to vector<32xf32>
    %50 = vector.shape_cast %49 : vector<32xf32> to vector<32x1xf32>
    %cst_44 = arith.constant 8.192000e+03 : f32
    %51 = vector.broadcast %cst_44 : f32 to vector<32x1xf32>
    %52 = arith.divf %50, %51 : vector<32x1xf32>
    %53 = arith.mulf %48, %48 : vector<32x1xf32>
    %54 = arith.subf %52, %53 : vector<32x1xf32>
    %cst_45 = arith.constant 0.000000e+00 : f32
    %55 = vector.broadcast %cst_45 : f32 to vector<32x1xf32>
    %56 = arith.maximumf %54, %55 : vector<32x1xf32>
    %cst_46 = arith.constant 9.99999974E-6 : f32
    %57 = vector.broadcast %cst_46 : f32 to vector<32x1xf32>
    %58 = arith.addf %56, %57 : vector<32x1xf32>
    %59 = math.rsqrt %58 : vector<32x1xf32>
    %60 = vector.broadcast %48 : vector<32x1xf32> to vector<32x256xf32>
    %61 = arith.subf %39, %60 : vector<32x256xf32>
    %62 = arith.mulf %59, %40 : vector<32x1xf32>
    %63 = vector.broadcast %62 : vector<32x1xf32> to vector<32x256xf32>
    %64 = arith.mulf %61, %63 : vector<32x256xf32>
    %65 = vector.broadcast %41 : vector<32x1xf32> to vector<32x256xf32>
    %66 = arith.addf %64, %65 : vector<32x256xf32>
    %67 = vector.extract_strided_slice %36 {offsets = [0, 2], sizes = [32, 1], strides = [1, 1]} : vector<32x4xf32> to vector<32x1xf32>
    %68 = vector.extract_strided_slice %36 {offsets = [0, 3], sizes = [32, 1], strides = [1, 1]} : vector<32x4xf32> to vector<32x1xf32>
    %cst_47 = arith.constant dense<0.000000e+00> : vector<32x256xf32>
    %69 = tpu.matmul %37, %35, %cst_47 {dimension_numbers = #tpu.dot_dimension_numbers<[1], [0], [0], [1], [0, 0, 1, 1], [], []>, precision = #tpu.contract_precision<fp32>} : vector<32x32xf32>, vector<32x256xf32>, vector<32x256xf32> -> vector<32x256xf32>
    %70 = arith.mulf %35, %35 : vector<32x256xf32>
    %cst_48 = arith.constant dense<0.000000e+00> : vector<32x256xf32>
    %71 = tpu.matmul %37, %70, %cst_48 {dimension_numbers = #tpu.dot_dimension_numbers<[1], [0], [0], [1], [0, 0, 1, 1], [], []>, precision = #tpu.contract_precision<fp32>} : vector<32x32xf32>, vector<32x256xf32>, vector<32x256xf32> -> vector<32x256xf32>
    %cst_49 = arith.constant dense<0.000000e+00> : vector<32xf32>
    %72 = vector.multi_reduction <add>, %69, %cst_49 [1] : vector<32x256xf32> to vector<32xf32>
    %73 = vector.shape_cast %72 : vector<32xf32> to vector<32x1xf32>
    %cst_50 = arith.constant 8.192000e+03 : f32
    %74 = vector.broadcast %cst_50 : f32 to vector<32x1xf32>
    %75 = arith.divf %73, %74 : vector<32x1xf32>
    %cst_51 = arith.constant dense<0.000000e+00> : vector<32xf32>
    %76 = vector.multi_reduction <add>, %71, %cst_51 [1] : vector<32x256xf32> to vector<32xf32>
    %77 = vector.shape_cast %76 : vector<32xf32> to vector<32x1xf32>
    %cst_52 = arith.constant 8.192000e+03 : f32
    %78 = vector.broadcast %cst_52 : f32 to vector<32x1xf32>
    %79 = arith.divf %77, %78 : vector<32x1xf32>
    %80 = arith.mulf %75, %75 : vector<32x1xf32>
    %81 = arith.subf %79, %80 : vector<32x1xf32>
    %cst_53 = arith.constant 0.000000e+00 : f32
    %82 = vector.broadcast %cst_53 : f32 to vector<32x1xf32>
    %83 = arith.maximumf %81, %82 : vector<32x1xf32>
    %cst_54 = arith.constant 9.99999974E-6 : f32
    %84 = vector.broadcast %cst_54 : f32 to vector<32x1xf32>
    %85 = arith.addf %83, %84 : vector<32x1xf32>
    %86 = math.rsqrt %85 : vector<32x1xf32>
    %87 = vector.broadcast %75 : vector<32x1xf32> to vector<32x256xf32>
    %88 = arith.subf %35, %87 : vector<32x256xf32>
    %89 = arith.mulf %86, %67 : vector<32x1xf32>
    %90 = vector.broadcast %89 : vector<32x1xf32> to vector<32x256xf32>
    %91 = arith.mulf %88, %90 : vector<32x256xf32>
    %92 = vector.broadcast %68 : vector<32x1xf32> to vector<32x256xf32>
    %93 = arith.addf %91, %92 : vector<32x256xf32>
    %94 = arith.addf %66, %93 : vector<32x256xf32>
    %c0_55 = arith.constant 0 : index
    %c0_56 = arith.constant 0 : index
    %95 = vector.load %arg12[%c0_55, %c0_56] : memref<9x256xf32, #tpu.memory_space<vmem>>, vector<9x256xf32>
    %c0_57 = arith.constant 0 : index
    %c0_58 = arith.constant 0 : index
    %96 = vector.load %arg9[%c0_57, %c0_58] : memref<32x4xf32, #tpu.memory_space<vmem>>, vector<32x4xf32>
    %c0_59 = arith.constant 0 : index
    %c0_60 = arith.constant 0 : index
    %97 = vector.load %arg10[%c0_59, %c0_60] : memref<32x32xf32, #tpu.memory_space<vmem>>, vector<32x32xf32>
    %c17_i32 = arith.constant 17 : i32
    %98 = tpu.dynamic_rotate %94 by %c17_i32 dim 1 : vector<32x256xf32>, i32 -> vector<32x256xf32>
    %99 = vector.extract_strided_slice %95 {offsets = [0, 0], sizes = [1, 256], strides = [1, 1]} : vector<9x256xf32> to vector<1x256xf32>
    %100 = vector.broadcast %99 : vector<1x256xf32> to vector<32x256xf32>
    %101 = arith.mulf %98, %100 : vector<32x256xf32>
    %102 = arith.truncf %101 : vector<32x256xf32> to vector<32x256xbf16>
    %c16_i32 = arith.constant 16 : i32
    %103 = tpu.dynamic_rotate %94 by %c16_i32 dim 1 : vector<32x256xf32>, i32 -> vector<32x256xf32>
    %104 = vector.extract_strided_slice %95 {offsets = [1, 0], sizes = [1, 256], strides = [1, 1]} : vector<9x256xf32> to vector<1x256xf32>
    %105 = vector.broadcast %104 : vector<1x256xf32> to vector<32x256xf32>
    %106 = arith.mulf %103, %105 : vector<32x256xf32>
    %107 = arith.truncf %106 : vector<32x256xf32> to vector<32x256xbf16>
    %c15_i32 = arith.constant 15 : i32
    %108 = tpu.dynamic_rotate %94 by %c15_i32 dim 1 : vector<32x256xf32>, i32 -> vector<32x256xf32>
    %109 = vector.extract_strided_slice %95 {offsets = [2, 0], sizes = [1, 256], strides = [1, 1]} : vector<9x256xf32> to vector<1x256xf32>
    %110 = vector.broadcast %109 : vector<1x256xf32> to vector<32x256xf32>
    %111 = arith.mulf %108, %110 : vector<32x256xf32>
    %112 = arith.truncf %111 : vector<32x256xf32> to vector<32x256xbf16>
    %c1_i32 = arith.constant 1 : i32
    %113 = tpu.dynamic_rotate %94 by %c1_i32 dim 1 : vector<32x256xf32>, i32 -> vector<32x256xf32>
    %114 = vector.extract_strided_slice %95 {offsets = [3, 0], sizes = [1, 256], strides = [1, 1]} : vector<9x256xf32> to vector<1x256xf32>
    %115 = vector.broadcast %114 : vector<1x256xf32> to vector<32x256xf32>
    %116 = arith.mulf %113, %115 : vector<32x256xf32>
    %117 = arith.truncf %116 : vector<32x256xf32> to vector<32x256xbf16>
    %118 = arith.truncf %94 : vector<32x256xf32> to vector<32x256xbf16>
    %c255_i32 = arith.constant 255 : i32
    %119 = tpu.dynamic_rotate %94 by %c255_i32 dim 1 : vector<32x256xf32>, i32 -> vector<32x256xf32>
    %120 = vector.extract_strided_slice %95 {offsets = [5, 0], sizes = [1, 256], strides = [1, 1]} : vector<9x256xf32> to vector<1x256xf32>
    %121 = vector.broadcast %120 : vector<1x256xf32> to vector<32x256xf32>
    %122 = arith.mulf %119, %121 : vector<32x256xf32>
    %123 = arith.truncf %122 : vector<32x256xf32> to vector<32x256xbf16>
    %c241_i32 = arith.constant 241 : i32
    %124 = tpu.dynamic_rotate %94 by %c241_i32 dim 1 : vector<32x256xf32>, i32 -> vector<32x256xf32>
    %125 = vector.extract_strided_slice %95 {offsets = [6, 0], sizes = [1, 256], strides = [1, 1]} : vector<9x256xf32> to vector<1x256xf32>
    %126 = vector.broadcast %125 : vector<1x256xf32> to vector<32x256xf32>
    %127 = arith.mulf %124, %126 : vector<32x256xf32>
    %128 = arith.truncf %127 : vector<32x256xf32> to vector<32x256xbf16>
    %c240_i32 = arith.constant 240 : i32
    %129 = tpu.dynamic_rotate %94 by %c240_i32 dim 1 : vector<32x256xf32>, i32 -> vector<32x256xf32>
    %130 = vector.extract_strided_slice %95 {offsets = [7, 0], sizes = [1, 256], strides = [1, 1]} : vector<9x256xf32> to vector<1x256xf32>
    %131 = vector.broadcast %130 : vector<1x256xf32> to vector<32x256xf32>
    %132 = arith.mulf %129, %131 : vector<32x256xf32>
    %133 = arith.truncf %132 : vector<32x256xf32> to vector<32x256xbf16>
    %c239_i32 = arith.constant 239 : i32
    %134 = tpu.dynamic_rotate %94 by %c239_i32 dim 1 : vector<32x256xf32>, i32 -> vector<32x256xf32>
    %135 = vector.extract_strided_slice %95 {offsets = [8, 0], sizes = [1, 256], strides = [1, 1]} : vector<9x256xf32> to vector<1x256xf32>
    %136 = vector.broadcast %135 : vector<1x256xf32> to vector<32x256xf32>
    %137 = arith.mulf %134, %136 : vector<32x256xf32>
    %138 = arith.truncf %137 : vector<32x256xf32> to vector<32x256xbf16>
    %139 = tpu.concatenate %102, %107, %112, %117, %118, %123, %128, %133, %138 in 0 : vector<32x256xbf16>, vector<32x256xbf16>, vector<32x256xbf16>, vector<32x256xbf16>, vector<32x256xbf16>, vector<32x256xbf16>, vector<32x256xbf16>, vector<32x256xbf16>, vector<32x256xbf16> -> vector<288x256xbf16>
    %c0_61 = arith.constant 0 : index
    %c0_62 = arith.constant 0 : index
    %140 = vector.load %arg8[%c0_61, %c0_62] : memref<32x288xbf16, #tpu.memory_space<vmem>>, vector<32x288xbf16>
    %cst_63 = arith.constant dense<0.000000e+00> : vector<32x256xf32>
    %141 = tpu.matmul %140, %139, %cst_63 {dimension_numbers = #tpu.dot_dimension_numbers<[1], [0], [0], [1], [0, 0, 1, 1], [], []>} : vector<32x288xbf16>, vector<288x256xbf16>, vector<32x256xf32> -> vector<32x256xf32>
    %142 = vector.extract_strided_slice %96 {offsets = [0, 0], sizes = [32, 1], strides = [1, 1]} : vector<32x4xf32> to vector<32x1xf32>
    %143 = vector.extract_strided_slice %96 {offsets = [0, 1], sizes = [32, 1], strides = [1, 1]} : vector<32x4xf32> to vector<32x1xf32>
    %cst_64 = arith.constant dense<0.000000e+00> : vector<32x256xf32>
    %144 = tpu.matmul %97, %141, %cst_64 {dimension_numbers = #tpu.dot_dimension_numbers<[1], [0], [0], [1], [0, 0, 1, 1], [], []>, precision = #tpu.contract_precision<fp32>} : vector<32x32xf32>, vector<32x256xf32>, vector<32x256xf32> -> vector<32x256xf32>
    %145 = arith.mulf %141, %141 : vector<32x256xf32>
    %cst_65 = arith.constant dense<0.000000e+00> : vector<32x256xf32>
    %146 = tpu.matmul %97, %145, %cst_65 {dimension_numbers = #tpu.dot_dimension_numbers<[1], [0], [0], [1], [0, 0, 1, 1], [], []>, precision = #tpu.contract_precision<fp32>} : vector<32x32xf32>, vector<32x256xf32>, vector<32x256xf32> -> vector<32x256xf32>
    %cst_66 = arith.constant dense<0.000000e+00> : vector<32xf32>
    %147 = vector.multi_reduction <add>, %144, %cst_66 [1] : vector<32x256xf32> to vector<32xf32>
    %148 = vector.shape_cast %147 : vector<32xf32> to vector<32x1xf32>
    %cst_67 = arith.constant 5.120000e+02 : f32
    %149 = vector.broadcast %cst_67 : f32 to vector<32x1xf32>
    %150 = arith.divf %148, %149 : vector<32x1xf32>
    %cst_68 = arith.constant dense<0.000000e+00> : vector<32xf32>
    %151 = vector.multi_reduction <add>, %146, %cst_68 [1] : vector<32x256xf32> to vector<32xf32>
    %152 = vector.shape_cast %151 : vector<32xf32> to vector<32x1xf32>
    %cst_69 = arith.constant 5.120000e+02 : f32
    %153 = vector.broadcast %cst_69 : f32 to vector<32x1xf32>
    %154 = arith.divf %152, %153 : vector<32x1xf32>
    %155 = arith.mulf %150, %150 : vector<32x1xf32>
    %156 = arith.subf %154, %155 : vector<32x1xf32>
    %cst_70 = arith.constant 0.000000e+00 : f32
    %157 = vector.broadcast %cst_70 : f32 to vector<32x1xf32>
    %158 = arith.maximumf %156, %157 : vector<32x1xf32>
    %cst_71 = arith.constant 9.99999974E-6 : f32
    %159 = vector.broadcast %cst_71 : f32 to vector<32x1xf32>
    %160 = arith.addf %158, %159 : vector<32x1xf32>
    %161 = math.rsqrt %160 : vector<32x1xf32>
    %162 = vector.broadcast %150 : vector<32x1xf32> to vector<32x256xf32>
    %163 = arith.subf %141, %162 : vector<32x256xf32>
    %164 = arith.mulf %161, %142 : vector<32x1xf32>
    %165 = vector.broadcast %164 : vector<32x1xf32> to vector<32x256xf32>
    %166 = arith.mulf %163, %165 : vector<32x256xf32>
    %167 = vector.broadcast %143 : vector<32x1xf32> to vector<32x256xf32>
    %168 = arith.addf %166, %167 : vector<32x256xf32>
    %cst_72 = arith.constant 0.000000e+00 : f32
    %169 = vector.broadcast %cst_72 : f32 to vector<32x256xf32>
    %170 = arith.maximumf %168, %169 : vector<32x256xf32>
    %c17_i32_73 = arith.constant 17 : i32
    %171 = tpu.dynamic_rotate %170 by %c17_i32_73 dim 1 : vector<32x256xf32>, i32 -> vector<32x256xf32>
    %172 = vector.extract_strided_slice %95 {offsets = [0, 0], sizes = [1, 256], strides = [1, 1]} : vector<9x256xf32> to vector<1x256xf32>
    %173 = vector.broadcast %172 : vector<1x256xf32> to vector<32x256xf32>
    %174 = arith.mulf %171, %173 : vector<32x256xf32>
    %175 = arith.truncf %174 : vector<32x256xf32> to vector<32x256xbf16>
    %c16_i32_74 = arith.constant 16 : i32
    %176 = tpu.dynamic_rotate %170 by %c16_i32_74 dim 1 : vector<32x256xf32>, i32 -> vector<32x256xf32>
    %177 = vector.extract_strided_slice %95 {offsets = [1, 0], sizes = [1, 256], strides = [1, 1]} : vector<9x256xf32> to vector<1x256xf32>
    %178 = vector.broadcast %177 : vector<1x256xf32> to vector<32x256xf32>
    %179 = arith.mulf %176, %178 : vector<32x256xf32>
    %180 = arith.truncf %179 : vector<32x256xf32> to vector<32x256xbf16>
    %c15_i32_75 = arith.constant 15 : i32
    %181 = tpu.dynamic_rotate %170 by %c15_i32_75 dim 1 : vector<32x256xf32>, i32 -> vector<32x256xf32>
    %182 = vector.extract_strided_slice %95 {offsets = [2, 0], sizes = [1, 256], strides = [1, 1]} : vector<9x256xf32> to vector<1x256xf32>
    %183 = vector.broadcast %182 : vector<1x256xf32> to vector<32x256xf32>
    %184 = arith.mulf %181, %183 : vector<32x256xf32>
    %185 = arith.truncf %184 : vector<32x256xf32> to vector<32x256xbf16>
    %c1_i32_76 = arith.constant 1 : i32
    %186 = tpu.dynamic_rotate %170 by %c1_i32_76 dim 1 : vector<32x256xf32>, i32 -> vector<32x256xf32>
    %187 = vector.extract_strided_slice %95 {offsets = [3, 0], sizes = [1, 256], strides = [1, 1]} : vector<9x256xf32> to vector<1x256xf32>
    %188 = vector.broadcast %187 : vector<1x256xf32> to vector<32x256xf32>
    %189 = arith.mulf %186, %188 : vector<32x256xf32>
    %190 = arith.truncf %189 : vector<32x256xf32> to vector<32x256xbf16>
    %191 = arith.truncf %170 : vector<32x256xf32> to vector<32x256xbf16>
    %c255_i32_77 = arith.constant 255 : i32
    %192 = tpu.dynamic_rotate %170 by %c255_i32_77 dim 1 : vector<32x256xf32>, i32 -> vector<32x256xf32>
    %193 = vector.extract_strided_slice %95 {offsets = [5, 0], sizes = [1, 256], strides = [1, 1]} : vector<9x256xf32> to vector<1x256xf32>
    %194 = vector.broadcast %193 : vector<1x256xf32> to vector<32x256xf32>
    %195 = arith.mulf %192, %194 : vector<32x256xf32>
    %196 = arith.truncf %195 : vector<32x256xf32> to vector<32x256xbf16>
    %c241_i32_78 = arith.constant 241 : i32
    %197 = tpu.dynamic_rotate %170 by %c241_i32_78 dim 1 : vector<32x256xf32>, i32 -> vector<32x256xf32>
    %198 = vector.extract_strided_slice %95 {offsets = [6, 0], sizes = [1, 256], strides = [1, 1]} : vector<9x256xf32> to vector<1x256xf32>
    %199 = vector.broadcast %198 : vector<1x256xf32> to vector<32x256xf32>
    %200 = arith.mulf %197, %199 : vector<32x256xf32>
    %201 = arith.truncf %200 : vector<32x256xf32> to vector<32x256xbf16>
    %c240_i32_79 = arith.constant 240 : i32
    %202 = tpu.dynamic_rotate %170 by %c240_i32_79 dim 1 : vector<32x256xf32>, i32 -> vector<32x256xf32>
    %203 = vector.extract_strided_slice %95 {offsets = [7, 0], sizes = [1, 256], strides = [1, 1]} : vector<9x256xf32> to vector<1x256xf32>
    %204 = vector.broadcast %203 : vector<1x256xf32> to vector<32x256xf32>
    %205 = arith.mulf %202, %204 : vector<32x256xf32>
    %206 = arith.truncf %205 : vector<32x256xf32> to vector<32x256xbf16>
    %c239_i32_80 = arith.constant 239 : i32
    %207 = tpu.dynamic_rotate %170 by %c239_i32_80 dim 1 : vector<32x256xf32>, i32 -> vector<32x256xf32>
    %208 = vector.extract_strided_slice %95 {offsets = [8, 0], sizes = [1, 256], strides = [1, 1]} : vector<9x256xf32> to vector<1x256xf32>
    %209 = vector.broadcast %208 : vector<1x256xf32> to vector<32x256xf32>
    %210 = arith.mulf %207, %209 : vector<32x256xf32>
    %211 = arith.truncf %210 : vector<32x256xf32> to vector<32x256xbf16>
    %212 = tpu.concatenate %175, %180, %185, %190, %191, %196, %201, %206, %211 in 0 : vector<32x256xbf16>, vector<32x256xbf16>, vector<32x256xbf16>, vector<32x256xbf16>, vector<32x256xbf16>, vector<32x256xbf16>, vector<32x256xbf16>, vector<32x256xbf16>, vector<32x256xbf16> -> vector<288x256xbf16>
    %c0_81 = arith.constant 0 : index
    %c0_82 = arith.constant 0 : index
    %213 = vector.load %arg11[%c0_81, %c0_82] : memref<32x288xbf16, #tpu.memory_space<vmem>>, vector<32x288xbf16>
    %cst_83 = arith.constant dense<0.000000e+00> : vector<32x256xf32>
    %214 = tpu.matmul %213, %212, %cst_83 {dimension_numbers = #tpu.dot_dimension_numbers<[1], [0], [0], [1], [0, 0, 1, 1], [], []>} : vector<32x288xbf16>, vector<288x256xbf16>, vector<32x256xf32> -> vector<32x256xf32>
    %215 = vector.extract_strided_slice %96 {offsets = [0, 2], sizes = [32, 1], strides = [1, 1]} : vector<32x4xf32> to vector<32x1xf32>
    %216 = vector.extract_strided_slice %96 {offsets = [0, 3], sizes = [32, 1], strides = [1, 1]} : vector<32x4xf32> to vector<32x1xf32>
    %cst_84 = arith.constant dense<0.000000e+00> : vector<32x256xf32>
    %217 = tpu.matmul %97, %214, %cst_84 {dimension_numbers = #tpu.dot_dimension_numbers<[1], [0], [0], [1], [0, 0, 1, 1], [], []>, precision = #tpu.contract_precision<fp32>} : vector<32x32xf32>, vector<32x256xf32>, vector<32x256xf32> -> vector<32x256xf32>
    %218 = arith.mulf %214, %214 : vector<32x256xf32>
    %cst_85 = arith.constant dense<0.000000e+00> : vector<32x256xf32>
    %219 = tpu.matmul %97, %218, %cst_85 {dimension_numbers = #tpu.dot_dimension_numbers<[1], [0], [0], [1], [0, 0, 1, 1], [], []>, precision = #tpu.contract_precision<fp32>} : vector<32x32xf32>, vector<32x256xf32>, vector<32x256xf32> -> vector<32x256xf32>
    %cst_86 = arith.constant dense<0.000000e+00> : vector<32xf32>
    %220 = vector.multi_reduction <add>, %217, %cst_86 [1] : vector<32x256xf32> to vector<32xf32>
    %221 = vector.shape_cast %220 : vector<32xf32> to vector<32x1xf32>
    %cst_87 = arith.constant 5.120000e+02 : f32
    %222 = vector.broadcast %cst_87 : f32 to vector<32x1xf32>
    %223 = arith.divf %221, %222 : vector<32x1xf32>
    %cst_88 = arith.constant dense<0.000000e+00> : vector<32xf32>
    %224 = vector.multi_reduction <add>, %219, %cst_88 [1] : vector<32x256xf32> to vector<32xf32>
    %225 = vector.shape_cast %224 : vector<32xf32> to vector<32x1xf32>
    %cst_89 = arith.constant 5.120000e+02 : f32
    %226 = vector.broadcast %cst_89 : f32 to vector<32x1xf32>
    %227 = arith.divf %225, %226 : vector<32x1xf32>
    %228 = arith.mulf %223, %223 : vector<32x1xf32>
    %229 = arith.subf %227, %228 : vector<32x1xf32>
    %cst_90 = arith.constant 0.000000e+00 : f32
    %230 = vector.broadcast %cst_90 : f32 to vector<32x1xf32>
    %231 = arith.maximumf %229, %230 : vector<32x1xf32>
    %cst_91 = arith.constant 9.99999974E-6 : f32
    %232 = vector.broadcast %cst_91 : f32 to vector<32x1xf32>
    %233 = arith.addf %231, %232 : vector<32x1xf32>
    %234 = math.rsqrt %233 : vector<32x1xf32>
    %235 = vector.broadcast %223 : vector<32x1xf32> to vector<32x256xf32>
    %236 = arith.subf %214, %235 : vector<32x256xf32>
    %237 = arith.mulf %234, %215 : vector<32x1xf32>
    %238 = vector.broadcast %237 : vector<32x1xf32> to vector<32x256xf32>
    %239 = arith.mulf %236, %238 : vector<32x256xf32>
    %240 = vector.broadcast %216 : vector<32x1xf32> to vector<32x256xf32>
    %241 = arith.addf %239, %240 : vector<32x256xf32>
    %cst_92 = arith.constant 0.000000e+00 : f32
    %242 = vector.broadcast %cst_92 : f32 to vector<32x256xf32>
    %243 = arith.maximumf %241, %242 : vector<32x256xf32>
    %c0_93 = arith.constant 0 : index
    %c0_94 = arith.constant 0 : index
    %c0_95 = arith.constant 0 : index
    %244 = vector.load %arg13[%c0_93, %c0_94, %c0_95] : memref<1x32x256xf32, #tpu.memory_space<vmem>>, vector<1x32x256xf32>
    %245 = vector.shape_cast %244 : vector<1x32x256xf32> to vector<32x256xf32>
    %246 = vector.shape_cast %243 : vector<32x256xf32> to vector<1x32x256xf32>
    tpu.vector_store %arg13[%c0_93, %c0_94, %c0_95], %246 {strides = array<i32>} : memref<1x32x256xf32, #tpu.memory_space<vmem>>, vector<1x32x256xf32>,
    return
  }
  func.func @transform_0(%arg0: i32) -> (i32, i32, i32) {
    %c0_i32 = arith.constant 0 : i32
    %c0_i32_0 = arith.constant 0 : i32
    %c0_i32_1 = arith.constant 0 : i32
    return %arg0, %c0_i32, %c0_i32_0 : i32, i32, i32
  }
  func.func @transform_1(%arg0: i32) -> (i32, i32, i32) {
    %c0_i32 = arith.constant 0 : i32
    %c0_i32_0 = arith.constant 0 : i32
    %c0_i32_1 = arith.constant 0 : i32
    return %arg0, %c0_i32, %c0_i32_0 : i32, i32, i32
  }
  func.func @transform_2(%arg0: i32) -> (i32, i32, i32) {
    %c0_i32 = arith.constant 0 : i32
    %c0_i32_0 = arith.constant 0 : i32
    %c0_i32_1 = arith.constant 0 : i32
    %c0_i32_2 = arith.constant 0 : i32
    return %c0_i32, %c0_i32_0, %c0_i32_1 : i32, i32, i32
  }
  func.func @transform_3(%arg0: i32) -> (i32, i32) {
    %c0_i32 = arith.constant 0 : i32
    %c0_i32_0 = arith.constant 0 : i32
    %c0_i32_1 = arith.constant 0 : i32
    return %c0_i32, %c0_i32_0 : i32, i32
  }
  func.func @transform_4(%arg0: i32) -> (i32, i32, i32) {
    %c0_i32 = arith.constant 0 : i32
    %c0_i32_0 = arith.constant 0 : i32
    %c0_i32_1 = arith.constant 0 : i32
    %c0_i32_2 = arith.constant 0 : i32
    return %c0_i32, %c0_i32_0, %c0_i32_1 : i32, i32, i32
  }
  func.func @transform_5(%arg0: i32) -> (i32, i32) {
    %c0_i32 = arith.constant 0 : i32
    %c0_i32_0 = arith.constant 0 : i32
    %c0_i32_1 = arith.constant 0 : i32
    return %c0_i32, %c0_i32_0 : i32, i32
  }
  func.func @transform_6(%arg0: i32) -> (i32, i32) {
    %c0_i32 = arith.constant 0 : i32
    %c0_i32_0 = arith.constant 0 : i32
    %c0_i32_1 = arith.constant 0 : i32
    return %c0_i32, %c0_i32_0 : i32, i32
  }
  func.func @transform_7(%arg0: i32) -> (i32, i32) {
    %c0_i32 = arith.constant 0 : i32
    %c0_i32_0 = arith.constant 0 : i32
    %c0_i32_1 = arith.constant 0 : i32
    return %c0_i32, %c0_i32_0 : i32, i32
  }
  func.func @transform_8(%arg0: i32) -> (i32, i32) {
    %c0_i32 = arith.constant 0 : i32
    %c0_i32_0 = arith.constant 0 : i32
    %c0_i32_1 = arith.constant 0 : i32
    return %c0_i32, %c0_i32_0 : i32, i32
  }
  func.func @transform_9(%arg0: i32) -> (i32, i32) {
    %c0_i32 = arith.constant 0 : i32
    %c0_i32_0 = arith.constant 0 : i32
    %c0_i32_1 = arith.constant 0 : i32
    return %c0_i32, %c0_i32_0 : i32, i32
  }
  func.func @transform_10(%arg0: i32) -> (i32, i32) {
    %c0_i32 = arith.constant 0 : i32
    %c0_i32_0 = arith.constant 0 : i32
    %c0_i32_1 = arith.constant 0 : i32
    return %c0_i32, %c0_i32_0 : i32, i32
  }
  func.func @transform_11(%arg0: i32) -> (i32, i32) {
    %c0_i32 = arith.constant 0 : i32
    %c0_i32_0 = arith.constant 0 : i32
    %c0_i32_1 = arith.constant 0 : i32
    return %c0_i32, %c0_i32_0 : i32, i32
  }
  func.func @transform_12(%arg0: i32) -> (i32, i32, i32) {
    %c0_i32 = arith.constant 0 : i32
    %c0_i32_0 = arith.constant 0 : i32
    %c0_i32_1 = arith.constant 0 : i32
    return %arg0, %c0_i32, %c0_i32_0 : i32, i32, i32
  }
}

</mosaic_0001>

<llo_original>
// kernel: up_forward.1
$region0: #{up_forward.1}
  #allocation0 [shape = 'u32[]', space=smem, size = 0x4, offset = 0x4, fixed_abs, tag = 'smem constant byte address 0x4 - core index']
  #allocation1 [shape = 'u32[72,128]{1,0:T(1,128)}', space=vmem, size = 0x9000, scoped, tag = 'internal scratch']
  %s0 = inlined_call_operand.vmem [shape: f32[2,64,64], index: 0, kind: input, shape index: {}]
  %s1 = inlined_call_operand.vmem [shape: f32[2,32,256], index: 1, kind: input, shape index: {}]
  %s2 = inlined_call_operand.vmem [shape: bf16[4,32,64], index: 2, kind: input, shape index: {}]
  %s3 = inlined_call_operand.vmem [shape: f32[32,1], index: 3, kind: input, shape index: {}]
  %s4 = inlined_call_operand.vmem [shape: f32[4,64,256], index: 4, kind: input, shape index: {}]
  %s5 = inlined_call_operand.vmem [shape: f32[32,4], index: 5, kind: input, shape index: {}]
  %s6 = inlined_call_operand.vmem [shape: f32[32,32], index: 6, kind: input, shape index: {}]
  %s7 = inlined_call_operand.vmem [shape: bf16[32,288], index: 7, kind: input, shape index: {}]
  %s8 = inlined_call_operand.vmem [shape: f32[32,4], index: 8, kind: input, shape index: {}]
  %s9 = inlined_call_operand.vmem [shape: f32[32,32], index: 9, kind: input, shape index: {}]
  %s10 = inlined_call_operand.vmem [shape: bf16[32,288], index: 10, kind: input, shape index: {}]
  %s11 = inlined_call_operand.vmem [shape: f32[9,256], index: 11, kind: input, shape index: {}]
  %s12 = inlined_call_operand.vmem [shape: f32[2,32,256], index: 12, kind: output, shape index: {}]
  %s13 = sld [smem:[#allocation0]]
  $region81: #{up_forward.1} parent=0
    _
  %s15 = ssub.s32 1, %s13
  %s16 = scalar_select 0, %s15, %s13
  loop: start=0, step=1, limit=4
  $region2: #{up_forward.1} parent=0 // loop_pre_header
    _
  $region3: #{up_forward.1} parent=0 // loop_header
    %s18 = sphi 0, %s22
    %p19 = scmp.ge.s32.totalorder %s18, 4
    %s28 = sphi 0, %s30
    %s31 = sphi 0, %s28
    %s32 = sphi 0, %s31
    %s48 = sphi 0, %s32
    %s54 = sphi 0, %s56
    %s57 = sphi 0, %s54
    %s58 = sphi 0, %s57
    %s74 = sphi 0, %s58
    %s78 = sphi 0, %s78
    %s80 = sphi 0, %s78
    %s81 = sphi 0, %s80
    %s95 = sphi 0, %s81
    %s99 = sphi 0, %s99
    %s101 = sphi 0, %s99
    %s102 = sphi 0, %s101
    %s116 = sphi 0, %s102
    %s120 = sphi 0, %s120
    %s122 = sphi 0, %s120
    %s123 = sphi 0, %s122
    %s137 = sphi 0, %s123
    %s141 = sphi 0, %s141
    %s143 = sphi 0, %s141
    %s144 = sphi 0, %s143
    %s158 = sphi 0, %s144
    %s162 = sphi 0, %s162
    %s164 = sphi 0, %s162
    %s165 = sphi 0, %s164
    %s179 = sphi 0, %s165
    %s183 = sphi 0, %s183
    %s185 = sphi 0, %s183
    %s186 = sphi 0, %s185
    %s200 = sphi 0, %s186
    %s204 = sphi 0, %s204
    %s206 = sphi 0, %s204
    %s207 = sphi 0, %s206
    %s221 = sphi 0, %s207
    %s225 = sphi 0, %s225
    %s227 = sphi 0, %s225
    %s228 = sphi 0, %s227
    %s242 = sphi 0, %s228
    %s246 = sphi 0, %s246
    %s248 = sphi 0, %s246
    %s249 = sphi 0, %s248
    %s263 = sphi 0, %s249
    %s267 = sphi 0, %s267
    %s269 = sphi 0, %s267
    %s270 = sphi 0, %s269
    %s284 = sphi 0, %s270
    %s290 = sphi 0, %s292
    %s293 = sphi 0, %s290
    %s294 = sphi 0, %s293
    %s310 = sphi 0, %s294
  $region4: #{up_forward.1} parent=0 // loop_header_branch
    %21 = sbr.rel (%p19) target = $region8
  $region5: #{up_forward.1} parent=0 // loop_body
    %s23 = ssub.s32 %s18, 1
    %s24 = ssub.s32 %s18, 2
    %s25 = sadd.s32 %s18, 1
    %s26 = ssub.s32 %s18, %s25
    %p27 = scmp.eq.s32.totalorder %s26, 0
    %s29 = sadd.s32 %s28, 1
    %s30 = scalar_select %p27, %s28, %s29
    %p33 = pneg %p27
    %p34 = scmp.eq.s32.totalorder %s18, 1
    %p35 = por %p33, %p34
    %p36 = scmp.ne.s32.totalorder %s28, %s31
    %p37 = scmp.eq.s32.totalorder %s18, 0
    %p38 = por %p36, %p37
    %p39 = scmp.ne.s32.totalorder %s28, %s31
    %p40 = scmp.eq.s32.totalorder %s23, 1
    %p41 = por %p39, %p40
    %p42 = scmp.ne.s32.totalorder %s31, %s32
    %p43 = scmp.eq.s32.totalorder %s23, 0
    %p44 = por %p42, %p43
    %p45 = scmp.ne.s32.totalorder %s31, %s32
    %p46 = scmp.eq.s32.totalorder %s24, 1
    %p47 = por %p45, %p46
    %p49 = scmp.ne.s32.totalorder %s32, %s48
    %p50 = scmp.eq.s32.totalorder %s24, 0
    %p51 = por %p49, %p50
    %s52 = ssub.s32 %s18, %s25
    %p53 = scmp.eq.s32.totalorder %s52, 0
    %s55 = sadd.s32 %s54, 1
    %s56 = scalar_select %p53, %s54, %s55
    %p59 = pneg %p53
    %p60 = scmp.eq.s32.totalorder %s18, 1
    %p61 = por %p59, %p60
    %p62 = scmp.ne.s32.totalorder %s54, %s57
    %p63 = scmp.eq.s32.totalorder %s18, 0
    %p64 = por %p62, %p63
    %p65 = scmp.ne.s32.totalorder %s54, %s57
    %p66 = scmp.eq.s32.totalorder %s23, 1
    %p67 = por %p65, %p66
    %p68 = scmp.ne.s32.totalorder %s57, %s58
    %p69 = scmp.eq.s32.totalorder %s23, 0
    %p70 = por %p68, %p69
    %p71 = scmp.ne.s32.totalorder %s57, %s58
    %p72 = scmp.eq.s32.totalorder %s24, 1
    %p73 = por %p71, %p72
    %p75 = scmp.ne.s32.totalorder %s58, %s74
    %p76 = scmp.eq.s32.totalorder %s24, 0
    %p77 = por %p75, %p76
    %s79 = sadd.s32 %s78, 1
    %p82 = scmp.eq.s32.totalorder %s18, 1
    %p83 = scmp.ne.s32.totalorder %s78, %s80
    %p84 = scmp.eq.s32.totalorder %s18, 0
    %p85 = por %p83, %p84
    %p86 = scmp.ne.s32.totalorder %s78, %s80
    %p87 = scmp.eq.s32.totalorder %s23, 1
    %p88 = por %p86, %p87
    %p89 = scmp.ne.s32.totalorder %s80, %s81
    %p90 = scmp.eq.s32.totalorder %s23, 0
    %p91 = por %p89, %p90
    %p92 = scmp.ne.s32.totalorder %s80, %s81
    %p93 = scmp.eq.s32.totalorder %s24, 1
    %p94 = por %p92, %p93
    %p96 = scmp.ne.s32.totalorder %s81, %s95
    %p97 = scmp.eq.s32.totalorder %s24, 0
    %p98 = por %p96, %p97
    %s100 = sadd.s32 %s99, 1
    %p103 = scmp.eq.s32.totalorder %s18, 1
    %p104 = scmp.ne.s32.totalorder %s99, %s101
    %p105 = scmp.eq.s32.totalorder %s18, 0
    %p106 = por %p104, %p105
    %p107 = scmp.ne.s32.totalorder %s99, %s101
    %p108 = scmp.eq.s32.totalorder %s23, 1
    %p109 = por %p107, %p108
    %p110 = scmp.ne.s32.totalorder %s101, %s102
    %p111 = scmp.eq.s32.totalorder %s23, 0
    %p112 = por %p110, %p111
    %p113 = scmp.ne.s32.totalorder %s101, %s102
    %p114 = scmp.eq.s32.totalorder %s24, 1
    %p115 = por %p113, %p114
    %p117 = scmp.ne.s32.totalorder %s102, %s116
    %p118 = scmp.eq.s32.totalorder %s24, 0
    %p119 = por %p117, %p118
    %s121 = sadd.s32 %s120, 1
    %p124 = scmp.eq.s32.totalorder %s18, 1
    %p125 = scmp.ne.s32.totalorder %s120, %s122
    %p126 = scmp.eq.s32.totalorder %s18, 0
    %p127 = por %p125, %p126
    %p128 = scmp.ne.s32.totalorder %s120, %s122
    %p129 = scmp.eq.s32.totalorder %s23, 1
    %p130 = por %p128, %p129
    %p131 = scmp.ne.s32.totalorder %s122, %s123
    %p132 = scmp.eq.s32.totalorder %s23, 0
    %p133 = por %p131, %p132
    %p134 = scmp.ne.s32.totalorder %s122, %s123
    %p135 = scmp.eq.s32.totalorder %s24, 1
    %p136 = por %p134, %p135
    %p138 = scmp.ne.s32.totalorder %s123, %s137
    %p139 = scmp.eq.s32.totalorder %s24, 0
    %p140 = por %p138, %p139
    %s142 = sadd.s32 %s141, 1
    %p145 = scmp.eq.s32.totalorder %s18, 1
    %p146 = scmp.ne.s32.totalorder %s141, %s143
    %p147 = scmp.eq.s32.totalorder %s18, 0
    %p148 = por %p146, %p147
    %p149 = scmp.ne.s32.totalorder %s141, %s143
    %p150 = scmp.eq.s32.totalorder %s23, 1
    %p151 = por %p149, %p150
    %p152 = scmp.ne.s32.totalorder %s143, %s144
    %p153 = scmp.eq.s32.totalorder %s23, 0
    %p154 = por %p152, %p153
    %p155 = scmp.ne.s32.totalorder %s143, %s144
    %p156 = scmp.eq.s32.totalorder %s24, 1
    %p157 = por %p155, %p156
    %p159 = scmp.ne.s32.totalorder %s144, %s158
    %p160 = scmp.eq.s32.totalorder %s24, 0
    %p161 = por %p159, %p160
    %s163 = sadd.s32 %s162, 1
    %p166 = scmp.eq.s32.totalorder %s18, 1
    %p167 = scmp.ne.s32.totalorder %s162, %s164
    %p168 = scmp.eq.s32.totalorder %s18, 0
    %p169 = por %p167, %p168
    %p170 = scmp.ne.s32.totalorder %s162, %s164
    %p171 = scmp.eq.s32.totalorder %s23, 1
    %p172 = por %p170, %p171
    %p173 = scmp.ne.s32.totalorder %s164, %s165
    %p174 = scmp.eq.s32.totalorder %s23, 0
    %p175 = por %p173, %p174
    %p176 = scmp.ne.s32.totalorder %s164, %s165
    %p177 = scmp.eq.s32.totalorder %s24, 1
    %p178 = por %p176, %p177
    %p180 = scmp.ne.s32.totalorder %s165, %s179
    %p181 = scmp.eq.s32.totalorder %s24, 0
    %p182 = por %p180, %p181
    %s184 = sadd.s32 %s183, 1
    %p187 = scmp.eq.s32.totalorder %s18, 1
    %p188 = scmp.ne.s32.totalorder %s183, %s185
    %p189 = scmp.eq.s32.totalorder %s18, 0
    %p190 = por %p188, %p189
    %p191 = scmp.ne.s32.totalorder %s183, %s185
    %p192 = scmp.eq.s32.totalorder %s23, 1
    %p193 = por %p191, %p192
    %p194 = scmp.ne.s32.totalorder %s185, %s186
    %p195 = scmp.eq.s32.totalorder %s23, 0
    %p196 = por %p194, %p195
    %p197 = scmp.ne.s32.totalorder %s185, %s186
    %p198 = scmp.eq.s32.totalorder %s24, 1
    %p199 = por %p197, %p198
    %p201 = scmp.ne.s32.totalorder %s186, %s200
    %p202 = scmp.eq.s32.totalorder %s24, 0
    %p203 = por %p201, %p202
    %s205 = sadd.s32 %s204, 1
    %p208 = scmp.eq.s32.totalorder %s18, 1
    %p209 = scmp.ne.s32.totalorder %s204, %s206
    %p210 = scmp.eq.s32.totalorder %s18, 0
    %p211 = por %p209, %p210
    %p212 = scmp.ne.s32.totalorder %s204, %s206
    %p213 = scmp.eq.s32.totalorder %s23, 1
    %p214 = por %p212, %p213
    %p215 = scmp.ne.s32.totalorder %s206, %s207
    %p216 = scmp.eq.s32.totalorder %s23, 0
    %p217 = por %p215, %p216
    %p218 = scmp.ne.s32.totalorder %s206, %s207
    %p219 = scmp.eq.s32.totalorder %s24, 1
    %p220 = por %p218, %p219
    %p222 = scmp.ne.s32.totalorder %s207, %s221
    %p223 = scmp.eq.s32.totalorder %s24, 0
    %p224 = por %p222, %p223
    %s226 = sadd.s32 %s225, 1
    %p229 = scmp.eq.s32.totalorder %s18, 1
    %p230 = scmp.ne.s32.totalorder %s225, %s227
    %p231 = scmp.eq.s32.totalorder %s18, 0
    %p232 = por %p230, %p231
    %p233 = scmp.ne.s32.totalorder %s225, %s227
    %p234 = scmp.eq.s32.totalorder %s23, 1
    %p235 = por %p233, %p234
    %p236 = scmp.ne.s32.totalorder %s227, %s228
    %p237 = scmp.eq.s32.totalorder %s23, 0
    %p238 = por %p236, %p237
    %p239 = scmp.ne.s32.totalorder %s227, %s228
    %p240 = scmp.eq.s32.totalorder %s24, 1
    %p241 = por %p239, %p240
    %p243 = scmp.ne.s32.totalorder %s228, %s242
    %p244 = scmp.eq.s32.totalorder %s24, 0
    %p245 = por %p243, %p244
    %s247 = sadd.s32 %s246, 1
    %p250 = scmp.eq.s32.totalorder %s18, 1
    %p251 = scmp.ne.s32.totalorder %s246, %s248
    %p252 = scmp.eq.s32.totalorder %s18, 0
    %p253 = por %p251, %p252
    %p254 = scmp.ne.s32.totalorder %s246, %s248
    %p255 = scmp.eq.s32.totalorder %s23, 1
    %p256 = por %p254, %p255
    %p257 = scmp.ne.s32.totalorder %s248, %s249
    %p258 = scmp.eq.s32.totalorder %s23, 0
    %p259 = por %p257, %p258
    %p260 = scmp.ne.s32.totalorder %s248, %s249
    %p261 = scmp.eq.s32.totalorder %s24, 1
    %p262 = por %p260, %p261
    %p264 = scmp.ne.s32.totalorder %s249, %s263
    %p265 = scmp.eq.s32.totalorder %s24, 0
    %p266 = por %p264, %p265
    %s268 = sadd.s32 %s267, 1
    %p271 = scmp.eq.s32.totalorder %s18, 1
    %p272 = scmp.ne.s32.totalorder %s267, %s269
    %p273 = scmp.eq.s32.totalorder %s18, 0
    %p274 = por %p272, %p273
    %p275 = scmp.ne.s32.totalorder %s267, %s269
    %p276 = scmp.eq.s32.totalorder %s23, 1
    %p277 = por %p275, %p276
    %p278 = scmp.ne.s32.totalorder %s269, %s270
    %p279 = scmp.eq.s32.totalorder %s23, 0
    %p280 = por %p278, %p279
    %p281 = scmp.ne.s32.totalorder %s269, %s270
    %p282 = scmp.eq.s32.totalorder %s24, 1
    %p283 = por %p281, %p282
    %p285 = scmp.ne.s32.totalorder %s270, %s284
    %p286 = scmp.eq.s32.totalorder %s24, 0
    %p287 = por %p285, %p286
    %s288 = ssub.s32 %s18, %s25
    %p289 = scmp.eq.s32.totalorder %s288, 0
    %s291 = sadd.s32 %s290, 1
    %s292 = scalar_select %p289, %s290, %s291
    %p295 = pneg %p289
    %p296 = scmp.eq.s32.totalorder %s18, 1
    %p297 = por %p295, %p296
    %p298 = scmp.ne.s32.totalorder %s290, %s293
    %p299 = scmp.eq.s32.totalorder %s18, 0
    %p300 = por %p298, %p299
    %p301 = scmp.ne.s32.totalorder %s290, %s293
    %p302 = scmp.eq.s32.totalorder %s23, 1
    %p303 = por %p301, %p302
    %p304 = scmp.ne.s32.totalorder %s293, %s294
    %p305 = scmp.eq.s32.totalorder %s23, 0
    %p306 = por %p304, %p305
    %p307 = scmp.ne.s32.totalorder %s293, %s294
    %p308 = scmp.eq.s32.totalorder %s24, 1
    %p309 = por %p307, %p308
    %p311 = scmp.ne.s32.totalorder %s294, %s310
    %p312 = scmp.eq.s32.totalorder %s24, 0
    %p313 = por %p311, %p312
    %p314 = scmp.le.s32.totalorder 1, %s18
    %p315 = scmp.lt.s32.totalorder %s18, 3
    %p316 = pnand %p314, %p315
    %p317 = pneg %p316
    // Predicated region
    $region9: #{up_forward.1} parent=5 // pred_check
      _
    $region10: #{up_forward.1} parent=5 // pred_check_branch
      %319 = sbr.rel (%p316) target = $region12
    $region11: #{up_forward.1} parent=5 // pred_region
      %s320 = ssub.s32 %s18, 1
      // Predicated region
      $region13: #{up_forward.1} parent=11 // pred_check
        %p321 = pneg %p91
      $region14: #{up_forward.1} parent=11 // pred_check_branch
        %323 = sbr.rel (%p321) target = $region16
      $region15: #{up_forward.1} parent=11 // pred_region
        _
      $region16: #{up_forward.1} parent=11 // pred_fallthru
        _
      // Predicated region
      $region17: #{up_forward.1} parent=11 // pred_check
        %p324 = pneg %p112
      $region18: #{up_forward.1} parent=11 // pred_check_branch
        %326 = sbr.rel (%p324) target = $region20
      $region19: #{up_forward.1} parent=11 // pred_region
        _
      $region20: #{up_forward.1} parent=11 // pred_fallthru
        _
      // Predicated region
      $region21: #{up_forward.1} parent=11 // pred_check
        %p327 = pneg %p133
      $region22: #{up_forward.1} parent=11 // pred_check_branch
        %329 = sbr.rel (%p327) target = $region24
      $region23: #{up_forward.1} parent=11 // pred_region
        _
      $region24: #{up_forward.1} parent=11 // pred_fallthru
        _
      // Predicated region
      $region25: #{up_forward.1} parent=11 // pred_check
        %p330 = pneg %p154
      $region26: #{up_forward.1} parent=11 // pred_check_branch
        %332 = sbr.rel (%p330) target = $region28
      $region27: #{up_forward.1} parent=11 // pred_region
        _
      $region28: #{up_forward.1} parent=11 // pred_fallthru
        _
      // Predicated region
      $region29: #{up_forward.1} parent=11 // pred_check
        %p333 = pneg %p175
      $region30: #{up_forward.1} parent=11 // pred_check_branch
        %335 = sbr.rel (%p333) target = $region32
      $region31: #{up_forward.1} parent=11 // pred_region
        _
      $region32: #{up_forward.1} parent=11 // pred_fallthru
        _
      // Predicated region
      $region33: #{up_forward.1} parent=11 // pred_check
        %p336 = pneg %p196
      $region34: #{up_forward.1} parent=11 // pred_check_branch
        %338 = sbr.rel (%p336) target = $region36
      $region35: #{up_forward.1} parent=11 // pred_region
        _
      $region36: #{up_forward.1} parent=11 // pred_fallthru
        _
      // Predicated region
      $region37: #{up_forward.1} parent=11 // pred_check
        %p339 = pneg %p217
      $region38: #{up_forward.1} parent=11 // pred_check_branch
        %341 = sbr.rel (%p339) target = $region40
      $region39: #{up_forward.1} parent=11 // pred_region
        _
      $region40: #{up_forward.1} parent=11 // pred_fallthru
        _
      // Predicated region
      $region41: #{up_forward.1} parent=11 // pred_check
        %p342 = pneg %p238
      $region42: #{up_forward.1} parent=11 // pred_check_branch
        %344 = sbr.rel (%p342) target = $region44
      $region43: #{up_forward.1} parent=11 // pred_region
        _
      $region44: #{up_forward.1} parent=11 // pred_fallthru
        _
      // Predicated region
      $region45: #{up_forward.1} parent=11 // pred_check
        %p345 = pneg %p259
      $region46: #{up_forward.1} parent=11 // pred_check_branch
        %347 = sbr.rel (%p345) target = $region48
      $region47: #{up_forward.1} parent=11 // pred_region
        _
      $region48: #{up_forward.1} parent=11 // pred_fallthru
        _
      // Predicated region
      $region49: #{up_forward.1} parent=11 // pred_check
        %p348 = pneg %p280
      $region50: #{up_forward.1} parent=11 // pred_check_branch
        %350 = sbr.rel (%p348) target = $region52
      $region51: #{up_forward.1} parent=11 // pred_region
        _
      $region52: #{up_forward.1} parent=11 // pred_fallthru
        _
    $region12: #{up_forward.1} parent=5 // pred_fallthru
      _
    %p351 = scmp.lt.s32.totalorder %s18, 2
    // Predicated region
    $region53: #{up_forward.1} parent=5 // pred_check
      %p352 = pneg %p351
    $region54: #{up_forward.1} parent=5 // pred_check_branch
      %354 = sbr.rel (%p352) target = $region56
    $region55: #{up_forward.1} parent=5 // pred_region
      // Predicated region
      $region57: #{up_forward.1} parent=55 // pred_check
        %p355 = pneg %p38
      $region58: #{up_forward.1} parent=55 // pred_check_branch
        %357 = sbr.rel (%p355) target = $region60
      $region59: #{up_forward.1} parent=55 // pred_region
        %p358 = scmp.lt.s32.totalorder %s18, 1
        %s359 = scalar_select %p358, %s18, 1
        %s360 = smul.addr %s359, 8
        %s361 = smul.addr %s360, 8
        %s362 = scalar_lea.vmem %s0, %s361
      $region60: #{up_forward.1} parent=55 // pred_fallthru
        _
      // Predicated region
      $region61: #{up_forward.1} parent=55 // pred_check
        %p363 = pneg %p64
      $region62: #{up_forward.1} parent=55 // pred_check_branch
        %365 = sbr.rel (%p363) target = $region64
      $region63: #{up_forward.1} parent=55 // pred_region
        %p366 = scmp.lt.s32.totalorder %s18, 1
        %s367 = scalar_select %p366, %s18, 1
        %s368 = smul.addr %s367, 8
        %s369 = smul.addr %s368, 8
        %s370 = scalar_lea.vmem %s1, %s369
      $region64: #{up_forward.1} parent=55 // pred_fallthru
        _
    $region56: #{up_forward.1} parent=5 // pred_fallthru
      _
    %p371 = scmp.le.s32.totalorder 1, %s18
    %p372 = scmp.lt.s32.totalorder %s18, 3
    %p373 = pnand %p371, %p372
    %p374 = pneg %p373
    // Predicated region
    $region65: #{up_forward.1} parent=5 // pred_check
      _
    $region66: #{up_forward.1} parent=5 // pred_check_branch
      %376 = sbr.rel (%p373) target = $region68
    $region67: #{up_forward.1} parent=5 // pred_region
      %s377 = ssub.s32 %s18, 1
      %p378 = scmp.lt.s32.totalorder %s23, 1
      %s379 = scalar_select %p378, %s23, 1
      %s380 = smul.addr %s379, 8
      %s381 = smul.addr %s380, 8
      %s382 = scalar_lea.vmem %s0, %s381
      %p383 = pneg %p44
      %p384 = pneg %p41
      %p385 = scmp.lt.s32.totalorder %s23, 1
      %s386 = scalar_select %p385, %s23, 1
      %s387 = smul.addr %s386, 8
      %s388 = smul.addr %s387, 8
      %s389 = scalar_lea.vmem %s1, %s388
      %p390 = pneg %p70
      %p391 = pneg %p67
      %p392 = pneg %p91
      %p393 = pneg %p88
      %p394 = pneg %p112
      %p395 = pneg %p109
      %p396 = pneg %p133
      %p397 = pneg %p130
      %p398 = pneg %p154
      %p399 = pneg %p151
      %p400 = pneg %p175
      %p401 = pneg %p172
      %p402 = pneg %p196
      %p403 = pneg %p193
      %p404 = pneg %p217
      %p405 = pneg %p214
      %p406 = pneg %p238
      %p407 = pneg %p235
      %p408 = pneg %p259
      %p409 = pneg %p256
      %p410 = pneg %p280
      %p411 = pneg %p277
      %p412 = pneg %p306
      %p413 = pneg %p303
      %p414 = scmp.lt.s32.totalorder %s23, 1
      %s415 = scalar_select %p414, %s23, 1
      %s416 = smul.addr %s415, 8
      %s417 = smul.addr %s416, 8
      %s418 = scalar_lea.vmem %s12, %s417
      %p419 = scmp.lt.s32.totalorder %s23, 1
      %s420 = scalar_select %p419, %s23, 1
      %s421 = smul.addr %s420, 8
      %s422 = smul.addr %s421, 8
      %s423 = scalar_lea.vmem %s0, %s422
      %p424 = scmp.lt.s32.totalorder %s23, 1
      %s425 = scalar_select %p424, %s23, 1
      %s426 = smul.addr %s425, 8
      %s427 = smul.addr %s426, 8
      %s428 = scalar_lea.vmem %s1, %s427
      %p429 = scmp.lt.s32.totalorder %s23, 1
      %s430 = scalar_select %p429, %s23, 1
      %s431 = smul.addr %s430, 8
      %s432 = smul.addr %s431, 8
      %s433 = scalar_lea.vmem %s12, %s432
      %v435 = vld [vmem:[%s423] sm:$0xff]
      %v436 = vld [vmem:[%s423 + $0x8] sm:$0xff]
      %v437 = vld [vmem:[%s423 + $0x10] sm:$0xff]
      %v438 = vld [vmem:[%s423 + $0x18] sm:$0xff]
      %v439 = vld [vmem:[%s423 + $0x20] sm:$0xff]
      %v440 = vld [vmem:[%s423 + $0x28] sm:$0xff]
      %v441 = vld [vmem:[%s423 + $0x30] sm:$0xff]
      %v442 = vld [vmem:[%s423 + $0x38] sm:$0xff]
      %v443 = vld [vmem:[%s2] sm:$0xf]
      %v444 = vld [vmem:[%s2 + $0x4] sm:$0xf]
      %v445 = vld [vmem:[%s2 + $0x8] sm:$0xf]
      %v446 = vld [vmem:[%s2 + $0xc] sm:$0xf]
      %v447 = vpack.c.bf16 %v436, %v435
      %v448 = vpack.c.bf16 %v438, %v437
      %v449 = vpack.c.bf16 %v440, %v439
      %v450 = vpack.c.bf16 %v442, %v441
      %v455 = vunpack.c.l.b16 %v443
      %v456 = vunpack.c.l.b16 %v444
      %v457 = vunpack.c.l.b16 %v445
      %v458 = vunpack.c.l.b16 %v446
      %v459 = vpack.c.b16 %v456, %v455
      %v460 = vpack.c.b16 %v458, %v457
      %vm461 = vcmask 523264
      %v463 = vsel %vm461, %v459, 0
      %v466 = vsel %vm461, %v460, 0
      %468 = vmatpush.bf16.msra.mxu0 0
      %469 = vmatpush.bf16.msra.mxu0 0
      %470 = vmatpush.bf16.msra.mxu0 0
      %471 = vmatpush.bf16.msra.mxu0 0
      %472 = vmatpush.bf16.msra.mxu0 %v450
      %473 = vmatpush.bf16.msra.mxu0 %v449
      %474 = vmatpush.bf16.msra.mxu0 %v448
      %475 = vmatpush.bf16.msra.mxu0 %v447
      %476 = vmatmul.bf16.gmra.mxu0 %v463
      %v477 = vpop.f32.mrf.mxu0
      %v478 = vadd.f32 0.0, %v477
      %v479 = vpop.f32.mrf.mxu0
      %v480 = vadd.f32 0.0, %v479
      %481 = vmatmul.bf16.gmra.mxu0 %v466
      %v482 = vpop.f32.mrf.mxu0
      %v483 = vadd.f32 0.0, %v482
      %v484 = vpop.f32.mrf.mxu0
      %v485 = vadd.f32 0.0, %v484
      %486 = vdwg.mxu0
      %v487 = vld [vmem:[%s4] sm:$0xff]
      %v488 = vld [vmem:[%s4 + $0x8] sm:$0xff]
      %v489 = vld [vmem:[%s4 + $0x10] sm:$0xff]
      %v490 = vld [vmem:[%s4 + $0x18] sm:$0xff]
      %v491 = vld [vmem:[%s4 + $0x20] sm:$0xff]
      %v492 = vld [vmem:[%s4 + $0x28] sm:$0xff]
      %v493 = vld [vmem:[%s4 + $0x30] sm:$0xff]
      %v494 = vld [vmem:[%s4 + $0x38] sm:$0xff]
      %v495 = vld [vmem:[%s4 + $0x40] sm:$0xff]
      %v496 = vld [vmem:[%s4 + $0x48] sm:$0xff]
      %v497 = vld [vmem:[%s4 + $0x50] sm:$0xff]
      %v498 = vld [vmem:[%s4 + $0x58] sm:$0xff]
      %v499 = vld [vmem:[%s4 + $0x60] sm:$0xff]
      %v500 = vld [vmem:[%s4 + $0x68] sm:$0xff]
      %v501 = vld [vmem:[%s4 + $0x70] sm:$0xff]
      %v502 = vld [vmem:[%s4 + $0x78] sm:$0xff]
      %s503 = scalar_lea.vmem %s2, 16
      %v504 = vld [vmem:[%s503] sm:$0xf]
      %v505 = vld [vmem:[%s503 + $0x4] sm:$0xf]
      %v506 = vld [vmem:[%s503 + $0x8] sm:$0xf]
      %v507 = vld [vmem:[%s503 + $0xc] sm:$0xf]
      %v512 = vunpack.c.l.b16 %v504
      %v513 = vunpack.c.l.b16 %v505
      %v514 = vunpack.c.l.b16 %v506
      %v515 = vunpack.c.l.b16 %v507
      %v516 = vpack.c.b16 %v513, %v512
      %v517 = vpack.c.b16 %v515, %v514
      %v519 = vsel %vm461, %v516, 0
      %v522 = vsel %vm461, %v517, 0
      %524 = vmatpush.bf16.msra.mxu0 0
      %525 = vmatpush.bf16.msra.mxu0 0
      %526 = vmatpush.bf16.msra.mxu0 0
      %527 = vmatpush.bf16.msra.mxu0 0
      %528 = vmatpush.bf16.msra.mxu0 %v450
      %529 = vmatpush.bf16.msra.mxu0 %v449
      %530 = vmatpush.bf16.msra.mxu0 %v448
      %531 = vmatpush.bf16.msra.mxu0 %v447
      %532 = vmatmul.bf16.gmra.mxu0 %v519
      %v533 = vpop.f32.mrf.mxu0
      %v534 = vadd.f32 0.0, %v533
      %v535 = vpop.f32.mrf.mxu0
      %v536 = vadd.f32 0.0, %v535
      %537 = vmatmul.bf16.gmra.mxu0 %v522
      %v538 = vpop.f32.mrf.mxu0
      %v539 = vadd.f32 0.0, %v538
      %v540 = vpop.f32.mrf.mxu0
      %v541 = vadd.f32 0.0, %v540
      %542 = vdwg.mxu0
      %s543 = scalar_lea.vmem %s4, 128
      %v544 = vld [vmem:[%s543] sm:$0xff]
      %v545 = vld [vmem:[%s543 + $0x8] sm:$0xff]
      %v546 = vld [vmem:[%s543 + $0x10] sm:$0xff]
      %v547 = vld [vmem:[%s543 + $0x18] sm:$0xff]
      %v548 = vld [vmem:[%s543 + $0x20] sm:$0xff]
      %v549 = vld [vmem:[%s543 + $0x28] sm:$0xff]
      %v550 = vld [vmem:[%s543 + $0x30] sm:$0xff]
      %v551 = vld [vmem:[%s543 + $0x38] sm:$0xff]
      %v552 = vld [vmem:[%s543 + $0x40] sm:$0xff]
      %v553 = vld [vmem:[%s543 + $0x48] sm:$0xff]
      %v554 = vld [vmem:[%s543 + $0x50] sm:$0xff]
      %v555 = vld [vmem:[%s543 + $0x58] sm:$0xff]
      %v556 = vld [vmem:[%s543 + $0x60] sm:$0xff]
      %v557 = vld [vmem:[%s543 + $0x68] sm:$0xff]
      %v558 = vld [vmem:[%s543 + $0x70] sm:$0xff]
      %v559 = vld [vmem:[%s543 + $0x78] sm:$0xff]
      %v561 = vsel %vm461, %v534, 0
      %v564 = vsel %vm461, %v536, 0
      %v567 = vsel %vm461, %v539, 0
      %v570 = vsel %vm461, %v541, 0
      %572 = vmatpush.msra.mxu0 0.0
      %573 = vmatpush.msra.mxu0 0.0
      %574 = vmatpush.msra.mxu0 0.0
      %575 = vmatpush.msra.mxu0 0.0
      %576 = vmatpush.msra.mxu0 0.0
      %577 = vmatpush.msra.mxu0 0.0
      %578 = vmatpush.msra.mxu0 0.0
      %579 = vmatpush.msra.mxu0 0.0
      %v580 = vand.u32 %v558, 4294901760
      %581 = vmatpush.msra.mxu0 %v580
      %v582 = vand.u32 %v556, 4294901760
      %583 = vmatpush.msra.mxu0 %v582
      %v584 = vand.u32 %v554, 4294901760
      %585 = vmatpush.msra.mxu0 %v584
      %v586 = vand.u32 %v552, 4294901760
      %587 = vmatpush.msra.mxu0 %v586
      %v588 = vand.u32 %v550, 4294901760
      %589 = vmatpush.msra.mxu0 %v588
      %v590 = vand.u32 %v548, 4294901760
      %591 = vmatpush.msra.mxu0 %v590
      %v592 = vand.u32 %v546, 4294901760
      %593 = vmatpush.msra.mxu0 %v592
      %v594 = vand.u32 %v544, 4294901760
      %595 = vmatpush.msra.mxu0 %v594
      %v596 = vand.u32 %v561, 4294901760
      %v597 = vsub.f32 %v561, %v596
      %v598 = vand.u32 %v597, 4294901760
      %v599 = vsub.f32 %v597, %v598
      %v600 = vand.u32 %v599, 4294901760
      %601 = vmatmul.f32.gmra.mxu0 %v600
      %v602 = vpop.f32.mrf.mxu0
      %v603 = vadd.f32 0.0, %v602
      %v604 = vand.u32 %v564, 4294901760
      %v605 = vsub.f32 %v564, %v604
      %v606 = vand.u32 %v605, 4294901760
      %v607 = vsub.f32 %v605, %v606
      %v608 = vand.u32 %v607, 4294901760
      %609 = vmatmul.f32.gmra.mxu0 %v608
      %v610 = vpop.f32.mrf.mxu0
      %v611 = vadd.f32 0.0, %v610
      %v612 = vand.u32 %v567, 4294901760
      %v613 = vsub.f32 %v567, %v612
      %v614 = vand.u32 %v613, 4294901760
      %v615 = vsub.f32 %v613, %v614
      %v616 = vand.u32 %v615, 4294901760
      %617 = vmatmul.f32.gmra.mxu0 %v616
      %v618 = vpop.f32.mrf.mxu0
      %v619 = vadd.f32 0.0, %v618
      %v620 = vand.u32 %v570, 4294901760
      %v621 = vsub.f32 %v570, %v620
      %v622 = vand.u32 %v621, 4294901760
      %v623 = vsub.f32 %v621, %v622
      %v624 = vand.u32 %v623, 4294901760
      %625 = vmatmul.f32.gmra.mxu0 %v624
      %v626 = vpop.f32.mrf.mxu0
      %v627 = vadd.f32 0.0, %v626
      %628 = vdwg.mxu0
      %629 = vmatpush.msra.mxu0 0.0
      %630 = vmatpush.msra.mxu0 0.0
      %631 = vmatpush.msra.mxu0 0.0
      %632 = vmatpush.msra.mxu0 0.0
      %633 = vmatpush.msra.mxu0 0.0
      %634 = vmatpush.msra.mxu0 0.0
      %635 = vmatpush.msra.mxu0 0.0
      %636 = vmatpush.msra.mxu0 0.0
      %v637 = vand.u32 %v558, 4294901760
      %v638 = vsub.f32 %v558, %v637
      %v639 = vand.u32 %v638, 4294901760
      %v640 = vsub.f32 %v638, %v639
      %v641 = vand.u32 %v640, 4294901760
      %642 = vmatpush.msra.mxu0 %v641
      %v643 = vand.u32 %v556, 4294901760
      %v644 = vsub.f32 %v556, %v643
      %v645 = vand.u32 %v644, 4294901760
      %v646 = vsub.f32 %v644, %v645
      %v647 = vand.u32 %v646, 4294901760
      %648 = vmatpush.msra.mxu0 %v647
      %v649 = vand.u32 %v554, 4294901760
      %v650 = vsub.f32 %v554, %v649
      %v651 = vand.u32 %v650, 4294901760
      %v652 = vsub.f32 %v650, %v651
      %v653 = vand.u32 %v652, 4294901760
      %654 = vmatpush.msra.mxu0 %v653
      %v655 = vand.u32 %v552, 4294901760
      %v656 = vsub.f32 %v552, %v655
      %v657 = vand.u32 %v656, 4294901760
      %v658 = vsub.f32 %v656, %v657
      %v659 = vand.u32 %v658, 4294901760
      %660 = vmatpush.msra.mxu0 %v659
      %v661 = vand.u32 %v550, 4294901760
      %v662 = vsub.f32 %v550, %v661
      %v663 = vand.u32 %v662, 4294901760
      %v664 = vsub.f32 %v662, %v663
      %v665 = vand.u32 %v664, 4294901760
      %666 = vmatpush.msra.mxu0 %v665
      %v667 = vand.u32 %v548, 4294901760
      %v668 = vsub.f32 %v548, %v667
      %v669 = vand.u32 %v668, 4294901760
      %v670 = vsub.f32 %v668, %v669
      %v671 = vand.u32 %v670, 4294901760
      %672 = vmatpush.msra.mxu0 %v671
      %v673 = vand.u32 %v546, 4294901760
      %v674 = vsub.f32 %v546, %v673
      %v675 = vand.u32 %v674, 4294901760
      %v676 = vsub.f32 %v674, %v675
      %v677 = vand.u32 %v676, 4294901760
      %678 = vmatpush.msra.mxu0 %v677
      %v679 = vand.u32 %v544, 4294901760
      %v680 = vsub.f32 %v544, %v679
      %v681 = vand.u32 %v680, 4294901760
      %v682 = vsub.f32 %v680, %v681
      %v683 = vand.u32 %v682, 4294901760
      %684 = vmatpush.msra.mxu0 %v683
      %v685 = vand.u32 %v561, 4294901760
      %686 = vmatmul.f32.gmra.mxu0 %v685
      %v687 = vpop.f32.mrf.mxu0
      %v688 = vadd.f32 %v603, %v687
      %v689 = vand.u32 %v564, 4294901760
      %690 = vmatmul.f32.gmra.mxu0 %v689
      %v691 = vpop.f32.mrf.mxu0
      %v692 = vadd.f32 %v611, %v691
      %v693 = vand.u32 %v567, 4294901760
      %694 = vmatmul.f32.gmra.mxu0 %v693
      %v695 = vpop.f32.mrf.mxu0
      %v696 = vadd.f32 %v619, %v695
      %v697 = vand.u32 %v570, 4294901760
      %698 = vmatmul.f32.gmra.mxu0 %v697
      %v699 = vpop.f32.mrf.mxu0
      %v700 = vadd.f32 %v627, %v699
      %701 = vdwg.mxu0
      %702 = vmatpush.msra.mxu0 0.0
      %703 = vmatpush.msra.mxu0 0.0
      %704 = vmatpush.msra.mxu0 0.0
      %705 = vmatpush.msra.mxu0 0.0
      %706 = vmatpush.msra.mxu0 0.0
      %707 = vmatpush.msra.mxu0 0.0
      %708 = vmatpush.msra.mxu0 0.0
      %709 = vmatpush.msra.mxu0 0.0
      %v710 = vand.u32 %v558, 4294901760
      %v711 = vsub.f32 %v558, %v710
      %712 = vmatpush.msra.mxu0 %v711
      %v713 = vand.u32 %v556, 4294901760
      %v714 = vsub.f32 %v556, %v713
      %715 = vmatpush.msra.mxu0 %v714
      %v716 = vand.u32 %v554, 4294901760
      %v717 = vsub.f32 %v554, %v716
      %718 = vmatpush.msra.mxu0 %v717
      %v719 = vand.u32 %v552, 4294901760
      %v720 = vsub.f32 %v552, %v719
      %721 = vmatpush.msra.mxu0 %v720
      %v722 = vand.u32 %v550, 4294901760
      %v723 = vsub.f32 %v550, %v722
      %724 = vmatpush.msra.mxu0 %v723
      %v725 = vand.u32 %v548, 4294901760
      %v726 = vsub.f32 %v548, %v725
      %727 = vmatpush.msra.mxu0 %v726
      %v728 = vand.u32 %v546, 4294901760
      %v729 = vsub.f32 %v546, %v728
      %730 = vmatpush.msra.mxu0 %v729
      %v731 = vand.u32 %v544, 4294901760
      %v732 = vsub.f32 %v544, %v731
      %733 = vmatpush.msra.mxu0 %v732
      %v734 = vand.u32 %v561, 4294901760
      %v735 = vsub.f32 %v561, %v734
      %736 = vmatmul.f32.gmra.mxu0 %v735
      %v737 = vpop.f32.mrf.mxu0
      %v738 = vadd.f32 %v688, %v737
      %v739 = vand.u32 %v564, 4294901760
      %v740 = vsub.f32 %v564, %v739
      %741 = vmatmul.f32.gmra.mxu0 %v740
      %v742 = vpop.f32.mrf.mxu0
      %v743 = vadd.f32 %v692, %v742
      %v744 = vand.u32 %v567, 4294901760
      %v745 = vsub.f32 %v567, %v744
      %746 = vmatmul.f32.gmra.mxu0 %v745
      %v747 = vpop.f32.mrf.mxu0
      %v748 = vadd.f32 %v696, %v747
      %v749 = vand.u32 %v570, 4294901760
      %v750 = vsub.f32 %v570, %v749
      %751 = vmatmul.f32.gmra.mxu0 %v750
      %v752 = vpop.f32.mrf.mxu0
      %v753 = vadd.f32 %v700, %v752
      %754 = vdwg.mxu0
      %755 = vmatpush.msra.mxu0 0.0
      %756 = vmatpush.msra.mxu0 0.0
      %757 = vmatpush.msra.mxu0 0.0
      %758 = vmatpush.msra.mxu0 0.0
      %759 = vmatpush.msra.mxu0 0.0
      %760 = vmatpush.msra.mxu0 0.0
      %761 = vmatpush.msra.mxu0 0.0
      %762 = vmatpush.msra.mxu0 0.0
      %v763 = vand.u32 %v558, 4294901760
      %764 = vmatpush.msra.mxu0 %v763
      %v765 = vand.u32 %v556, 4294901760
      %766 = vmatpush.msra.mxu0 %v765
      %v767 = vand.u32 %v554, 4294901760
      %768 = vmatpush.msra.mxu0 %v767
      %v769 = vand.u32 %v552, 4294901760
      %770 = vmatpush.msra.mxu0 %v769
      %v771 = vand.u32 %v550, 4294901760
      %772 = vmatpush.msra.mxu0 %v771
      %v773 = vand.u32 %v548, 4294901760
      %774 = vmatpush.msra.mxu0 %v773
      %v775 = vand.u32 %v546, 4294901760
      %776 = vmatpush.msra.mxu0 %v775
      %v777 = vand.u32 %v544, 4294901760
      %778 = vmatpush.msra.mxu0 %v777
      %v779 = vand.u32 %v561, 4294901760
      %v780 = vsub.f32 %v561, %v779
      %v781 = vand.u32 %v780, 4294901760
      %782 = vmatmul.f32.gmra.mxu0 %v781
      %v783 = vpop.f32.mrf.mxu0
      %v784 = vadd.f32 %v738, %v783
      %v785 = vand.u32 %v564, 4294901760
      %v786 = vsub.f32 %v564, %v785
      %v787 = vand.u32 %v786, 4294901760
      %788 = vmatmul.f32.gmra.mxu0 %v787
      %v789 = vpop.f32.mrf.mxu0
      %v790 = vadd.f32 %v743, %v789
      %v791 = vand.u32 %v567, 4294901760
      %v792 = vsub.f32 %v567, %v791
      %v793 = vand.u32 %v792, 4294901760
      %794 = vmatmul.f32.gmra.mxu0 %v793
      %v795 = vpop.f32.mrf.mxu0
      %v796 = vadd.f32 %v748, %v795
      %v797 = vand.u32 %v570, 4294901760
      %v798 = vsub.f32 %v570, %v797
      %v799 = vand.u32 %v798, 4294901760
      %800 = vmatmul.f32.gmra.mxu0 %v799
      %v801 = vpop.f32.mrf.mxu0
      %v802 = vadd.f32 %v753, %v801
      %803 = vdwg.mxu0
      %804 = vmatpush.msra.mxu0 0.0
      %805 = vmatpush.msra.mxu0 0.0
      %806 = vmatpush.msra.mxu0 0.0
      %807 = vmatpush.msra.mxu0 0.0
      %808 = vmatpush.msra.mxu0 0.0
      %809 = vmatpush.msra.mxu0 0.0
      %810 = vmatpush.msra.mxu0 0.0
      %811 = vmatpush.msra.mxu0 0.0
      %v812 = vand.u32 %v558, 4294901760
      %v813 = vsub.f32 %v558, %v812
      %v814 = vand.u32 %v813, 4294901760
      %815 = vmatpush.msra.mxu0 %v814
      %v816 = vand.u32 %v556, 4294901760
      %v817 = vsub.f32 %v556, %v816
      %v818 = vand.u32 %v817, 4294901760
      %819 = vmatpush.msra.mxu0 %v818
      %v820 = vand.u32 %v554, 4294901760
      %v821 = vsub.f32 %v554, %v820
      %v822 = vand.u32 %v821, 4294901760
      %823 = vmatpush.msra.mxu0 %v822
      %v824 = vand.u32 %v552, 4294901760
      %v825 = vsub.f32 %v552, %v824
      %v826 = vand.u32 %v825, 4294901760
      %827 = vmatpush.msra.mxu0 %v826
      %v828 = vand.u32 %v550, 4294901760
      %v829 = vsub.f32 %v550, %v828
      %v830 = vand.u32 %v829, 4294901760
      %831 = vmatpush.msra.mxu0 %v830
      %v832 = vand.u32 %v548, 4294901760
      %v833 = vsub.f32 %v548, %v832
      %v834 = vand.u32 %v833, 4294901760
      %835 = vmatpush.msra.mxu0 %v834
      %v836 = vand.u32 %v546, 4294901760
      %v837 = vsub.f32 %v546, %v836
      %v838 = vand.u32 %v837, 4294901760
      %839 = vmatpush.msra.mxu0 %v838
      %v840 = vand.u32 %v544, 4294901760
      %v841 = vsub.f32 %v544, %v840
      %v842 = vand.u32 %v841, 4294901760
      %843 = vmatpush.msra.mxu0 %v842
      %v844 = vand.u32 %v561, 4294901760
      %845 = vmatmul.f32.gmra.mxu0 %v844
      %v846 = vpop.f32.mrf.mxu0
      %v847 = vadd.f32 %v784, %v846
      %v848 = vand.u32 %v564, 4294901760
      %849 = vmatmul.f32.gmra.mxu0 %v848
      %v850 = vpop.f32.mrf.mxu0
      %v851 = vadd.f32 %v790, %v850
      %v852 = vand.u32 %v567, 4294901760
      %853 = vmatmul.f32.gmra.mxu0 %v852
      %v854 = vpop.f32.mrf.mxu0
      %v855 = vadd.f32 %v796, %v854
      %v856 = vand.u32 %v570, 4294901760
      %857 = vmatmul.f32.gmra.mxu0 %v856
      %v858 = vpop.f32.mrf.mxu0
      %v859 = vadd.f32 %v802, %v858
      %860 = vdwg.mxu0
      %861 = vmatpush.msra.mxu0 0.0
      %862 = vmatpush.msra.mxu0 0.0
      %863 = vmatpush.msra.mxu0 0.0
      %864 = vmatpush.msra.mxu0 0.0
      %865 = vmatpush.msra.mxu0 0.0
      %866 = vmatpush.msra.mxu0 0.0
      %867 = vmatpush.msra.mxu0 0.0
      %868 = vmatpush.msra.mxu0 0.0
      %v869 = vand.u32 %v558, 4294901760
      %870 = vmatpush.msra.mxu0 %v869
      %v871 = vand.u32 %v556, 4294901760
      %872 = vmatpush.msra.mxu0 %v871
      %v873 = vand.u32 %v554, 4294901760
      %874 = vmatpush.msra.mxu0 %v873
      %v875 = vand.u32 %v552, 4294901760
      %876 = vmatpush.msra.mxu0 %v875
      %v877 = vand.u32 %v550, 4294901760
      %878 = vmatpush.msra.mxu0 %v877
      %v879 = vand.u32 %v548, 4294901760
      %880 = vmatpush.msra.mxu0 %v879
      %v881 = vand.u32 %v546, 4294901760
      %882 = vmatpush.msra.mxu0 %v881
      %v883 = vand.u32 %v544, 4294901760
      %884 = vmatpush.msra.mxu0 %v883
      %v885 = vand.u32 %v561, 4294901760
      %886 = vmatmul.f32.gmra.mxu0 %v885
      %v887 = vpop.f32.mrf.mxu0
      %v888 = vadd.f32 %v847, %v887
      %v889 = vand.u32 %v564, 4294901760
      %890 = vmatmul.f32.gmra.mxu0 %v889
      %v891 = vpop.f32.mrf.mxu0
      %v892 = vadd.f32 %v851, %v891
      %v893 = vand.u32 %v567, 4294901760
      %894 = vmatmul.f32.gmra.mxu0 %v893
      %v895 = vpop.f32.mrf.mxu0
      %v896 = vadd.f32 %v855, %v895
      %v897 = vand.u32 %v570, 4294901760
      %898 = vmatmul.f32.gmra.mxu0 %v897
      %v899 = vpop.f32.mrf.mxu0
      %v900 = vadd.f32 %v859, %v899
      %901 = vdwg.mxu0
      %902 = vmatpush.msra.mxu0 0.0
      %903 = vmatpush.msra.mxu0 0.0
      %904 = vmatpush.msra.mxu0 0.0
      %905 = vmatpush.msra.mxu0 0.0
      %906 = vmatpush.msra.mxu0 0.0
      %907 = vmatpush.msra.mxu0 0.0
      %908 = vmatpush.msra.mxu0 0.0
      %909 = vmatpush.msra.mxu0 0.0
      %v910 = vand.u32 %v559, 4294901760
      %911 = vmatpush.msra.mxu0 %v910
      %v912 = vand.u32 %v557, 4294901760
      %913 = vmatpush.msra.mxu0 %v912
      %v914 = vand.u32 %v555, 4294901760
      %915 = vmatpush.msra.mxu0 %v914
      %v916 = vand.u32 %v553, 4294901760
      %917 = vmatpush.msra.mxu0 %v916
      %v918 = vand.u32 %v551, 4294901760
      %919 = vmatpush.msra.mxu0 %v918
      %v920 = vand.u32 %v549, 4294901760
      %921 = vmatpush.msra.mxu0 %v920
      %v922 = vand.u32 %v547, 4294901760
      %923 = vmatpush.msra.mxu0 %v922
      %v924 = vand.u32 %v545, 4294901760
      %925 = vmatpush.msra.mxu0 %v924
      %v926 = vand.u32 %v561, 4294901760
      %v927 = vsub.f32 %v561, %v926
      %v928 = vand.u32 %v927, 4294901760
      %v929 = vsub.f32 %v927, %v928
      %v930 = vand.u32 %v929, 4294901760
      %931 = vmatmul.f32.gmra.mxu0 %v930
      %v932 = vpop.f32.mrf.mxu0
      %v933 = vadd.f32 0.0, %v932
      %v934 = vand.u32 %v564, 4294901760
      %v935 = vsub.f32 %v564, %v934
      %v936 = vand.u32 %v935, 4294901760
      %v937 = vsub.f32 %v935, %v936
      %v938 = vand.u32 %v937, 4294901760
      %939 = vmatmul.f32.gmra.mxu0 %v938
      %v940 = vpop.f32.mrf.mxu0
      %v941 = vadd.f32 0.0, %v940
      %v942 = vand.u32 %v567, 4294901760
      %v943 = vsub.f32 %v567, %v942
      %v944 = vand.u32 %v943, 4294901760
      %v945 = vsub.f32 %v943, %v944
      %v946 = vand.u32 %v945, 4294901760
      %947 = vmatmul.f32.gmra.mxu0 %v946
      %v948 = vpop.f32.mrf.mxu0
      %v949 = vadd.f32 0.0, %v948
      %v950 = vand.u32 %v570, 4294901760
      %v951 = vsub.f32 %v570, %v950
      %v952 = vand.u32 %v951, 4294901760
      %v953 = vsub.f32 %v951, %v952
      %v954 = vand.u32 %v953, 4294901760
      %955 = vmatmul.f32.gmra.mxu0 %v954
      %v956 = vpop.f32.mrf.mxu0
      %v957 = vadd.f32 0.0, %v956
      %958 = vdwg.mxu0
      %959 = vmatpush.msra.mxu0 0.0
      %960 = vmatpush.msra.mxu0 0.0
      %961 = vmatpush.msra.mxu0 0.0
      %962 = vmatpush.msra.mxu0 0.0
      %963 = vmatpush.msra.mxu0 0.0
      %964 = vmatpush.msra.mxu0 0.0
      %965 = vmatpush.msra.mxu0 0.0
      %966 = vmatpush.msra.mxu0 0.0
      %v967 = vand.u32 %v559, 4294901760
      %v968 = vsub.f32 %v559, %v967
      %v969 = vand.u32 %v968, 4294901760
      %v970 = vsub.f32 %v968, %v969
      %v971 = vand.u32 %v970, 4294901760
      %972 = vmatpush.msra.mxu0 %v971
      %v973 = vand.u32 %v557, 4294901760
      %v974 = vsub.f32 %v557, %v973
      %v975 = vand.u32 %v974, 4294901760
      %v976 = vsub.f32 %v974, %v975
      %v977 = vand.u32 %v976, 4294901760
      %978 = vmatpush.msra.mxu0 %v977
      %v979 = vand.u32 %v555, 4294901760
      %v980 = vsub.f32 %v555, %v979
      %v981 = vand.u32 %v980, 4294901760
      %v982 = vsub.f32 %v980, %v981
      %v983 = vand.u32 %v982, 4294901760
      %984 = vmatpush.msra.mxu0 %v983
      %v985 = vand.u32 %v553, 4294901760
      %v986 = vsub.f32 %v553, %v985
      %v987 = vand.u32 %v986, 4294901760
      %v988 = vsub.f32 %v986, %v987
      %v989 = vand.u32 %v988, 4294901760
      %990 = vmatpush.msra.mxu0 %v989
      %v991 = vand.u32 %v551, 4294901760
      %v992 = vsub.f32 %v551, %v991
      %v993 = vand.u32 %v992, 4294901760
      %v994 = vsub.f32 %v992, %v993
      %v995 = vand.u32 %v994, 4294901760
      %996 = vmatpush.msra.mxu0 %v995
      %v997 = vand.u32 %v549, 4294901760
      %v998 = vsub.f32 %v549, %v997
      %v999 = vand.u32 %v998, 4294901760
      %v1000 = vsub.f32 %v998, %v999
      %v1001 = vand.u32 %v1000, 4294901760
      %1002 = vmatpush.msra.mxu0 %v1001
      %v1003 = vand.u32 %v547, 4294901760
      %v1004 = vsub.f32 %v547, %v1003
      %v1005 = vand.u32 %v1004, 4294901760
      %v1006 = vsub.f32 %v1004, %v1005
      %v1007 = vand.u32 %v1006, 4294901760
      %1008 = vmatpush.msra.mxu0 %v1007
      %v1009 = vand.u32 %v545, 4294901760
      %v1010 = vsub.f32 %v545, %v1009
      %v1011 = vand.u32 %v1010, 4294901760
      %v1012 = vsub.f32 %v1010, %v1011
      %v1013 = vand.u32 %v1012, 4294901760
      %1014 = vmatpush.msra.mxu0 %v1013
      %v1015 = vand.u32 %v561, 4294901760
      %1016 = vmatmul.f32.gmra.mxu0 %v1015
      %v1017 = vpop.f32.mrf.mxu0
      %v1018 = vadd.f32 %v933, %v1017
      %v1019 = vand.u32 %v564, 4294901760
      %1020 = vmatmul.f32.gmra.mxu0 %v1019
      %v1021 = vpop.f32.mrf.mxu0
      %v1022 = vadd.f32 %v941, %v1021
      %v1023 = vand.u32 %v567, 4294901760
      %1024 = vmatmul.f32.gmra.mxu0 %v1023
      %v1025 = vpop.f32.mrf.mxu0
      %v1026 = vadd.f32 %v949, %v1025
      %v1027 = vand.u32 %v570, 4294901760
      %1028 = vmatmul.f32.gmra.mxu0 %v1027
      %v1029 = vpop.f32.mrf.mxu0
      %v1030 = vadd.f32 %v957, %v1029
      %1031 = vdwg.mxu0
      %1032 = vmatpush.msra.mxu0 0.0
      %1033 = vmatpush.msra.mxu0 0.0
      %1034 = vmatpush.msra.mxu0 0.0
      %1035 = vmatpush.msra.mxu0 0.0
      %1036 = vmatpush.msra.mxu0 0.0
      %1037 = vmatpush.msra.mxu0 0.0
      %1038 = vmatpush.msra.mxu0 0.0
      %1039 = vmatpush.msra.mxu0 0.0
      %v1040 = vand.u32 %v559, 4294901760
      %v1041 = vsub.f32 %v559, %v1040
      %1042 = vmatpush.msra.mxu0 %v1041
      %v1043 = vand.u32 %v557, 4294901760
      %v1044 = vsub.f32 %v557, %v1043
      %1045 = vmatpush.msra.mxu0 %v1044
      %v1046 = vand.u32 %v555, 4294901760
      %v1047 = vsub.f32 %v555, %v1046
      %1048 = vmatpush.msra.mxu0 %v1047
      %v1049 = vand.u32 %v553, 4294901760
      %v1050 = vsub.f32 %v553, %v1049
      %1051 = vmatpush.msra.mxu0 %v1050
      %v1052 = vand.u32 %v551, 4294901760
      %v1053 = vsub.f32 %v551, %v1052
      %1054 = vmatpush.msra.mxu0 %v1053
      %v1055 = vand.u32 %v549, 4294901760
      %v1056 = vsub.f32 %v549, %v1055
      %1057 = vmatpush.msra.mxu0 %v1056
      %v1058 = vand.u32 %v547, 4294901760
      %v1059 = vsub.f32 %v547, %v1058
      %1060 = vmatpush.msra.mxu0 %v1059
      %v1061 = vand.u32 %v545, 4294901760
      %v1062 = vsub.f32 %v545, %v1061
      %1063 = vmatpush.msra.mxu0 %v1062
      %v1064 = vand.u32 %v561, 4294901760
      %v1065 = vsub.f32 %v561, %v1064
      %1066 = vmatmul.f32.gmra.mxu0 %v1065
      %v1067 = vpop.f32.mrf.mxu0
      %v1068 = vadd.f32 %v1018, %v1067
      %v1069 = vand.u32 %v564, 4294901760
      %v1070 = vsub.f32 %v564, %v1069
      %1071 = vmatmul.f32.gmra.mxu0 %v1070
      %v1072 = vpop.f32.mrf.mxu0
      %v1073 = vadd.f32 %v1022, %v1072
      %v1074 = vand.u32 %v567, 4294901760
      %v1075 = vsub.f32 %v567, %v1074
      %1076 = vmatmul.f32.gmra.mxu0 %v1075
      %v1077 = vpop.f32.mrf.mxu0
      %v1078 = vadd.f32 %v1026, %v1077
      %v1079 = vand.u32 %v570, 4294901760
      %v1080 = vsub.f32 %v570, %v1079
      %1081 = vmatmul.f32.gmra.mxu0 %v1080
      %v1082 = vpop.f32.mrf.mxu0
      %v1083 = vadd.f32 %v1030, %v1082
      %1084 = vdwg.mxu0
      %1085 = vmatpush.msra.mxu0 0.0
      %1086 = vmatpush.msra.mxu0 0.0
      %1087 = vmatpush.msra.mxu0 0.0
      %1088 = vmatpush.msra.mxu0 0.0
      %1089 = vmatpush.msra.mxu0 0.0
      %1090 = vmatpush.msra.mxu0 0.0
      %1091 = vmatpush.msra.mxu0 0.0
      %1092 = vmatpush.msra.mxu0 0.0
      %v1093 = vand.u32 %v559, 4294901760
      %1094 = vmatpush.msra.mxu0 %v1093
      %v1095 = vand.u32 %v557, 4294901760
      %1096 = vmatpush.msra.mxu0 %v1095
      %v1097 = vand.u32 %v555, 4294901760
      %1098 = vmatpush.msra.mxu0 %v1097
      %v1099 = vand.u32 %v553, 4294901760
      %1100 = vmatpush.msra.mxu0 %v1099
      %v1101 = vand.u32 %v551, 4294901760
      %1102 = vmatpush.msra.mxu0 %v1101
      %v1103 = vand.u32 %v549, 4294901760
      %1104 = vmatpush.msra.mxu0 %v1103
      %v1105 = vand.u32 %v547, 4294901760
      %1106 = vmatpush.msra.mxu0 %v1105
      %v1107 = vand.u32 %v545, 4294901760
      %1108 = vmatpush.msra.mxu0 %v1107
      %v1109 = vand.u32 %v561, 4294901760
      %v1110 = vsub.f32 %v561, %v1109
      %v1111 = vand.u32 %v1110, 4294901760
      %1112 = vmatmul.f32.gmra.mxu0 %v1111
      %v1113 = vpop.f32.mrf.mxu0
      %v1114 = vadd.f32 %v1068, %v1113
      %v1115 = vand.u32 %v564, 4294901760
      %v1116 = vsub.f32 %v564, %v1115
      %v1117 = vand.u32 %v1116, 4294901760
      %1118 = vmatmul.f32.gmra.mxu0 %v1117
      %v1119 = vpop.f32.mrf.mxu0
      %v1120 = vadd.f32 %v1073, %v1119
      %v1121 = vand.u32 %v567, 4294901760
      %v1122 = vsub.f32 %v567, %v1121
      %v1123 = vand.u32 %v1122, 4294901760
      %1124 = vmatmul.f32.gmra.mxu0 %v1123
      %v1125 = vpop.f32.mrf.mxu0
      %v1126 = vadd.f32 %v1078, %v1125
      %v1127 = vand.u32 %v570, 4294901760
      %v1128 = vsub.f32 %v570, %v1127
      %v1129 = vand.u32 %v1128, 4294901760
      %1130 = vmatmul.f32.gmra.mxu0 %v1129
      %v1131 = vpop.f32.mrf.mxu0
      %v1132 = vadd.f32 %v1083, %v1131
      %1133 = vdwg.mxu0
      %1134 = vmatpush.msra.mxu0 0.0
      %1135 = vmatpush.msra.mxu0 0.0
      %1136 = vmatpush.msra.mxu0 0.0
      %1137 = vmatpush.msra.mxu0 0.0
      %1138 = vmatpush.msra.mxu0 0.0
      %1139 = vmatpush.msra.mxu0 0.0
      %1140 = vmatpush.msra.mxu0 0.0
      %1141 = vmatpush.msra.mxu0 0.0
      %v1142 = vand.u32 %v559, 4294901760
      %v1143 = vsub.f32 %v559, %v1142
      %v1144 = vand.u32 %v1143, 4294901760
      %1145 = vmatpush.msra.mxu0 %v1144
      %v1146 = vand.u32 %v557, 4294901760
      %v1147 = vsub.f32 %v557, %v1146
      %v1148 = vand.u32 %v1147, 4294901760
      %1149 = vmatpush.msra.mxu0 %v1148
      %v1150 = vand.u32 %v555, 4294901760
      %v1151 = vsub.f32 %v555, %v1150
      %v1152 = vand.u32 %v1151, 4294901760
      %1153 = vmatpush.msra.mxu0 %v1152
      %v1154 = vand.u32 %v553, 4294901760
      %v1155 = vsub.f32 %v553, %v1154
      %v1156 = vand.u32 %v1155, 4294901760
      %1157 = vmatpush.msra.mxu0 %v1156
      %v1158 = vand.u32 %v551, 4294901760
      %v1159 = vsub.f32 %v551, %v1158
      %v1160 = vand.u32 %v1159, 4294901760
      %1161 = vmatpush.msra.mxu0 %v1160
      %v1162 = vand.u32 %v549, 4294901760
      %v1163 = vsub.f32 %v549, %v1162
      %v1164 = vand.u32 %v1163, 4294901760
      %1165 = vmatpush.msra.mxu0 %v1164
      %v1166 = vand.u32 %v547, 4294901760
      %v1167 = vsub.f32 %v547, %v1166
      %v1168 = vand.u32 %v1167, 4294901760
      %1169 = vmatpush.msra.mxu0 %v1168
      %v1170 = vand.u32 %v545, 4294901760
      %v1171 = vsub.f32 %v545, %v1170
      %v1172 = vand.u32 %v1171, 4294901760
      %1173 = vmatpush.msra.mxu0 %v1172
      %v1174 = vand.u32 %v561, 4294901760
      %1175 = vmatmul.f32.gmra.mxu0 %v1174
      %v1176 = vpop.f32.mrf.mxu0
      %v1177 = vadd.f32 %v1114, %v1176
      %v1178 = vand.u32 %v564, 4294901760
      %1179 = vmatmul.f32.gmra.mxu0 %v1178
      %v1180 = vpop.f32.mrf.mxu0
      %v1181 = vadd.f32 %v1120, %v1180
      %v1182 = vand.u32 %v567, 4294901760
      %1183 = vmatmul.f32.gmra.mxu0 %v1182
      %v1184 = vpop.f32.mrf.mxu0
      %v1185 = vadd.f32 %v1126, %v1184
      %v1186 = vand.u32 %v570, 4294901760
      %1187 = vmatmul.f32.gmra.mxu0 %v1186
      %v1188 = vpop.f32.mrf.mxu0
      %v1189 = vadd.f32 %v1132, %v1188
      %1190 = vdwg.mxu0
      %1191 = vmatpush.msra.mxu0 0.0
      %1192 = vmatpush.msra.mxu0 0.0
      %1193 = vmatpush.msra.mxu0 0.0
      %1194 = vmatpush.msra.mxu0 0.0
      %1195 = vmatpush.msra.mxu0 0.0
      %1196 = vmatpush.msra.mxu0 0.0
      %1197 = vmatpush.msra.mxu0 0.0
      %1198 = vmatpush.msra.mxu0 0.0
      %v1199 = vand.u32 %v559, 4294901760
      %1200 = vmatpush.msra.mxu0 %v1199
      %v1201 = vand.u32 %v557, 4294901760
      %1202 = vmatpush.msra.mxu0 %v1201
      %v1203 = vand.u32 %v555, 4294901760
      %1204 = vmatpush.msra.mxu0 %v1203
      %v1205 = vand.u32 %v553, 4294901760
      %1206 = vmatpush.msra.mxu0 %v1205
      %v1207 = vand.u32 %v551, 4294901760
      %1208 = vmatpush.msra.mxu0 %v1207
      %v1209 = vand.u32 %v549, 4294901760
      %1210 = vmatpush.msra.mxu0 %v1209
      %v1211 = vand.u32 %v547, 4294901760
      %1212 = vmatpush.msra.mxu0 %v1211
      %v1213 = vand.u32 %v545, 4294901760
      %1214 = vmatpush.msra.mxu0 %v1213
      %v1215 = vand.u32 %v561, 4294901760
      %1216 = vmatmul.f32.gmra.mxu0 %v1215
      %v1217 = vpop.f32.mrf.mxu0
      %v1218 = vadd.f32 %v1177, %v1217
      %v1219 = vand.u32 %v564, 4294901760
      %1220 = vmatmul.f32.gmra.mxu0 %v1219
      %v1221 = vpop.f32.mrf.mxu0
      %v1222 = vadd.f32 %v1181, %v1221
      %v1223 = vand.u32 %v567, 4294901760
      %1224 = vmatmul.f32.gmra.mxu0 %v1223
      %v1225 = vpop.f32.mrf.mxu0
      %v1226 = vadd.f32 %v1185, %v1225
      %v1227 = vand.u32 %v570, 4294901760
      %1228 = vmatmul.f32.gmra.mxu0 %v1227
      %v1229 = vpop.f32.mrf.mxu0
      %v1230 = vadd.f32 %v1189, %v1229
      %1231 = vdwg.mxu0
      %v1233 = vsel %vm461, %v478, 0
      %v1236 = vsel %vm461, %v480, 0
      %v1239 = vsel %vm461, %v483, 0
      %v1242 = vsel %vm461, %v485, 0
      %1244 = vmatpush.msra.mxu0 0.0
      %1245 = vmatpush.msra.mxu0 0.0
      %1246 = vmatpush.msra.mxu0 0.0
      %1247 = vmatpush.msra.mxu0 0.0
      %1248 = vmatpush.msra.mxu0 0.0
      %1249 = vmatpush.msra.mxu0 0.0
      %1250 = vmatpush.msra.mxu0 0.0
      %1251 = vmatpush.msra.mxu0 0.0
      %v1252 = vand.u32 %v501, 4294901760
      %1253 = vmatpush.msra.mxu0 %v1252
      %v1254 = vand.u32 %v499, 4294901760
      %1255 = vmatpush.msra.mxu0 %v1254
      %v1256 = vand.u32 %v497, 4294901760
      %1257 = vmatpush.msra.mxu0 %v1256
      %v1258 = vand.u32 %v495, 4294901760
      %1259 = vmatpush.msra.mxu0 %v1258
      %v1260 = vand.u32 %v493, 4294901760
      %1261 = vmatpush.msra.mxu0 %v1260
      %v1262 = vand.u32 %v491, 4294901760
      %1263 = vmatpush.msra.mxu0 %v1262
      %v1264 = vand.u32 %v489, 4294901760
      %1265 = vmatpush.msra.mxu0 %v1264
      %v1266 = vand.u32 %v487, 4294901760
      %1267 = vmatpush.msra.mxu0 %v1266
      %v1268 = vand.u32 %v1233, 4294901760
      %v1269 = vsub.f32 %v1233, %v1268
      %v1270 = vand.u32 %v1269, 4294901760
      %v1271 = vsub.f32 %v1269, %v1270
      %v1272 = vand.u32 %v1271, 4294901760
      %1273 = vmatmul.f32.gmra.mxu0 %v1272
      %v1274 = vpop.f32.mrf.mxu0
      %v1275 = vadd.f32 %v888, %v1274
      %v1276 = vand.u32 %v1236, 4294901760
      %v1277 = vsub.f32 %v1236, %v1276
      %v1278 = vand.u32 %v1277, 4294901760
      %v1279 = vsub.f32 %v1277, %v1278
      %v1280 = vand.u32 %v1279, 4294901760
      %1281 = vmatmul.f32.gmra.mxu0 %v1280
      %v1282 = vpop.f32.mrf.mxu0
      %v1283 = vadd.f32 %v892, %v1282
      %v1284 = vand.u32 %v1239, 4294901760
      %v1285 = vsub.f32 %v1239, %v1284
      %v1286 = vand.u32 %v1285, 4294901760
      %v1287 = vsub.f32 %v1285, %v1286
      %v1288 = vand.u32 %v1287, 4294901760
      %1289 = vmatmul.f32.gmra.mxu0 %v1288
      %v1290 = vpop.f32.mrf.mxu0
      %v1291 = vadd.f32 %v896, %v1290
      %v1292 = vand.u32 %v1242, 4294901760
      %v1293 = vsub.f32 %v1242, %v1292
      %v1294 = vand.u32 %v1293, 4294901760
      %v1295 = vsub.f32 %v1293, %v1294
      %v1296 = vand.u32 %v1295, 4294901760
      %1297 = vmatmul.f32.gmra.mxu0 %v1296
      %v1298 = vpop.f32.mrf.mxu0
      %v1299 = vadd.f32 %v900, %v1298
      %1300 = vdwg.mxu0
      %1301 = vmatpush.msra.mxu0 0.0
      %1302 = vmatpush.msra.mxu0 0.0
      %1303 = vmatpush.msra.mxu0 0.0
      %1304 = vmatpush.msra.mxu0 0.0
      %1305 = vmatpush.msra.mxu0 0.0
      %1306 = vmatpush.msra.mxu0 0.0
      %1307 = vmatpush.msra.mxu0 0.0
      %1308 = vmatpush.msra.mxu0 0.0
      %v1309 = vand.u32 %v501, 4294901760
      %v1310 = vsub.f32 %v501, %v1309
      %v1311 = vand.u32 %v1310, 4294901760
      %v1312 = vsub.f32 %v1310, %v1311
      %v1313 = vand.u32 %v1312, 4294901760
      %1314 = vmatpush.msra.mxu0 %v1313
      %v1315 = vand.u32 %v499, 4294901760
      %v1316 = vsub.f32 %v499, %v1315
      %v1317 = vand.u32 %v1316, 4294901760
      %v1318 = vsub.f32 %v1316, %v1317
      %v1319 = vand.u32 %v1318, 4294901760
      %1320 = vmatpush.msra.mxu0 %v1319
      %v1321 = vand.u32 %v497, 4294901760
      %v1322 = vsub.f32 %v497, %v1321
      %v1323 = vand.u32 %v1322, 4294901760
      %v1324 = vsub.f32 %v1322, %v1323
      %v1325 = vand.u32 %v1324, 4294901760
      %1326 = vmatpush.msra.mxu0 %v1325
      %v1327 = vand.u32 %v495, 4294901760
      %v1328 = vsub.f32 %v495, %v1327
      %v1329 = vand.u32 %v1328, 4294901760
      %v1330 = vsub.f32 %v1328, %v1329
      %v1331 = vand.u32 %v1330, 4294901760
      %1332 = vmatpush.msra.mxu0 %v1331
      %v1333 = vand.u32 %v493, 4294901760
      %v1334 = vsub.f32 %v493, %v1333
      %v1335 = vand.u32 %v1334, 4294901760
      %v1336 = vsub.f32 %v1334, %v1335
      %v1337 = vand.u32 %v1336, 4294901760
      %1338 = vmatpush.msra.mxu0 %v1337
      %v1339 = vand.u32 %v491, 4294901760
      %v1340 = vsub.f32 %v491, %v1339
      %v1341 = vand.u32 %v1340, 4294901760
      %v1342 = vsub.f32 %v1340, %v1341
      %v1343 = vand.u32 %v1342, 4294901760
      %1344 = vmatpush.msra.mxu0 %v1343
      %v1345 = vand.u32 %v489, 4294901760
      %v1346 = vsub.f32 %v489, %v1345
      %v1347 = vand.u32 %v1346, 4294901760
      %v1348 = vsub.f32 %v1346, %v1347
      %v1349 = vand.u32 %v1348, 4294901760
      %1350 = vmatpush.msra.mxu0 %v1349
      %v1351 = vand.u32 %v487, 4294901760
      %v1352 = vsub.f32 %v487, %v1351
      %v1353 = vand.u32 %v1352, 4294901760
      %v1354 = vsub.f32 %v1352, %v1353
      %v1355 = vand.u32 %v1354, 4294901760
      %1356 = vmatpush.msra.mxu0 %v1355
      %v1357 = vand.u32 %v1233, 4294901760
      %1358 = vmatmul.f32.gmra.mxu0 %v1357
      %v1359 = vpop.f32.mrf.mxu0
      %v1360 = vadd.f32 %v1275, %v1359
      %v1361 = vand.u32 %v1236, 4294901760
      %1362 = vmatmul.f32.gmra.mxu0 %v1361
      %v1363 = vpop.f32.mrf.mxu0
      %v1364 = vadd.f32 %v1283, %v1363
      %v1365 = vand.u32 %v1239, 4294901760
      %1366 = vmatmul.f32.gmra.mxu0 %v1365
      %v1367 = vpop.f32.mrf.mxu0
      %v1368 = vadd.f32 %v1291, %v1367
      %v1369 = vand.u32 %v1242, 4294901760
      %1370 = vmatmul.f32.gmra.mxu0 %v1369
      %v1371 = vpop.f32.mrf.mxu0
      %v1372 = vadd.f32 %v1299, %v1371
      %1373 = vdwg.mxu0
      %1374 = vmatpush.msra.mxu0 0.0
      %1375 = vmatpush.msra.mxu0 0.0
      %1376 = vmatpush.msra.mxu0 0.0
      %1377 = vmatpush.msra.mxu0 0.0
      %1378 = vmatpush.msra.mxu0 0.0
      %1379 = vmatpush.msra.mxu0 0.0
      %1380 = vmatpush.msra.mxu0 0.0
      %1381 = vmatpush.msra.mxu0 0.0
      %v1382 = vand.u32 %v501, 4294901760
      %v1383 = vsub.f32 %v501, %v1382
      %1384 = vmatpush.msra.mxu0 %v1383
      %v1385 = vand.u32 %v499, 4294901760
      %v1386 = vsub.f32 %v499, %v1385
      %1387 = vmatpush.msra.mxu0 %v1386
      %v1388 = vand.u32 %v497, 4294901760
      %v1389 = vsub.f32 %v497, %v1388
      %1390 = vmatpush.msra.mxu0 %v1389
      %v1391 = vand.u32 %v495, 4294901760
      %v1392 = vsub.f32 %v495, %v1391
      %1393 = vmatpush.msra.mxu0 %v1392
      %v1394 = vand.u32 %v493, 4294901760
      %v1395 = vsub.f32 %v493, %v1394
      %1396 = vmatpush.msra.mxu0 %v1395
      %v1397 = vand.u32 %v491, 4294901760
      %v1398 = vsub.f32 %v491, %v1397
      %1399 = vmatpush.msra.mxu0 %v1398
      %v1400 = vand.u32 %v489, 4294901760
      %v1401 = vsub.f32 %v489, %v1400
      %1402 = vmatpush.msra.mxu0 %v1401
      %v1403 = vand.u32 %v487, 4294901760
      %v1404 = vsub.f32 %v487, %v1403
      %1405 = vmatpush.msra.mxu0 %v1404
      %v1406 = vand.u32 %v1233, 4294901760
      %v1407 = vsub.f32 %v1233, %v1406
      %1408 = vmatmul.f32.gmra.mxu0 %v1407
      %v1409 = vpop.f32.mrf.mxu0
      %v1410 = vadd.f32 %v1360, %v1409
      %v1411 = vand.u32 %v1236, 4294901760
      %v1412 = vsub.f32 %v1236, %v1411
      %1413 = vmatmul.f32.gmra.mxu0 %v1412
      %v1414 = vpop.f32.mrf.mxu0
      %v1415 = vadd.f32 %v1364, %v1414
      %v1416 = vand.u32 %v1239, 4294901760
      %v1417 = vsub.f32 %v1239, %v1416
      %1418 = vmatmul.f32.gmra.mxu0 %v1417
      %v1419 = vpop.f32.mrf.mxu0
      %v1420 = vadd.f32 %v1368, %v1419
      %v1421 = vand.u32 %v1242, 4294901760
      %v1422 = vsub.f32 %v1242, %v1421
      %1423 = vmatmul.f32.gmra.mxu0 %v1422
      %v1424 = vpop.f32.mrf.mxu0
      %v1425 = vadd.f32 %v1372, %v1424
      %1426 = vdwg.mxu0
      %1427 = vmatpush.msra.mxu0 0.0
      %1428 = vmatpush.msra.mxu0 0.0
      %1429 = vmatpush.msra.mxu0 0.0
      %1430 = vmatpush.msra.mxu0 0.0
      %1431 = vmatpush.msra.mxu0 0.0
      %1432 = vmatpush.msra.mxu0 0.0
      %1433 = vmatpush.msra.mxu0 0.0
      %1434 = vmatpush.msra.mxu0 0.0
      %v1435 = vand.u32 %v501, 4294901760
      %1436 = vmatpush.msra.mxu0 %v1435
      %v1437 = vand.u32 %v499, 4294901760
      %1438 = vmatpush.msra.mxu0 %v1437
      %v1439 = vand.u32 %v497, 4294901760
      %1440 = vmatpush.msra.mxu0 %v1439
      %v1441 = vand.u32 %v495, 4294901760
      %1442 = vmatpush.msra.mxu0 %v1441
      %v1443 = vand.u32 %v493, 4294901760
      %1444 = vmatpush.msra.mxu0 %v1443
      %v1445 = vand.u32 %v491, 4294901760
      %1446 = vmatpush.msra.mxu0 %v1445
      %v1447 = vand.u32 %v489, 4294901760
      %1448 = vmatpush.msra.mxu0 %v1447
      %v1449 = vand.u32 %v487, 4294901760
      %1450 = vmatpush.msra.mxu0 %v1449
      %v1451 = vand.u32 %v1233, 4294901760
      %v1452 = vsub.f32 %v1233, %v1451
      %v1453 = vand.u32 %v1452, 4294901760
      %1454 = vmatmul.f32.gmra.mxu0 %v1453
      %v1455 = vpop.f32.mrf.mxu0
      %v1456 = vadd.f32 %v1410, %v1455
      %v1457 = vand.u32 %v1236, 4294901760
      %v1458 = vsub.f32 %v1236, %v1457
      %v1459 = vand.u32 %v1458, 4294901760
      %1460 = vmatmul.f32.gmra.mxu0 %v1459
      %v1461 = vpop.f32.mrf.mxu0
      %v1462 = vadd.f32 %v1415, %v1461
      %v1463 = vand.u32 %v1239, 4294901760
      %v1464 = vsub.f32 %v1239, %v1463
      %v1465 = vand.u32 %v1464, 4294901760
      %1466 = vmatmul.f32.gmra.mxu0 %v1465
      %v1467 = vpop.f32.mrf.mxu0
      %v1468 = vadd.f32 %v1420, %v1467
      %v1469 = vand.u32 %v1242, 4294901760
      %v1470 = vsub.f32 %v1242, %v1469
      %v1471 = vand.u32 %v1470, 4294901760
      %1472 = vmatmul.f32.gmra.mxu0 %v1471
      %v1473 = vpop.f32.mrf.mxu0
      %v1474 = vadd.f32 %v1425, %v1473
      %1475 = vdwg.mxu0
      %1476 = vmatpush.msra.mxu0 0.0
      %1477 = vmatpush.msra.mxu0 0.0
      %1478 = vmatpush.msra.mxu0 0.0
      %1479 = vmatpush.msra.mxu0 0.0
      %1480 = vmatpush.msra.mxu0 0.0
      %1481 = vmatpush.msra.mxu0 0.0
      %1482 = vmatpush.msra.mxu0 0.0
      %1483 = vmatpush.msra.mxu0 0.0
      %v1484 = vand.u32 %v501, 4294901760
      %v1485 = vsub.f32 %v501, %v1484
      %v1486 = vand.u32 %v1485, 4294901760
      %1487 = vmatpush.msra.mxu0 %v1486
      %v1488 = vand.u32 %v499, 4294901760
      %v1489 = vsub.f32 %v499, %v1488
      %v1490 = vand.u32 %v1489, 4294901760
      %1491 = vmatpush.msra.mxu0 %v1490
      %v1492 = vand.u32 %v497, 4294901760
      %v1493 = vsub.f32 %v497, %v1492
      %v1494 = vand.u32 %v1493, 4294901760
      %1495 = vmatpush.msra.mxu0 %v1494
      %v1496 = vand.u32 %v495, 4294901760
      %v1497 = vsub.f32 %v495, %v1496
      %v1498 = vand.u32 %v1497, 4294901760
      %1499 = vmatpush.msra.mxu0 %v1498
      %v1500 = vand.u32 %v493, 4294901760
      %v1501 = vsub.f32 %v493, %v1500
      %v1502 = vand.u32 %v1501, 4294901760
      %1503 = vmatpush.msra.mxu0 %v1502
      %v1504 = vand.u32 %v491, 4294901760
      %v1505 = vsub.f32 %v491, %v1504
      %v1506 = vand.u32 %v1505, 4294901760
      %1507 = vmatpush.msra.mxu0 %v1506
      %v1508 = vand.u32 %v489, 4294901760
      %v1509 = vsub.f32 %v489, %v1508
      %v1510 = vand.u32 %v1509, 4294901760
      %1511 = vmatpush.msra.mxu0 %v1510
      %v1512 = vand.u32 %v487, 4294901760
      %v1513 = vsub.f32 %v487, %v1512
      %v1514 = vand.u32 %v1513, 4294901760
      %1515 = vmatpush.msra.mxu0 %v1514
      %v1516 = vand.u32 %v1233, 4294901760
      %1517 = vmatmul.f32.gmra.mxu0 %v1516
      %v1518 = vpop.f32.mrf.mxu0
      %v1519 = vadd.f32 %v1456, %v1518
      %v1520 = vand.u32 %v1236, 4294901760
      %1521 = vmatmul.f32.gmra.mxu0 %v1520
      %v1522 = vpop.f32.mrf.mxu0
      %v1523 = vadd.f32 %v1462, %v1522
      %v1524 = vand.u32 %v1239, 4294901760
      %1525 = vmatmul.f32.gmra.mxu0 %v1524
      %v1526 = vpop.f32.mrf.mxu0
      %v1527 = vadd.f32 %v1468, %v1526
      %v1528 = vand.u32 %v1242, 4294901760
      %1529 = vmatmul.f32.gmra.mxu0 %v1528
      %v1530 = vpop.f32.mrf.mxu0
      %v1531 = vadd.f32 %v1474, %v1530
      %1532 = vdwg.mxu0
      %1533 = vmatpush.msra.mxu0 0.0
      %1534 = vmatpush.msra.mxu0 0.0
      %1535 = vmatpush.msra.mxu0 0.0
      %1536 = vmatpush.msra.mxu0 0.0
      %1537 = vmatpush.msra.mxu0 0.0
      %1538 = vmatpush.msra.mxu0 0.0
      %1539 = vmatpush.msra.mxu0 0.0
      %1540 = vmatpush.msra.mxu0 0.0
      %v1541 = vand.u32 %v501, 4294901760
      %1542 = vmatpush.msra.mxu0 %v1541
      %v1543 = vand.u32 %v499, 4294901760
      %1544 = vmatpush.msra.mxu0 %v1543
      %v1545 = vand.u32 %v497, 4294901760
      %1546 = vmatpush.msra.mxu0 %v1545
      %v1547 = vand.u32 %v495, 4294901760
      %1548 = vmatpush.msra.mxu0 %v1547
      %v1549 = vand.u32 %v493, 4294901760
      %1550 = vmatpush.msra.mxu0 %v1549
      %v1551 = vand.u32 %v491, 4294901760
      %1552 = vmatpush.msra.mxu0 %v1551
      %v1553 = vand.u32 %v489, 4294901760
      %1554 = vmatpush.msra.mxu0 %v1553
      %v1555 = vand.u32 %v487, 4294901760
      %1556 = vmatpush.msra.mxu0 %v1555
      %v1557 = vand.u32 %v1233, 4294901760
      %1558 = vmatmul.f32.gmra.mxu0 %v1557
      %v1559 = vpop.f32.mrf.mxu0
      %v1560 = vadd.f32 %v1519, %v1559
      %v1561 = vand.u32 %v1236, 4294901760
      %1562 = vmatmul.f32.gmra.mxu0 %v1561
      %v1563 = vpop.f32.mrf.mxu0
      %v1564 = vadd.f32 %v1523, %v1563
      %v1565 = vand.u32 %v1239, 4294901760
      %1566 = vmatmul.f32.gmra.mxu0 %v1565
      %v1567 = vpop.f32.mrf.mxu0
      %v1568 = vadd.f32 %v1527, %v1567
      %v1569 = vand.u32 %v1242, 4294901760
      %1570 = vmatmul.f32.gmra.mxu0 %v1569
      %v1571 = vpop.f32.mrf.mxu0
      %v1572 = vadd.f32 %v1531, %v1571
      %1573 = vdwg.mxu0
      %1574 = vmatpush.msra.mxu0 0.0
      %1575 = vmatpush.msra.mxu0 0.0
      %1576 = vmatpush.msra.mxu0 0.0
      %1577 = vmatpush.msra.mxu0 0.0
      %1578 = vmatpush.msra.mxu0 0.0
      %1579 = vmatpush.msra.mxu0 0.0
      %1580 = vmatpush.msra.mxu0 0.0
      %1581 = vmatpush.msra.mxu0 0.0
      %v1582 = vand.u32 %v502, 4294901760
      %1583 = vmatpush.msra.mxu0 %v1582
      %v1584 = vand.u32 %v500, 4294901760
      %1585 = vmatpush.msra.mxu0 %v1584
      %v1586 = vand.u32 %v498, 4294901760
      %1587 = vmatpush.msra.mxu0 %v1586
      %v1588 = vand.u32 %v496, 4294901760
      %1589 = vmatpush.msra.mxu0 %v1588
      %v1590 = vand.u32 %v494, 4294901760
      %1591 = vmatpush.msra.mxu0 %v1590
      %v1592 = vand.u32 %v492, 4294901760
      %1593 = vmatpush.msra.mxu0 %v1592
      %v1594 = vand.u32 %v490, 4294901760
      %1595 = vmatpush.msra.mxu0 %v1594
      %v1596 = vand.u32 %v488, 4294901760
      %1597 = vmatpush.msra.mxu0 %v1596
      %v1598 = vand.u32 %v1233, 4294901760
      %v1599 = vsub.f32 %v1233, %v1598
      %v1600 = vand.u32 %v1599, 4294901760
      %v1601 = vsub.f32 %v1599, %v1600
      %v1602 = vand.u32 %v1601, 4294901760
      %1603 = vmatmul.f32.gmra.mxu0 %v1602
      %v1604 = vpop.f32.mrf.mxu0
      %v1605 = vadd.f32 %v1218, %v1604
      %v1606 = vand.u32 %v1236, 4294901760
      %v1607 = vsub.f32 %v1236, %v1606
      %v1608 = vand.u32 %v1607, 4294901760
      %v1609 = vsub.f32 %v1607, %v1608
      %v1610 = vand.u32 %v1609, 4294901760
      %1611 = vmatmul.f32.gmra.mxu0 %v1610
      %v1612 = vpop.f32.mrf.mxu0
      %v1613 = vadd.f32 %v1222, %v1612
      %v1614 = vand.u32 %v1239, 4294901760
      %v1615 = vsub.f32 %v1239, %v1614
      %v1616 = vand.u32 %v1615, 4294901760
      %v1617 = vsub.f32 %v1615, %v1616
      %v1618 = vand.u32 %v1617, 4294901760
      %1619 = vmatmul.f32.gmra.mxu0 %v1618
      %v1620 = vpop.f32.mrf.mxu0
      %v1621 = vadd.f32 %v1226, %v1620
      %v1622 = vand.u32 %v1242, 4294901760
      %v1623 = vsub.f32 %v1242, %v1622
      %v1624 = vand.u32 %v1623, 4294901760
      %v1625 = vsub.f32 %v1623, %v1624
      %v1626 = vand.u32 %v1625, 4294901760
      %1627 = vmatmul.f32.gmra.mxu0 %v1626
      %v1628 = vpop.f32.mrf.mxu0
      %v1629 = vadd.f32 %v1230, %v1628
      %1630 = vdwg.mxu0
      %1631 = vmatpush.msra.mxu0 0.0
      %1632 = vmatpush.msra.mxu0 0.0
      %1633 = vmatpush.msra.mxu0 0.0
      %1634 = vmatpush.msra.mxu0 0.0
      %1635 = vmatpush.msra.mxu0 0.0
      %1636 = vmatpush.msra.mxu0 0.0
      %1637 = vmatpush.msra.mxu0 0.0
      %1638 = vmatpush.msra.mxu0 0.0
      %v1639 = vand.u32 %v502, 4294901760
      %v1640 = vsub.f32 %v502, %v1639
      %v1641 = vand.u32 %v1640, 4294901760
      %v1642 = vsub.f32 %v1640, %v1641
      %v1643 = vand.u32 %v1642, 4294901760
      %1644 = vmatpush.msra.mxu0 %v1643
      %v1645 = vand.u32 %v500, 4294901760
      %v1646 = vsub.f32 %v500, %v1645
      %v1647 = vand.u32 %v1646, 4294901760
      %v1648 = vsub.f32 %v1646, %v1647
      %v1649 = vand.u32 %v1648, 4294901760
      %1650 = vmatpush.msra.mxu0 %v1649
      %v1651 = vand.u32 %v498, 4294901760
      %v1652 = vsub.f32 %v498, %v1651
      %v1653 = vand.u32 %v1652, 4294901760
      %v1654 = vsub.f32 %v1652, %v1653
      %v1655 = vand.u32 %v1654, 4294901760
      %1656 = vmatpush.msra.mxu0 %v1655
      %v1657 = vand.u32 %v496, 4294901760
      %v1658 = vsub.f32 %v496, %v1657
      %v1659 = vand.u32 %v1658, 4294901760
      %v1660 = vsub.f32 %v1658, %v1659
      %v1661 = vand.u32 %v1660, 4294901760
      %1662 = vmatpush.msra.mxu0 %v1661
      %v1663 = vand.u32 %v494, 4294901760
      %v1664 = vsub.f32 %v494, %v1663
      %v1665 = vand.u32 %v1664, 4294901760
      %v1666 = vsub.f32 %v1664, %v1665
      %v1667 = vand.u32 %v1666, 4294901760
      %1668 = vmatpush.msra.mxu0 %v1667
      %v1669 = vand.u32 %v492, 4294901760
      %v1670 = vsub.f32 %v492, %v1669
      %v1671 = vand.u32 %v1670, 4294901760
      %v1672 = vsub.f32 %v1670, %v1671
      %v1673 = vand.u32 %v1672, 4294901760
      %1674 = vmatpush.msra.mxu0 %v1673
      %v1675 = vand.u32 %v490, 4294901760
      %v1676 = vsub.f32 %v490, %v1675
      %v1677 = vand.u32 %v1676, 4294901760
      %v1678 = vsub.f32 %v1676, %v1677
      %v1679 = vand.u32 %v1678, 4294901760
      %1680 = vmatpush.msra.mxu0 %v1679
      %v1681 = vand.u32 %v488, 4294901760
      %v1682 = vsub.f32 %v488, %v1681
      %v1683 = vand.u32 %v1682, 4294901760
      %v1684 = vsub.f32 %v1682, %v1683
      %v1685 = vand.u32 %v1684, 4294901760
      %1686 = vmatpush.msra.mxu0 %v1685
      %v1687 = vand.u32 %v1233, 4294901760
      %1688 = vmatmul.f32.gmra.mxu0 %v1687
      %v1689 = vpop.f32.mrf.mxu0
      %v1690 = vadd.f32 %v1605, %v1689
      %v1691 = vand.u32 %v1236, 4294901760
      %1692 = vmatmul.f32.gmra.mxu0 %v1691
      %v1693 = vpop.f32.mrf.mxu0
      %v1694 = vadd.f32 %v1613, %v1693
      %v1695 = vand.u32 %v1239, 4294901760
      %1696 = vmatmul.f32.gmra.mxu0 %v1695
      %v1697 = vpop.f32.mrf.mxu0
      %v1698 = vadd.f32 %v1621, %v1697
      %v1699 = vand.u32 %v1242, 4294901760
      %1700 = vmatmul.f32.gmra.mxu0 %v1699
      %v1701 = vpop.f32.mrf.mxu0
      %v1702 = vadd.f32 %v1629, %v1701
      %1703 = vdwg.mxu0
      %1704 = vmatpush.msra.mxu0 0.0
      %1705 = vmatpush.msra.mxu0 0.0
      %1706 = vmatpush.msra.mxu0 0.0
      %1707 = vmatpush.msra.mxu0 0.0
      %1708 = vmatpush.msra.mxu0 0.0
      %1709 = vmatpush.msra.mxu0 0.0
      %1710 = vmatpush.msra.mxu0 0.0
      %1711 = vmatpush.msra.mxu0 0.0
      %v1712 = vand.u32 %v502, 4294901760
      %v1713 = vsub.f32 %v502, %v1712
      %1714 = vmatpush.msra.mxu0 %v1713
      %v1715 = vand.u32 %v500, 4294901760
      %v1716 = vsub.f32 %v500, %v1715
      %1717 = vmatpush.msra.mxu0 %v1716
      %v1718 = vand.u32 %v498, 4294901760
      %v1719 = vsub.f32 %v498, %v1718
      %1720 = vmatpush.msra.mxu0 %v1719
      %v1721 = vand.u32 %v496, 4294901760
      %v1722 = vsub.f32 %v496, %v1721
      %1723 = vmatpush.msra.mxu0 %v1722
      %v1724 = vand.u32 %v494, 4294901760
      %v1725 = vsub.f32 %v494, %v1724
      %1726 = vmatpush.msra.mxu0 %v1725
      %v1727 = vand.u32 %v492, 4294901760
      %v1728 = vsub.f32 %v492, %v1727
      %1729 = vmatpush.msra.mxu0 %v1728
      %v1730 = vand.u32 %v490, 4294901760
      %v1731 = vsub.f32 %v490, %v1730
      %1732 = vmatpush.msra.mxu0 %v1731
      %v1733 = vand.u32 %v488, 4294901760
      %v1734 = vsub.f32 %v488, %v1733
      %1735 = vmatpush.msra.mxu0 %v1734
      %v1736 = vand.u32 %v1233, 4294901760
      %v1737 = vsub.f32 %v1233, %v1736
      %1738 = vmatmul.f32.gmra.mxu0 %v1737
      %v1739 = vpop.f32.mrf.mxu0
      %v1740 = vadd.f32 %v1690, %v1739
      %v1741 = vand.u32 %v1236, 4294901760
      %v1742 = vsub.f32 %v1236, %v1741
      %1743 = vmatmul.f32.gmra.mxu0 %v1742
      %v1744 = vpop.f32.mrf.mxu0
      %v1745 = vadd.f32 %v1694, %v1744
      %v1746 = vand.u32 %v1239, 4294901760
      %v1747 = vsub.f32 %v1239, %v1746
      %1748 = vmatmul.f32.gmra.mxu0 %v1747
      %v1749 = vpop.f32.mrf.mxu0
      %v1750 = vadd.f32 %v1698, %v1749
      %v1751 = vand.u32 %v1242, 4294901760
      %v1752 = vsub.f32 %v1242, %v1751
      %1753 = vmatmul.f32.gmra.mxu0 %v1752
      %v1754 = vpop.f32.mrf.mxu0
      %v1755 = vadd.f32 %v1702, %v1754
      %1756 = vdwg.mxu0
      %1757 = vmatpush.msra.mxu0 0.0
      %1758 = vmatpush.msra.mxu0 0.0
      %1759 = vmatpush.msra.mxu0 0.0
      %1760 = vmatpush.msra.mxu0 0.0
      %1761 = vmatpush.msra.mxu0 0.0
      %1762 = vmatpush.msra.mxu0 0.0
      %1763 = vmatpush.msra.mxu0 0.0
      %1764 = vmatpush.msra.mxu0 0.0
      %v1765 = vand.u32 %v502, 4294901760
      %1766 = vmatpush.msra.mxu0 %v1765
      %v1767 = vand.u32 %v500, 4294901760
      %1768 = vmatpush.msra.mxu0 %v1767
      %v1769 = vand.u32 %v498, 4294901760
      %1770 = vmatpush.msra.mxu0 %v1769
      %v1771 = vand.u32 %v496, 4294901760
      %1772 = vmatpush.msra.mxu0 %v1771
      %v1773 = vand.u32 %v494, 4294901760
      %1774 = vmatpush.msra.mxu0 %v1773
      %v1775 = vand.u32 %v492, 4294901760
      %1776 = vmatpush.msra.mxu0 %v1775
      %v1777 = vand.u32 %v490, 4294901760
      %1778 = vmatpush.msra.mxu0 %v1777
      %v1779 = vand.u32 %v488, 4294901760
      %1780 = vmatpush.msra.mxu0 %v1779
      %v1781 = vand.u32 %v1233, 4294901760
      %v1782 = vsub.f32 %v1233, %v1781
      %v1783 = vand.u32 %v1782, 4294901760
      %1784 = vmatmul.f32.gmra.mxu0 %v1783
      %v1785 = vpop.f32.mrf.mxu0
      %v1786 = vadd.f32 %v1740, %v1785
      %v1787 = vand.u32 %v1236, 4294901760
      %v1788 = vsub.f32 %v1236, %v1787
      %v1789 = vand.u32 %v1788, 4294901760
      %1790 = vmatmul.f32.gmra.mxu0 %v1789
      %v1791 = vpop.f32.mrf.mxu0
      %v1792 = vadd.f32 %v1745, %v1791
      %v1793 = vand.u32 %v1239, 4294901760
      %v1794 = vsub.f32 %v1239, %v1793
      %v1795 = vand.u32 %v1794, 4294901760
      %1796 = vmatmul.f32.gmra.mxu0 %v1795
      %v1797 = vpop.f32.mrf.mxu0
      %v1798 = vadd.f32 %v1750, %v1797
      %v1799 = vand.u32 %v1242, 4294901760
      %v1800 = vsub.f32 %v1242, %v1799
      %v1801 = vand.u32 %v1800, 4294901760
      %1802 = vmatmul.f32.gmra.mxu0 %v1801
      %v1803 = vpop.f32.mrf.mxu0
      %v1804 = vadd.f32 %v1755, %v1803
      %1805 = vdwg.mxu0
      %1806 = vmatpush.msra.mxu0 0.0
      %1807 = vmatpush.msra.mxu0 0.0
      %1808 = vmatpush.msra.mxu0 0.0
      %1809 = vmatpush.msra.mxu0 0.0
      %1810 = vmatpush.msra.mxu0 0.0
      %1811 = vmatpush.msra.mxu0 0.0
      %1812 = vmatpush.msra.mxu0 0.0
      %1813 = vmatpush.msra.mxu0 0.0
      %v1814 = vand.u32 %v502, 4294901760
      %v1815 = vsub.f32 %v502, %v1814
      %v1816 = vand.u32 %v1815, 4294901760
      %1817 = vmatpush.msra.mxu0 %v1816
      %v1818 = vand.u32 %v500, 4294901760
      %v1819 = vsub.f32 %v500, %v1818
      %v1820 = vand.u32 %v1819, 4294901760
      %1821 = vmatpush.msra.mxu0 %v1820
      %v1822 = vand.u32 %v498, 4294901760
      %v1823 = vsub.f32 %v498, %v1822
      %v1824 = vand.u32 %v1823, 4294901760
      %1825 = vmatpush.msra.mxu0 %v1824
      %v1826 = vand.u32 %v496, 4294901760
      %v1827 = vsub.f32 %v496, %v1826
      %v1828 = vand.u32 %v1827, 4294901760
      %1829 = vmatpush.msra.mxu0 %v1828
      %v1830 = vand.u32 %v494, 4294901760
      %v1831 = vsub.f32 %v494, %v1830
      %v1832 = vand.u32 %v1831, 4294901760
      %1833 = vmatpush.msra.mxu0 %v1832
      %v1834 = vand.u32 %v492, 4294901760
      %v1835 = vsub.f32 %v492, %v1834
      %v1836 = vand.u32 %v1835, 4294901760
      %1837 = vmatpush.msra.mxu0 %v1836
      %v1838 = vand.u32 %v490, 4294901760
      %v1839 = vsub.f32 %v490, %v1838
      %v1840 = vand.u32 %v1839, 4294901760
      %1841 = vmatpush.msra.mxu0 %v1840
      %v1842 = vand.u32 %v488, 4294901760
      %v1843 = vsub.f32 %v488, %v1842
      %v1844 = vand.u32 %v1843, 4294901760
      %1845 = vmatpush.msra.mxu0 %v1844
      %v1846 = vand.u32 %v1233, 4294901760
      %1847 = vmatmul.f32.gmra.mxu0 %v1846
      %v1848 = vpop.f32.mrf.mxu0
      %v1849 = vadd.f32 %v1786, %v1848
      %v1850 = vand.u32 %v1236, 4294901760
      %1851 = vmatmul.f32.gmra.mxu0 %v1850
      %v1852 = vpop.f32.mrf.mxu0
      %v1853 = vadd.f32 %v1792, %v1852
      %v1854 = vand.u32 %v1239, 4294901760
      %1855 = vmatmul.f32.gmra.mxu0 %v1854
      %v1856 = vpop.f32.mrf.mxu0
      %v1857 = vadd.f32 %v1798, %v1856
      %v1858 = vand.u32 %v1242, 4294901760
      %1859 = vmatmul.f32.gmra.mxu0 %v1858
      %v1860 = vpop.f32.mrf.mxu0
      %v1861 = vadd.f32 %v1804, %v1860
      %1862 = vdwg.mxu0
      %1863 = vmatpush.msra.mxu0 0.0
      %1864 = vmatpush.msra.mxu0 0.0
      %1865 = vmatpush.msra.mxu0 0.0
      %1866 = vmatpush.msra.mxu0 0.0
      %1867 = vmatpush.msra.mxu0 0.0
      %1868 = vmatpush.msra.mxu0 0.0
      %1869 = vmatpush.msra.mxu0 0.0
      %1870 = vmatpush.msra.mxu0 0.0
      %v1871 = vand.u32 %v502, 4294901760
      %1872 = vmatpush.msra.mxu0 %v1871
      %v1873 = vand.u32 %v500, 4294901760
      %1874 = vmatpush.msra.mxu0 %v1873
      %v1875 = vand.u32 %v498, 4294901760
      %1876 = vmatpush.msra.mxu0 %v1875
      %v1877 = vand.u32 %v496, 4294901760
      %1878 = vmatpush.msra.mxu0 %v1877
      %v1879 = vand.u32 %v494, 4294901760
      %1880 = vmatpush.msra.mxu0 %v1879
      %v1881 = vand.u32 %v492, 4294901760
      %1882 = vmatpush.msra.mxu0 %v1881
      %v1883 = vand.u32 %v490, 4294901760
      %1884 = vmatpush.msra.mxu0 %v1883
      %v1885 = vand.u32 %v488, 4294901760
      %1886 = vmatpush.msra.mxu0 %v1885
      %v1887 = vand.u32 %v1233, 4294901760
      %1888 = vmatmul.f32.gmra.mxu0 %v1887
      %v1889 = vpop.f32.mrf.mxu0
      %v1890 = vadd.f32 %v1849, %v1889
      %v1891 = vand.u32 %v1236, 4294901760
      %1892 = vmatmul.f32.gmra.mxu0 %v1891
      %v1893 = vpop.f32.mrf.mxu0
      %v1894 = vadd.f32 %v1853, %v1893
      %v1895 = vand.u32 %v1239, 4294901760
      %1896 = vmatmul.f32.gmra.mxu0 %v1895
      %v1897 = vpop.f32.mrf.mxu0
      %v1898 = vadd.f32 %v1857, %v1897
      %v1899 = vand.u32 %v1242, 4294901760
      %1900 = vmatmul.f32.gmra.mxu0 %v1899
      %v1901 = vpop.f32.mrf.mxu0
      %v1902 = vadd.f32 %v1861, %v1901
      %1903 = vdwg.mxu0
      %s1904 = scalar_lea.vmem %s2, 32
      %v1905 = vld [vmem:[%s1904] sm:$0xf]
      %v1906 = vld [vmem:[%s1904 + $0x4] sm:$0xf]
      %v1907 = vld [vmem:[%s1904 + $0x8] sm:$0xf]
      %v1908 = vld [vmem:[%s1904 + $0xc] sm:$0xf]
      %v1913 = vunpack.c.l.b16 %v1905
      %v1914 = vunpack.c.l.b16 %v1906
      %v1915 = vunpack.c.l.b16 %v1907
      %v1916 = vunpack.c.l.b16 %v1908
      %v1917 = vpack.c.b16 %v1914, %v1913
      %v1918 = vpack.c.b16 %v1916, %v1915
      %v1920 = vsel %vm461, %v1917, 0
      %v1923 = vsel %vm461, %v1918, 0
      %1925 = vmatpush.bf16.msra.mxu0 0
      %1926 = vmatpush.bf16.msra.mxu0 0
      %1927 = vmatpush.bf16.msra.mxu0 0
      %1928 = vmatpush.bf16.msra.mxu0 0
      %1929 = vmatpush.bf16.msra.mxu0 %v450
      %1930 = vmatpush.bf16.msra.mxu0 %v449
      %1931 = vmatpush.bf16.msra.mxu0 %v448
      %1932 = vmatpush.bf16.msra.mxu0 %v447
      %1933 = vmatmul.bf16.gmra.mxu0 %v1920
      %v1934 = vpop.f32.mrf.mxu0
      %v1935 = vadd.f32 0.0, %v1934
      %v1936 = vpop.f32.mrf.mxu0
      %v1937 = vadd.f32 0.0, %v1936
      %1938 = vmatmul.bf16.gmra.mxu0 %v1923
      %v1939 = vpop.f32.mrf.mxu0
      %v1940 = vadd.f32 0.0, %v1939
      %v1941 = vpop.f32.mrf.mxu0
      %v1942 = vadd.f32 0.0, %v1941
      %1943 = vdwg.mxu0
      %s1944 = scalar_lea.vmem %s4, 256
      %v1945 = vld [vmem:[%s1944] sm:$0xff]
      %v1946 = vld [vmem:[%s1944 + $0x8] sm:$0xff]
      %v1947 = vld [vmem:[%s1944 + $0x10] sm:$0xff]
      %v1948 = vld [vmem:[%s1944 + $0x18] sm:$0xff]
      %v1949 = vld [vmem:[%s1944 + $0x20] sm:$0xff]
      %v1950 = vld [vmem:[%s1944 + $0x28] sm:$0xff]
      %v1951 = vld [vmem:[%s1944 + $0x30] sm:$0xff]
      %v1952 = vld [vmem:[%s1944 + $0x38] sm:$0xff]
      %v1953 = vld [vmem:[%s1944 + $0x40] sm:$0xff]
      %v1954 = vld [vmem:[%s1944 + $0x48] sm:$0xff]
      %v1955 = vld [vmem:[%s1944 + $0x50] sm:$0xff]
      %v1956 = vld [vmem:[%s1944 + $0x58] sm:$0xff]
      %v1957 = vld [vmem:[%s1944 + $0x60] sm:$0xff]
      %v1958 = vld [vmem:[%s1944 + $0x68] sm:$0xff]
      %v1959 = vld [vmem:[%s1944 + $0x70] sm:$0xff]
      %v1960 = vld [vmem:[%s1944 + $0x78] sm:$0xff]
      %v1962 = vsel %vm461, %v1935, 0
      %v1965 = vsel %vm461, %v1937, 0
      %v1968 = vsel %vm461, %v1940, 0
      %v1971 = vsel %vm461, %v1942, 0
      %1973 = vmatpush.msra.mxu0 0.0
      %1974 = vmatpush.msra.mxu0 0.0
      %1975 = vmatpush.msra.mxu0 0.0
      %1976 = vmatpush.msra.mxu0 0.0
      %1977 = vmatpush.msra.mxu0 0.0
      %1978 = vmatpush.msra.mxu0 0.0
      %1979 = vmatpush.msra.mxu0 0.0
      %1980 = vmatpush.msra.mxu0 0.0
      %v1981 = vand.u32 %v1959, 4294901760
      %1982 = vmatpush.msra.mxu0 %v1981
      %v1983 = vand.u32 %v1957, 4294901760
      %1984 = vmatpush.msra.mxu0 %v1983
      %v1985 = vand.u32 %v1955, 4294901760
      %1986 = vmatpush.msra.mxu0 %v1985
      %v1987 = vand.u32 %v1953, 4294901760
      %1988 = vmatpush.msra.mxu0 %v1987
      %v1989 = vand.u32 %v1951, 4294901760
      %1990 = vmatpush.msra.mxu0 %v1989
      %v1991 = vand.u32 %v1949, 4294901760
      %1992 = vmatpush.msra.mxu0 %v1991
      %v1993 = vand.u32 %v1947, 4294901760
      %1994 = vmatpush.msra.mxu0 %v1993
      %v1995 = vand.u32 %v1945, 4294901760
      %1996 = vmatpush.msra.mxu0 %v1995
      %v1997 = vand.u32 %v1962, 4294901760
      %v1998 = vsub.f32 %v1962, %v1997
      %v1999 = vand.u32 %v1998, 4294901760
      %v2000 = vsub.f32 %v1998, %v1999
      %v2001 = vand.u32 %v2000, 4294901760
      %2002 = vmatmul.f32.gmra.mxu0 %v2001
      %v2003 = vpop.f32.mrf.mxu0
      %v2004 = vadd.f32 0.0, %v2003
      %v2005 = vand.u32 %v1965, 4294901760
      %v2006 = vsub.f32 %v1965, %v2005
      %v2007 = vand.u32 %v2006, 4294901760
      %v2008 = vsub.f32 %v2006, %v2007
      %v2009 = vand.u32 %v2008, 4294901760
      %2010 = vmatmul.f32.gmra.mxu0 %v2009
      %v2011 = vpop.f32.mrf.mxu0
      %v2012 = vadd.f32 0.0, %v2011
      %v2013 = vand.u32 %v1968, 4294901760
      %v2014 = vsub.f32 %v1968, %v2013
      %v2015 = vand.u32 %v2014, 4294901760
      %v2016 = vsub.f32 %v2014, %v2015
      %v2017 = vand.u32 %v2016, 4294901760
      %2018 = vmatmul.f32.gmra.mxu0 %v2017
      %v2019 = vpop.f32.mrf.mxu0
      %v2020 = vadd.f32 0.0, %v2019
      %v2021 = vand.u32 %v1971, 4294901760
      %v2022 = vsub.f32 %v1971, %v2021
      %v2023 = vand.u32 %v2022, 4294901760
      %v2024 = vsub.f32 %v2022, %v2023
      %v2025 = vand.u32 %v2024, 4294901760
      %2026 = vmatmul.f32.gmra.mxu0 %v2025
      %v2027 = vpop.f32.mrf.mxu0
      %v2028 = vadd.f32 0.0, %v2027
      %2029 = vdwg.mxu0
      %2030 = vmatpush.msra.mxu0 0.0
      %2031 = vmatpush.msra.mxu0 0.0
      %2032 = vmatpush.msra.mxu0 0.0
      %2033 = vmatpush.msra.mxu0 0.0
      %2034 = vmatpush.msra.mxu0 0.0
      %2035 = vmatpush.msra.mxu0 0.0
      %2036 = vmatpush.msra.mxu0 0.0
      %2037 = vmatpush.msra.mxu0 0.0
      %v2038 = vand.u32 %v1959, 4294901760
      %v2039 = vsub.f32 %v1959, %v2038
      %v2040 = vand.u32 %v2039, 4294901760
      %v2041 = vsub.f32 %v2039, %v2040
      %v2042 = vand.u32 %v2041, 4294901760
      %2043 = vmatpush.msra.mxu0 %v2042
      %v2044 = vand.u32 %v1957, 4294901760
      %v2045 = vsub.f32 %v1957, %v2044
      %v2046 = vand.u32 %v2045, 4294901760
      %v2047 = vsub.f32 %v2045, %v2046
      %v2048 = vand.u32 %v2047, 4294901760
      %2049 = vmatpush.msra.mxu0 %v2048
      %v2050 = vand.u32 %v1955, 4294901760
      %v2051 = vsub.f32 %v1955, %v2050
      %v2052 = vand.u32 %v2051, 4294901760
      %v2053 = vsub.f32 %v2051, %v2052
      %v2054 = vand.u32 %v2053, 4294901760
      %2055 = vmatpush.msra.mxu0 %v2054
      %v2056 = vand.u32 %v1953, 4294901760
      %v2057 = vsub.f32 %v1953, %v2056
      %v2058 = vand.u32 %v2057, 4294901760
      %v2059 = vsub.f32 %v2057, %v2058
      %v2060 = vand.u32 %v2059, 4294901760
      %2061 = vmatpush.msra.mxu0 %v2060
      %v2062 = vand.u32 %v1951, 4294901760
      %v2063 = vsub.f32 %v1951, %v2062
      %v2064 = vand.u32 %v2063, 4294901760
      %v2065 = vsub.f32 %v2063, %v2064
      %v2066 = vand.u32 %v2065, 4294901760
      %2067 = vmatpush.msra.mxu0 %v2066
      %v2068 = vand.u32 %v1949, 4294901760
      %v2069 = vsub.f32 %v1949, %v2068
      %v2070 = vand.u32 %v2069, 4294901760
      %v2071 = vsub.f32 %v2069, %v2070
      %v2072 = vand.u32 %v2071, 4294901760
      %2073 = vmatpush.msra.mxu0 %v2072
      %v2074 = vand.u32 %v1947, 4294901760
      %v2075 = vsub.f32 %v1947, %v2074
      %v2076 = vand.u32 %v2075, 4294901760
      %v2077 = vsub.f32 %v2075, %v2076
      %v2078 = vand.u32 %v2077, 4294901760
      %2079 = vmatpush.msra.mxu0 %v2078
      %v2080 = vand.u32 %v1945, 4294901760
      %v2081 = vsub.f32 %v1945, %v2080
      %v2082 = vand.u32 %v2081, 4294901760
      %v2083 = vsub.f32 %v2081, %v2082
      %v2084 = vand.u32 %v2083, 4294901760
      %2085 = vmatpush.msra.mxu0 %v2084
      %v2086 = vand.u32 %v1962, 4294901760
      %2087 = vmatmul.f32.gmra.mxu0 %v2086
      %v2088 = vpop.f32.mrf.mxu0
      %v2089 = vadd.f32 %v2004, %v2088
      %v2090 = vand.u32 %v1965, 4294901760
      %2091 = vmatmul.f32.gmra.mxu0 %v2090
      %v2092 = vpop.f32.mrf.mxu0
      %v2093 = vadd.f32 %v2012, %v2092
      %v2094 = vand.u32 %v1968, 4294901760
      %2095 = vmatmul.f32.gmra.mxu0 %v2094
      %v2096 = vpop.f32.mrf.mxu0
      %v2097 = vadd.f32 %v2020, %v2096
      %v2098 = vand.u32 %v1971, 4294901760
      %2099 = vmatmul.f32.gmra.mxu0 %v2098
      %v2100 = vpop.f32.mrf.mxu0
      %v2101 = vadd.f32 %v2028, %v2100
      %2102 = vdwg.mxu0
      %2103 = vmatpush.msra.mxu0 0.0
      %2104 = vmatpush.msra.mxu0 0.0
      %2105 = vmatpush.msra.mxu0 0.0
      %2106 = vmatpush.msra.mxu0 0.0
      %2107 = vmatpush.msra.mxu0 0.0
      %2108 = vmatpush.msra.mxu0 0.0
      %2109 = vmatpush.msra.mxu0 0.0
      %2110 = vmatpush.msra.mxu0 0.0
      %v2111 = vand.u32 %v1959, 4294901760
      %v2112 = vsub.f32 %v1959, %v2111
      %2113 = vmatpush.msra.mxu0 %v2112
      %v2114 = vand.u32 %v1957, 4294901760
      %v2115 = vsub.f32 %v1957, %v2114
      %2116 = vmatpush.msra.mxu0 %v2115
      %v2117 = vand.u32 %v1955, 4294901760
      %v2118 = vsub.f32 %v1955, %v2117
      %2119 = vmatpush.msra.mxu0 %v2118
      %v2120 = vand.u32 %v1953, 4294901760
      %v2121 = vsub.f32 %v1953, %v2120
      %2122 = vmatpush.msra.mxu0 %v2121
      %v2123 = vand.u32 %v1951, 4294901760
      %v2124 = vsub.f32 %v1951, %v2123
      %2125 = vmatpush.msra.mxu0 %v2124
      %v2126 = vand.u32 %v1949, 4294901760
      %v2127 = vsub.f32 %v1949, %v2126
      %2128 = vmatpush.msra.mxu0 %v2127
      %v2129 = vand.u32 %v1947, 4294901760
      %v2130 = vsub.f32 %v1947, %v2129
      %2131 = vmatpush.msra.mxu0 %v2130
      %v2132 = vand.u32 %v1945, 4294901760
      %v2133 = vsub.f32 %v1945, %v2132
      %2134 = vmatpush.msra.mxu0 %v2133
      %v2135 = vand.u32 %v1962, 4294901760
      %v2136 = vsub.f32 %v1962, %v2135
      %2137 = vmatmul.f32.gmra.mxu0 %v2136
      %v2138 = vpop.f32.mrf.mxu0
      %v2139 = vadd.f32 %v2089, %v2138
      %v2140 = vand.u32 %v1965, 4294901760
      %v2141 = vsub.f32 %v1965, %v2140
      %2142 = vmatmul.f32.gmra.mxu0 %v2141
      %v2143 = vpop.f32.mrf.mxu0
      %v2144 = vadd.f32 %v2093, %v2143
      %v2145 = vand.u32 %v1968, 4294901760
      %v2146 = vsub.f32 %v1968, %v2145
      %2147 = vmatmul.f32.gmra.mxu0 %v2146
      %v2148 = vpop.f32.mrf.mxu0
      %v2149 = vadd.f32 %v2097, %v2148
      %v2150 = vand.u32 %v1971, 4294901760
      %v2151 = vsub.f32 %v1971, %v2150
      %2152 = vmatmul.f32.gmra.mxu0 %v2151
      %v2153 = vpop.f32.mrf.mxu0
      %v2154 = vadd.f32 %v2101, %v2153
      %2155 = vdwg.mxu0
      %2156 = vmatpush.msra.mxu0 0.0
      %2157 = vmatpush.msra.mxu0 0.0
      %2158 = vmatpush.msra.mxu0 0.0
      %2159 = vmatpush.msra.mxu0 0.0
      %2160 = vmatpush.msra.mxu0 0.0
      %2161 = vmatpush.msra.mxu0 0.0
      %2162 = vmatpush.msra.mxu0 0.0
      %2163 = vmatpush.msra.mxu0 0.0
      %v2164 = vand.u32 %v1959, 4294901760
      %2165 = vmatpush.msra.mxu0 %v2164
      %v2166 = vand.u32 %v1957, 4294901760
      %2167 = vmatpush.msra.mxu0 %v2166
      %v2168 = vand.u32 %v1955, 4294901760
      %2169 = vmatpush.msra.mxu0 %v2168
      %v2170 = vand.u32 %v1953, 4294901760
      %2171 = vmatpush.msra.mxu0 %v2170
      %v2172 = vand.u32 %v1951, 4294901760
      %2173 = vmatpush.msra.mxu0 %v2172
      %v2174 = vand.u32 %v1949, 4294901760
      %2175 = vmatpush.msra.mxu0 %v2174
      %v2176 = vand.u32 %v1947, 4294901760
      %2177 = vmatpush.msra.mxu0 %v2176
      %v2178 = vand.u32 %v1945, 4294901760
      %2179 = vmatpush.msra.mxu0 %v2178
      %v2180 = vand.u32 %v1962, 4294901760
      %v2181 = vsub.f32 %v1962, %v2180
      %v2182 = vand.u32 %v2181, 4294901760
      %2183 = vmatmul.f32.gmra.mxu0 %v2182
      %v2184 = vpop.f32.mrf.mxu0
      %v2185 = vadd.f32 %v2139, %v2184
      %v2186 = vand.u32 %v1965, 4294901760
      %v2187 = vsub.f32 %v1965, %v2186
      %v2188 = vand.u32 %v2187, 4294901760
      %2189 = vmatmul.f32.gmra.mxu0 %v2188
      %v2190 = vpop.f32.mrf.mxu0
      %v2191 = vadd.f32 %v2144, %v2190
      %v2192 = vand.u32 %v1968, 4294901760
      %v2193 = vsub.f32 %v1968, %v2192
      %v2194 = vand.u32 %v2193, 4294901760
      %2195 = vmatmul.f32.gmra.mxu0 %v2194
      %v2196 = vpop.f32.mrf.mxu0
      %v2197 = vadd.f32 %v2149, %v2196
      %v2198 = vand.u32 %v1971, 4294901760
      %v2199 = vsub.f32 %v1971, %v2198
      %v2200 = vand.u32 %v2199, 4294901760
      %2201 = vmatmul.f32.gmra.mxu0 %v2200
      %v2202 = vpop.f32.mrf.mxu0
      %v2203 = vadd.f32 %v2154, %v2202
      %2204 = vdwg.mxu0
      %2205 = vmatpush.msra.mxu0 0.0
      %2206 = vmatpush.msra.mxu0 0.0
      %2207 = vmatpush.msra.mxu0 0.0
      %2208 = vmatpush.msra.mxu0 0.0
      %2209 = vmatpush.msra.mxu0 0.0
      %2210 = vmatpush.msra.mxu0 0.0
      %2211 = vmatpush.msra.mxu0 0.0
      %2212 = vmatpush.msra.mxu0 0.0
      %v2213 = vand.u32 %v1959, 4294901760
      %v2214 = vsub.f32 %v1959, %v2213
      %v2215 = vand.u32 %v2214, 4294901760
      %2216 = vmatpush.msra.mxu0 %v2215
      %v2217 = vand.u32 %v1957, 4294901760
      %v2218 = vsub.f32 %v1957, %v2217
      %v2219 = vand.u32 %v2218, 4294901760
      %2220 = vmatpush.msra.mxu0 %v2219
      %v2221 = vand.u32 %v1955, 4294901760
      %v2222 = vsub.f32 %v1955, %v2221
      %v2223 = vand.u32 %v2222, 4294901760
      %2224 = vmatpush.msra.mxu0 %v2223
      %v2225 = vand.u32 %v1953, 4294901760
      %v2226 = vsub.f32 %v1953, %v2225
      %v2227 = vand.u32 %v2226, 4294901760
      %2228 = vmatpush.msra.mxu0 %v2227
      %v2229 = vand.u32 %v1951, 4294901760
      %v2230 = vsub.f32 %v1951, %v2229
      %v2231 = vand.u32 %v2230, 4294901760
      %2232 = vmatpush.msra.mxu0 %v2231
      %v2233 = vand.u32 %v1949, 4294901760
      %v2234 = vsub.f32 %v1949, %v2233
      %v2235 = vand.u32 %v2234, 4294901760
      %2236 = vmatpush.msra.mxu0 %v2235
      %v2237 = vand.u32 %v1947, 4294901760
      %v2238 = vsub.f32 %v1947, %v2237
      %v2239 = vand.u32 %v2238, 4294901760
      %2240 = vmatpush.msra.mxu0 %v2239
      %v2241 = vand.u32 %v1945, 4294901760
      %v2242 = vsub.f32 %v1945, %v2241
      %v2243 = vand.u32 %v2242, 4294901760
      %2244 = vmatpush.msra.mxu0 %v2243
      %v2245 = vand.u32 %v1962, 4294901760
      %2246 = vmatmul.f32.gmra.mxu0 %v2245
      %v2247 = vpop.f32.mrf.mxu0
      %v2248 = vadd.f32 %v2185, %v2247
      %v2249 = vand.u32 %v1965, 4294901760
      %2250 = vmatmul.f32.gmra.mxu0 %v2249
      %v2251 = vpop.f32.mrf.mxu0
      %v2252 = vadd.f32 %v2191, %v2251
      %v2253 = vand.u32 %v1968, 4294901760
      %2254 = vmatmul.f32.gmra.mxu0 %v2253
      %v2255 = vpop.f32.mrf.mxu0
      %v2256 = vadd.f32 %v2197, %v2255
      %v2257 = vand.u32 %v1971, 4294901760
      %2258 = vmatmul.f32.gmra.mxu0 %v2257
      %v2259 = vpop.f32.mrf.mxu0
      %v2260 = vadd.f32 %v2203, %v2259
      %2261 = vdwg.mxu0
      %2262 = vmatpush.msra.mxu0 0.0
      %2263 = vmatpush.msra.mxu0 0.0
      %2264 = vmatpush.msra.mxu0 0.0
      %2265 = vmatpush.msra.mxu0 0.0
      %2266 = vmatpush.msra.mxu0 0.0
      %2267 = vmatpush.msra.mxu0 0.0
      %2268 = vmatpush.msra.mxu0 0.0
      %2269 = vmatpush.msra.mxu0 0.0
      %v2270 = vand.u32 %v1959, 4294901760
      %2271 = vmatpush.msra.mxu0 %v2270
      %v2272 = vand.u32 %v1957, 4294901760
      %2273 = vmatpush.msra.mxu0 %v2272
      %v2274 = vand.u32 %v1955, 4294901760
      %2275 = vmatpush.msra.mxu0 %v2274
      %v2276 = vand.u32 %v1953, 4294901760
      %2277 = vmatpush.msra.mxu0 %v2276
      %v2278 = vand.u32 %v1951, 4294901760
      %2279 = vmatpush.msra.mxu0 %v2278
      %v2280 = vand.u32 %v1949, 4294901760
      %2281 = vmatpush.msra.mxu0 %v2280
      %v2282 = vand.u32 %v1947, 4294901760
      %2283 = vmatpush.msra.mxu0 %v2282
      %v2284 = vand.u32 %v1945, 4294901760
      %2285 = vmatpush.msra.mxu0 %v2284
      %v2286 = vand.u32 %v1962, 4294901760
      %2287 = vmatmul.f32.gmra.mxu0 %v2286
      %v2288 = vpop.f32.mrf.mxu0
      %v2289 = vadd.f32 %v2248, %v2288
      %v2290 = vand.u32 %v1965, 4294901760
      %2291 = vmatmul.f32.gmra.mxu0 %v2290
      %v2292 = vpop.f32.mrf.mxu0
      %v2293 = vadd.f32 %v2252, %v2292
      %v2294 = vand.u32 %v1968, 4294901760
      %2295 = vmatmul.f32.gmra.mxu0 %v2294
      %v2296 = vpop.f32.mrf.mxu0
      %v2297 = vadd.f32 %v2256, %v2296
      %v2298 = vand.u32 %v1971, 4294901760
      %2299 = vmatmul.f32.gmra.mxu0 %v2298
      %v2300 = vpop.f32.mrf.mxu0
      %v2301 = vadd.f32 %v2260, %v2300
      %2302 = vdwg.mxu0
      %2303 = vmatpush.msra.mxu0 0.0
      %2304 = vmatpush.msra.mxu0 0.0
      %2305 = vmatpush.msra.mxu0 0.0
      %2306 = vmatpush.msra.mxu0 0.0
      %2307 = vmatpush.msra.mxu0 0.0
      %2308 = vmatpush.msra.mxu0 0.0
      %2309 = vmatpush.msra.mxu0 0.0
      %2310 = vmatpush.msra.mxu0 0.0
      %v2311 = vand.u32 %v1960, 4294901760
      %2312 = vmatpush.msra.mxu0 %v2311
      %v2313 = vand.u32 %v1958, 4294901760
      %2314 = vmatpush.msra.mxu0 %v2313
      %v2315 = vand.u32 %v1956, 4294901760
      %2316 = vmatpush.msra.mxu0 %v2315
      %v2317 = vand.u32 %v1954, 4294901760
      %2318 = vmatpush.msra.mxu0 %v2317
      %v2319 = vand.u32 %v1952, 4294901760
      %2320 = vmatpush.msra.mxu0 %v2319
      %v2321 = vand.u32 %v1950, 4294901760
      %2322 = vmatpush.msra.mxu0 %v2321
      %v2323 = vand.u32 %v1948, 4294901760
      %2324 = vmatpush.msra.mxu0 %v2323
      %v2325 = vand.u32 %v1946, 4294901760
      %2326 = vmatpush.msra.mxu0 %v2325
      %v2327 = vand.u32 %v1962, 4294901760
      %v2328 = vsub.f32 %v1962, %v2327
      %v2329 = vand.u32 %v2328, 4294901760
      %v2330 = vsub.f32 %v2328, %v2329
      %v2331 = vand.u32 %v2330, 4294901760
      %2332 = vmatmul.f32.gmra.mxu0 %v2331
      %v2333 = vpop.f32.mrf.mxu0
      %v2334 = vadd.f32 0.0, %v2333
      %v2335 = vand.u32 %v1965, 4294901760
      %v2336 = vsub.f32 %v1965, %v2335
      %v2337 = vand.u32 %v2336, 4294901760
      %v2338 = vsub.f32 %v2336, %v2337
      %v2339 = vand.u32 %v2338, 4294901760
      %2340 = vmatmul.f32.gmra.mxu0 %v2339
      %v2341 = vpop.f32.mrf.mxu0
      %v2342 = vadd.f32 0.0, %v2341
      %v2343 = vand.u32 %v1968, 4294901760
      %v2344 = vsub.f32 %v1968, %v2343
      %v2345 = vand.u32 %v2344, 4294901760
      %v2346 = vsub.f32 %v2344, %v2345
      %v2347 = vand.u32 %v2346, 4294901760
      %2348 = vmatmul.f32.gmra.mxu0 %v2347
      %v2349 = vpop.f32.mrf.mxu0
      %v2350 = vadd.f32 0.0, %v2349
      %v2351 = vand.u32 %v1971, 4294901760
      %v2352 = vsub.f32 %v1971, %v2351
      %v2353 = vand.u32 %v2352, 4294901760
      %v2354 = vsub.f32 %v2352, %v2353
      %v2355 = vand.u32 %v2354, 4294901760
      %2356 = vmatmul.f32.gmra.mxu0 %v2355
      %v2357 = vpop.f32.mrf.mxu0
      %v2358 = vadd.f32 0.0, %v2357
      %2359 = vdwg.mxu0
      %2360 = vmatpush.msra.mxu0 0.0
      %2361 = vmatpush.msra.mxu0 0.0
      %2362 = vmatpush.msra.mxu0 0.0
      %2363 = vmatpush.msra.mxu0 0.0
      %2364 = vmatpush.msra.mxu0 0.0
      %2365 = vmatpush.msra.mxu0 0.0
      %2366 = vmatpush.msra.mxu0 0.0
      %2367 = vmatpush.msra.mxu0 0.0
      %v2368 = vand.u32 %v1960, 4294901760
      %v2369 = vsub.f32 %v1960, %v2368
      %v2370 = vand.u32 %v2369, 4294901760
      %v2371 = vsub.f32 %v2369, %v2370
      %v2372 = vand.u32 %v2371, 4294901760
      %2373 = vmatpush.msra.mxu0 %v2372
      %v2374 = vand.u32 %v1958, 4294901760
      %v2375 = vsub.f32 %v1958, %v2374
      %v2376 = vand.u32 %v2375, 4294901760
      %v2377 = vsub.f32 %v2375, %v2376
      %v2378 = vand.u32 %v2377, 4294901760
      %2379 = vmatpush.msra.mxu0 %v2378
      %v2380 = vand.u32 %v1956, 4294901760
      %v2381 = vsub.f32 %v1956, %v2380
      %v2382 = vand.u32 %v2381, 4294901760
      %v2383 = vsub.f32 %v2381, %v2382
      %v2384 = vand.u32 %v2383, 4294901760
      %2385 = vmatpush.msra.mxu0 %v2384
      %v2386 = vand.u32 %v1954, 4294901760
      %v2387 = vsub.f32 %v1954, %v2386
      %v2388 = vand.u32 %v2387, 4294901760
      %v2389 = vsub.f32 %v2387, %v2388
      %v2390 = vand.u32 %v2389, 4294901760
      %2391 = vmatpush.msra.mxu0 %v2390
      %v2392 = vand.u32 %v1952, 4294901760
      %v2393 = vsub.f32 %v1952, %v2392
      %v2394 = vand.u32 %v2393, 4294901760
      %v2395 = vsub.f32 %v2393, %v2394
      %v2396 = vand.u32 %v2395, 4294901760
      %2397 = vmatpush.msra.mxu0 %v2396
      %v2398 = vand.u32 %v1950, 4294901760
      %v2399 = vsub.f32 %v1950, %v2398
      %v2400 = vand.u32 %v2399, 4294901760
      %v2401 = vsub.f32 %v2399, %v2400
      %v2402 = vand.u32 %v2401, 4294901760
      %2403 = vmatpush.msra.mxu0 %v2402
      %v2404 = vand.u32 %v1948, 4294901760
      %v2405 = vsub.f32 %v1948, %v2404
      %v2406 = vand.u32 %v2405, 4294901760
      %v2407 = vsub.f32 %v2405, %v2406
      %v2408 = vand.u32 %v2407, 4294901760
      %2409 = vmatpush.msra.mxu0 %v2408
      %v2410 = vand.u32 %v1946, 4294901760
      %v2411 = vsub.f32 %v1946, %v2410
      %v2412 = vand.u32 %v2411, 4294901760
      %v2413 = vsub.f32 %v2411, %v2412
      %v2414 = vand.u32 %v2413, 4294901760
      %2415 = vmatpush.msra.mxu0 %v2414
      %v2416 = vand.u32 %v1962, 4294901760
      %2417 = vmatmul.f32.gmra.mxu0 %v2416
      %v2418 = vpop.f32.mrf.mxu0
      %v2419 = vadd.f32 %v2334, %v2418
      %v2420 = vand.u32 %v1965, 4294901760
      %2421 = vmatmul.f32.gmra.mxu0 %v2420
      %v2422 = vpop.f32.mrf.mxu0
      %v2423 = vadd.f32 %v2342, %v2422
      %v2424 = vand.u32 %v1968, 4294901760
      %2425 = vmatmul.f32.gmra.mxu0 %v2424
      %v2426 = vpop.f32.mrf.mxu0
      %v2427 = vadd.f32 %v2350, %v2426
      %v2428 = vand.u32 %v1971, 4294901760
      %2429 = vmatmul.f32.gmra.mxu0 %v2428
      %v2430 = vpop.f32.mrf.mxu0
      %v2431 = vadd.f32 %v2358, %v2430
      %2432 = vdwg.mxu0
      %2433 = vmatpush.msra.mxu0 0.0
      %2434 = vmatpush.msra.mxu0 0.0
      %2435 = vmatpush.msra.mxu0 0.0
      %2436 = vmatpush.msra.mxu0 0.0
      %2437 = vmatpush.msra.mxu0 0.0
      %2438 = vmatpush.msra.mxu0 0.0
      %2439 = vmatpush.msra.mxu0 0.0
      %2440 = vmatpush.msra.mxu0 0.0
      %v2441 = vand.u32 %v1960, 4294901760
      %v2442 = vsub.f32 %v1960, %v2441
      %2443 = vmatpush.msra.mxu0 %v2442
      %v2444 = vand.u32 %v1958, 4294901760
      %v2445 = vsub.f32 %v1958, %v2444
      %2446 = vmatpush.msra.mxu0 %v2445
      %v2447 = vand.u32 %v1956, 4294901760
      %v2448 = vsub.f32 %v1956, %v2447
      %2449 = vmatpush.msra.mxu0 %v2448
      %v2450 = vand.u32 %v1954, 4294901760
      %v2451 = vsub.f32 %v1954, %v2450
      %2452 = vmatpush.msra.mxu0 %v2451
      %v2453 = vand.u32 %v1952, 4294901760
      %v2454 = vsub.f32 %v1952, %v2453
      %2455 = vmatpush.msra.mxu0 %v2454
      %v2456 = vand.u32 %v1950, 4294901760
      %v2457 = vsub.f32 %v1950, %v2456
      %2458 = vmatpush.msra.mxu0 %v2457
      %v2459 = vand.u32 %v1948, 4294901760
      %v2460 = vsub.f32 %v1948, %v2459
      %2461 = vmatpush.msra.mxu0 %v2460
      %v2462 = vand.u32 %v1946, 4294901760
      %v2463 = vsub.f32 %v1946, %v2462
      %2464 = vmatpush.msra.mxu0 %v2463
      %v2465 = vand.u32 %v1962, 4294901760
      %v2466 = vsub.f32 %v1962, %v2465
      %2467 = vmatmul.f32.gmra.mxu0 %v2466
      %v2468 = vpop.f32.mrf.mxu0
      %v2469 = vadd.f32 %v2419, %v2468
      %v2470 = vand.u32 %v1965, 4294901760
      %v2471 = vsub.f32 %v1965, %v2470
      %2472 = vmatmul.f32.gmra.mxu0 %v2471
      %v2473 = vpop.f32.mrf.mxu0
      %v2474 = vadd.f32 %v2423, %v2473
      %v2475 = vand.u32 %v1968, 4294901760
      %v2476 = vsub.f32 %v1968, %v2475
      %2477 = vmatmul.f32.gmra.mxu0 %v2476
      %v2478 = vpop.f32.mrf.mxu0
      %v2479 = vadd.f32 %v2427, %v2478
      %v2480 = vand.u32 %v1971, 4294901760
      %v2481 = vsub.f32 %v1971, %v2480
      %2482 = vmatmul.f32.gmra.mxu0 %v2481
      %v2483 = vpop.f32.mrf.mxu0
      %v2484 = vadd.f32 %v2431, %v2483
      %2485 = vdwg.mxu0
      %2486 = vmatpush.msra.mxu0 0.0
      %2487 = vmatpush.msra.mxu0 0.0
      %2488 = vmatpush.msra.mxu0 0.0
      %2489 = vmatpush.msra.mxu0 0.0
      %2490 = vmatpush.msra.mxu0 0.0
      %2491 = vmatpush.msra.mxu0 0.0
      %2492 = vmatpush.msra.mxu0 0.0
      %2493 = vmatpush.msra.mxu0 0.0
      %v2494 = vand.u32 %v1960, 4294901760
      %2495 = vmatpush.msra.mxu0 %v2494
      %v2496 = vand.u32 %v1958, 4294901760
      %2497 = vmatpush.msra.mxu0 %v2496
      %v2498 = vand.u32 %v1956, 4294901760
      %2499 = vmatpush.msra.mxu0 %v2498
      %v2500 = vand.u32 %v1954, 4294901760
      %2501 = vmatpush.msra.mxu0 %v2500
      %v2502 = vand.u32 %v1952, 4294901760
      %2503 = vmatpush.msra.mxu0 %v2502
      %v2504 = vand.u32 %v1950, 4294901760
      %2505 = vmatpush.msra.mxu0 %v2504
      %v2506 = vand.u32 %v1948, 4294901760
      %2507 = vmatpush.msra.mxu0 %v2506
      %v2508 = vand.u32 %v1946, 4294901760
      %2509 = vmatpush.msra.mxu0 %v2508
      %v2510 = vand.u32 %v1962, 4294901760
      %v2511 = vsub.f32 %v1962, %v2510
      %v2512 = vand.u32 %v2511, 4294901760
      %2513 = vmatmul.f32.gmra.mxu0 %v2512
      %v2514 = vpop.f32.mrf.mxu0
      %v2515 = vadd.f32 %v2469, %v2514
      %v2516 = vand.u32 %v1965, 4294901760
      %v2517 = vsub.f32 %v1965, %v2516
      %v2518 = vand.u32 %v2517, 4294901760
      %2519 = vmatmul.f32.gmra.mxu0 %v2518
      %v2520 = vpop.f32.mrf.mxu0
      %v2521 = vadd.f32 %v2474, %v2520
      %v2522 = vand.u32 %v1968, 4294901760
      %v2523 = vsub.f32 %v1968, %v2522
      %v2524 = vand.u32 %v2523, 4294901760
      %2525 = vmatmul.f32.gmra.mxu0 %v2524
      %v2526 = vpop.f32.mrf.mxu0
      %v2527 = vadd.f32 %v2479, %v2526
      %v2528 = vand.u32 %v1971, 4294901760
      %v2529 = vsub.f32 %v1971, %v2528
      %v2530 = vand.u32 %v2529, 4294901760
      %2531 = vmatmul.f32.gmra.mxu0 %v2530
      %v2532 = vpop.f32.mrf.mxu0
      %v2533 = vadd.f32 %v2484, %v2532
      %2534 = vdwg.mxu0
      %2535 = vmatpush.msra.mxu0 0.0
      %2536 = vmatpush.msra.mxu0 0.0
      %2537 = vmatpush.msra.mxu0 0.0
      %2538 = vmatpush.msra.mxu0 0.0
      %2539 = vmatpush.msra.mxu0 0.0
      %2540 = vmatpush.msra.mxu0 0.0
      %2541 = vmatpush.msra.mxu0 0.0
      %2542 = vmatpush.msra.mxu0 0.0
      %v2543 = vand.u32 %v1960, 4294901760
      %v2544 = vsub.f32 %v1960, %v2543
      %v2545 = vand.u32 %v2544, 4294901760
      %2546 = vmatpush.msra.mxu0 %v2545
      %v2547 = vand.u32 %v1958, 4294901760
      %v2548 = vsub.f32 %v1958, %v2547
      %v2549 = vand.u32 %v2548, 4294901760
      %2550 = vmatpush.msra.mxu0 %v2549
      %v2551 = vand.u32 %v1956, 4294901760
      %v2552 = vsub.f32 %v1956, %v2551
      %v2553 = vand.u32 %v2552, 4294901760
      %2554 = vmatpush.msra.mxu0 %v2553
      %v2555 = vand.u32 %v1954, 4294901760
      %v2556 = vsub.f32 %v1954, %v2555
      %v2557 = vand.u32 %v2556, 4294901760
      %2558 = vmatpush.msra.mxu0 %v2557
      %v2559 = vand.u32 %v1952, 4294901760
      %v2560 = vsub.f32 %v1952, %v2559
      %v2561 = vand.u32 %v2560, 4294901760
      %2562 = vmatpush.msra.mxu0 %v2561
      %v2563 = vand.u32 %v1950, 4294901760
      %v2564 = vsub.f32 %v1950, %v2563
      %v2565 = vand.u32 %v2564, 4294901760
      %2566 = vmatpush.msra.mxu0 %v2565
      %v2567 = vand.u32 %v1948, 4294901760
      %v2568 = vsub.f32 %v1948, %v2567
      %v2569 = vand.u32 %v2568, 4294901760
      %2570 = vmatpush.msra.mxu0 %v2569
      %v2571 = vand.u32 %v1946, 4294901760
      %v2572 = vsub.f32 %v1946, %v2571
      %v2573 = vand.u32 %v2572, 4294901760
      %2574 = vmatpush.msra.mxu0 %v2573
      %v2575 = vand.u32 %v1962, 4294901760
      %2576 = vmatmul.f32.gmra.mxu0 %v2575
      %v2577 = vpop.f32.mrf.mxu0
      %v2578 = vadd.f32 %v2515, %v2577
      %v2579 = vand.u32 %v1965, 4294901760
      %2580 = vmatmul.f32.gmra.mxu0 %v2579
      %v2581 = vpop.f32.mrf.mxu0
      %v2582 = vadd.f32 %v2521, %v2581
      %v2583 = vand.u32 %v1968, 4294901760
      %2584 = vmatmul.f32.gmra.mxu0 %v2583
      %v2585 = vpop.f32.mrf.mxu0
      %v2586 = vadd.f32 %v2527, %v2585
      %v2587 = vand.u32 %v1971, 4294901760
      %2588 = vmatmul.f32.gmra.mxu0 %v2587
      %v2589 = vpop.f32.mrf.mxu0
      %v2590 = vadd.f32 %v2533, %v2589
      %2591 = vdwg.mxu0
      %2592 = vmatpush.msra.mxu0 0.0
      %2593 = vmatpush.msra.mxu0 0.0
      %2594 = vmatpush.msra.mxu0 0.0
      %2595 = vmatpush.msra.mxu0 0.0
      %2596 = vmatpush.msra.mxu0 0.0
      %2597 = vmatpush.msra.mxu0 0.0
      %2598 = vmatpush.msra.mxu0 0.0
      %2599 = vmatpush.msra.mxu0 0.0
      %v2600 = vand.u32 %v1960, 4294901760
      %2601 = vmatpush.msra.mxu0 %v2600
      %v2602 = vand.u32 %v1958, 4294901760
      %2603 = vmatpush.msra.mxu0 %v2602
      %v2604 = vand.u32 %v1956, 4294901760
      %2605 = vmatpush.msra.mxu0 %v2604
      %v2606 = vand.u32 %v1954, 4294901760
      %2607 = vmatpush.msra.mxu0 %v2606
      %v2608 = vand.u32 %v1952, 4294901760
      %2609 = vmatpush.msra.mxu0 %v2608
      %v2610 = vand.u32 %v1950, 4294901760
      %2611 = vmatpush.msra.mxu0 %v2610
      %v2612 = vand.u32 %v1948, 4294901760
      %2613 = vmatpush.msra.mxu0 %v2612
      %v2614 = vand.u32 %v1946, 4294901760
      %2615 = vmatpush.msra.mxu0 %v2614
      %v2616 = vand.u32 %v1962, 4294901760
      %2617 = vmatmul.f32.gmra.mxu0 %v2616
      %v2618 = vpop.f32.mrf.mxu0
      %v2619 = vadd.f32 %v2578, %v2618
      %v2620 = vand.u32 %v1965, 4294901760
      %2621 = vmatmul.f32.gmra.mxu0 %v2620
      %v2622 = vpop.f32.mrf.mxu0
      %v2623 = vadd.f32 %v2582, %v2622
      %v2624 = vand.u32 %v1968, 4294901760
      %2625 = vmatmul.f32.gmra.mxu0 %v2624
      %v2626 = vpop.f32.mrf.mxu0
      %v2627 = vadd.f32 %v2586, %v2626
      %v2628 = vand.u32 %v1971, 4294901760
      %2629 = vmatmul.f32.gmra.mxu0 %v2628
      %v2630 = vpop.f32.mrf.mxu0
      %v2631 = vadd.f32 %v2590, %v2630
      %2632 = vdwg.mxu0
      %v2633 = vadd.f32 %v1560, %v2289
      %v2634 = vadd.f32 %v1890, %v2619
      %v2635 = vadd.f32 %v1564, %v2293
      %v2636 = vadd.f32 %v1894, %v2623
      %v2637 = vadd.f32 %v1568, %v2297
      %v2638 = vadd.f32 %v1898, %v2627
      %v2639 = vadd.f32 %v1572, %v2301
      %v2640 = vadd.f32 %v1902, %v2631
      %s2641 = scalar_lea.vmem %s2, 48
      %v2642 = vld [vmem:[%s2641] sm:$0xf]
      %v2643 = vld [vmem:[%s2641 + $0x4] sm:$0xf]
      %v2644 = vld [vmem:[%s2641 + $0x8] sm:$0xf]
      %v2645 = vld [vmem:[%s2641 + $0xc] sm:$0xf]
      %v2650 = vunpack.c.l.b16 %v2642
      %v2651 = vunpack.c.l.b16 %v2643
      %v2652 = vunpack.c.l.b16 %v2644
      %v2653 = vunpack.c.l.b16 %v2645
      %v2654 = vpack.c.b16 %v2651, %v2650
      %v2655 = vpack.c.b16 %v2653, %v2652
      %v2657 = vsel %vm461, %v2654, 0
      %v2660 = vsel %vm461, %v2655, 0
      %2662 = vmatpush.bf16.msra.mxu0 0
      %2663 = vmatpush.bf16.msra.mxu0 0
      %2664 = vmatpush.bf16.msra.mxu0 0
      %2665 = vmatpush.bf16.msra.mxu0 0
      %2666 = vmatpush.bf16.msra.mxu0 %v450
      %2667 = vmatpush.bf16.msra.mxu0 %v449
      %2668 = vmatpush.bf16.msra.mxu0 %v448
      %2669 = vmatpush.bf16.msra.mxu0 %v447
      %2670 = vmatmul.bf16.gmra.mxu0 %v2657
      %v2671 = vpop.f32.mrf.mxu0
      %v2672 = vadd.f32 0.0, %v2671
      %v2673 = vpop.f32.mrf.mxu0
      %v2674 = vadd.f32 0.0, %v2673
      %2675 = vmatmul.bf16.gmra.mxu0 %v2660
      %v2676 = vpop.f32.mrf.mxu0
      %v2677 = vadd.f32 0.0, %v2676
      %v2678 = vpop.f32.mrf.mxu0
      %v2679 = vadd.f32 0.0, %v2678
      %2680 = vdwg.mxu0
      %s2681 = scalar_lea.vmem %s4, 384
      %v2682 = vld [vmem:[%s2681] sm:$0xff]
      %v2683 = vld [vmem:[%s2681 + $0x8] sm:$0xff]
      %v2684 = vld [vmem:[%s2681 + $0x10] sm:$0xff]
      %v2685 = vld [vmem:[%s2681 + $0x18] sm:$0xff]
      %v2686 = vld [vmem:[%s2681 + $0x20] sm:$0xff]
      %v2687 = vld [vmem:[%s2681 + $0x28] sm:$0xff]
      %v2688 = vld [vmem:[%s2681 + $0x30] sm:$0xff]
      %v2689 = vld [vmem:[%s2681 + $0x38] sm:$0xff]
      %v2690 = vld [vmem:[%s2681 + $0x40] sm:$0xff]
      %v2691 = vld [vmem:[%s2681 + $0x48] sm:$0xff]
      %v2692 = vld [vmem:[%s2681 + $0x50] sm:$0xff]
      %v2693 = vld [vmem:[%s2681 + $0x58] sm:$0xff]
      %v2694 = vld [vmem:[%s2681 + $0x60] sm:$0xff]
      %v2695 = vld [vmem:[%s2681 + $0x68] sm:$0xff]
      %v2696 = vld [vmem:[%s2681 + $0x70] sm:$0xff]
      %v2697 = vld [vmem:[%s2681 + $0x78] sm:$0xff]
      %v2699 = vsel %vm461, %v2672, 0
      %v2702 = vsel %vm461, %v2674, 0
      %v2705 = vsel %vm461, %v2677, 0
      %v2708 = vsel %vm461, %v2679, 0
      %2710 = vmatpush.msra.mxu0 0.0
      %2711 = vmatpush.msra.mxu0 0.0
      %2712 = vmatpush.msra.mxu0 0.0
      %2713 = vmatpush.msra.mxu0 0.0
      %2714 = vmatpush.msra.mxu0 0.0
      %2715 = vmatpush.msra.mxu0 0.0
      %2716 = vmatpush.msra.mxu0 0.0
      %2717 = vmatpush.msra.mxu0 0.0
      %v2718 = vand.u32 %v2696, 4294901760
      %2719 = vmatpush.msra.mxu0 %v2718
      %v2720 = vand.u32 %v2694, 4294901760
      %2721 = vmatpush.msra.mxu0 %v2720
      %v2722 = vand.u32 %v2692, 4294901760
      %2723 = vmatpush.msra.mxu0 %v2722
      %v2724 = vand.u32 %v2690, 4294901760
      %2725 = vmatpush.msra.mxu0 %v2724
      %v2726 = vand.u32 %v2688, 4294901760
      %2727 = vmatpush.msra.mxu0 %v2726
      %v2728 = vand.u32 %v2686, 4294901760
      %2729 = vmatpush.msra.mxu0 %v2728
      %v2730 = vand.u32 %v2684, 4294901760
      %2731 = vmatpush.msra.mxu0 %v2730
      %v2732 = vand.u32 %v2682, 4294901760
      %2733 = vmatpush.msra.mxu0 %v2732
      %v2734 = vand.u32 %v2699, 4294901760
      %v2735 = vsub.f32 %v2699, %v2734
      %v2736 = vand.u32 %v2735, 4294901760
      %v2737 = vsub.f32 %v2735, %v2736
      %v2738 = vand.u32 %v2737, 4294901760
      %2739 = vmatmul.f32.gmra.mxu0 %v2738
      %v2740 = vpop.f32.mrf.mxu0
      %v2741 = vadd.f32 0.0, %v2740
      %v2742 = vand.u32 %v2702, 4294901760
      %v2743 = vsub.f32 %v2702, %v2742
      %v2744 = vand.u32 %v2743, 4294901760
      %v2745 = vsub.f32 %v2743, %v2744
      %v2746 = vand.u32 %v2745, 4294901760
      %2747 = vmatmul.f32.gmra.mxu0 %v2746
      %v2748 = vpop.f32.mrf.mxu0
      %v2749 = vadd.f32 0.0, %v2748
      %v2750 = vand.u32 %v2705, 4294901760
      %v2751 = vsub.f32 %v2705, %v2750
      %v2752 = vand.u32 %v2751, 4294901760
      %v2753 = vsub.f32 %v2751, %v2752
      %v2754 = vand.u32 %v2753, 4294901760
      %2755 = vmatmul.f32.gmra.mxu0 %v2754
      %v2756 = vpop.f32.mrf.mxu0
      %v2757 = vadd.f32 0.0, %v2756
      %v2758 = vand.u32 %v2708, 4294901760
      %v2759 = vsub.f32 %v2708, %v2758
      %v2760 = vand.u32 %v2759, 4294901760
      %v2761 = vsub.f32 %v2759, %v2760
      %v2762 = vand.u32 %v2761, 4294901760
      %2763 = vmatmul.f32.gmra.mxu0 %v2762
      %v2764 = vpop.f32.mrf.mxu0
      %v2765 = vadd.f32 0.0, %v2764
      %2766 = vdwg.mxu0
      %2767 = vmatpush.msra.mxu0 0.0
      %2768 = vmatpush.msra.mxu0 0.0
      %2769 = vmatpush.msra.mxu0 0.0
      %2770 = vmatpush.msra.mxu0 0.0
      %2771 = vmatpush.msra.mxu0 0.0
      %2772 = vmatpush.msra.mxu0 0.0
      %2773 = vmatpush.msra.mxu0 0.0
      %2774 = vmatpush.msra.mxu0 0.0
      %v2775 = vand.u32 %v2696, 4294901760
      %v2776 = vsub.f32 %v2696, %v2775
      %v2777 = vand.u32 %v2776, 4294901760
      %v2778 = vsub.f32 %v2776, %v2777
      %v2779 = vand.u32 %v2778, 4294901760
      %2780 = vmatpush.msra.mxu0 %v2779
      %v2781 = vand.u32 %v2694, 4294901760
      %v2782 = vsub.f32 %v2694, %v2781
      %v2783 = vand.u32 %v2782, 4294901760
      %v2784 = vsub.f32 %v2782, %v2783
      %v2785 = vand.u32 %v2784, 4294901760
      %2786 = vmatpush.msra.mxu0 %v2785
      %v2787 = vand.u32 %v2692, 4294901760
      %v2788 = vsub.f32 %v2692, %v2787
      %v2789 = vand.u32 %v2788, 4294901760
      %v2790 = vsub.f32 %v2788, %v2789
      %v2791 = vand.u32 %v2790, 4294901760
      %2792 = vmatpush.msra.mxu0 %v2791
      %v2793 = vand.u32 %v2690, 4294901760
      %v2794 = vsub.f32 %v2690, %v2793
      %v2795 = vand.u32 %v2794, 4294901760
      %v2796 = vsub.f32 %v2794, %v2795
      %v2797 = vand.u32 %v2796, 4294901760
      %2798 = vmatpush.msra.mxu0 %v2797
      %v2799 = vand.u32 %v2688, 4294901760
      %v2800 = vsub.f32 %v2688, %v2799
      %v2801 = vand.u32 %v2800, 4294901760
      %v2802 = vsub.f32 %v2800, %v2801
      %v2803 = vand.u32 %v2802, 4294901760
      %2804 = vmatpush.msra.mxu0 %v2803
      %v2805 = vand.u32 %v2686, 4294901760
      %v2806 = vsub.f32 %v2686, %v2805
      %v2807 = vand.u32 %v2806, 4294901760
      %v2808 = vsub.f32 %v2806, %v2807
      %v2809 = vand.u32 %v2808, 4294901760
      %2810 = vmatpush.msra.mxu0 %v2809
      %v2811 = vand.u32 %v2684, 4294901760
      %v2812 = vsub.f32 %v2684, %v2811
      %v2813 = vand.u32 %v2812, 4294901760
      %v2814 = vsub.f32 %v2812, %v2813
      %v2815 = vand.u32 %v2814, 4294901760
      %2816 = vmatpush.msra.mxu0 %v2815
      %v2817 = vand.u32 %v2682, 4294901760
      %v2818 = vsub.f32 %v2682, %v2817
      %v2819 = vand.u32 %v2818, 4294901760
      %v2820 = vsub.f32 %v2818, %v2819
      %v2821 = vand.u32 %v2820, 4294901760
      %2822 = vmatpush.msra.mxu0 %v2821
      %v2823 = vand.u32 %v2699, 4294901760
      %2824 = vmatmul.f32.gmra.mxu0 %v2823
      %v2825 = vpop.f32.mrf.mxu0
      %v2826 = vadd.f32 %v2741, %v2825
      %v2827 = vand.u32 %v2702, 4294901760
      %2828 = vmatmul.f32.gmra.mxu0 %v2827
      %v2829 = vpop.f32.mrf.mxu0
      %v2830 = vadd.f32 %v2749, %v2829
      %v2831 = vand.u32 %v2705, 4294901760
      %2832 = vmatmul.f32.gmra.mxu0 %v2831
      %v2833 = vpop.f32.mrf.mxu0
      %v2834 = vadd.f32 %v2757, %v2833
      %v2835 = vand.u32 %v2708, 4294901760
      %2836 = vmatmul.f32.gmra.mxu0 %v2835
      %v2837 = vpop.f32.mrf.mxu0
      %v2838 = vadd.f32 %v2765, %v2837
      %2839 = vdwg.mxu0
      %2840 = vmatpush.msra.mxu0 0.0
      %2841 = vmatpush.msra.mxu0 0.0
      %2842 = vmatpush.msra.mxu0 0.0
      %2843 = vmatpush.msra.mxu0 0.0
      %2844 = vmatpush.msra.mxu0 0.0
      %2845 = vmatpush.msra.mxu0 0.0
      %2846 = vmatpush.msra.mxu0 0.0
      %2847 = vmatpush.msra.mxu0 0.0
      %v2848 = vand.u32 %v2696, 4294901760
      %v2849 = vsub.f32 %v2696, %v2848
      %2850 = vmatpush.msra.mxu0 %v2849
      %v2851 = vand.u32 %v2694, 4294901760
      %v2852 = vsub.f32 %v2694, %v2851
      %2853 = vmatpush.msra.mxu0 %v2852
      %v2854 = vand.u32 %v2692, 4294901760
      %v2855 = vsub.f32 %v2692, %v2854
      %2856 = vmatpush.msra.mxu0 %v2855
      %v2857 = vand.u32 %v2690, 4294901760
      %v2858 = vsub.f32 %v2690, %v2857
      %2859 = vmatpush.msra.mxu0 %v2858
      %v2860 = vand.u32 %v2688, 4294901760
      %v2861 = vsub.f32 %v2688, %v2860
      %2862 = vmatpush.msra.mxu0 %v2861
      %v2863 = vand.u32 %v2686, 4294901760
      %v2864 = vsub.f32 %v2686, %v2863
      %2865 = vmatpush.msra.mxu0 %v2864
      %v2866 = vand.u32 %v2684, 4294901760
      %v2867 = vsub.f32 %v2684, %v2866
      %2868 = vmatpush.msra.mxu0 %v2867
      %v2869 = vand.u32 %v2682, 4294901760
      %v2870 = vsub.f32 %v2682, %v2869
      %2871 = vmatpush.msra.mxu0 %v2870
      %v2872 = vand.u32 %v2699, 4294901760
      %v2873 = vsub.f32 %v2699, %v2872
      %2874 = vmatmul.f32.gmra.mxu0 %v2873
      %v2875 = vpop.f32.mrf.mxu0
      %v2876 = vadd.f32 %v2826, %v2875
      %v2877 = vand.u32 %v2702, 4294901760
      %v2878 = vsub.f32 %v2702, %v2877
      %2879 = vmatmul.f32.gmra.mxu0 %v2878
      %v2880 = vpop.f32.mrf.mxu0
      %v2881 = vadd.f32 %v2830, %v2880
      %v2882 = vand.u32 %v2705, 4294901760
      %v2883 = vsub.f32 %v2705, %v2882
      %2884 = vmatmul.f32.gmra.mxu0 %v2883
      %v2885 = vpop.f32.mrf.mxu0
      %v2886 = vadd.f32 %v2834, %v2885
      %v2887 = vand.u32 %v2708, 4294901760
      %v2888 = vsub.f32 %v2708, %v2887
      %2889 = vmatmul.f32.gmra.mxu0 %v2888
      %v2890 = vpop.f32.mrf.mxu0
      %v2891 = vadd.f32 %v2838, %v2890
      %2892 = vdwg.mxu0
      %2893 = vmatpush.msra.mxu0 0.0
      %2894 = vmatpush.msra.mxu0 0.0
      %2895 = vmatpush.msra.mxu0 0.0
      %2896 = vmatpush.msra.mxu0 0.0
      %2897 = vmatpush.msra.mxu0 0.0
      %2898 = vmatpush.msra.mxu0 0.0
      %2899 = vmatpush.msra.mxu0 0.0
      %2900 = vmatpush.msra.mxu0 0.0
      %v2901 = vand.u32 %v2696, 4294901760
      %2902 = vmatpush.msra.mxu0 %v2901
      %v2903 = vand.u32 %v2694, 4294901760
      %2904 = vmatpush.msra.mxu0 %v2903
      %v2905 = vand.u32 %v2692, 4294901760
      %2906 = vmatpush.msra.mxu0 %v2905
      %v2907 = vand.u32 %v2690, 4294901760
      %2908 = vmatpush.msra.mxu0 %v2907
      %v2909 = vand.u32 %v2688, 4294901760
      %2910 = vmatpush.msra.mxu0 %v2909
      %v2911 = vand.u32 %v2686, 4294901760
      %2912 = vmatpush.msra.mxu0 %v2911
      %v2913 = vand.u32 %v2684, 4294901760
      %2914 = vmatpush.msra.mxu0 %v2913
      %v2915 = vand.u32 %v2682, 4294901760
      %2916 = vmatpush.msra.mxu0 %v2915
      %v2917 = vand.u32 %v2699, 4294901760
      %v2918 = vsub.f32 %v2699, %v2917
      %v2919 = vand.u32 %v2918, 4294901760
      %2920 = vmatmul.f32.gmra.mxu0 %v2919
      %v2921 = vpop.f32.mrf.mxu0
      %v2922 = vadd.f32 %v2876, %v2921
      %v2923 = vand.u32 %v2702, 4294901760
      %v2924 = vsub.f32 %v2702, %v2923
      %v2925 = vand.u32 %v2924, 4294901760
      %2926 = vmatmul.f32.gmra.mxu0 %v2925
      %v2927 = vpop.f32.mrf.mxu0
      %v2928 = vadd.f32 %v2881, %v2927
      %v2929 = vand.u32 %v2705, 4294901760
      %v2930 = vsub.f32 %v2705, %v2929
      %v2931 = vand.u32 %v2930, 4294901760
      %2932 = vmatmul.f32.gmra.mxu0 %v2931
      %v2933 = vpop.f32.mrf.mxu0
      %v2934 = vadd.f32 %v2886, %v2933
      %v2935 = vand.u32 %v2708, 4294901760
      %v2936 = vsub.f32 %v2708, %v2935
      %v2937 = vand.u32 %v2936, 4294901760
      %2938 = vmatmul.f32.gmra.mxu0 %v2937
      %v2939 = vpop.f32.mrf.mxu0
      %v2940 = vadd.f32 %v2891, %v2939
      %2941 = vdwg.mxu0
      %2942 = vmatpush.msra.mxu0 0.0
      %2943 = vmatpush.msra.mxu0 0.0
      %2944 = vmatpush.msra.mxu0 0.0
      %2945 = vmatpush.msra.mxu0 0.0
      %2946 = vmatpush.msra.mxu0 0.0
      %2947 = vmatpush.msra.mxu0 0.0
      %2948 = vmatpush.msra.mxu0 0.0
      %2949 = vmatpush.msra.mxu0 0.0
      %v2950 = vand.u32 %v2696, 4294901760
      %v2951 = vsub.f32 %v2696, %v2950
      %v2952 = vand.u32 %v2951, 4294901760
      %2953 = vmatpush.msra.mxu0 %v2952
      %v2954 = vand.u32 %v2694, 4294901760
      %v2955 = vsub.f32 %v2694, %v2954
      %v2956 = vand.u32 %v2955, 4294901760
      %2957 = vmatpush.msra.mxu0 %v2956
      %v2958 = vand.u32 %v2692, 4294901760
      %v2959 = vsub.f32 %v2692, %v2958
      %v2960 = vand.u32 %v2959, 4294901760
      %2961 = vmatpush.msra.mxu0 %v2960
      %v2962 = vand.u32 %v2690, 4294901760
      %v2963 = vsub.f32 %v2690, %v2962
      %v2964 = vand.u32 %v2963, 4294901760
      %2965 = vmatpush.msra.mxu0 %v2964
      %v2966 = vand.u32 %v2688, 4294901760
      %v2967 = vsub.f32 %v2688, %v2966
      %v2968 = vand.u32 %v2967, 4294901760
      %2969 = vmatpush.msra.mxu0 %v2968
      %v2970 = vand.u32 %v2686, 4294901760
      %v2971 = vsub.f32 %v2686, %v2970
      %v2972 = vand.u32 %v2971, 4294901760
      %2973 = vmatpush.msra.mxu0 %v2972
      %v2974 = vand.u32 %v2684, 4294901760
      %v2975 = vsub.f32 %v2684, %v2974
      %v2976 = vand.u32 %v2975, 4294901760
      %2977 = vmatpush.msra.mxu0 %v2976
      %v2978 = vand.u32 %v2682, 4294901760
      %v2979 = vsub.f32 %v2682, %v2978
      %v2980 = vand.u32 %v2979, 4294901760
      %2981 = vmatpush.msra.mxu0 %v2980
      %v2982 = vand.u32 %v2699, 4294901760
      %2983 = vmatmul.f32.gmra.mxu0 %v2982
      %v2984 = vpop.f32.mrf.mxu0
      %v2985 = vadd.f32 %v2922, %v2984
      %v2986 = vand.u32 %v2702, 4294901760
      %2987 = vmatmul.f32.gmra.mxu0 %v2986
      %v2988 = vpop.f32.mrf.mxu0
      %v2989 = vadd.f32 %v2928, %v2988
      %v2990 = vand.u32 %v2705, 4294901760
      %2991 = vmatmul.f32.gmra.mxu0 %v2990
      %v2992 = vpop.f32.mrf.mxu0
      %v2993 = vadd.f32 %v2934, %v2992
      %v2994 = vand.u32 %v2708, 4294901760
      %2995 = vmatmul.f32.gmra.mxu0 %v2994
      %v2996 = vpop.f32.mrf.mxu0
      %v2997 = vadd.f32 %v2940, %v2996
      %2998 = vdwg.mxu0
      %2999 = vmatpush.msra.mxu0 0.0
      %3000 = vmatpush.msra.mxu0 0.0
      %3001 = vmatpush.msra.mxu0 0.0
      %3002 = vmatpush.msra.mxu0 0.0
      %3003 = vmatpush.msra.mxu0 0.0
      %3004 = vmatpush.msra.mxu0 0.0
      %3005 = vmatpush.msra.mxu0 0.0
      %3006 = vmatpush.msra.mxu0 0.0
      %v3007 = vand.u32 %v2696, 4294901760
      %3008 = vmatpush.msra.mxu0 %v3007
      %v3009 = vand.u32 %v2694, 4294901760
      %3010 = vmatpush.msra.mxu0 %v3009
      %v3011 = vand.u32 %v2692, 4294901760
      %3012 = vmatpush.msra.mxu0 %v3011
      %v3013 = vand.u32 %v2690, 4294901760
      %3014 = vmatpush.msra.mxu0 %v3013
      %v3015 = vand.u32 %v2688, 4294901760
      %3016 = vmatpush.msra.mxu0 %v3015
      %v3017 = vand.u32 %v2686, 4294901760
      %3018 = vmatpush.msra.mxu0 %v3017
      %v3019 = vand.u32 %v2684, 4294901760
      %3020 = vmatpush.msra.mxu0 %v3019
      %v3021 = vand.u32 %v2682, 4294901760
      %3022 = vmatpush.msra.mxu0 %v3021
      %v3023 = vand.u32 %v2699, 4294901760
      %3024 = vmatmul.f32.gmra.mxu0 %v3023
      %v3025 = vpop.f32.mrf.mxu0
      %v3026 = vadd.f32 %v2985, %v3025
      %v3027 = vand.u32 %v2702, 4294901760
      %3028 = vmatmul.f32.gmra.mxu0 %v3027
      %v3029 = vpop.f32.mrf.mxu0
      %v3030 = vadd.f32 %v2989, %v3029
      %v3031 = vand.u32 %v2705, 4294901760
      %3032 = vmatmul.f32.gmra.mxu0 %v3031
      %v3033 = vpop.f32.mrf.mxu0
      %v3034 = vadd.f32 %v2993, %v3033
      %v3035 = vand.u32 %v2708, 4294901760
      %3036 = vmatmul.f32.gmra.mxu0 %v3035
      %v3037 = vpop.f32.mrf.mxu0
      %v3038 = vadd.f32 %v2997, %v3037
      %3039 = vdwg.mxu0
      %3040 = vmatpush.msra.mxu0 0.0
      %3041 = vmatpush.msra.mxu0 0.0
      %3042 = vmatpush.msra.mxu0 0.0
      %3043 = vmatpush.msra.mxu0 0.0
      %3044 = vmatpush.msra.mxu0 0.0
      %3045 = vmatpush.msra.mxu0 0.0
      %3046 = vmatpush.msra.mxu0 0.0
      %3047 = vmatpush.msra.mxu0 0.0
      %v3048 = vand.u32 %v2697, 4294901760
      %3049 = vmatpush.msra.mxu0 %v3048
      %v3050 = vand.u32 %v2695, 4294901760
      %3051 = vmatpush.msra.mxu0 %v3050
      %v3052 = vand.u32 %v2693, 4294901760
      %3053 = vmatpush.msra.mxu0 %v3052
      %v3054 = vand.u32 %v2691, 4294901760
      %3055 = vmatpush.msra.mxu0 %v3054
      %v3056 = vand.u32 %v2689, 4294901760
      %3057 = vmatpush.msra.mxu0 %v3056
      %v3058 = vand.u32 %v2687, 4294901760
      %3059 = vmatpush.msra.mxu0 %v3058
      %v3060 = vand.u32 %v2685, 4294901760
      %3061 = vmatpush.msra.mxu0 %v3060
      %v3062 = vand.u32 %v2683, 4294901760
      %3063 = vmatpush.msra.mxu0 %v3062
      %v3064 = vand.u32 %v2699, 4294901760
      %v3065 = vsub.f32 %v2699, %v3064
      %v3066 = vand.u32 %v3065, 4294901760
      %v3067 = vsub.f32 %v3065, %v3066
      %v3068 = vand.u32 %v3067, 4294901760
      %3069 = vmatmul.f32.gmra.mxu0 %v3068
      %v3070 = vpop.f32.mrf.mxu0
      %v3071 = vadd.f32 0.0, %v3070
      %v3072 = vand.u32 %v2702, 4294901760
      %v3073 = vsub.f32 %v2702, %v3072
      %v3074 = vand.u32 %v3073, 4294901760
      %v3075 = vsub.f32 %v3073, %v3074
      %v3076 = vand.u32 %v3075, 4294901760
      %3077 = vmatmul.f32.gmra.mxu0 %v3076
      %v3078 = vpop.f32.mrf.mxu0
      %v3079 = vadd.f32 0.0, %v3078
      %v3080 = vand.u32 %v2705, 4294901760
      %v3081 = vsub.f32 %v2705, %v3080
      %v3082 = vand.u32 %v3081, 4294901760
      %v3083 = vsub.f32 %v3081, %v3082
      %v3084 = vand.u32 %v3083, 4294901760
      %3085 = vmatmul.f32.gmra.mxu0 %v3084
      %v3086 = vpop.f32.mrf.mxu0
      %v3087 = vadd.f32 0.0, %v3086
      %v3088 = vand.u32 %v2708, 4294901760
      %v3089 = vsub.f32 %v2708, %v3088
      %v3090 = vand.u32 %v3089, 4294901760
      %v3091 = vsub.f32 %v3089, %v3090
      %v3092 = vand.u32 %v3091, 4294901760
      %3093 = vmatmul.f32.gmra.mxu0 %v3092
      %v3094 = vpop.f32.mrf.mxu0
      %v3095 = vadd.f32 0.0, %v3094
      %3096 = vdwg.mxu0
      %3097 = vmatpush.msra.mxu0 0.0
      %3098 = vmatpush.msra.mxu0 0.0
      %3099 = vmatpush.msra.mxu0 0.0
      %3100 = vmatpush.msra.mxu0 0.0
      %3101 = vmatpush.msra.mxu0 0.0
      %3102 = vmatpush.msra.mxu0 0.0
      %3103 = vmatpush.msra.mxu0 0.0
      %3104 = vmatpush.msra.mxu0 0.0
      %v3105 = vand.u32 %v2697, 4294901760
      %v3106 = vsub.f32 %v2697, %v3105
      %v3107 = vand.u32 %v3106, 4294901760
      %v3108 = vsub.f32 %v3106, %v3107
      %v3109 = vand.u32 %v3108, 4294901760
      %3110 = vmatpush.msra.mxu0 %v3109
      %v3111 = vand.u32 %v2695, 4294901760
      %v3112 = vsub.f32 %v2695, %v3111
      %v3113 = vand.u32 %v3112, 4294901760
      %v3114 = vsub.f32 %v3112, %v3113
      %v3115 = vand.u32 %v3114, 4294901760
      %3116 = vmatpush.msra.mxu0 %v3115
      %v3117 = vand.u32 %v2693, 4294901760
      %v3118 = vsub.f32 %v2693, %v3117
      %v3119 = vand.u32 %v3118, 4294901760
      %v3120 = vsub.f32 %v3118, %v3119
      %v3121 = vand.u32 %v3120, 4294901760
      %3122 = vmatpush.msra.mxu0 %v3121
      %v3123 = vand.u32 %v2691, 4294901760
      %v3124 = vsub.f32 %v2691, %v3123
      %v3125 = vand.u32 %v3124, 4294901760
      %v3126 = vsub.f32 %v3124, %v3125
      %v3127 = vand.u32 %v3126, 4294901760
      %3128 = vmatpush.msra.mxu0 %v3127
      %v3129 = vand.u32 %v2689, 4294901760
      %v3130 = vsub.f32 %v2689, %v3129
      %v3131 = vand.u32 %v3130, 4294901760
      %v3132 = vsub.f32 %v3130, %v3131
      %v3133 = vand.u32 %v3132, 4294901760
      %3134 = vmatpush.msra.mxu0 %v3133
      %v3135 = vand.u32 %v2687, 4294901760
      %v3136 = vsub.f32 %v2687, %v3135
      %v3137 = vand.u32 %v3136, 4294901760
      %v3138 = vsub.f32 %v3136, %v3137
      %v3139 = vand.u32 %v3138, 4294901760
      %3140 = vmatpush.msra.mxu0 %v3139
      %v3141 = vand.u32 %v2685, 4294901760
      %v3142 = vsub.f32 %v2685, %v3141
      %v3143 = vand.u32 %v3142, 4294901760
      %v3144 = vsub.f32 %v3142, %v3143
      %v3145 = vand.u32 %v3144, 4294901760
      %3146 = vmatpush.msra.mxu0 %v3145
      %v3147 = vand.u32 %v2683, 4294901760
      %v3148 = vsub.f32 %v2683, %v3147
      %v3149 = vand.u32 %v3148, 4294901760
      %v3150 = vsub.f32 %v3148, %v3149
      %v3151 = vand.u32 %v3150, 4294901760
      %3152 = vmatpush.msra.mxu0 %v3151
      %v3153 = vand.u32 %v2699, 4294901760
      %3154 = vmatmul.f32.gmra.mxu0 %v3153
      %v3155 = vpop.f32.mrf.mxu0
      %v3156 = vadd.f32 %v3071, %v3155
      %v3157 = vand.u32 %v2702, 4294901760
      %3158 = vmatmul.f32.gmra.mxu0 %v3157
      %v3159 = vpop.f32.mrf.mxu0
      %v3160 = vadd.f32 %v3079, %v3159
      %v3161 = vand.u32 %v2705, 4294901760
      %3162 = vmatmul.f32.gmra.mxu0 %v3161
      %v3163 = vpop.f32.mrf.mxu0
      %v3164 = vadd.f32 %v3087, %v3163
      %v3165 = vand.u32 %v2708, 4294901760
      %3166 = vmatmul.f32.gmra.mxu0 %v3165
      %v3167 = vpop.f32.mrf.mxu0
      %v3168 = vadd.f32 %v3095, %v3167
      %3169 = vdwg.mxu0
      %3170 = vmatpush.msra.mxu0 0.0
      %3171 = vmatpush.msra.mxu0 0.0
      %3172 = vmatpush.msra.mxu0 0.0
      %3173 = vmatpush.msra.mxu0 0.0
      %3174 = vmatpush.msra.mxu0 0.0
      %3175 = vmatpush.msra.mxu0 0.0
      %3176 = vmatpush.msra.mxu0 0.0
      %3177 = vmatpush.msra.mxu0 0.0
      %v3178 = vand.u32 %v2697, 4294901760
      %v3179 = vsub.f32 %v2697, %v3178
      %3180 = vmatpush.msra.mxu0 %v3179
      %v3181 = vand.u32 %v2695, 4294901760
      %v3182 = vsub.f32 %v2695, %v3181
      %3183 = vmatpush.msra.mxu0 %v3182
      %v3184 = vand.u32 %v2693, 4294901760
      %v3185 = vsub.f32 %v2693, %v3184
      %3186 = vmatpush.msra.mxu0 %v3185
      %v3187 = vand.u32 %v2691, 4294901760
      %v3188 = vsub.f32 %v2691, %v3187
      %3189 = vmatpush.msra.mxu0 %v3188
      %v3190 = vand.u32 %v2689, 4294901760
      %v3191 = vsub.f32 %v2689, %v3190
      %3192 = vmatpush.msra.mxu0 %v3191
      %v3193 = vand.u32 %v2687, 4294901760
      %v3194 = vsub.f32 %v2687, %v3193
      %3195 = vmatpush.msra.mxu0 %v3194
      %v3196 = vand.u32 %v2685, 4294901760
      %v3197 = vsub.f32 %v2685, %v3196
      %3198 = vmatpush.msra.mxu0 %v3197
      %v3199 = vand.u32 %v2683, 4294901760
      %v3200 = vsub.f32 %v2683, %v3199
      %3201 = vmatpush.msra.mxu0 %v3200
      %v3202 = vand.u32 %v2699, 4294901760
      %v3203 = vsub.f32 %v2699, %v3202
      %3204 = vmatmul.f32.gmra.mxu0 %v3203
      %v3205 = vpop.f32.mrf.mxu0
      %v3206 = vadd.f32 %v3156, %v3205
      %v3207 = vand.u32 %v2702, 4294901760
      %v3208 = vsub.f32 %v2702, %v3207
      %3209 = vmatmul.f32.gmra.mxu0 %v3208
      %v3210 = vpop.f32.mrf.mxu0
      %v3211 = vadd.f32 %v3160, %v3210
      %v3212 = vand.u32 %v2705, 4294901760
      %v3213 = vsub.f32 %v2705, %v3212
      %3214 = vmatmul.f32.gmra.mxu0 %v3213
      %v3215 = vpop.f32.mrf.mxu0
      %v3216 = vadd.f32 %v3164, %v3215
      %v3217 = vand.u32 %v2708, 4294901760
      %v3218 = vsub.f32 %v2708, %v3217
      %3219 = vmatmul.f32.gmra.mxu0 %v3218
      %v3220 = vpop.f32.mrf.mxu0
      %v3221 = vadd.f32 %v3168, %v3220
      %3222 = vdwg.mxu0
      %3223 = vmatpush.msra.mxu0 0.0
      %3224 = vmatpush.msra.mxu0 0.0
      %3225 = vmatpush.msra.mxu0 0.0
      %3226 = vmatpush.msra.mxu0 0.0
      %3227 = vmatpush.msra.mxu0 0.0
      %3228 = vmatpush.msra.mxu0 0.0
      %3229 = vmatpush.msra.mxu0 0.0
      %3230 = vmatpush.msra.mxu0 0.0
      %v3231 = vand.u32 %v2697, 4294901760
      %3232 = vmatpush.msra.mxu0 %v3231
      %v3233 = vand.u32 %v2695, 4294901760
      %3234 = vmatpush.msra.mxu0 %v3233
      %v3235 = vand.u32 %v2693, 4294901760
      %3236 = vmatpush.msra.mxu0 %v3235
      %v3237 = vand.u32 %v2691, 4294901760
      %3238 = vmatpush.msra.mxu0 %v3237
      %v3239 = vand.u32 %v2689, 4294901760
      %3240 = vmatpush.msra.mxu0 %v3239
      %v3241 = vand.u32 %v2687, 4294901760
      %3242 = vmatpush.msra.mxu0 %v3241
      %v3243 = vand.u32 %v2685, 4294901760
      %3244 = vmatpush.msra.mxu0 %v3243
      %v3245 = vand.u32 %v2683, 4294901760
      %3246 = vmatpush.msra.mxu0 %v3245
      %v3247 = vand.u32 %v2699, 4294901760
      %v3248 = vsub.f32 %v2699, %v3247
      %v3249 = vand.u32 %v3248, 4294901760
      %3250 = vmatmul.f32.gmra.mxu0 %v3249
      %v3251 = vpop.f32.mrf.mxu0
      %v3252 = vadd.f32 %v3206, %v3251
      %v3253 = vand.u32 %v2702, 4294901760
      %v3254 = vsub.f32 %v2702, %v3253
      %v3255 = vand.u32 %v3254, 4294901760
      %3256 = vmatmul.f32.gmra.mxu0 %v3255
      %v3257 = vpop.f32.mrf.mxu0
      %v3258 = vadd.f32 %v3211, %v3257
      %v3259 = vand.u32 %v2705, 4294901760
      %v3260 = vsub.f32 %v2705, %v3259
      %v3261 = vand.u32 %v3260, 4294901760
      %3262 = vmatmul.f32.gmra.mxu0 %v3261
      %v3263 = vpop.f32.mrf.mxu0
      %v3264 = vadd.f32 %v3216, %v3263
      %v3265 = vand.u32 %v2708, 4294901760
      %v3266 = vsub.f32 %v2708, %v3265
      %v3267 = vand.u32 %v3266, 4294901760
      %3268 = vmatmul.f32.gmra.mxu0 %v3267
      %v3269 = vpop.f32.mrf.mxu0
      %v3270 = vadd.f32 %v3221, %v3269
      %3271 = vdwg.mxu0
      %3272 = vmatpush.msra.mxu0 0.0
      %3273 = vmatpush.msra.mxu0 0.0
      %3274 = vmatpush.msra.mxu0 0.0
      %3275 = vmatpush.msra.mxu0 0.0
      %3276 = vmatpush.msra.mxu0 0.0
      %3277 = vmatpush.msra.mxu0 0.0
      %3278 = vmatpush.msra.mxu0 0.0
      %3279 = vmatpush.msra.mxu0 0.0
      %v3280 = vand.u32 %v2697, 4294901760
      %v3281 = vsub.f32 %v2697, %v3280
      %v3282 = vand.u32 %v3281, 4294901760
      %3283 = vmatpush.msra.mxu0 %v3282
      %v3284 = vand.u32 %v2695, 4294901760
      %v3285 = vsub.f32 %v2695, %v3284
      %v3286 = vand.u32 %v3285, 4294901760
      %3287 = vmatpush.msra.mxu0 %v3286
      %v3288 = vand.u32 %v2693, 4294901760
      %v3289 = vsub.f32 %v2693, %v3288
      %v3290 = vand.u32 %v3289, 4294901760
      %3291 = vmatpush.msra.mxu0 %v3290
      %v3292 = vand.u32 %v2691, 4294901760
      %v3293 = vsub.f32 %v2691, %v3292
      %v3294 = vand.u32 %v3293, 4294901760
      %3295 = vmatpush.msra.mxu0 %v3294
      %v3296 = vand.u32 %v2689, 4294901760
      %v3297 = vsub.f32 %v2689, %v3296
      %v3298 = vand.u32 %v3297, 4294901760
      %3299 = vmatpush.msra.mxu0 %v3298
      %v3300 = vand.u32 %v2687, 4294901760
      %v3301 = vsub.f32 %v2687, %v3300
      %v3302 = vand.u32 %v3301, 4294901760
      %3303 = vmatpush.msra.mxu0 %v3302
      %v3304 = vand.u32 %v2685, 4294901760
      %v3305 = vsub.f32 %v2685, %v3304
      %v3306 = vand.u32 %v3305, 4294901760
      %3307 = vmatpush.msra.mxu0 %v3306
      %v3308 = vand.u32 %v2683, 4294901760
      %v3309 = vsub.f32 %v2683, %v3308
      %v3310 = vand.u32 %v3309, 4294901760
      %3311 = vmatpush.msra.mxu0 %v3310
      %v3312 = vand.u32 %v2699, 4294901760
      %3313 = vmatmul.f32.gmra.mxu0 %v3312
      %v3314 = vpop.f32.mrf.mxu0
      %v3315 = vadd.f32 %v3252, %v3314
      %v3316 = vand.u32 %v2702, 4294901760
      %3317 = vmatmul.f32.gmra.mxu0 %v3316
      %v3318 = vpop.f32.mrf.mxu0
      %v3319 = vadd.f32 %v3258, %v3318
      %v3320 = vand.u32 %v2705, 4294901760
      %3321 = vmatmul.f32.gmra.mxu0 %v3320
      %v3322 = vpop.f32.mrf.mxu0
      %v3323 = vadd.f32 %v3264, %v3322
      %v3324 = vand.u32 %v2708, 4294901760
      %3325 = vmatmul.f32.gmra.mxu0 %v3324
      %v3326 = vpop.f32.mrf.mxu0
      %v3327 = vadd.f32 %v3270, %v3326
      %3328 = vdwg.mxu0
      %3329 = vmatpush.msra.mxu0 0.0
      %3330 = vmatpush.msra.mxu0 0.0
      %3331 = vmatpush.msra.mxu0 0.0
      %3332 = vmatpush.msra.mxu0 0.0
      %3333 = vmatpush.msra.mxu0 0.0
      %3334 = vmatpush.msra.mxu0 0.0
      %3335 = vmatpush.msra.mxu0 0.0
      %3336 = vmatpush.msra.mxu0 0.0
      %v3337 = vand.u32 %v2697, 4294901760
      %3338 = vmatpush.msra.mxu0 %v3337
      %v3339 = vand.u32 %v2695, 4294901760
      %3340 = vmatpush.msra.mxu0 %v3339
      %v3341 = vand.u32 %v2693, 4294901760
      %3342 = vmatpush.msra.mxu0 %v3341
      %v3343 = vand.u32 %v2691, 4294901760
      %3344 = vmatpush.msra.mxu0 %v3343
      %v3345 = vand.u32 %v2689, 4294901760
      %3346 = vmatpush.msra.mxu0 %v3345
      %v3347 = vand.u32 %v2687, 4294901760
      %3348 = vmatpush.msra.mxu0 %v3347
      %v3349 = vand.u32 %v2685, 4294901760
      %3350 = vmatpush.msra.mxu0 %v3349
      %v3351 = vand.u32 %v2683, 4294901760
      %3352 = vmatpush.msra.mxu0 %v3351
      %v3353 = vand.u32 %v2699, 4294901760
      %3354 = vmatmul.f32.gmra.mxu0 %v3353
      %v3355 = vpop.f32.mrf.mxu0
      %v3356 = vadd.f32 %v3315, %v3355
      %v3357 = vand.u32 %v2702, 4294901760
      %3358 = vmatmul.f32.gmra.mxu0 %v3357
      %v3359 = vpop.f32.mrf.mxu0
      %v3360 = vadd.f32 %v3319, %v3359
      %v3361 = vand.u32 %v2705, 4294901760
      %3362 = vmatmul.f32.gmra.mxu0 %v3361
      %v3363 = vpop.f32.mrf.mxu0
      %v3364 = vadd.f32 %v3323, %v3363
      %v3365 = vand.u32 %v2708, 4294901760
      %3366 = vmatmul.f32.gmra.mxu0 %v3365
      %v3367 = vpop.f32.mrf.mxu0
      %v3368 = vadd.f32 %v3327, %v3367
      %3369 = vdwg.mxu0
      %v3370 = vadd.f32 %v2633, %v3026
      %v3371 = vadd.f32 %v2634, %v3356
      %v3372 = vadd.f32 %v2635, %v3030
      %v3373 = vadd.f32 %v2636, %v3360
      %v3374 = vadd.f32 %v2637, %v3034
      %v3375 = vadd.f32 %v2638, %v3364
      %v3376 = vadd.f32 %v2639, %v3038
      %v3377 = vadd.f32 %v2640, %v3368
      %v3378 = vld [vmem:[%s3] sm:$0xff]
      %v3379 = vld [vmem:[%s3 + $0x8] sm:$0xff]
      %v3380 = vld [vmem:[%s3 + $0x10] sm:$0xff]
      %v3381 = vld [vmem:[%s3 + $0x18] sm:$0xff]
      %3383 = vset.pattern.permute.xlu0 0
      %3384 = vperm.xlu0 %3383, %v3378
      %v3385 = vpop.permute.xlu0 %3384
      %3388 = vset.pattern.permute.xlu0 0
      %3389 = vperm.xlu0 %3388, %v3379
      %v3390 = vpop.permute.xlu0 %3389
      %3393 = vset.pattern.permute.xlu0 0
      %3394 = vperm.xlu0 %3393, %v3380
      %v3395 = vpop.permute.xlu0 %3394
      %3398 = vset.pattern.permute.xlu0 0
      %3399 = vperm.xlu0 %3398, %v3381
      %v3400 = vpop.permute.xlu0 %3399
      %v3402 = vadd.f32 %v3370, %v3385
      %v3403 = vadd.f32 %v3371, %v3385
      %v3404 = vadd.f32 %v3372, %v3390
      %v3405 = vadd.f32 %v3373, %v3390
      %v3406 = vadd.f32 %v3374, %v3395
      %v3407 = vadd.f32 %v3375, %v3395
      %v3408 = vadd.f32 %v3376, %v3400
      %v3409 = vadd.f32 %v3377, %v3400
      %v3410 = vld [vmem:[%s5] sm:$0xff]
      %v3411 = vld [vmem:[%s5 + $0x8] sm:$0xff]
      %v3412 = vld [vmem:[%s5 + $0x10] sm:$0xff]
      %v3413 = vld [vmem:[%s5 + $0x18] sm:$0xff]
      %v3414 = vld [vmem:[%s6] sm:$0xff]
      %v3415 = vld [vmem:[%s6 + $0x8] sm:$0xff]
      %v3416 = vld [vmem:[%s6 + $0x10] sm:$0xff]
      %v3417 = vld [vmem:[%s6 + $0x18] sm:$0xff]
      %v3418 = vld [vmem:[%s428] sm:$0xff]
      %v3419 = vld [vmem:[%s428 + $0x8] sm:$0xff]
      %v3420 = vld [vmem:[%s428 + $0x10] sm:$0xff]
      %v3421 = vld [vmem:[%s428 + $0x18] sm:$0xff]
      %v3422 = vld [vmem:[%s428 + $0x20] sm:$0xff]
      %v3423 = vld [vmem:[%s428 + $0x28] sm:$0xff]
      %v3424 = vld [vmem:[%s428 + $0x30] sm:$0xff]
      %v3425 = vld [vmem:[%s428 + $0x38] sm:$0xff]
      %vm3426 = vcmask 261120
      %v3428 = vsel %vm3426, %v3414, 0
      %v3431 = vsel %vm3426, %v3415, 0
      %v3434 = vsel %vm3426, %v3416, 0
      %v3437 = vsel %vm3426, %v3417, 0
      %3439 = vmatpush.msra.mxu0 0.0
      %3440 = vmatpush.msra.mxu0 0.0
      %3441 = vmatpush.msra.mxu0 0.0
      %3442 = vmatpush.msra.mxu0 0.0
      %3443 = vmatpush.msra.mxu0 0.0
      %3444 = vmatpush.msra.mxu0 0.0
      %3445 = vmatpush.msra.mxu0 0.0
      %3446 = vmatpush.msra.mxu0 0.0
      %3447 = vmatpush.msra.mxu0 0.0
      %3448 = vmatpush.msra.mxu0 0.0
      %3449 = vmatpush.msra.mxu0 0.0
      %3450 = vmatpush.msra.mxu0 0.0
      %v3451 = vand.u32 %v3424, 4294901760
      %3452 = vmatpush.msra.mxu0 %v3451
      %v3453 = vand.u32 %v3422, 4294901760
      %3454 = vmatpush.msra.mxu0 %v3453
      %v3455 = vand.u32 %v3420, 4294901760
      %3456 = vmatpush.msra.mxu0 %v3455
      %v3457 = vand.u32 %v3418, 4294901760
      %3458 = vmatpush.msra.mxu0 %v3457
      %v3459 = vand.u32 %v3428, 4294901760
      %v3460 = vsub.f32 %v3428, %v3459
      %v3461 = vand.u32 %v3460, 4294901760
      %v3462 = vsub.f32 %v3460, %v3461
      %v3463 = vand.u32 %v3462, 4294901760
      %3464 = vmatmul.f32.gmra.mxu0 %v3463
      %v3465 = vpop.f32.mrf.mxu0
      %v3466 = vadd.f32 0.0, %v3465
      %v3467 = vand.u32 %v3431, 4294901760
      %v3468 = vsub.f32 %v3431, %v3467
      %v3469 = vand.u32 %v3468, 4294901760
      %v3470 = vsub.f32 %v3468, %v3469
      %v3471 = vand.u32 %v3470, 4294901760
      %3472 = vmatmul.f32.gmra.mxu0 %v3471
      %v3473 = vpop.f32.mrf.mxu0
      %v3474 = vadd.f32 0.0, %v3473
      %v3475 = vand.u32 %v3434, 4294901760
      %v3476 = vsub.f32 %v3434, %v3475
      %v3477 = vand.u32 %v3476, 4294901760
      %v3478 = vsub.f32 %v3476, %v3477
      %v3479 = vand.u32 %v3478, 4294901760
      %3480 = vmatmul.f32.gmra.mxu0 %v3479
      %v3481 = vpop.f32.mrf.mxu0
      %v3482 = vadd.f32 0.0, %v3481
      %v3483 = vand.u32 %v3437, 4294901760
      %v3484 = vsub.f32 %v3437, %v3483
      %v3485 = vand.u32 %v3484, 4294901760
      %v3486 = vsub.f32 %v3484, %v3485
      %v3487 = vand.u32 %v3486, 4294901760
      %3488 = vmatmul.f32.gmra.mxu0 %v3487
      %v3489 = vpop.f32.mrf.mxu0
      %v3490 = vadd.f32 0.0, %v3489
      %3491 = vdwg.mxu0
      %3492 = vmatpush.msra.mxu0 0.0
      %3493 = vmatpush.msra.mxu0 0.0
      %3494 = vmatpush.msra.mxu0 0.0
      %3495 = vmatpush.msra.mxu0 0.0
      %3496 = vmatpush.msra.mxu0 0.0
      %3497 = vmatpush.msra.mxu0 0.0
      %3498 = vmatpush.msra.mxu0 0.0
      %3499 = vmatpush.msra.mxu0 0.0
      %3500 = vmatpush.msra.mxu0 0.0
      %3501 = vmatpush.msra.mxu0 0.0
      %3502 = vmatpush.msra.mxu0 0.0
      %3503 = vmatpush.msra.mxu0 0.0
      %v3504 = vand.u32 %v3424, 4294901760
      %v3505 = vsub.f32 %v3424, %v3504
      %v3506 = vand.u32 %v3505, 4294901760
      %v3507 = vsub.f32 %v3505, %v3506
      %v3508 = vand.u32 %v3507, 4294901760
      %3509 = vmatpush.msra.mxu0 %v3508
      %v3510 = vand.u32 %v3422, 4294901760
      %v3511 = vsub.f32 %v3422, %v3510
      %v3512 = vand.u32 %v3511, 4294901760
      %v3513 = vsub.f32 %v3511, %v3512
      %v3514 = vand.u32 %v3513, 4294901760
      %3515 = vmatpush.msra.mxu0 %v3514
      %v3516 = vand.u32 %v3420, 4294901760
      %v3517 = vsub.f32 %v3420, %v3516
      %v3518 = vand.u32 %v3517, 4294901760
      %v3519 = vsub.f32 %v3517, %v3518
      %v3520 = vand.u32 %v3519, 4294901760
      %3521 = vmatpush.msra.mxu0 %v3520
      %v3522 = vand.u32 %v3418, 4294901760
      %v3523 = vsub.f32 %v3418, %v3522
      %v3524 = vand.u32 %v3523, 4294901760
      %v3525 = vsub.f32 %v3523, %v3524
      %v3526 = vand.u32 %v3525, 4294901760
      %3527 = vmatpush.msra.mxu0 %v3526
      %v3528 = vand.u32 %v3428, 4294901760
      %3529 = vmatmul.f32.gmra.mxu0 %v3528
      %v3530 = vpop.f32.mrf.mxu0
      %v3531 = vadd.f32 %v3466, %v3530
      %v3532 = vand.u32 %v3431, 4294901760
      %3533 = vmatmul.f32.gmra.mxu0 %v3532
      %v3534 = vpop.f32.mrf.mxu0
      %v3535 = vadd.f32 %v3474, %v3534
      %v3536 = vand.u32 %v3434, 4294901760
      %3537 = vmatmul.f32.gmra.mxu0 %v3536
      %v3538 = vpop.f32.mrf.mxu0
      %v3539 = vadd.f32 %v3482, %v3538
      %v3540 = vand.u32 %v3437, 4294901760
      %3541 = vmatmul.f32.gmra.mxu0 %v3540
      %v3542 = vpop.f32.mrf.mxu0
      %v3543 = vadd.f32 %v3490, %v3542
      %3544 = vdwg.mxu0
      %3545 = vmatpush.msra.mxu0 0.0
      %3546 = vmatpush.msra.mxu0 0.0
      %3547 = vmatpush.msra.mxu0 0.0
      %3548 = vmatpush.msra.mxu0 0.0
      %3549 = vmatpush.msra.mxu0 0.0
      %3550 = vmatpush.msra.mxu0 0.0
      %3551 = vmatpush.msra.mxu0 0.0
      %3552 = vmatpush.msra.mxu0 0.0
      %3553 = vmatpush.msra.mxu0 0.0
      %3554 = vmatpush.msra.mxu0 0.0
      %3555 = vmatpush.msra.mxu0 0.0
      %3556 = vmatpush.msra.mxu0 0.0
      %v3557 = vand.u32 %v3424, 4294901760
      %v3558 = vsub.f32 %v3424, %v3557
      %3559 = vmatpush.msra.mxu0 %v3558
      %v3560 = vand.u32 %v3422, 4294901760
      %v3561 = vsub.f32 %v3422, %v3560
      %3562 = vmatpush.msra.mxu0 %v3561
      %v3563 = vand.u32 %v3420, 4294901760
      %v3564 = vsub.f32 %v3420, %v3563
      %3565 = vmatpush.msra.mxu0 %v3564
      %v3566 = vand.u32 %v3418, 4294901760
      %v3567 = vsub.f32 %v3418, %v3566
      %3568 = vmatpush.msra.mxu0 %v3567
      %v3569 = vand.u32 %v3428, 4294901760
      %v3570 = vsub.f32 %v3428, %v3569
      %3571 = vmatmul.f32.gmra.mxu0 %v3570
      %v3572 = vpop.f32.mrf.mxu0
      %v3573 = vadd.f32 %v3531, %v3572
      %v3574 = vand.u32 %v3431, 4294901760
      %v3575 = vsub.f32 %v3431, %v3574
      %3576 = vmatmul.f32.gmra.mxu0 %v3575
      %v3577 = vpop.f32.mrf.mxu0
      %v3578 = vadd.f32 %v3535, %v3577
      %v3579 = vand.u32 %v3434, 4294901760
      %v3580 = vsub.f32 %v3434, %v3579
      %3581 = vmatmul.f32.gmra.mxu0 %v3580
      %v3582 = vpop.f32.mrf.mxu0
      %v3583 = vadd.f32 %v3539, %v3582
      %v3584 = vand.u32 %v3437, 4294901760
      %v3585 = vsub.f32 %v3437, %v3584
      %3586 = vmatmul.f32.gmra.mxu0 %v3585
      %v3587 = vpop.f32.mrf.mxu0
      %v3588 = vadd.f32 %v3543, %v3587
      %3589 = vdwg.mxu0
      %3590 = vmatpush.msra.mxu0 0.0
      %3591 = vmatpush.msra.mxu0 0.0
      %3592 = vmatpush.msra.mxu0 0.0
      %3593 = vmatpush.msra.mxu0 0.0
      %3594 = vmatpush.msra.mxu0 0.0
      %3595 = vmatpush.msra.mxu0 0.0
      %3596 = vmatpush.msra.mxu0 0.0
      %3597 = vmatpush.msra.mxu0 0.0
      %3598 = vmatpush.msra.mxu0 0.0
      %3599 = vmatpush.msra.mxu0 0.0
      %3600 = vmatpush.msra.mxu0 0.0
      %3601 = vmatpush.msra.mxu0 0.0
      %v3602 = vand.u32 %v3424, 4294901760
      %3603 = vmatpush.msra.mxu0 %v3602
      %v3604 = vand.u32 %v3422, 4294901760
      %3605 = vmatpush.msra.mxu0 %v3604
      %v3606 = vand.u32 %v3420, 4294901760
      %3607 = vmatpush.msra.mxu0 %v3606
      %v3608 = vand.u32 %v3418, 4294901760
      %3609 = vmatpush.msra.mxu0 %v3608
      %v3610 = vand.u32 %v3428, 4294901760
      %v3611 = vsub.f32 %v3428, %v3610
      %v3612 = vand.u32 %v3611, 4294901760
      %3613 = vmatmul.f32.gmra.mxu0 %v3612
      %v3614 = vpop.f32.mrf.mxu0
      %v3615 = vadd.f32 %v3573, %v3614
      %v3616 = vand.u32 %v3431, 4294901760
      %v3617 = vsub.f32 %v3431, %v3616
      %v3618 = vand.u32 %v3617, 4294901760
      %3619 = vmatmul.f32.gmra.mxu0 %v3618
      %v3620 = vpop.f32.mrf.mxu0
      %v3621 = vadd.f32 %v3578, %v3620
      %v3622 = vand.u32 %v3434, 4294901760
      %v3623 = vsub.f32 %v3434, %v3622
      %v3624 = vand.u32 %v3623, 4294901760
      %3625 = vmatmul.f32.gmra.mxu0 %v3624
      %v3626 = vpop.f32.mrf.mxu0
      %v3627 = vadd.f32 %v3583, %v3626
      %v3628 = vand.u32 %v3437, 4294901760
      %v3629 = vsub.f32 %v3437, %v3628
      %v3630 = vand.u32 %v3629, 4294901760
      %3631 = vmatmul.f32.gmra.mxu0 %v3630
      %v3632 = vpop.f32.mrf.mxu0
      %v3633 = vadd.f32 %v3588, %v3632
      %3634 = vdwg.mxu0
      %3635 = vmatpush.msra.mxu0 0.0
      %3636 = vmatpush.msra.mxu0 0.0
      %3637 = vmatpush.msra.mxu0 0.0
      %3638 = vmatpush.msra.mxu0 0.0
      %3639 = vmatpush.msra.mxu0 0.0
      %3640 = vmatpush.msra.mxu0 0.0
      %3641 = vmatpush.msra.mxu0 0.0
      %3642 = vmatpush.msra.mxu0 0.0
      %3643 = vmatpush.msra.mxu0 0.0
      %3644 = vmatpush.msra.mxu0 0.0
      %3645 = vmatpush.msra.mxu0 0.0
      %3646 = vmatpush.msra.mxu0 0.0
      %v3647 = vand.u32 %v3424, 4294901760
      %v3648 = vsub.f32 %v3424, %v3647
      %v3649 = vand.u32 %v3648, 4294901760
      %3650 = vmatpush.msra.mxu0 %v3649
      %v3651 = vand.u32 %v3422, 4294901760
      %v3652 = vsub.f32 %v3422, %v3651
      %v3653 = vand.u32 %v3652, 4294901760
      %3654 = vmatpush.msra.mxu0 %v3653
      %v3655 = vand.u32 %v3420, 4294901760
      %v3656 = vsub.f32 %v3420, %v3655
      %v3657 = vand.u32 %v3656, 4294901760
      %3658 = vmatpush.msra.mxu0 %v3657
      %v3659 = vand.u32 %v3418, 4294901760
      %v3660 = vsub.f32 %v3418, %v3659
      %v3661 = vand.u32 %v3660, 4294901760
      %3662 = vmatpush.msra.mxu0 %v3661
      %v3663 = vand.u32 %v3428, 4294901760
      %3664 = vmatmul.f32.gmra.mxu0 %v3663
      %v3665 = vpop.f32.mrf.mxu0
      %v3666 = vadd.f32 %v3615, %v3665
      %v3667 = vand.u32 %v3431, 4294901760
      %3668 = vmatmul.f32.gmra.mxu0 %v3667
      %v3669 = vpop.f32.mrf.mxu0
      %v3670 = vadd.f32 %v3621, %v3669
      %v3671 = vand.u32 %v3434, 4294901760
      %3672 = vmatmul.f32.gmra.mxu0 %v3671
      %v3673 = vpop.f32.mrf.mxu0
      %v3674 = vadd.f32 %v3627, %v3673
      %v3675 = vand.u32 %v3437, 4294901760
      %3676 = vmatmul.f32.gmra.mxu0 %v3675
      %v3677 = vpop.f32.mrf.mxu0
      %v3678 = vadd.f32 %v3633, %v3677
      %3679 = vdwg.mxu0
      %3680 = vmatpush.msra.mxu0 0.0
      %3681 = vmatpush.msra.mxu0 0.0
      %3682 = vmatpush.msra.mxu0 0.0
      %3683 = vmatpush.msra.mxu0 0.0
      %3684 = vmatpush.msra.mxu0 0.0
      %3685 = vmatpush.msra.mxu0 0.0
      %3686 = vmatpush.msra.mxu0 0.0
      %3687 = vmatpush.msra.mxu0 0.0
      %3688 = vmatpush.msra.mxu0 0.0
      %3689 = vmatpush.msra.mxu0 0.0
      %3690 = vmatpush.msra.mxu0 0.0
      %3691 = vmatpush.msra.mxu0 0.0
      %v3692 = vand.u32 %v3424, 4294901760
      %3693 = vmatpush.msra.mxu0 %v3692
      %v3694 = vand.u32 %v3422, 4294901760
      %3695 = vmatpush.msra.mxu0 %v3694
      %v3696 = vand.u32 %v3420, 4294901760
      %3697 = vmatpush.msra.mxu0 %v3696
      %v3698 = vand.u32 %v3418, 4294901760
      %3699 = vmatpush.msra.mxu0 %v3698
      %v3700 = vand.u32 %v3428, 4294901760
      %3701 = vmatmul.f32.gmra.mxu0 %v3700
      %v3702 = vpop.f32.mrf.mxu0
      %v3703 = vadd.f32 %v3666, %v3702
      %v3704 = vand.u32 %v3431, 4294901760
      %3705 = vmatmul.f32.gmra.mxu0 %v3704
      %v3706 = vpop.f32.mrf.mxu0
      %v3707 = vadd.f32 %v3670, %v3706
      %v3708 = vand.u32 %v3434, 4294901760
      %3709 = vmatmul.f32.gmra.mxu0 %v3708
      %v3710 = vpop.f32.mrf.mxu0
      %v3711 = vadd.f32 %v3674, %v3710
      %v3712 = vand.u32 %v3437, 4294901760
      %3713 = vmatmul.f32.gmra.mxu0 %v3712
      %v3714 = vpop.f32.mrf.mxu0
      %v3715 = vadd.f32 %v3678, %v3714
      %3716 = vdwg.mxu0
      %3717 = vmatpush.msra.mxu0 0.0
      %3718 = vmatpush.msra.mxu0 0.0
      %3719 = vmatpush.msra.mxu0 0.0
      %3720 = vmatpush.msra.mxu0 0.0
      %3721 = vmatpush.msra.mxu0 0.0
      %3722 = vmatpush.msra.mxu0 0.0
      %3723 = vmatpush.msra.mxu0 0.0
      %3724 = vmatpush.msra.mxu0 0.0
      %3725 = vmatpush.msra.mxu0 0.0
      %3726 = vmatpush.msra.mxu0 0.0
      %3727 = vmatpush.msra.mxu0 0.0
      %3728 = vmatpush.msra.mxu0 0.0
      %v3729 = vand.u32 %v3425, 4294901760
      %3730 = vmatpush.msra.mxu0 %v3729
      %v3731 = vand.u32 %v3423, 4294901760
      %3732 = vmatpush.msra.mxu0 %v3731
      %v3733 = vand.u32 %v3421, 4294901760
      %3734 = vmatpush.msra.mxu0 %v3733
      %v3735 = vand.u32 %v3419, 4294901760
      %3736 = vmatpush.msra.mxu0 %v3735
      %v3737 = vand.u32 %v3428, 4294901760
      %v3738 = vsub.f32 %v3428, %v3737
      %v3739 = vand.u32 %v3738, 4294901760
      %v3740 = vsub.f32 %v3738, %v3739
      %v3741 = vand.u32 %v3740, 4294901760
      %3742 = vmatmul.f32.gmra.mxu0 %v3741
      %v3743 = vpop.f32.mrf.mxu0
      %v3744 = vadd.f32 0.0, %v3743
      %v3745 = vand.u32 %v3431, 4294901760
      %v3746 = vsub.f32 %v3431, %v3745
      %v3747 = vand.u32 %v3746, 4294901760
      %v3748 = vsub.f32 %v3746, %v3747
      %v3749 = vand.u32 %v3748, 4294901760
      %3750 = vmatmul.f32.gmra.mxu0 %v3749
      %v3751 = vpop.f32.mrf.mxu0
      %v3752 = vadd.f32 0.0, %v3751
      %v3753 = vand.u32 %v3434, 4294901760
      %v3754 = vsub.f32 %v3434, %v3753
      %v3755 = vand.u32 %v3754, 4294901760
      %v3756 = vsub.f32 %v3754, %v3755
      %v3757 = vand.u32 %v3756, 4294901760
      %3758 = vmatmul.f32.gmra.mxu0 %v3757
      %v3759 = vpop.f32.mrf.mxu0
      %v3760 = vadd.f32 0.0, %v3759
      %v3761 = vand.u32 %v3437, 4294901760
      %v3762 = vsub.f32 %v3437, %v3761
      %v3763 = vand.u32 %v3762, 4294901760
      %v3764 = vsub.f32 %v3762, %v3763
      %v3765 = vand.u32 %v3764, 4294901760
      %3766 = vmatmul.f32.gmra.mxu0 %v3765
      %v3767 = vpop.f32.mrf.mxu0
      %v3768 = vadd.f32 0.0, %v3767
      %3769 = vdwg.mxu0
      %3770 = vmatpush.msra.mxu0 0.0
      %3771 = vmatpush.msra.mxu0 0.0
      %3772 = vmatpush.msra.mxu0 0.0
      %3773 = vmatpush.msra.mxu0 0.0
      %3774 = vmatpush.msra.mxu0 0.0
      %3775 = vmatpush.msra.mxu0 0.0
      %3776 = vmatpush.msra.mxu0 0.0
      %3777 = vmatpush.msra.mxu0 0.0
      %3778 = vmatpush.msra.mxu0 0.0
      %3779 = vmatpush.msra.mxu0 0.0
      %3780 = vmatpush.msra.mxu0 0.0
      %3781 = vmatpush.msra.mxu0 0.0
      %v3782 = vand.u32 %v3425, 4294901760
      %v3783 = vsub.f32 %v3425, %v3782
      %v3784 = vand.u32 %v3783, 4294901760
      %v3785 = vsub.f32 %v3783, %v3784
      %v3786 = vand.u32 %v3785, 4294901760
      %3787 = vmatpush.msra.mxu0 %v3786
      %v3788 = vand.u32 %v3423, 4294901760
      %v3789 = vsub.f32 %v3423, %v3788
      %v3790 = vand.u32 %v3789, 4294901760
      %v3791 = vsub.f32 %v3789, %v3790
      %v3792 = vand.u32 %v3791, 4294901760
      %3793 = vmatpush.msra.mxu0 %v3792
      %v3794 = vand.u32 %v3421, 4294901760
      %v3795 = vsub.f32 %v3421, %v3794
      %v3796 = vand.u32 %v3795, 4294901760
      %v3797 = vsub.f32 %v3795, %v3796
      %v3798 = vand.u32 %v3797, 4294901760
      %3799 = vmatpush.msra.mxu0 %v3798
      %v3800 = vand.u32 %v3419, 4294901760
      %v3801 = vsub.f32 %v3419, %v3800
      %v3802 = vand.u32 %v3801, 4294901760
      %v3803 = vsub.f32 %v3801, %v3802
      %v3804 = vand.u32 %v3803, 4294901760
      %3805 = vmatpush.msra.mxu0 %v3804
      %v3806 = vand.u32 %v3428, 4294901760
      %3807 = vmatmul.f32.gmra.mxu0 %v3806
      %v3808 = vpop.f32.mrf.mxu0
      %v3809 = vadd.f32 %v3744, %v3808
      %v3810 = vand.u32 %v3431, 4294901760
      %3811 = vmatmul.f32.gmra.mxu0 %v3810
      %v3812 = vpop.f32.mrf.mxu0
      %v3813 = vadd.f32 %v3752, %v3812
      %v3814 = vand.u32 %v3434, 4294901760
      %3815 = vmatmul.f32.gmra.mxu0 %v3814
      %v3816 = vpop.f32.mrf.mxu0
      %v3817 = vadd.f32 %v3760, %v3816
      %v3818 = vand.u32 %v3437, 4294901760
      %3819 = vmatmul.f32.gmra.mxu0 %v3818
      %v3820 = vpop.f32.mrf.mxu0
      %v3821 = vadd.f32 %v3768, %v3820
      %3822 = vdwg.mxu0
      %3823 = vmatpush.msra.mxu0 0.0
      %3824 = vmatpush.msra.mxu0 0.0
      %3825 = vmatpush.msra.mxu0 0.0
      %3826 = vmatpush.msra.mxu0 0.0
      %3827 = vmatpush.msra.mxu0 0.0
      %3828 = vmatpush.msra.mxu0 0.0
      %3829 = vmatpush.msra.mxu0 0.0
      %3830 = vmatpush.msra.mxu0 0.0
      %3831 = vmatpush.msra.mxu0 0.0
      %3832 = vmatpush.msra.mxu0 0.0
      %3833 = vmatpush.msra.mxu0 0.0
      %3834 = vmatpush.msra.mxu0 0.0
      %v3835 = vand.u32 %v3425, 4294901760
      %v3836 = vsub.f32 %v3425, %v3835
      %3837 = vmatpush.msra.mxu0 %v3836
      %v3838 = vand.u32 %v3423, 4294901760
      %v3839 = vsub.f32 %v3423, %v3838
      %3840 = vmatpush.msra.mxu0 %v3839
      %v3841 = vand.u32 %v3421, 4294901760
      %v3842 = vsub.f32 %v3421, %v3841
      %3843 = vmatpush.msra.mxu0 %v3842
      %v3844 = vand.u32 %v3419, 4294901760
      %v3845 = vsub.f32 %v3419, %v3844
      %3846 = vmatpush.msra.mxu0 %v3845
      %v3847 = vand.u32 %v3428, 4294901760
      %v3848 = vsub.f32 %v3428, %v3847
      %3849 = vmatmul.f32.gmra.mxu0 %v3848
      %v3850 = vpop.f32.mrf.mxu0
      %v3851 = vadd.f32 %v3809, %v3850
      %v3852 = vand.u32 %v3431, 4294901760
      %v3853 = vsub.f32 %v3431, %v3852
      %3854 = vmatmul.f32.gmra.mxu0 %v3853
      %v3855 = vpop.f32.mrf.mxu0
      %v3856 = vadd.f32 %v3813, %v3855
      %v3857 = vand.u32 %v3434, 4294901760
      %v3858 = vsub.f32 %v3434, %v3857
      %3859 = vmatmul.f32.gmra.mxu0 %v3858
      %v3860 = vpop.f32.mrf.mxu0
      %v3861 = vadd.f32 %v3817, %v3860
      %v3862 = vand.u32 %v3437, 4294901760
      %v3863 = vsub.f32 %v3437, %v3862
      %3864 = vmatmul.f32.gmra.mxu0 %v3863
      %v3865 = vpop.f32.mrf.mxu0
      %v3866 = vadd.f32 %v3821, %v3865
      %3867 = vdwg.mxu0
      %3868 = vmatpush.msra.mxu0 0.0
      %3869 = vmatpush.msra.mxu0 0.0
      %3870 = vmatpush.msra.mxu0 0.0
      %3871 = vmatpush.msra.mxu0 0.0
      %3872 = vmatpush.msra.mxu0 0.0
      %3873 = vmatpush.msra.mxu0 0.0
      %3874 = vmatpush.msra.mxu0 0.0
      %3875 = vmatpush.msra.mxu0 0.0
      %3876 = vmatpush.msra.mxu0 0.0
      %3877 = vmatpush.msra.mxu0 0.0
      %3878 = vmatpush.msra.mxu0 0.0
      %3879 = vmatpush.msra.mxu0 0.0
      %v3880 = vand.u32 %v3425, 4294901760
      %3881 = vmatpush.msra.mxu0 %v3880
      %v3882 = vand.u32 %v3423, 4294901760
      %3883 = vmatpush.msra.mxu0 %v3882
      %v3884 = vand.u32 %v3421, 4294901760
      %3885 = vmatpush.msra.mxu0 %v3884
      %v3886 = vand.u32 %v3419, 4294901760
      %3887 = vmatpush.msra.mxu0 %v3886
      %v3888 = vand.u32 %v3428, 4294901760
      %v3889 = vsub.f32 %v3428, %v3888
      %v3890 = vand.u32 %v3889, 4294901760
      %3891 = vmatmul.f32.gmra.mxu0 %v3890
      %v3892 = vpop.f32.mrf.mxu0
      %v3893 = vadd.f32 %v3851, %v3892
      %v3894 = vand.u32 %v3431, 4294901760
      %v3895 = vsub.f32 %v3431, %v3894
      %v3896 = vand.u32 %v3895, 4294901760
      %3897 = vmatmul.f32.gmra.mxu0 %v3896
      %v3898 = vpop.f32.mrf.mxu0
      %v3899 = vadd.f32 %v3856, %v3898
      %v3900 = vand.u32 %v3434, 4294901760
      %v3901 = vsub.f32 %v3434, %v3900
      %v3902 = vand.u32 %v3901, 4294901760
      %3903 = vmatmul.f32.gmra.mxu0 %v3902
      %v3904 = vpop.f32.mrf.mxu0
      %v3905 = vadd.f32 %v3861, %v3904
      %v3906 = vand.u32 %v3437, 4294901760
      %v3907 = vsub.f32 %v3437, %v3906
      %v3908 = vand.u32 %v3907, 4294901760
      %3909 = vmatmul.f32.gmra.mxu0 %v3908
      %v3910 = vpop.f32.mrf.mxu0
      %v3911 = vadd.f32 %v3866, %v3910
      %3912 = vdwg.mxu0
      %3913 = vmatpush.msra.mxu0 0.0
      %3914 = vmatpush.msra.mxu0 0.0
      %3915 = vmatpush.msra.mxu0 0.0
      %3916 = vmatpush.msra.mxu0 0.0
      %3917 = vmatpush.msra.mxu0 0.0
      %3918 = vmatpush.msra.mxu0 0.0
      %3919 = vmatpush.msra.mxu0 0.0
      %3920 = vmatpush.msra.mxu0 0.0
      %3921 = vmatpush.msra.mxu0 0.0
      %3922 = vmatpush.msra.mxu0 0.0
      %3923 = vmatpush.msra.mxu0 0.0
      %3924 = vmatpush.msra.mxu0 0.0
      %v3925 = vand.u32 %v3425, 4294901760
      %v3926 = vsub.f32 %v3425, %v3925
      %v3927 = vand.u32 %v3926, 4294901760
      %3928 = vmatpush.msra.mxu0 %v3927
      %v3929 = vand.u32 %v3423, 4294901760
      %v3930 = vsub.f32 %v3423, %v3929
      %v3931 = vand.u32 %v3930, 4294901760
      %3932 = vmatpush.msra.mxu0 %v3931
      %v3933 = vand.u32 %v3421, 4294901760
      %v3934 = vsub.f32 %v3421, %v3933
      %v3935 = vand.u32 %v3934, 4294901760
      %3936 = vmatpush.msra.mxu0 %v3935
      %v3937 = vand.u32 %v3419, 4294901760
      %v3938 = vsub.f32 %v3419, %v3937
      %v3939 = vand.u32 %v3938, 4294901760
      %3940 = vmatpush.msra.mxu0 %v3939
      %v3941 = vand.u32 %v3428, 4294901760
      %3942 = vmatmul.f32.gmra.mxu0 %v3941
      %v3943 = vpop.f32.mrf.mxu0
      %v3944 = vadd.f32 %v3893, %v3943
      %v3945 = vand.u32 %v3431, 4294901760
      %3946 = vmatmul.f32.gmra.mxu0 %v3945
      %v3947 = vpop.f32.mrf.mxu0
      %v3948 = vadd.f32 %v3899, %v3947
      %v3949 = vand.u32 %v3434, 4294901760
      %3950 = vmatmul.f32.gmra.mxu0 %v3949
      %v3951 = vpop.f32.mrf.mxu0
      %v3952 = vadd.f32 %v3905, %v3951
      %v3953 = vand.u32 %v3437, 4294901760
      %3954 = vmatmul.f32.gmra.mxu0 %v3953
      %v3955 = vpop.f32.mrf.mxu0
      %v3956 = vadd.f32 %v3911, %v3955
      %3957 = vdwg.mxu0
      %3958 = vmatpush.msra.mxu0 0.0
      %3959 = vmatpush.msra.mxu0 0.0
      %3960 = vmatpush.msra.mxu0 0.0
      %3961 = vmatpush.msra.mxu0 0.0
      %3962 = vmatpush.msra.mxu0 0.0
      %3963 = vmatpush.msra.mxu0 0.0
      %3964 = vmatpush.msra.mxu0 0.0
      %3965 = vmatpush.msra.mxu0 0.0
      %3966 = vmatpush.msra.mxu0 0.0
      %3967 = vmatpush.msra.mxu0 0.0
      %3968 = vmatpush.msra.mxu0 0.0
      %3969 = vmatpush.msra.mxu0 0.0
      %v3970 = vand.u32 %v3425, 4294901760
      %3971 = vmatpush.msra.mxu0 %v3970
      %v3972 = vand.u32 %v3423, 4294901760
      %3973 = vmatpush.msra.mxu0 %v3972
      %v3974 = vand.u32 %v3421, 4294901760
      %3975 = vmatpush.msra.mxu0 %v3974
      %v3976 = vand.u32 %v3419, 4294901760
      %3977 = vmatpush.msra.mxu0 %v3976
      %v3978 = vand.u32 %v3428, 4294901760
      %3979 = vmatmul.f32.gmra.mxu0 %v3978
      %v3980 = vpop.f32.mrf.mxu0
      %v3981 = vadd.f32 %v3944, %v3980
      %v3982 = vand.u32 %v3431, 4294901760
      %3983 = vmatmul.f32.gmra.mxu0 %v3982
      %v3984 = vpop.f32.mrf.mxu0
      %v3985 = vadd.f32 %v3948, %v3984
      %v3986 = vand.u32 %v3434, 4294901760
      %3987 = vmatmul.f32.gmra.mxu0 %v3986
      %v3988 = vpop.f32.mrf.mxu0
      %v3989 = vadd.f32 %v3952, %v3988
      %v3990 = vand.u32 %v3437, 4294901760
      %3991 = vmatmul.f32.gmra.mxu0 %v3990
      %v3992 = vpop.f32.mrf.mxu0
      %v3993 = vadd.f32 %v3956, %v3992
      %3994 = vdwg.mxu0
      %v3995 = vmul.f32 %v3418, %v3418
      %v3996 = vmul.f32 %v3419, %v3419
      %v3997 = vmul.f32 %v3420, %v3420
      %v3998 = vmul.f32 %v3421, %v3421
      %v3999 = vmul.f32 %v3422, %v3422
      %v4000 = vmul.f32 %v3423, %v3423
      %v4001 = vmul.f32 %v3424, %v3424
      %v4002 = vmul.f32 %v3425, %v3425
      %4003 = vmatpush.msra.mxu0 0.0
      %4004 = vmatpush.msra.mxu0 0.0
      %4005 = vmatpush.msra.mxu0 0.0
      %4006 = vmatpush.msra.mxu0 0.0
      %4007 = vmatpush.msra.mxu0 0.0
      %4008 = vmatpush.msra.mxu0 0.0
      %4009 = vmatpush.msra.mxu0 0.0
      %4010 = vmatpush.msra.mxu0 0.0
      %4011 = vmatpush.msra.mxu0 0.0
      %4012 = vmatpush.msra.mxu0 0.0
      %4013 = vmatpush.msra.mxu0 0.0
      %4014 = vmatpush.msra.mxu0 0.0
      %v4015 = vand.u32 %v4001, 4294901760
      %4016 = vmatpush.msra.mxu0 %v4015
      %v4017 = vand.u32 %v3999, 4294901760
      %4018 = vmatpush.msra.mxu0 %v4017
      %v4019 = vand.u32 %v3997, 4294901760
      %4020 = vmatpush.msra.mxu0 %v4019
      %v4021 = vand.u32 %v3995, 4294901760
      %4022 = vmatpush.msra.mxu0 %v4021
      %v4023 = vand.u32 %v3428, 4294901760
      %v4024 = vsub.f32 %v3428, %v4023
      %v4025 = vand.u32 %v4024, 4294901760
      %v4026 = vsub.f32 %v4024, %v4025
      %v4027 = vand.u32 %v4026, 4294901760
      %4028 = vmatmul.f32.gmra.mxu0 %v4027
      %v4029 = vpop.f32.mrf.mxu0
      %v4030 = vadd.f32 0.0, %v4029
      %v4031 = vand.u32 %v3431, 4294901760
      %v4032 = vsub.f32 %v3431, %v4031
      %v4033 = vand.u32 %v4032, 4294901760
      %v4034 = vsub.f32 %v4032, %v4033
      %v4035 = vand.u32 %v4034, 4294901760
      %4036 = vmatmul.f32.gmra.mxu0 %v4035
      %v4037 = vpop.f32.mrf.mxu0
      %v4038 = vadd.f32 0.0, %v4037
      %v4039 = vand.u32 %v3434, 4294901760
      %v4040 = vsub.f32 %v3434, %v4039
      %v4041 = vand.u32 %v4040, 4294901760
      %v4042 = vsub.f32 %v4040, %v4041
      %v4043 = vand.u32 %v4042, 4294901760
      %4044 = vmatmul.f32.gmra.mxu0 %v4043
      %v4045 = vpop.f32.mrf.mxu0
      %v4046 = vadd.f32 0.0, %v4045
      %v4047 = vand.u32 %v3437, 4294901760
      %v4048 = vsub.f32 %v3437, %v4047
      %v4049 = vand.u32 %v4048, 4294901760
      %v4050 = vsub.f32 %v4048, %v4049
      %v4051 = vand.u32 %v4050, 4294901760
      %4052 = vmatmul.f32.gmra.mxu0 %v4051
      %v4053 = vpop.f32.mrf.mxu0
      %v4054 = vadd.f32 0.0, %v4053
      %4055 = vdwg.mxu0
      %4056 = vmatpush.msra.mxu0 0.0
      %4057 = vmatpush.msra.mxu0 0.0
      %4058 = vmatpush.msra.mxu0 0.0
      %4059 = vmatpush.msra.mxu0 0.0
      %4060 = vmatpush.msra.mxu0 0.0
      %4061 = vmatpush.msra.mxu0 0.0
      %4062 = vmatpush.msra.mxu0 0.0
      %4063 = vmatpush.msra.mxu0 0.0
      %4064 = vmatpush.msra.mxu0 0.0
      %4065 = vmatpush.msra.mxu0 0.0
      %4066 = vmatpush.msra.mxu0 0.0
      %4067 = vmatpush.msra.mxu0 0.0
      %v4068 = vand.u32 %v4001, 4294901760
      %v4069 = vsub.f32 %v4001, %v4068
      %v4070 = vand.u32 %v4069, 4294901760
      %v4071 = vsub.f32 %v4069, %v4070
      %v4072 = vand.u32 %v4071, 4294901760
      %4073 = vmatpush.msra.mxu0 %v4072
      %v4074 = vand.u32 %v3999, 4294901760
      %v4075 = vsub.f32 %v3999, %v4074
      %v4076 = vand.u32 %v4075, 4294901760
      %v4077 = vsub.f32 %v4075, %v4076
      %v4078 = vand.u32 %v4077, 4294901760
      %4079 = vmatpush.msra.mxu0 %v4078
      %v4080 = vand.u32 %v3997, 4294901760
      %v4081 = vsub.f32 %v3997, %v4080
      %v4082 = vand.u32 %v4081, 4294901760
      %v4083 = vsub.f32 %v4081, %v4082
      %v4084 = vand.u32 %v4083, 4294901760
      %4085 = vmatpush.msra.mxu0 %v4084
      %v4086 = vand.u32 %v3995, 4294901760
      %v4087 = vsub.f32 %v3995, %v4086
      %v4088 = vand.u32 %v4087, 4294901760
      %v4089 = vsub.f32 %v4087, %v4088
      %v4090 = vand.u32 %v4089, 4294901760
      %4091 = vmatpush.msra.mxu0 %v4090
      %v4092 = vand.u32 %v3428, 4294901760
      %4093 = vmatmul.f32.gmra.mxu0 %v4092
      %v4094 = vpop.f32.mrf.mxu0
      %v4095 = vadd.f32 %v4030, %v4094
      %v4096 = vand.u32 %v3431, 4294901760
      %4097 = vmatmul.f32.gmra.mxu0 %v4096
      %v4098 = vpop.f32.mrf.mxu0
      %v4099 = vadd.f32 %v4038, %v4098
      %v4100 = vand.u32 %v3434, 4294901760
      %4101 = vmatmul.f32.gmra.mxu0 %v4100
      %v4102 = vpop.f32.mrf.mxu0
      %v4103 = vadd.f32 %v4046, %v4102
      %v4104 = vand.u32 %v3437, 4294901760
      %4105 = vmatmul.f32.gmra.mxu0 %v4104
      %v4106 = vpop.f32.mrf.mxu0
      %v4107 = vadd.f32 %v4054, %v4106
      %4108 = vdwg.mxu0
      %4109 = vmatpush.msra.mxu0 0.0
      %4110 = vmatpush.msra.mxu0 0.0
      %4111 = vmatpush.msra.mxu0 0.0
      %4112 = vmatpush.msra.mxu0 0.0
      %4113 = vmatpush.msra.mxu0 0.0
      %4114 = vmatpush.msra.mxu0 0.0
      %4115 = vmatpush.msra.mxu0 0.0
      %4116 = vmatpush.msra.mxu0 0.0
      %4117 = vmatpush.msra.mxu0 0.0
      %4118 = vmatpush.msra.mxu0 0.0
      %4119 = vmatpush.msra.mxu0 0.0
      %4120 = vmatpush.msra.mxu0 0.0
      %v4121 = vand.u32 %v4001, 4294901760
      %v4122 = vsub.f32 %v4001, %v4121
      %4123 = vmatpush.msra.mxu0 %v4122
      %v4124 = vand.u32 %v3999, 4294901760
      %v4125 = vsub.f32 %v3999, %v4124
      %4126 = vmatpush.msra.mxu0 %v4125
      %v4127 = vand.u32 %v3997, 4294901760
      %v4128 = vsub.f32 %v3997, %v4127
      %4129 = vmatpush.msra.mxu0 %v4128
      %v4130 = vand.u32 %v3995, 4294901760
      %v4131 = vsub.f32 %v3995, %v4130
      %4132 = vmatpush.msra.mxu0 %v4131
      %v4133 = vand.u32 %v3428, 4294901760
      %v4134 = vsub.f32 %v3428, %v4133
      %4135 = vmatmul.f32.gmra.mxu0 %v4134
      %v4136 = vpop.f32.mrf.mxu0
      %v4137 = vadd.f32 %v4095, %v4136
      %v4138 = vand.u32 %v3431, 4294901760
      %v4139 = vsub.f32 %v3431, %v4138
      %4140 = vmatmul.f32.gmra.mxu0 %v4139
      %v4141 = vpop.f32.mrf.mxu0
      %v4142 = vadd.f32 %v4099, %v4141
      %v4143 = vand.u32 %v3434, 4294901760
      %v4144 = vsub.f32 %v3434, %v4143
      %4145 = vmatmul.f32.gmra.mxu0 %v4144
      %v4146 = vpop.f32.mrf.mxu0
      %v4147 = vadd.f32 %v4103, %v4146
      %v4148 = vand.u32 %v3437, 4294901760
      %v4149 = vsub.f32 %v3437, %v4148
      %4150 = vmatmul.f32.gmra.mxu0 %v4149
      %v4151 = vpop.f32.mrf.mxu0
      %v4152 = vadd.f32 %v4107, %v4151
      %4153 = vdwg.mxu0
      %4154 = vmatpush.msra.mxu0 0.0
      %4155 = vmatpush.msra.mxu0 0.0
      %4156 = vmatpush.msra.mxu0 0.0
      %4157 = vmatpush.msra.mxu0 0.0
      %4158 = vmatpush.msra.mxu0 0.0
      %4159 = vmatpush.msra.mxu0 0.0
      %4160 = vmatpush.msra.mxu0 0.0
      %4161 = vmatpush.msra.mxu0 0.0
      %4162 = vmatpush.msra.mxu0 0.0
      %4163 = vmatpush.msra.mxu0 0.0
      %4164 = vmatpush.msra.mxu0 0.0
      %4165 = vmatpush.msra.mxu0 0.0
      %v4166 = vand.u32 %v4001, 4294901760
      %4167 = vmatpush.msra.mxu0 %v4166
      %v4168 = vand.u32 %v3999, 4294901760
      %4169 = vmatpush.msra.mxu0 %v4168
      %v4170 = vand.u32 %v3997, 4294901760
      %4171 = vmatpush.msra.mxu0 %v4170
      %v4172 = vand.u32 %v3995, 4294901760
      %4173 = vmatpush.msra.mxu0 %v4172
      %v4174 = vand.u32 %v3428, 4294901760
      %v4175 = vsub.f32 %v3428, %v4174
      %v4176 = vand.u32 %v4175, 4294901760
      %4177 = vmatmul.f32.gmra.mxu0 %v4176
      %v4178 = vpop.f32.mrf.mxu0
      %v4179 = vadd.f32 %v4137, %v4178
      %v4180 = vand.u32 %v3431, 4294901760
      %v4181 = vsub.f32 %v3431, %v4180
      %v4182 = vand.u32 %v4181, 4294901760
      %4183 = vmatmul.f32.gmra.mxu0 %v4182
      %v4184 = vpop.f32.mrf.mxu0
      %v4185 = vadd.f32 %v4142, %v4184
      %v4186 = vand.u32 %v3434, 4294901760
      %v4187 = vsub.f32 %v3434, %v4186
      %v4188 = vand.u32 %v4187, 4294901760
      %4189 = vmatmul.f32.gmra.mxu0 %v4188
      %v4190 = vpop.f32.mrf.mxu0
      %v4191 = vadd.f32 %v4147, %v4190
      %v4192 = vand.u32 %v3437, 4294901760
      %v4193 = vsub.f32 %v3437, %v4192
      %v4194 = vand.u32 %v4193, 4294901760
      %4195 = vmatmul.f32.gmra.mxu0 %v4194
      %v4196 = vpop.f32.mrf.mxu0
      %v4197 = vadd.f32 %v4152, %v4196
      %4198 = vdwg.mxu0
      %4199 = vmatpush.msra.mxu0 0.0
      %4200 = vmatpush.msra.mxu0 0.0
      %4201 = vmatpush.msra.mxu0 0.0
      %4202 = vmatpush.msra.mxu0 0.0
      %4203 = vmatpush.msra.mxu0 0.0
      %4204 = vmatpush.msra.mxu0 0.0
      %4205 = vmatpush.msra.mxu0 0.0
      %4206 = vmatpush.msra.mxu0 0.0
      %4207 = vmatpush.msra.mxu0 0.0
      %4208 = vmatpush.msra.mxu0 0.0
      %4209 = vmatpush.msra.mxu0 0.0
      %4210 = vmatpush.msra.mxu0 0.0
      %v4211 = vand.u32 %v4001, 4294901760
      %v4212 = vsub.f32 %v4001, %v4211
      %v4213 = vand.u32 %v4212, 4294901760
      %4214 = vmatpush.msra.mxu0 %v4213
      %v4215 = vand.u32 %v3999, 4294901760
      %v4216 = vsub.f32 %v3999, %v4215
      %v4217 = vand.u32 %v4216, 4294901760
      %4218 = vmatpush.msra.mxu0 %v4217
      %v4219 = vand.u32 %v3997, 4294901760
      %v4220 = vsub.f32 %v3997, %v4219
      %v4221 = vand.u32 %v4220, 4294901760
      %4222 = vmatpush.msra.mxu0 %v4221
      %v4223 = vand.u32 %v3995, 4294901760
      %v4224 = vsub.f32 %v3995, %v4223
      %v4225 = vand.u32 %v4224, 4294901760
      %4226 = vmatpush.msra.mxu0 %v4225
      %v4227 = vand.u32 %v3428, 4294901760
      %4228 = vmatmul.f32.gmra.mxu0 %v4227
      %v4229 = vpop.f32.mrf.mxu0
      %v4230 = vadd.f32 %v4179, %v4229
      %v4231 = vand.u32 %v3431, 4294901760
      %4232 = vmatmul.f32.gmra.mxu0 %v4231
      %v4233 = vpop.f32.mrf.mxu0
      %v4234 = vadd.f32 %v4185, %v4233
      %v4235 = vand.u32 %v3434, 4294901760
      %4236 = vmatmul.f32.gmra.mxu0 %v4235
      %v4237 = vpop.f32.mrf.mxu0
      %v4238 = vadd.f32 %v4191, %v4237
      %v4239 = vand.u32 %v3437, 4294901760
      %4240 = vmatmul.f32.gmra.mxu0 %v4239
      %v4241 = vpop.f32.mrf.mxu0
      %v4242 = vadd.f32 %v4197, %v4241
      %4243 = vdwg.mxu0
      %4244 = vmatpush.msra.mxu0 0.0
      %4245 = vmatpush.msra.mxu0 0.0
      %4246 = vmatpush.msra.mxu0 0.0
      %4247 = vmatpush.msra.mxu0 0.0
      %4248 = vmatpush.msra.mxu0 0.0
      %4249 = vmatpush.msra.mxu0 0.0
      %4250 = vmatpush.msra.mxu0 0.0
      %4251 = vmatpush.msra.mxu0 0.0
      %4252 = vmatpush.msra.mxu0 0.0
      %4253 = vmatpush.msra.mxu0 0.0
      %4254 = vmatpush.msra.mxu0 0.0
      %4255 = vmatpush.msra.mxu0 0.0
      %v4256 = vand.u32 %v4001, 4294901760
      %4257 = vmatpush.msra.mxu0 %v4256
      %v4258 = vand.u32 %v3999, 4294901760
      %4259 = vmatpush.msra.mxu0 %v4258
      %v4260 = vand.u32 %v3997, 4294901760
      %4261 = vmatpush.msra.mxu0 %v4260
      %v4262 = vand.u32 %v3995, 4294901760
      %4263 = vmatpush.msra.mxu0 %v4262
      %v4264 = vand.u32 %v3428, 4294901760
      %4265 = vmatmul.f32.gmra.mxu0 %v4264
      %v4266 = vpop.f32.mrf.mxu0
      %v4267 = vadd.f32 %v4230, %v4266
      %v4268 = vand.u32 %v3431, 4294901760
      %4269 = vmatmul.f32.gmra.mxu0 %v4268
      %v4270 = vpop.f32.mrf.mxu0
      %v4271 = vadd.f32 %v4234, %v4270
      %v4272 = vand.u32 %v3434, 4294901760
      %4273 = vmatmul.f32.gmra.mxu0 %v4272
      %v4274 = vpop.f32.mrf.mxu0
      %v4275 = vadd.f32 %v4238, %v4274
      %v4276 = vand.u32 %v3437, 4294901760
      %4277 = vmatmul.f32.gmra.mxu0 %v4276
      %v4278 = vpop.f32.mrf.mxu0
      %v4279 = vadd.f32 %v4242, %v4278
      %4280 = vdwg.mxu0
      %4281 = vmatpush.msra.mxu0 0.0
      %4282 = vmatpush.msra.mxu0 0.0
      %4283 = vmatpush.msra.mxu0 0.0
      %4284 = vmatpush.msra.mxu0 0.0
      %4285 = vmatpush.msra.mxu0 0.0
      %4286 = vmatpush.msra.mxu0 0.0
      %4287 = vmatpush.msra.mxu0 0.0
      %4288 = vmatpush.msra.mxu0 0.0
      %4289 = vmatpush.msra.mxu0 0.0
      %4290 = vmatpush.msra.mxu0 0.0
      %4291 = vmatpush.msra.mxu0 0.0
      %4292 = vmatpush.msra.mxu0 0.0
      %v4293 = vand.u32 %v4002, 4294901760
      %4294 = vmatpush.msra.mxu0 %v4293
      %v4295 = vand.u32 %v4000, 4294901760
      %4296 = vmatpush.msra.mxu0 %v4295
      %v4297 = vand.u32 %v3998, 4294901760
      %4298 = vmatpush.msra.mxu0 %v4297
      %v4299 = vand.u32 %v3996, 4294901760
      %4300 = vmatpush.msra.mxu0 %v4299
      %v4301 = vand.u32 %v3428, 4294901760
      %v4302 = vsub.f32 %v3428, %v4301
      %v4303 = vand.u32 %v4302, 4294901760
      %v4304 = vsub.f32 %v4302, %v4303
      %v4305 = vand.u32 %v4304, 4294901760
      %4306 = vmatmul.f32.gmra.mxu0 %v4305
      %v4307 = vpop.f32.mrf.mxu0
      %v4308 = vadd.f32 0.0, %v4307
      %v4309 = vand.u32 %v3431, 4294901760
      %v4310 = vsub.f32 %v3431, %v4309
      %v4311 = vand.u32 %v4310, 4294901760
      %v4312 = vsub.f32 %v4310, %v4311
      %v4313 = vand.u32 %v4312, 4294901760
      %4314 = vmatmul.f32.gmra.mxu0 %v4313
      %v4315 = vpop.f32.mrf.mxu0
      %v4316 = vadd.f32 0.0, %v4315
      %v4317 = vand.u32 %v3434, 4294901760
      %v4318 = vsub.f32 %v3434, %v4317
      %v4319 = vand.u32 %v4318, 4294901760
      %v4320 = vsub.f32 %v4318, %v4319
      %v4321 = vand.u32 %v4320, 4294901760
      %4322 = vmatmul.f32.gmra.mxu0 %v4321
      %v4323 = vpop.f32.mrf.mxu0
      %v4324 = vadd.f32 0.0, %v4323
      %v4325 = vand.u32 %v3437, 4294901760
      %v4326 = vsub.f32 %v3437, %v4325
      %v4327 = vand.u32 %v4326, 4294901760
      %v4328 = vsub.f32 %v4326, %v4327
      %v4329 = vand.u32 %v4328, 4294901760
      %4330 = vmatmul.f32.gmra.mxu0 %v4329
      %v4331 = vpop.f32.mrf.mxu0
      %v4332 = vadd.f32 0.0, %v4331
      %4333 = vdwg.mxu0
      %4334 = vmatpush.msra.mxu0 0.0
      %4335 = vmatpush.msra.mxu0 0.0
      %4336 = vmatpush.msra.mxu0 0.0
      %4337 = vmatpush.msra.mxu0 0.0
      %4338 = vmatpush.msra.mxu0 0.0
      %4339 = vmatpush.msra.mxu0 0.0
      %4340 = vmatpush.msra.mxu0 0.0
      %4341 = vmatpush.msra.mxu0 0.0
      %4342 = vmatpush.msra.mxu0 0.0
      %4343 = vmatpush.msra.mxu0 0.0
      %4344 = vmatpush.msra.mxu0 0.0
      %4345 = vmatpush.msra.mxu0 0.0
      %v4346 = vand.u32 %v4002, 4294901760
      %v4347 = vsub.f32 %v4002, %v4346
      %v4348 = vand.u32 %v4347, 4294901760
      %v4349 = vsub.f32 %v4347, %v4348
      %v4350 = vand.u32 %v4349, 4294901760
      %4351 = vmatpush.msra.mxu0 %v4350
      %v4352 = vand.u32 %v4000, 4294901760
      %v4353 = vsub.f32 %v4000, %v4352
      %v4354 = vand.u32 %v4353, 4294901760
      %v4355 = vsub.f32 %v4353, %v4354
      %v4356 = vand.u32 %v4355, 4294901760
      %4357 = vmatpush.msra.mxu0 %v4356
      %v4358 = vand.u32 %v3998, 4294901760
      %v4359 = vsub.f32 %v3998, %v4358
      %v4360 = vand.u32 %v4359, 4294901760
      %v4361 = vsub.f32 %v4359, %v4360
      %v4362 = vand.u32 %v4361, 4294901760
      %4363 = vmatpush.msra.mxu0 %v4362
      %v4364 = vand.u32 %v3996, 4294901760
      %v4365 = vsub.f32 %v3996, %v4364
      %v4366 = vand.u32 %v4365, 4294901760
      %v4367 = vsub.f32 %v4365, %v4366
      %v4368 = vand.u32 %v4367, 4294901760
      %4369 = vmatpush.msra.mxu0 %v4368
      %v4370 = vand.u32 %v3428, 4294901760
      %4371 = vmatmul.f32.gmra.mxu0 %v4370
      %v4372 = vpop.f32.mrf.mxu0
      %v4373 = vadd.f32 %v4308, %v4372
      %v4374 = vand.u32 %v3431, 4294901760
      %4375 = vmatmul.f32.gmra.mxu0 %v4374
      %v4376 = vpop.f32.mrf.mxu0
      %v4377 = vadd.f32 %v4316, %v4376
      %v4378 = vand.u32 %v3434, 4294901760
      %4379 = vmatmul.f32.gmra.mxu0 %v4378
      %v4380 = vpop.f32.mrf.mxu0
      %v4381 = vadd.f32 %v4324, %v4380
      %v4382 = vand.u32 %v3437, 4294901760
      %4383 = vmatmul.f32.gmra.mxu0 %v4382
      %v4384 = vpop.f32.mrf.mxu0
      %v4385 = vadd.f32 %v4332, %v4384
      %4386 = vdwg.mxu0
      %4387 = vmatpush.msra.mxu0 0.0
      %4388 = vmatpush.msra.mxu0 0.0
      %4389 = vmatpush.msra.mxu0 0.0
      %4390 = vmatpush.msra.mxu0 0.0
      %4391 = vmatpush.msra.mxu0 0.0
      %4392 = vmatpush.msra.mxu0 0.0
      %4393 = vmatpush.msra.mxu0 0.0
      %4394 = vmatpush.msra.mxu0 0.0
      %4395 = vmatpush.msra.mxu0 0.0
      %4396 = vmatpush.msra.mxu0 0.0
      %4397 = vmatpush.msra.mxu0 0.0
      %4398 = vmatpush.msra.mxu0 0.0
      %v4399 = vand.u32 %v4002, 4294901760
      %v4400 = vsub.f32 %v4002, %v4399
      %4401 = vmatpush.msra.mxu0 %v4400
      %v4402 = vand.u32 %v4000, 4294901760
      %v4403 = vsub.f32 %v4000, %v4402
      %4404 = vmatpush.msra.mxu0 %v4403
      %v4405 = vand.u32 %v3998, 4294901760
      %v4406 = vsub.f32 %v3998, %v4405
      %4407 = vmatpush.msra.mxu0 %v4406
      %v4408 = vand.u32 %v3996, 4294901760
      %v4409 = vsub.f32 %v3996, %v4408
      %4410 = vmatpush.msra.mxu0 %v4409
      %v4411 = vand.u32 %v3428, 4294901760
      %v4412 = vsub.f32 %v3428, %v4411
      %4413 = vmatmul.f32.gmra.mxu0 %v4412
      %v4414 = vpop.f32.mrf.mxu0
      %v4415 = vadd.f32 %v4373, %v4414
      %v4416 = vand.u32 %v3431, 4294901760
      %v4417 = vsub.f32 %v3431, %v4416
      %4418 = vmatmul.f32.gmra.mxu0 %v4417
      %v4419 = vpop.f32.mrf.mxu0
      %v4420 = vadd.f32 %v4377, %v4419
      %v4421 = vand.u32 %v3434, 4294901760
      %v4422 = vsub.f32 %v3434, %v4421
      %4423 = vmatmul.f32.gmra.mxu0 %v4422
      %v4424 = vpop.f32.mrf.mxu0
      %v4425 = vadd.f32 %v4381, %v4424
      %v4426 = vand.u32 %v3437, 4294901760
      %v4427 = vsub.f32 %v3437, %v4426
      %4428 = vmatmul.f32.gmra.mxu0 %v4427
      %v4429 = vpop.f32.mrf.mxu0
      %v4430 = vadd.f32 %v4385, %v4429
      %4431 = vdwg.mxu0
      %4432 = vmatpush.msra.mxu0 0.0
      %4433 = vmatpush.msra.mxu0 0.0
      %4434 = vmatpush.msra.mxu0 0.0
      %4435 = vmatpush.msra.mxu0 0.0
      %4436 = vmatpush.msra.mxu0 0.0
      %4437 = vmatpush.msra.mxu0 0.0
      %4438 = vmatpush.msra.mxu0 0.0
      %4439 = vmatpush.msra.mxu0 0.0
      %4440 = vmatpush.msra.mxu0 0.0
      %4441 = vmatpush.msra.mxu0 0.0
      %4442 = vmatpush.msra.mxu0 0.0
      %4443 = vmatpush.msra.mxu0 0.0
      %v4444 = vand.u32 %v4002, 4294901760
      %4445 = vmatpush.msra.mxu0 %v4444
      %v4446 = vand.u32 %v4000, 4294901760
      %4447 = vmatpush.msra.mxu0 %v4446
      %v4448 = vand.u32 %v3998, 4294901760
      %4449 = vmatpush.msra.mxu0 %v4448
      %v4450 = vand.u32 %v3996, 4294901760
      %4451 = vmatpush.msra.mxu0 %v4450
      %v4452 = vand.u32 %v3428, 4294901760
      %v4453 = vsub.f32 %v3428, %v4452
      %v4454 = vand.u32 %v4453, 4294901760
      %4455 = vmatmul.f32.gmra.mxu0 %v4454
      %v4456 = vpop.f32.mrf.mxu0
      %v4457 = vadd.f32 %v4415, %v4456
      %v4458 = vand.u32 %v3431, 4294901760
      %v4459 = vsub.f32 %v3431, %v4458
      %v4460 = vand.u32 %v4459, 4294901760
      %4461 = vmatmul.f32.gmra.mxu0 %v4460
      %v4462 = vpop.f32.mrf.mxu0
      %v4463 = vadd.f32 %v4420, %v4462
      %v4464 = vand.u32 %v3434, 4294901760
      %v4465 = vsub.f32 %v3434, %v4464
      %v4466 = vand.u32 %v4465, 4294901760
      %4467 = vmatmul.f32.gmra.mxu0 %v4466
      %v4468 = vpop.f32.mrf.mxu0
      %v4469 = vadd.f32 %v4425, %v4468
      %v4470 = vand.u32 %v3437, 4294901760
      %v4471 = vsub.f32 %v3437, %v4470
      %v4472 = vand.u32 %v4471, 4294901760
      %4473 = vmatmul.f32.gmra.mxu0 %v4472
      %v4474 = vpop.f32.mrf.mxu0
      %v4475 = vadd.f32 %v4430, %v4474
      %4476 = vdwg.mxu0
      %4477 = vmatpush.msra.mxu0 0.0
      %4478 = vmatpush.msra.mxu0 0.0
      %4479 = vmatpush.msra.mxu0 0.0
      %4480 = vmatpush.msra.mxu0 0.0
      %4481 = vmatpush.msra.mxu0 0.0
      %4482 = vmatpush.msra.mxu0 0.0
      %4483 = vmatpush.msra.mxu0 0.0
      %4484 = vmatpush.msra.mxu0 0.0
      %4485 = vmatpush.msra.mxu0 0.0
      %4486 = vmatpush.msra.mxu0 0.0
      %4487 = vmatpush.msra.mxu0 0.0
      %4488 = vmatpush.msra.mxu0 0.0
      %v4489 = vand.u32 %v4002, 4294901760
      %v4490 = vsub.f32 %v4002, %v4489
      %v4491 = vand.u32 %v4490, 4294901760
      %4492 = vmatpush.msra.mxu0 %v4491
      %v4493 = vand.u32 %v4000, 4294901760
      %v4494 = vsub.f32 %v4000, %v4493
      %v4495 = vand.u32 %v4494, 4294901760
      %4496 = vmatpush.msra.mxu0 %v4495
      %v4497 = vand.u32 %v3998, 4294901760
      %v4498 = vsub.f32 %v3998, %v4497
      %v4499 = vand.u32 %v4498, 4294901760
      %4500 = vmatpush.msra.mxu0 %v4499
      %v4501 = vand.u32 %v3996, 4294901760
      %v4502 = vsub.f32 %v3996, %v4501
      %v4503 = vand.u32 %v4502, 4294901760
      %4504 = vmatpush.msra.mxu0 %v4503
      %v4505 = vand.u32 %v3428, 4294901760
      %4506 = vmatmul.f32.gmra.mxu0 %v4505
      %v4507 = vpop.f32.mrf.mxu0
      %v4508 = vadd.f32 %v4457, %v4507
      %v4509 = vand.u32 %v3431, 4294901760
      %4510 = vmatmul.f32.gmra.mxu0 %v4509
      %v4511 = vpop.f32.mrf.mxu0
      %v4512 = vadd.f32 %v4463, %v4511
      %v4513 = vand.u32 %v3434, 4294901760
      %4514 = vmatmul.f32.gmra.mxu0 %v4513
      %v4515 = vpop.f32.mrf.mxu0
      %v4516 = vadd.f32 %v4469, %v4515
      %v4517 = vand.u32 %v3437, 4294901760
      %4518 = vmatmul.f32.gmra.mxu0 %v4517
      %v4519 = vpop.f32.mrf.mxu0
      %v4520 = vadd.f32 %v4475, %v4519
      %4521 = vdwg.mxu0
      %4522 = vmatpush.msra.mxu0 0.0
      %4523 = vmatpush.msra.mxu0 0.0
      %4524 = vmatpush.msra.mxu0 0.0
      %4525 = vmatpush.msra.mxu0 0.0
      %4526 = vmatpush.msra.mxu0 0.0
      %4527 = vmatpush.msra.mxu0 0.0
      %4528 = vmatpush.msra.mxu0 0.0
      %4529 = vmatpush.msra.mxu0 0.0
      %4530 = vmatpush.msra.mxu0 0.0
      %4531 = vmatpush.msra.mxu0 0.0
      %4532 = vmatpush.msra.mxu0 0.0
      %4533 = vmatpush.msra.mxu0 0.0
      %v4534 = vand.u32 %v4002, 4294901760
      %4535 = vmatpush.msra.mxu0 %v4534
      %v4536 = vand.u32 %v4000, 4294901760
      %4537 = vmatpush.msra.mxu0 %v4536
      %v4538 = vand.u32 %v3998, 4294901760
      %4539 = vmatpush.msra.mxu0 %v4538
      %v4540 = vand.u32 %v3996, 4294901760
      %4541 = vmatpush.msra.mxu0 %v4540
      %v4542 = vand.u32 %v3428, 4294901760
      %4543 = vmatmul.f32.gmra.mxu0 %v4542
      %v4544 = vpop.f32.mrf.mxu0
      %v4545 = vadd.f32 %v4508, %v4544
      %v4546 = vand.u32 %v3431, 4294901760
      %4547 = vmatmul.f32.gmra.mxu0 %v4546
      %v4548 = vpop.f32.mrf.mxu0
      %v4549 = vadd.f32 %v4512, %v4548
      %v4550 = vand.u32 %v3434, 4294901760
      %4551 = vmatmul.f32.gmra.mxu0 %v4550
      %v4552 = vpop.f32.mrf.mxu0
      %v4553 = vadd.f32 %v4516, %v4552
      %v4554 = vand.u32 %v3437, 4294901760
      %4555 = vmatmul.f32.gmra.mxu0 %v4554
      %v4556 = vpop.f32.mrf.mxu0
      %v4557 = vadd.f32 %v4520, %v4556
      %4558 = vdwg.mxu0
      %v4559 = vadd.f32 %v3703, %v3981
      %4560 = vadd.xlane.f32.xlu0 %v4559
      %v4561 = vpop.xlane.xlu0 %4560
      %v4562 = vadd.f32 %v3707, %v3985
      %4563 = vadd.xlane.f32.xlu0 %v4562
      %v4564 = vpop.xlane.xlu0 %4563
      %v4565 = vadd.f32 %v3711, %v3989
      %4566 = vadd.xlane.f32.xlu0 %v4565
      %v4567 = vpop.xlane.xlu0 %4566
      %v4568 = vadd.f32 %v3715, %v3993
      %4569 = vadd.xlane.f32.xlu0 %v4568
      %v4570 = vpop.xlane.xlu0 %4569
      %v4571 = vrcp.pop 8192.0
      %v4572 = vmul.f32 8192.0, %v4571
      %v4573 = vsub.f32 1.0, %v4572
      %v4574 = vmul.f32 %v4571, %v4573
      %v4575 = vadd.f32 %v4571, %v4574
      %vm4576 = vweird.f32 %v4571
      %v4577 = vsel %vm4576, %v4571, %v4575
      %v4578 = vmul.f32 %v4561, %v4577
      %v4579 = vmul.f32 %v4564, %v4577
      %v4580 = vmul.f32 %v4567, %v4577
      %v4581 = vmul.f32 %v4570, %v4577
      %v4582 = vadd.f32 %v4267, %v4545
      %4583 = vadd.xlane.f32.xlu0 %v4582
      %v4584 = vpop.xlane.xlu0 %4583
      %v4585 = vadd.f32 %v4271, %v4549
      %4586 = vadd.xlane.f32.xlu0 %v4585
      %v4587 = vpop.xlane.xlu0 %4586
      %v4588 = vadd.f32 %v4275, %v4553
      %4589 = vadd.xlane.f32.xlu0 %v4588
      %v4590 = vpop.xlane.xlu0 %4589
      %v4591 = vadd.f32 %v4279, %v4557
      %4592 = vadd.xlane.f32.xlu0 %v4591
      %v4593 = vpop.xlane.xlu0 %4592
      %v4594 = vmul.f32 %v4584, %v4577
      %v4595 = vmul.f32 %v4587, %v4577
      %v4596 = vmul.f32 %v4590, %v4577
      %v4597 = vmul.f32 %v4593, %v4577
      %v4598 = vmul.f32 %v4578, %v4578
      %v4599 = vmul.f32 %v4579, %v4579
      %v4600 = vmul.f32 %v4580, %v4580
      %v4601 = vmul.f32 %v4581, %v4581
      %v4602 = vsub.f32 %v4594, %v4598
      %v4603 = vsub.f32 %v4595, %v4599
      %v4604 = vsub.f32 %v4596, %v4600
      %v4605 = vsub.f32 %v4597, %v4601
      %v4606 = vmax.f32 %v4602, 0.0
      %v4607 = vmax.f32 %v4603, 0.0
      %v4608 = vmax.f32 %v4604, 0.0
      %v4609 = vmax.f32 %v4605, 0.0
      %v4610 = vadd.f32 %v4606, 1e-05
      %v4611 = vadd.f32 %v4607, 1e-05
      %v4612 = vadd.f32 %v4608, 1e-05
      %v4613 = vadd.f32 %v4609, 1e-05
      %v4614 = vrsqrt.pop %v4610
      %v4615 = vmul.f32 %v4614, %v4610
      %v4616 = vmul.f32 %v4615, %v4614
      %v4617 = vmul.f32 0.5, %v4616
      %v4618 = vsub.f32 1.5, %v4617
      %v4619 = vmul.f32 %v4614, %v4618
      %vm4620 = vweird.f32 %v4610
      %vm4621 = vweird.f32 %v4614
      %vm4622 = vmor %vm4620, %vm4621
      %v4623 = vsel %vm4622, %v4614, %v4619
      %v4624 = vrsqrt.pop %v4611
      %v4625 = vmul.f32 %v4624, %v4611
      %v4626 = vmul.f32 %v4625, %v4624
      %v4627 = vmul.f32 0.5, %v4626
      %v4628 = vsub.f32 1.5, %v4627
      %v4629 = vmul.f32 %v4624, %v4628
      %vm4630 = vweird.f32 %v4611
      %vm4631 = vweird.f32 %v4624
      %vm4632 = vmor %vm4630, %vm4631
      %v4633 = vsel %vm4632, %v4624, %v4629
      %v4634 = vrsqrt.pop %v4612
      %v4635 = vmul.f32 %v4634, %v4612
      %v4636 = vmul.f32 %v4635, %v4634
      %v4637 = vmul.f32 0.5, %v4636
      %v4638 = vsub.f32 1.5, %v4637
      %v4639 = vmul.f32 %v4634, %v4638
      %vm4640 = vweird.f32 %v4612
      %vm4641 = vweird.f32 %v4634
      %vm4642 = vmor %vm4640, %vm4641
      %v4643 = vsel %vm4642, %v4634, %v4639
      %v4644 = vrsqrt.pop %v4613
      %v4645 = vmul.f32 %v4644, %v4613
      %v4646 = vmul.f32 %v4645, %v4644
      %v4647 = vmul.f32 0.5, %v4646
      %v4648 = vsub.f32 1.5, %v4647
      %v4649 = vmul.f32 %v4644, %v4648
      %vm4650 = vweird.f32 %v4613
      %vm4651 = vweird.f32 %v4644
      %vm4652 = vmor %vm4650, %vm4651
      %v4653 = vsel %vm4652, %v4644, %v4649
      %v4654 = vsub.f32 %v3418, %v4578
      %v4655 = vsub.f32 %v3419, %v4578
      %v4656 = vsub.f32 %v3420, %v4579
      %v4657 = vsub.f32 %v3421, %v4579
      %v4658 = vsub.f32 %v3422, %v4580
      %v4659 = vsub.f32 %v3423, %v4580
      %v4660 = vsub.f32 %v3424, %v4581
      %v4661 = vsub.f32 %v3425, %v4581
      %v4662 = vmul.f32 %v4623, %v3410
      %v4663 = vmul.f32 %v4633, %v3411
      %v4664 = vmul.f32 %v4643, %v3412
      %v4665 = vmul.f32 %v4653, %v3413
      %4667 = vset.pattern.permute.xlu0 0
      %4668 = vperm.xlu0 %4667, %v4662
      %v4669 = vpop.permute.xlu0 %4668
      %4672 = vset.pattern.permute.xlu0 0
      %4673 = vperm.xlu0 %4672, %v4663
      %v4674 = vpop.permute.xlu0 %4673
      %4677 = vset.pattern.permute.xlu0 0
      %4678 = vperm.xlu0 %4677, %v4664
      %v4679 = vpop.permute.xlu0 %4678
      %4682 = vset.pattern.permute.xlu0 0
      %4683 = vperm.xlu0 %4682, %v4665
      %v4684 = vpop.permute.xlu0 %4683
      %v4686 = vmul.f32 %v4654, %v4669
      %v4687 = vmul.f32 %v4655, %v4669
      %v4688 = vmul.f32 %v4656, %v4674
      %v4689 = vmul.f32 %v4657, %v4674
      %v4690 = vmul.f32 %v4658, %v4679
      %v4691 = vmul.f32 %v4659, %v4679
      %v4692 = vmul.f32 %v4660, %v4684
      %v4693 = vmul.f32 %v4661, %v4684
      %4695 = vset.pattern.permute.xlu0 1
      %4696 = vperm.xlu0 %4695, %v3410
      %v4697 = vpop.permute.xlu0 %4696
      %4700 = vset.pattern.permute.xlu0 1
      %4701 = vperm.xlu0 %4700, %v3411
      %v4702 = vpop.permute.xlu0 %4701
      %4705 = vset.pattern.permute.xlu0 1
      %4706 = vperm.xlu0 %4705, %v3412
      %v4707 = vpop.permute.xlu0 %4706
      %4710 = vset.pattern.permute.xlu0 1
      %4711 = vperm.xlu0 %4710, %v3413
      %v4712 = vpop.permute.xlu0 %4711
      %v4714 = vadd.f32 %v4686, %v4697
      %v4715 = vadd.f32 %v4687, %v4697
      %v4716 = vadd.f32 %v4688, %v4702
      %v4717 = vadd.f32 %v4689, %v4702
      %v4718 = vadd.f32 %v4690, %v4707
      %v4719 = vadd.f32 %v4691, %v4707
      %v4720 = vadd.f32 %v4692, %v4712
      %v4721 = vadd.f32 %v4693, %v4712
      %4722 = vmatpush.msra.mxu0 0.0
      %4723 = vmatpush.msra.mxu0 0.0
      %4724 = vmatpush.msra.mxu0 0.0
      %4725 = vmatpush.msra.mxu0 0.0
      %4726 = vmatpush.msra.mxu0 0.0
      %4727 = vmatpush.msra.mxu0 0.0
      %4728 = vmatpush.msra.mxu0 0.0
      %4729 = vmatpush.msra.mxu0 0.0
      %4730 = vmatpush.msra.mxu0 0.0
      %4731 = vmatpush.msra.mxu0 0.0
      %4732 = vmatpush.msra.mxu0 0.0
      %4733 = vmatpush.msra.mxu0 0.0
      %v4734 = vand.u32 %v3408, 4294901760
      %4735 = vmatpush.msra.mxu0 %v4734
      %v4736 = vand.u32 %v3406, 4294901760
      %4737 = vmatpush.msra.mxu0 %v4736
      %v4738 = vand.u32 %v3404, 4294901760
      %4739 = vmatpush.msra.mxu0 %v4738
      %v4740 = vand.u32 %v3402, 4294901760
      %4741 = vmatpush.msra.mxu0 %v4740
      %v4742 = vand.u32 %v3428, 4294901760
      %v4743 = vsub.f32 %v3428, %v4742
      %v4744 = vand.u32 %v4743, 4294901760
      %v4745 = vsub.f32 %v4743, %v4744
      %v4746 = vand.u32 %v4745, 4294901760
      %4747 = vmatmul.f32.gmra.mxu0 %v4746
      %v4748 = vpop.f32.mrf.mxu0
      %v4749 = vadd.f32 0.0, %v4748
      %v4750 = vand.u32 %v3431, 4294901760
      %v4751 = vsub.f32 %v3431, %v4750
      %v4752 = vand.u32 %v4751, 4294901760
      %v4753 = vsub.f32 %v4751, %v4752
      %v4754 = vand.u32 %v4753, 4294901760
      %4755 = vmatmul.f32.gmra.mxu0 %v4754
      %v4756 = vpop.f32.mrf.mxu0
      %v4757 = vadd.f32 0.0, %v4756
      %v4758 = vand.u32 %v3434, 4294901760
      %v4759 = vsub.f32 %v3434, %v4758
      %v4760 = vand.u32 %v4759, 4294901760
      %v4761 = vsub.f32 %v4759, %v4760
      %v4762 = vand.u32 %v4761, 4294901760
      %4763 = vmatmul.f32.gmra.mxu0 %v4762
      %v4764 = vpop.f32.mrf.mxu0
      %v4765 = vadd.f32 0.0, %v4764
      %v4766 = vand.u32 %v3437, 4294901760
      %v4767 = vsub.f32 %v3437, %v4766
      %v4768 = vand.u32 %v4767, 4294901760
      %v4769 = vsub.f32 %v4767, %v4768
      %v4770 = vand.u32 %v4769, 4294901760
      %4771 = vmatmul.f32.gmra.mxu0 %v4770
      %v4772 = vpop.f32.mrf.mxu0
      %v4773 = vadd.f32 0.0, %v4772
      %4774 = vdwg.mxu0
      %4775 = vmatpush.msra.mxu0 0.0
      %4776 = vmatpush.msra.mxu0 0.0
      %4777 = vmatpush.msra.mxu0 0.0
      %4778 = vmatpush.msra.mxu0 0.0
      %4779 = vmatpush.msra.mxu0 0.0
      %4780 = vmatpush.msra.mxu0 0.0
      %4781 = vmatpush.msra.mxu0 0.0
      %4782 = vmatpush.msra.mxu0 0.0
      %4783 = vmatpush.msra.mxu0 0.0
      %4784 = vmatpush.msra.mxu0 0.0
      %4785 = vmatpush.msra.mxu0 0.0
      %4786 = vmatpush.msra.mxu0 0.0
      %v4787 = vand.u32 %v3408, 4294901760
      %v4788 = vsub.f32 %v3408, %v4787
      %v4789 = vand.u32 %v4788, 4294901760
      %v4790 = vsub.f32 %v4788, %v4789
      %v4791 = vand.u32 %v4790, 4294901760
      %4792 = vmatpush.msra.mxu0 %v4791
      %v4793 = vand.u32 %v3406, 4294901760
      %v4794 = vsub.f32 %v3406, %v4793
      %v4795 = vand.u32 %v4794, 4294901760
      %v4796 = vsub.f32 %v4794, %v4795
      %v4797 = vand.u32 %v4796, 4294901760
      %4798 = vmatpush.msra.mxu0 %v4797
      %v4799 = vand.u32 %v3404, 4294901760
      %v4800 = vsub.f32 %v3404, %v4799
      %v4801 = vand.u32 %v4800, 4294901760
      %v4802 = vsub.f32 %v4800, %v4801
      %v4803 = vand.u32 %v4802, 4294901760
      %4804 = vmatpush.msra.mxu0 %v4803
      %v4805 = vand.u32 %v3402, 4294901760
      %v4806 = vsub.f32 %v3402, %v4805
      %v4807 = vand.u32 %v4806, 4294901760
      %v4808 = vsub.f32 %v4806, %v4807
      %v4809 = vand.u32 %v4808, 4294901760
      %4810 = vmatpush.msra.mxu0 %v4809
      %v4811 = vand.u32 %v3428, 4294901760
      %4812 = vmatmul.f32.gmra.mxu0 %v4811
      %v4813 = vpop.f32.mrf.mxu0
      %v4814 = vadd.f32 %v4749, %v4813
      %v4815 = vand.u32 %v3431, 4294901760
      %4816 = vmatmul.f32.gmra.mxu0 %v4815
      %v4817 = vpop.f32.mrf.mxu0
      %v4818 = vadd.f32 %v4757, %v4817
      %v4819 = vand.u32 %v3434, 4294901760
      %4820 = vmatmul.f32.gmra.mxu0 %v4819
      %v4821 = vpop.f32.mrf.mxu0
      %v4822 = vadd.f32 %v4765, %v4821
      %v4823 = vand.u32 %v3437, 4294901760
      %4824 = vmatmul.f32.gmra.mxu0 %v4823
      %v4825 = vpop.f32.mrf.mxu0
      %v4826 = vadd.f32 %v4773, %v4825
      %4827 = vdwg.mxu0
      %4828 = vmatpush.msra.mxu0 0.0
      %4829 = vmatpush.msra.mxu0 0.0
      %4830 = vmatpush.msra.mxu0 0.0
      %4831 = vmatpush.msra.mxu0 0.0
      %4832 = vmatpush.msra.mxu0 0.0
      %4833 = vmatpush.msra.mxu0 0.0
      %4834 = vmatpush.msra.mxu0 0.0
      %4835 = vmatpush.msra.mxu0 0.0
      %4836 = vmatpush.msra.mxu0 0.0
      %4837 = vmatpush.msra.mxu0 0.0
      %4838 = vmatpush.msra.mxu0 0.0
      %4839 = vmatpush.msra.mxu0 0.0
      %v4840 = vand.u32 %v3408, 4294901760
      %v4841 = vsub.f32 %v3408, %v4840
      %4842 = vmatpush.msra.mxu0 %v4841
      %v4843 = vand.u32 %v3406, 4294901760
      %v4844 = vsub.f32 %v3406, %v4843
      %4845 = vmatpush.msra.mxu0 %v4844
      %v4846 = vand.u32 %v3404, 4294901760
      %v4847 = vsub.f32 %v3404, %v4846
      %4848 = vmatpush.msra.mxu0 %v4847
      %v4849 = vand.u32 %v3402, 4294901760
      %v4850 = vsub.f32 %v3402, %v4849
      %4851 = vmatpush.msra.mxu0 %v4850
      %v4852 = vand.u32 %v3428, 4294901760
      %v4853 = vsub.f32 %v3428, %v4852
      %4854 = vmatmul.f32.gmra.mxu0 %v4853
      %v4855 = vpop.f32.mrf.mxu0
      %v4856 = vadd.f32 %v4814, %v4855
      %v4857 = vand.u32 %v3431, 4294901760
      %v4858 = vsub.f32 %v3431, %v4857
      %4859 = vmatmul.f32.gmra.mxu0 %v4858
      %v4860 = vpop.f32.mrf.mxu0
      %v4861 = vadd.f32 %v4818, %v4860
      %v4862 = vand.u32 %v3434, 4294901760
      %v4863 = vsub.f32 %v3434, %v4862
      %4864 = vmatmul.f32.gmra.mxu0 %v4863
      %v4865 = vpop.f32.mrf.mxu0
      %v4866 = vadd.f32 %v4822, %v4865
      %v4867 = vand.u32 %v3437, 4294901760
      %v4868 = vsub.f32 %v3437, %v4867
      %4869 = vmatmul.f32.gmra.mxu0 %v4868
      %v4870 = vpop.f32.mrf.mxu0
      %v4871 = vadd.f32 %v4826, %v4870
      %4872 = vdwg.mxu0
      %4873 = vmatpush.msra.mxu0 0.0
      %4874 = vmatpush.msra.mxu0 0.0
      %4875 = vmatpush.msra.mxu0 0.0
      %4876 = vmatpush.msra.mxu0 0.0
      %4877 = vmatpush.msra.mxu0 0.0
      %4878 = vmatpush.msra.mxu0 0.0
      %4879 = vmatpush.msra.mxu0 0.0
      %4880 = vmatpush.msra.mxu0 0.0
      %4881 = vmatpush.msra.mxu0 0.0
      %4882 = vmatpush.msra.mxu0 0.0
      %4883 = vmatpush.msra.mxu0 0.0
      %4884 = vmatpush.msra.mxu0 0.0
      %v4885 = vand.u32 %v3408, 4294901760
      %4886 = vmatpush.msra.mxu0 %v4885
      %v4887 = vand.u32 %v3406, 4294901760
      %4888 = vmatpush.msra.mxu0 %v4887
      %v4889 = vand.u32 %v3404, 4294901760
      %4890 = vmatpush.msra.mxu0 %v4889
      %v4891 = vand.u32 %v3402, 4294901760
      %4892 = vmatpush.msra.mxu0 %v4891
      %v4893 = vand.u32 %v3428, 4294901760
      %v4894 = vsub.f32 %v3428, %v4893
      %v4895 = vand.u32 %v4894, 4294901760
      %4896 = vmatmul.f32.gmra.mxu0 %v4895
      %v4897 = vpop.f32.mrf.mxu0
      %v4898 = vadd.f32 %v4856, %v4897
      %v4899 = vand.u32 %v3431, 4294901760
      %v4900 = vsub.f32 %v3431, %v4899
      %v4901 = vand.u32 %v4900, 4294901760
      %4902 = vmatmul.f32.gmra.mxu0 %v4901
      %v4903 = vpop.f32.mrf.mxu0
      %v4904 = vadd.f32 %v4861, %v4903
      %v4905 = vand.u32 %v3434, 4294901760
      %v4906 = vsub.f32 %v3434, %v4905
      %v4907 = vand.u32 %v4906, 4294901760
      %4908 = vmatmul.f32.gmra.mxu0 %v4907
      %v4909 = vpop.f32.mrf.mxu0
      %v4910 = vadd.f32 %v4866, %v4909
      %v4911 = vand.u32 %v3437, 4294901760
      %v4912 = vsub.f32 %v3437, %v4911
      %v4913 = vand.u32 %v4912, 4294901760
      %4914 = vmatmul.f32.gmra.mxu0 %v4913
      %v4915 = vpop.f32.mrf.mxu0
      %v4916 = vadd.f32 %v4871, %v4915
      %4917 = vdwg.mxu0
      %4918 = vmatpush.msra.mxu0 0.0
      %4919 = vmatpush.msra.mxu0 0.0
      %4920 = vmatpush.msra.mxu0 0.0
      %4921 = vmatpush.msra.mxu0 0.0
      %4922 = vmatpush.msra.mxu0 0.0
      %4923 = vmatpush.msra.mxu0 0.0
      %4924 = vmatpush.msra.mxu0 0.0
      %4925 = vmatpush.msra.mxu0 0.0
      %4926 = vmatpush.msra.mxu0 0.0
      %4927 = vmatpush.msra.mxu0 0.0
      %4928 = vmatpush.msra.mxu0 0.0
      %4929 = vmatpush.msra.mxu0 0.0
      %v4930 = vand.u32 %v3408, 4294901760
      %v4931 = vsub.f32 %v3408, %v4930
      %v4932 = vand.u32 %v4931, 4294901760
      %4933 = vmatpush.msra.mxu0 %v4932
      %v4934 = vand.u32 %v3406, 4294901760
      %v4935 = vsub.f32 %v3406, %v4934
      %v4936 = vand.u32 %v4935, 4294901760
      %4937 = vmatpush.msra.mxu0 %v4936
      %v4938 = vand.u32 %v3404, 4294901760
      %v4939 = vsub.f32 %v3404, %v4938
      %v4940 = vand.u32 %v4939, 4294901760
      %4941 = vmatpush.msra.mxu0 %v4940
      %v4942 = vand.u32 %v3402, 4294901760
      %v4943 = vsub.f32 %v3402, %v4942
      %v4944 = vand.u32 %v4943, 4294901760
      %4945 = vmatpush.msra.mxu0 %v4944
      %v4946 = vand.u32 %v3428, 4294901760
      %4947 = vmatmul.f32.gmra.mxu0 %v4946
      %v4948 = vpop.f32.mrf.mxu0
      %v4949 = vadd.f32 %v4898, %v4948
      %v4950 = vand.u32 %v3431, 4294901760
      %4951 = vmatmul.f32.gmra.mxu0 %v4950
      %v4952 = vpop.f32.mrf.mxu0
      %v4953 = vadd.f32 %v4904, %v4952
      %v4954 = vand.u32 %v3434, 4294901760
      %4955 = vmatmul.f32.gmra.mxu0 %v4954
      %v4956 = vpop.f32.mrf.mxu0
      %v4957 = vadd.f32 %v4910, %v4956
      %v4958 = vand.u32 %v3437, 4294901760
      %4959 = vmatmul.f32.gmra.mxu0 %v4958
      %v4960 = vpop.f32.mrf.mxu0
      %v4961 = vadd.f32 %v4916, %v4960
      %4962 = vdwg.mxu0
      %4963 = vmatpush.msra.mxu0 0.0
      %4964 = vmatpush.msra.mxu0 0.0
      %4965 = vmatpush.msra.mxu0 0.0
      %4966 = vmatpush.msra.mxu0 0.0
      %4967 = vmatpush.msra.mxu0 0.0
      %4968 = vmatpush.msra.mxu0 0.0
      %4969 = vmatpush.msra.mxu0 0.0
      %4970 = vmatpush.msra.mxu0 0.0
      %4971 = vmatpush.msra.mxu0 0.0
      %4972 = vmatpush.msra.mxu0 0.0
      %4973 = vmatpush.msra.mxu0 0.0
      %4974 = vmatpush.msra.mxu0 0.0
      %v4975 = vand.u32 %v3408, 4294901760
      %4976 = vmatpush.msra.mxu0 %v4975
      %v4977 = vand.u32 %v3406, 4294901760
      %4978 = vmatpush.msra.mxu0 %v4977
      %v4979 = vand.u32 %v3404, 4294901760
      %4980 = vmatpush.msra.mxu0 %v4979
      %v4981 = vand.u32 %v3402, 4294901760
      %4982 = vmatpush.msra.mxu0 %v4981
      %v4983 = vand.u32 %v3428, 4294901760
      %4984 = vmatmul.f32.gmra.mxu0 %v4983
      %v4985 = vpop.f32.mrf.mxu0
      %v4986 = vadd.f32 %v4949, %v4985
      %v4987 = vand.u32 %v3431, 4294901760
      %4988 = vmatmul.f32.gmra.mxu0 %v4987
      %v4989 = vpop.f32.mrf.mxu0
      %v4990 = vadd.f32 %v4953, %v4989
      %v4991 = vand.u32 %v3434, 4294901760
      %4992 = vmatmul.f32.gmra.mxu0 %v4991
      %v4993 = vpop.f32.mrf.mxu0
      %v4994 = vadd.f32 %v4957, %v4993
      %v4995 = vand.u32 %v3437, 4294901760
      %4996 = vmatmul.f32.gmra.mxu0 %v4995
      %v4997 = vpop.f32.mrf.mxu0
      %v4998 = vadd.f32 %v4961, %v4997
      %4999 = vdwg.mxu0
      %5000 = vmatpush.msra.mxu0 0.0
      %5001 = vmatpush.msra.mxu0 0.0
      %5002 = vmatpush.msra.mxu0 0.0
      %5003 = vmatpush.msra.mxu0 0.0
      %5004 = vmatpush.msra.mxu0 0.0
      %5005 = vmatpush.msra.mxu0 0.0
      %5006 = vmatpush.msra.mxu0 0.0
      %5007 = vmatpush.msra.mxu0 0.0
      %5008 = vmatpush.msra.mxu0 0.0
      %5009 = vmatpush.msra.mxu0 0.0
      %5010 = vmatpush.msra.mxu0 0.0
      %5011 = vmatpush.msra.mxu0 0.0
      %v5012 = vand.u32 %v3409, 4294901760
      %5013 = vmatpush.msra.mxu0 %v5012
      %v5014 = vand.u32 %v3407, 4294901760
      %5015 = vmatpush.msra.mxu0 %v5014
      %v5016 = vand.u32 %v3405, 4294901760
      %5017 = vmatpush.msra.mxu0 %v5016
      %v5018 = vand.u32 %v3403, 4294901760
      %5019 = vmatpush.msra.mxu0 %v5018
      %v5020 = vand.u32 %v3428, 4294901760
      %v5021 = vsub.f32 %v3428, %v5020
      %v5022 = vand.u32 %v5021, 4294901760
      %v5023 = vsub.f32 %v5021, %v5022
      %v5024 = vand.u32 %v5023, 4294901760
      %5025 = vmatmul.f32.gmra.mxu0 %v5024
      %v5026 = vpop.f32.mrf.mxu0
      %v5027 = vadd.f32 0.0, %v5026
      %v5028 = vand.u32 %v3431, 4294901760
      %v5029 = vsub.f32 %v3431, %v5028
      %v5030 = vand.u32 %v5029, 4294901760
      %v5031 = vsub.f32 %v5029, %v5030
      %v5032 = vand.u32 %v5031, 4294901760
      %5033 = vmatmul.f32.gmra.mxu0 %v5032
      %v5034 = vpop.f32.mrf.mxu0
      %v5035 = vadd.f32 0.0, %v5034
      %v5036 = vand.u32 %v3434, 4294901760
      %v5037 = vsub.f32 %v3434, %v5036
      %v5038 = vand.u32 %v5037, 4294901760
      %v5039 = vsub.f32 %v5037, %v5038
      %v5040 = vand.u32 %v5039, 4294901760
      %5041 = vmatmul.f32.gmra.mxu0 %v5040
      %v5042 = vpop.f32.mrf.mxu0
      %v5043 = vadd.f32 0.0, %v5042
      %v5044 = vand.u32 %v3437, 4294901760
      %v5045 = vsub.f32 %v3437, %v5044
      %v5046 = vand.u32 %v5045, 4294901760
      %v5047 = vsub.f32 %v5045, %v5046
      %v5048 = vand.u32 %v5047, 4294901760
      %5049 = vmatmul.f32.gmra.mxu0 %v5048
      %v5050 = vpop.f32.mrf.mxu0
      %v5051 = vadd.f32 0.0, %v5050
      %5052 = vdwg.mxu0
      %5053 = vmatpush.msra.mxu0 0.0
      %5054 = vmatpush.msra.mxu0 0.0
      %5055 = vmatpush.msra.mxu0 0.0
      %5056 = vmatpush.msra.mxu0 0.0
      %5057 = vmatpush.msra.mxu0 0.0
      %5058 = vmatpush.msra.mxu0 0.0
      %5059 = vmatpush.msra.mxu0 0.0
      %5060 = vmatpush.msra.mxu0 0.0
      %5061 = vmatpush.msra.mxu0 0.0
      %5062 = vmatpush.msra.mxu0 0.0
      %5063 = vmatpush.msra.mxu0 0.0
      %5064 = vmatpush.msra.mxu0 0.0
      %v5065 = vand.u32 %v3409, 4294901760
      %v5066 = vsub.f32 %v3409, %v5065
      %v5067 = vand.u32 %v5066, 4294901760
      %v5068 = vsub.f32 %v5066, %v5067
      %v5069 = vand.u32 %v5068, 4294901760
      %5070 = vmatpush.msra.mxu0 %v5069
      %v5071 = vand.u32 %v3407, 4294901760
      %v5072 = vsub.f32 %v3407, %v5071
      %v5073 = vand.u32 %v5072, 4294901760
      %v5074 = vsub.f32 %v5072, %v5073
      %v5075 = vand.u32 %v5074, 4294901760
      %5076 = vmatpush.msra.mxu0 %v5075
      %v5077 = vand.u32 %v3405, 4294901760
      %v5078 = vsub.f32 %v3405, %v5077
      %v5079 = vand.u32 %v5078, 4294901760
      %v5080 = vsub.f32 %v5078, %v5079
      %v5081 = vand.u32 %v5080, 4294901760
      %5082 = vmatpush.msra.mxu0 %v5081
      %v5083 = vand.u32 %v3403, 4294901760
      %v5084 = vsub.f32 %v3403, %v5083
      %v5085 = vand.u32 %v5084, 4294901760
      %v5086 = vsub.f32 %v5084, %v5085
      %v5087 = vand.u32 %v5086, 4294901760
      %5088 = vmatpush.msra.mxu0 %v5087
      %v5089 = vand.u32 %v3428, 4294901760
      %5090 = vmatmul.f32.gmra.mxu0 %v5089
      %v5091 = vpop.f32.mrf.mxu0
      %v5092 = vadd.f32 %v5027, %v5091
      %v5093 = vand.u32 %v3431, 4294901760
      %5094 = vmatmul.f32.gmra.mxu0 %v5093
      %v5095 = vpop.f32.mrf.mxu0
      %v5096 = vadd.f32 %v5035, %v5095
      %v5097 = vand.u32 %v3434, 4294901760
      %5098 = vmatmul.f32.gmra.mxu0 %v5097
      %v5099 = vpop.f32.mrf.mxu0
      %v5100 = vadd.f32 %v5043, %v5099
      %v5101 = vand.u32 %v3437, 4294901760
      %5102 = vmatmul.f32.gmra.mxu0 %v5101
      %v5103 = vpop.f32.mrf.mxu0
      %v5104 = vadd.f32 %v5051, %v5103
      %5105 = vdwg.mxu0
      %5106 = vmatpush.msra.mxu0 0.0
      %5107 = vmatpush.msra.mxu0 0.0
      %5108 = vmatpush.msra.mxu0 0.0
      %5109 = vmatpush.msra.mxu0 0.0
      %5110 = vmatpush.msra.mxu0 0.0
      %5111 = vmatpush.msra.mxu0 0.0
      %5112 = vmatpush.msra.mxu0 0.0
      %5113 = vmatpush.msra.mxu0 0.0
      %5114 = vmatpush.msra.mxu0 0.0
      %5115 = vmatpush.msra.mxu0 0.0
      %5116 = vmatpush.msra.mxu0 0.0
      %5117 = vmatpush.msra.mxu0 0.0
      %v5118 = vand.u32 %v3409, 4294901760
      %v5119 = vsub.f32 %v3409, %v5118
      %5120 = vmatpush.msra.mxu0 %v5119
      %v5121 = vand.u32 %v3407, 4294901760
      %v5122 = vsub.f32 %v3407, %v5121
      %5123 = vmatpush.msra.mxu0 %v5122
      %v5124 = vand.u32 %v3405, 4294901760
      %v5125 = vsub.f32 %v3405, %v5124
      %5126 = vmatpush.msra.mxu0 %v5125
      %v5127 = vand.u32 %v3403, 4294901760
      %v5128 = vsub.f32 %v3403, %v5127
      %5129 = vmatpush.msra.mxu0 %v5128
      %v5130 = vand.u32 %v3428, 4294901760
      %v5131 = vsub.f32 %v3428, %v5130
      %5132 = vmatmul.f32.gmra.mxu0 %v5131
      %v5133 = vpop.f32.mrf.mxu0
      %v5134 = vadd.f32 %v5092, %v5133
      %v5135 = vand.u32 %v3431, 4294901760
      %v5136 = vsub.f32 %v3431, %v5135
      %5137 = vmatmul.f32.gmra.mxu0 %v5136
      %v5138 = vpop.f32.mrf.mxu0
      %v5139 = vadd.f32 %v5096, %v5138
      %v5140 = vand.u32 %v3434, 4294901760
      %v5141 = vsub.f32 %v3434, %v5140
      %5142 = vmatmul.f32.gmra.mxu0 %v5141
      %v5143 = vpop.f32.mrf.mxu0
      %v5144 = vadd.f32 %v5100, %v5143
      %v5145 = vand.u32 %v3437, 4294901760
      %v5146 = vsub.f32 %v3437, %v5145
      %5147 = vmatmul.f32.gmra.mxu0 %v5146
      %v5148 = vpop.f32.mrf.mxu0
      %v5149 = vadd.f32 %v5104, %v5148
      %5150 = vdwg.mxu0
      %5151 = vmatpush.msra.mxu0 0.0
      %5152 = vmatpush.msra.mxu0 0.0
      %5153 = vmatpush.msra.mxu0 0.0
      %5154 = vmatpush.msra.mxu0 0.0
      %5155 = vmatpush.msra.mxu0 0.0
      %5156 = vmatpush.msra.mxu0 0.0
      %5157 = vmatpush.msra.mxu0 0.0
      %5158 = vmatpush.msra.mxu0 0.0
      %5159 = vmatpush.msra.mxu0 0.0
      %5160 = vmatpush.msra.mxu0 0.0
      %5161 = vmatpush.msra.mxu0 0.0
      %5162 = vmatpush.msra.mxu0 0.0
      %v5163 = vand.u32 %v3409, 4294901760
      %5164 = vmatpush.msra.mxu0 %v5163
      %v5165 = vand.u32 %v3407, 4294901760
      %5166 = vmatpush.msra.mxu0 %v5165
      %v5167 = vand.u32 %v3405, 4294901760
      %5168 = vmatpush.msra.mxu0 %v5167
      %v5169 = vand.u32 %v3403, 4294901760
      %5170 = vmatpush.msra.mxu0 %v5169
      %v5171 = vand.u32 %v3428, 4294901760
      %v5172 = vsub.f32 %v3428, %v5171
      %v5173 = vand.u32 %v5172, 4294901760
      %5174 = vmatmul.f32.gmra.mxu0 %v5173
      %v5175 = vpop.f32.mrf.mxu0
      %v5176 = vadd.f32 %v5134, %v5175
      %v5177 = vand.u32 %v3431, 4294901760
      %v5178 = vsub.f32 %v3431, %v5177
      %v5179 = vand.u32 %v5178, 4294901760
      %5180 = vmatmul.f32.gmra.mxu0 %v5179
      %v5181 = vpop.f32.mrf.mxu0
      %v5182 = vadd.f32 %v5139, %v5181
      %v5183 = vand.u32 %v3434, 4294901760
      %v5184 = vsub.f32 %v3434, %v5183
      %v5185 = vand.u32 %v5184, 4294901760
      %5186 = vmatmul.f32.gmra.mxu0 %v5185
      %v5187 = vpop.f32.mrf.mxu0
      %v5188 = vadd.f32 %v5144, %v5187
      %v5189 = vand.u32 %v3437, 4294901760
      %v5190 = vsub.f32 %v3437, %v5189
      %v5191 = vand.u32 %v5190, 4294901760
      %5192 = vmatmul.f32.gmra.mxu0 %v5191
      %v5193 = vpop.f32.mrf.mxu0
      %v5194 = vadd.f32 %v5149, %v5193
      %5195 = vdwg.mxu0
      %5196 = vmatpush.msra.mxu0 0.0
      %5197 = vmatpush.msra.mxu0 0.0
      %5198 = vmatpush.msra.mxu0 0.0
      %5199 = vmatpush.msra.mxu0 0.0
      %5200 = vmatpush.msra.mxu0 0.0
      %5201 = vmatpush.msra.mxu0 0.0
      %5202 = vmatpush.msra.mxu0 0.0
      %5203 = vmatpush.msra.mxu0 0.0
      %5204 = vmatpush.msra.mxu0 0.0
      %5205 = vmatpush.msra.mxu0 0.0
      %5206 = vmatpush.msra.mxu0 0.0
      %5207 = vmatpush.msra.mxu0 0.0
      %v5208 = vand.u32 %v3409, 4294901760
      %v5209 = vsub.f32 %v3409, %v5208
      %v5210 = vand.u32 %v5209, 4294901760
      %5211 = vmatpush.msra.mxu0 %v5210
      %v5212 = vand.u32 %v3407, 4294901760
      %v5213 = vsub.f32 %v3407, %v5212
      %v5214 = vand.u32 %v5213, 4294901760
      %5215 = vmatpush.msra.mxu0 %v5214
      %v5216 = vand.u32 %v3405, 4294901760
      %v5217 = vsub.f32 %v3405, %v5216
      %v5218 = vand.u32 %v5217, 4294901760
      %5219 = vmatpush.msra.mxu0 %v5218
      %v5220 = vand.u32 %v3403, 4294901760
      %v5221 = vsub.f32 %v3403, %v5220
      %v5222 = vand.u32 %v5221, 4294901760
      %5223 = vmatpush.msra.mxu0 %v5222
      %v5224 = vand.u32 %v3428, 4294901760
      %5225 = vmatmul.f32.gmra.mxu0 %v5224
      %v5226 = vpop.f32.mrf.mxu0
      %v5227 = vadd.f32 %v5176, %v5226
      %v5228 = vand.u32 %v3431, 4294901760
      %5229 = vmatmul.f32.gmra.mxu0 %v5228
      %v5230 = vpop.f32.mrf.mxu0
      %v5231 = vadd.f32 %v5182, %v5230
      %v5232 = vand.u32 %v3434, 4294901760
      %5233 = vmatmul.f32.gmra.mxu0 %v5232
      %v5234 = vpop.f32.mrf.mxu0
      %v5235 = vadd.f32 %v5188, %v5234
      %v5236 = vand.u32 %v3437, 4294901760
      %5237 = vmatmul.f32.gmra.mxu0 %v5236
      %v5238 = vpop.f32.mrf.mxu0
      %v5239 = vadd.f32 %v5194, %v5238
      %5240 = vdwg.mxu0
      %5241 = vmatpush.msra.mxu0 0.0
      %5242 = vmatpush.msra.mxu0 0.0
      %5243 = vmatpush.msra.mxu0 0.0
      %5244 = vmatpush.msra.mxu0 0.0
      %5245 = vmatpush.msra.mxu0 0.0
      %5246 = vmatpush.msra.mxu0 0.0
      %5247 = vmatpush.msra.mxu0 0.0
      %5248 = vmatpush.msra.mxu0 0.0
      %5249 = vmatpush.msra.mxu0 0.0
      %5250 = vmatpush.msra.mxu0 0.0
      %5251 = vmatpush.msra.mxu0 0.0
      %5252 = vmatpush.msra.mxu0 0.0
      %v5253 = vand.u32 %v3409, 4294901760
      %5254 = vmatpush.msra.mxu0 %v5253
      %v5255 = vand.u32 %v3407, 4294901760
      %5256 = vmatpush.msra.mxu0 %v5255
      %v5257 = vand.u32 %v3405, 4294901760
      %5258 = vmatpush.msra.mxu0 %v5257
      %v5259 = vand.u32 %v3403, 4294901760
      %5260 = vmatpush.msra.mxu0 %v5259
      %v5261 = vand.u32 %v3428, 4294901760
      %5262 = vmatmul.f32.gmra.mxu0 %v5261
      %v5263 = vpop.f32.mrf.mxu0
      %v5264 = vadd.f32 %v5227, %v5263
      %v5265 = vand.u32 %v3431, 4294901760
      %5266 = vmatmul.f32.gmra.mxu0 %v5265
      %v5267 = vpop.f32.mrf.mxu0
      %v5268 = vadd.f32 %v5231, %v5267
      %v5269 = vand.u32 %v3434, 4294901760
      %5270 = vmatmul.f32.gmra.mxu0 %v5269
      %v5271 = vpop.f32.mrf.mxu0
      %v5272 = vadd.f32 %v5235, %v5271
      %v5273 = vand.u32 %v3437, 4294901760
      %5274 = vmatmul.f32.gmra.mxu0 %v5273
      %v5275 = vpop.f32.mrf.mxu0
      %v5276 = vadd.f32 %v5239, %v5275
      %5277 = vdwg.mxu0
      %v5278 = vmul.f32 %v3402, %v3402
      %v5279 = vmul.f32 %v3403, %v3403
      %v5280 = vmul.f32 %v3404, %v3404
      %v5281 = vmul.f32 %v3405, %v3405
      %v5282 = vmul.f32 %v3406, %v3406
      %v5283 = vmul.f32 %v3407, %v3407
      %v5284 = vmul.f32 %v3408, %v3408
      %v5285 = vmul.f32 %v3409, %v3409
      %5286 = vmatpush.msra.mxu0 0.0
      %5287 = vmatpush.msra.mxu0 0.0
      %5288 = vmatpush.msra.mxu0 0.0
      %5289 = vmatpush.msra.mxu0 0.0
      %5290 = vmatpush.msra.mxu0 0.0
      %5291 = vmatpush.msra.mxu0 0.0
      %5292 = vmatpush.msra.mxu0 0.0
      %5293 = vmatpush.msra.mxu0 0.0
      %5294 = vmatpush.msra.mxu0 0.0
      %5295 = vmatpush.msra.mxu0 0.0
      %5296 = vmatpush.msra.mxu0 0.0
      %5297 = vmatpush.msra.mxu0 0.0
      %v5298 = vand.u32 %v5284, 4294901760
      %5299 = vmatpush.msra.mxu0 %v5298
      %v5300 = vand.u32 %v5282, 4294901760
      %5301 = vmatpush.msra.mxu0 %v5300
      %v5302 = vand.u32 %v5280, 4294901760
      %5303 = vmatpush.msra.mxu0 %v5302
      %v5304 = vand.u32 %v5278, 4294901760
      %5305 = vmatpush.msra.mxu0 %v5304
      %v5306 = vand.u32 %v3428, 4294901760
      %v5307 = vsub.f32 %v3428, %v5306
      %v5308 = vand.u32 %v5307, 4294901760
      %v5309 = vsub.f32 %v5307, %v5308
      %v5310 = vand.u32 %v5309, 4294901760
      %5311 = vmatmul.f32.gmra.mxu0 %v5310
      %v5312 = vpop.f32.mrf.mxu0
      %v5313 = vadd.f32 0.0, %v5312
      %v5314 = vand.u32 %v3431, 4294901760
      %v5315 = vsub.f32 %v3431, %v5314
      %v5316 = vand.u32 %v5315, 4294901760
      %v5317 = vsub.f32 %v5315, %v5316
      %v5318 = vand.u32 %v5317, 4294901760
      %5319 = vmatmul.f32.gmra.mxu0 %v5318
      %v5320 = vpop.f32.mrf.mxu0
      %v5321 = vadd.f32 0.0, %v5320
      %v5322 = vand.u32 %v3434, 4294901760
      %v5323 = vsub.f32 %v3434, %v5322
      %v5324 = vand.u32 %v5323, 4294901760
      %v5325 = vsub.f32 %v5323, %v5324
      %v5326 = vand.u32 %v5325, 4294901760
      %5327 = vmatmul.f32.gmra.mxu0 %v5326
      %v5328 = vpop.f32.mrf.mxu0
      %v5329 = vadd.f32 0.0, %v5328
      %v5330 = vand.u32 %v3437, 4294901760
      %v5331 = vsub.f32 %v3437, %v5330
      %v5332 = vand.u32 %v5331, 4294901760
      %v5333 = vsub.f32 %v5331, %v5332
      %v5334 = vand.u32 %v5333, 4294901760
      %5335 = vmatmul.f32.gmra.mxu0 %v5334
      %v5336 = vpop.f32.mrf.mxu0
      %v5337 = vadd.f32 0.0, %v5336
      %5338 = vdwg.mxu0
      %5339 = vmatpush.msra.mxu0 0.0
      %5340 = vmatpush.msra.mxu0 0.0
      %5341 = vmatpush.msra.mxu0 0.0
      %5342 = vmatpush.msra.mxu0 0.0
      %5343 = vmatpush.msra.mxu0 0.0
      %5344 = vmatpush.msra.mxu0 0.0
      %5345 = vmatpush.msra.mxu0 0.0
      %5346 = vmatpush.msra.mxu0 0.0
      %5347 = vmatpush.msra.mxu0 0.0
      %5348 = vmatpush.msra.mxu0 0.0
      %5349 = vmatpush.msra.mxu0 0.0
      %5350 = vmatpush.msra.mxu0 0.0
      %v5351 = vand.u32 %v5284, 4294901760
      %v5352 = vsub.f32 %v5284, %v5351
      %v5353 = vand.u32 %v5352, 4294901760
      %v5354 = vsub.f32 %v5352, %v5353
      %v5355 = vand.u32 %v5354, 4294901760
      %5356 = vmatpush.msra.mxu0 %v5355
      %v5357 = vand.u32 %v5282, 4294901760
      %v5358 = vsub.f32 %v5282, %v5357
      %v5359 = vand.u32 %v5358, 4294901760
      %v5360 = vsub.f32 %v5358, %v5359
      %v5361 = vand.u32 %v5360, 4294901760
      %5362 = vmatpush.msra.mxu0 %v5361
      %v5363 = vand.u32 %v5280, 4294901760
      %v5364 = vsub.f32 %v5280, %v5363
      %v5365 = vand.u32 %v5364, 4294901760
      %v5366 = vsub.f32 %v5364, %v5365
      %v5367 = vand.u32 %v5366, 4294901760
      %5368 = vmatpush.msra.mxu0 %v5367
      %v5369 = vand.u32 %v5278, 4294901760
      %v5370 = vsub.f32 %v5278, %v5369
      %v5371 = vand.u32 %v5370, 4294901760
      %v5372 = vsub.f32 %v5370, %v5371
      %v5373 = vand.u32 %v5372, 4294901760
      %5374 = vmatpush.msra.mxu0 %v5373
      %v5375 = vand.u32 %v3428, 4294901760
      %5376 = vmatmul.f32.gmra.mxu0 %v5375
      %v5377 = vpop.f32.mrf.mxu0
      %v5378 = vadd.f32 %v5313, %v5377
      %v5379 = vand.u32 %v3431, 4294901760
      %5380 = vmatmul.f32.gmra.mxu0 %v5379
      %v5381 = vpop.f32.mrf.mxu0
      %v5382 = vadd.f32 %v5321, %v5381
      %v5383 = vand.u32 %v3434, 4294901760
      %5384 = vmatmul.f32.gmra.mxu0 %v5383
      %v5385 = vpop.f32.mrf.mxu0
      %v5386 = vadd.f32 %v5329, %v5385
      %v5387 = vand.u32 %v3437, 4294901760
      %5388 = vmatmul.f32.gmra.mxu0 %v5387
      %v5389 = vpop.f32.mrf.mxu0
      %v5390 = vadd.f32 %v5337, %v5389
      %5391 = vdwg.mxu0
      %5392 = vmatpush.msra.mxu0 0.0
      %5393 = vmatpush.msra.mxu0 0.0
      %5394 = vmatpush.msra.mxu0 0.0
      %5395 = vmatpush.msra.mxu0 0.0
      %5396 = vmatpush.msra.mxu0 0.0
      %5397 = vmatpush.msra.mxu0 0.0
      %5398 = vmatpush.msra.mxu0 0.0
      %5399 = vmatpush.msra.mxu0 0.0
      %5400 = vmatpush.msra.mxu0 0.0
      %5401 = vmatpush.msra.mxu0 0.0
      %5402 = vmatpush.msra.mxu0 0.0
      %5403 = vmatpush.msra.mxu0 0.0
      %v5404 = vand.u32 %v5284, 4294901760
      %v5405 = vsub.f32 %v5284, %v5404
      %5406 = vmatpush.msra.mxu0 %v5405
      %v5407 = vand.u32 %v5282, 4294901760
      %v5408 = vsub.f32 %v5282, %v5407
      %5409 = vmatpush.msra.mxu0 %v5408
      %v5410 = vand.u32 %v5280, 4294901760
      %v5411 = vsub.f32 %v5280, %v5410
      %5412 = vmatpush.msra.mxu0 %v5411
      %v5413 = vand.u32 %v5278, 4294901760
      %v5414 = vsub.f32 %v5278, %v5413
      %5415 = vmatpush.msra.mxu0 %v5414
      %v5416 = vand.u32 %v3428, 4294901760
      %v5417 = vsub.f32 %v3428, %v5416
      %5418 = vmatmul.f32.gmra.mxu0 %v5417
      %v5419 = vpop.f32.mrf.mxu0
      %v5420 = vadd.f32 %v5378, %v5419
      %v5421 = vand.u32 %v3431, 4294901760
      %v5422 = vsub.f32 %v3431, %v5421
      %5423 = vmatmul.f32.gmra.mxu0 %v5422
      %v5424 = vpop.f32.mrf.mxu0
      %v5425 = vadd.f32 %v5382, %v5424
      %v5426 = vand.u32 %v3434, 4294901760
      %v5427 = vsub.f32 %v3434, %v5426
      %5428 = vmatmul.f32.gmra.mxu0 %v5427
      %v5429 = vpop.f32.mrf.mxu0
      %v5430 = vadd.f32 %v5386, %v5429
      %v5431 = vand.u32 %v3437, 4294901760
      %v5432 = vsub.f32 %v3437, %v5431
      %5433 = vmatmul.f32.gmra.mxu0 %v5432
      %v5434 = vpop.f32.mrf.mxu0
      %v5435 = vadd.f32 %v5390, %v5434
      %5436 = vdwg.mxu0
      %5437 = vmatpush.msra.mxu0 0.0
      %5438 = vmatpush.msra.mxu0 0.0
      %5439 = vmatpush.msra.mxu0 0.0
      %5440 = vmatpush.msra.mxu0 0.0
      %5441 = vmatpush.msra.mxu0 0.0
      %5442 = vmatpush.msra.mxu0 0.0
      %5443 = vmatpush.msra.mxu0 0.0
      %5444 = vmatpush.msra.mxu0 0.0
      %5445 = vmatpush.msra.mxu0 0.0
      %5446 = vmatpush.msra.mxu0 0.0
      %5447 = vmatpush.msra.mxu0 0.0
      %5448 = vmatpush.msra.mxu0 0.0
      %v5449 = vand.u32 %v5284, 4294901760
      %5450 = vmatpush.msra.mxu0 %v5449
      %v5451 = vand.u32 %v5282, 4294901760
      %5452 = vmatpush.msra.mxu0 %v5451
      %v5453 = vand.u32 %v5280, 4294901760
      %5454 = vmatpush.msra.mxu0 %v5453
      %v5455 = vand.u32 %v5278, 4294901760
      %5456 = vmatpush.msra.mxu0 %v5455
      %v5457 = vand.u32 %v3428, 4294901760
      %v5458 = vsub.f32 %v3428, %v5457
      %v5459 = vand.u32 %v5458, 4294901760
      %5460 = vmatmul.f32.gmra.mxu0 %v5459
      %v5461 = vpop.f32.mrf.mxu0
      %v5462 = vadd.f32 %v5420, %v5461
      %v5463 = vand.u32 %v3431, 4294901760
      %v5464 = vsub.f32 %v3431, %v5463
      %v5465 = vand.u32 %v5464, 4294901760
      %5466 = vmatmul.f32.gmra.mxu0 %v5465
      %v5467 = vpop.f32.mrf.mxu0
      %v5468 = vadd.f32 %v5425, %v5467
      %v5469 = vand.u32 %v3434, 4294901760
      %v5470 = vsub.f32 %v3434, %v5469
      %v5471 = vand.u32 %v5470, 4294901760
      %5472 = vmatmul.f32.gmra.mxu0 %v5471
      %v5473 = vpop.f32.mrf.mxu0
      %v5474 = vadd.f32 %v5430, %v5473
      %v5475 = vand.u32 %v3437, 4294901760
      %v5476 = vsub.f32 %v3437, %v5475
      %v5477 = vand.u32 %v5476, 4294901760
      %5478 = vmatmul.f32.gmra.mxu0 %v5477
      %v5479 = vpop.f32.mrf.mxu0
      %v5480 = vadd.f32 %v5435, %v5479
      %5481 = vdwg.mxu0
      %5482 = vmatpush.msra.mxu0 0.0
      %5483 = vmatpush.msra.mxu0 0.0
      %5484 = vmatpush.msra.mxu0 0.0
      %5485 = vmatpush.msra.mxu0 0.0
      %5486 = vmatpush.msra.mxu0 0.0
      %5487 = vmatpush.msra.mxu0 0.0
      %5488 = vmatpush.msra.mxu0 0.0
      %5489 = vmatpush.msra.mxu0 0.0
      %5490 = vmatpush.msra.mxu0 0.0
      %5491 = vmatpush.msra.mxu0 0.0
      %5492 = vmatpush.msra.mxu0 0.0
      %5493 = vmatpush.msra.mxu0 0.0
      %v5494 = vand.u32 %v5284, 4294901760
      %v5495 = vsub.f32 %v5284, %v5494
      %v5496 = vand.u32 %v5495, 4294901760
      %5497 = vmatpush.msra.mxu0 %v5496
      %v5498 = vand.u32 %v5282, 4294901760
      %v5499 = vsub.f32 %v5282, %v5498
      %v5500 = vand.u32 %v5499, 4294901760
      %5501 = vmatpush.msra.mxu0 %v5500
      %v5502 = vand.u32 %v5280, 4294901760
      %v5503 = vsub.f32 %v5280, %v5502
      %v5504 = vand.u32 %v5503, 4294901760
      %5505 = vmatpush.msra.mxu0 %v5504
      %v5506 = vand.u32 %v5278, 4294901760
      %v5507 = vsub.f32 %v5278, %v5506
      %v5508 = vand.u32 %v5507, 4294901760
      %5509 = vmatpush.msra.mxu0 %v5508
      %v5510 = vand.u32 %v3428, 4294901760
      %5511 = vmatmul.f32.gmra.mxu0 %v5510
      %v5512 = vpop.f32.mrf.mxu0
      %v5513 = vadd.f32 %v5462, %v5512
      %v5514 = vand.u32 %v3431, 4294901760
      %5515 = vmatmul.f32.gmra.mxu0 %v5514
      %v5516 = vpop.f32.mrf.mxu0
      %v5517 = vadd.f32 %v5468, %v5516
      %v5518 = vand.u32 %v3434, 4294901760
      %5519 = vmatmul.f32.gmra.mxu0 %v5518
      %v5520 = vpop.f32.mrf.mxu0
      %v5521 = vadd.f32 %v5474, %v5520
      %v5522 = vand.u32 %v3437, 4294901760
      %5523 = vmatmul.f32.gmra.mxu0 %v5522
      %v5524 = vpop.f32.mrf.mxu0
      %v5525 = vadd.f32 %v5480, %v5524
      %5526 = vdwg.mxu0
      %5527 = vmatpush.msra.mxu0 0.0
      %5528 = vmatpush.msra.mxu0 0.0
      %5529 = vmatpush.msra.mxu0 0.0
      %5530 = vmatpush.msra.mxu0 0.0
      %5531 = vmatpush.msra.mxu0 0.0
      %5532 = vmatpush.msra.mxu0 0.0
      %5533 = vmatpush.msra.mxu0 0.0
      %5534 = vmatpush.msra.mxu0 0.0
      %5535 = vmatpush.msra.mxu0 0.0
      %5536 = vmatpush.msra.mxu0 0.0
      %5537 = vmatpush.msra.mxu0 0.0
      %5538 = vmatpush.msra.mxu0 0.0
      %v5539 = vand.u32 %v5284, 4294901760
      %5540 = vmatpush.msra.mxu0 %v5539
      %v5541 = vand.u32 %v5282, 4294901760
      %5542 = vmatpush.msra.mxu0 %v5541
      %v5543 = vand.u32 %v5280, 4294901760
      %5544 = vmatpush.msra.mxu0 %v5543
      %v5545 = vand.u32 %v5278, 4294901760
      %5546 = vmatpush.msra.mxu0 %v5545
      %v5547 = vand.u32 %v3428, 4294901760
      %5548 = vmatmul.f32.gmra.mxu0 %v5547
      %v5549 = vpop.f32.mrf.mxu0
      %v5550 = vadd.f32 %v5513, %v5549
      %v5551 = vand.u32 %v3431, 4294901760
      %5552 = vmatmul.f32.gmra.mxu0 %v5551
      %v5553 = vpop.f32.mrf.mxu0
      %v5554 = vadd.f32 %v5517, %v5553
      %v5555 = vand.u32 %v3434, 4294901760
      %5556 = vmatmul.f32.gmra.mxu0 %v5555
      %v5557 = vpop.f32.mrf.mxu0
      %v5558 = vadd.f32 %v5521, %v5557
      %v5559 = vand.u32 %v3437, 4294901760
      %5560 = vmatmul.f32.gmra.mxu0 %v5559
      %v5561 = vpop.f32.mrf.mxu0
      %v5562 = vadd.f32 %v5525, %v5561
      %5563 = vdwg.mxu0
      %5564 = vmatpush.msra.mxu0 0.0
      %5565 = vmatpush.msra.mxu0 0.0
      %5566 = vmatpush.msra.mxu0 0.0
      %5567 = vmatpush.msra.mxu0 0.0
      %5568 = vmatpush.msra.mxu0 0.0
      %5569 = vmatpush.msra.mxu0 0.0
      %5570 = vmatpush.msra.mxu0 0.0
      %5571 = vmatpush.msra.mxu0 0.0
      %5572 = vmatpush.msra.mxu0 0.0
      %5573 = vmatpush.msra.mxu0 0.0
      %5574 = vmatpush.msra.mxu0 0.0
      %5575 = vmatpush.msra.mxu0 0.0
      %v5576 = vand.u32 %v5285, 4294901760
      %5577 = vmatpush.msra.mxu0 %v5576
      %v5578 = vand.u32 %v5283, 4294901760
      %5579 = vmatpush.msra.mxu0 %v5578
      %v5580 = vand.u32 %v5281, 4294901760
      %5581 = vmatpush.msra.mxu0 %v5580
      %v5582 = vand.u32 %v5279, 4294901760
      %5583 = vmatpush.msra.mxu0 %v5582
      %v5584 = vand.u32 %v3428, 4294901760
      %v5585 = vsub.f32 %v3428, %v5584
      %v5586 = vand.u32 %v5585, 4294901760
      %v5587 = vsub.f32 %v5585, %v5586
      %v5588 = vand.u32 %v5587, 4294901760
      %5589 = vmatmul.f32.gmra.mxu0 %v5588
      %v5590 = vpop.f32.mrf.mxu0
      %v5591 = vadd.f32 0.0, %v5590
      %v5592 = vand.u32 %v3431, 4294901760
      %v5593 = vsub.f32 %v3431, %v5592
      %v5594 = vand.u32 %v5593, 4294901760
      %v5595 = vsub.f32 %v5593, %v5594
      %v5596 = vand.u32 %v5595, 4294901760
      %5597 = vmatmul.f32.gmra.mxu0 %v5596
      %v5598 = vpop.f32.mrf.mxu0
      %v5599 = vadd.f32 0.0, %v5598
      %v5600 = vand.u32 %v3434, 4294901760
      %v5601 = vsub.f32 %v3434, %v5600
      %v5602 = vand.u32 %v5601, 4294901760
      %v5603 = vsub.f32 %v5601, %v5602
      %v5604 = vand.u32 %v5603, 4294901760
      %5605 = vmatmul.f32.gmra.mxu0 %v5604
      %v5606 = vpop.f32.mrf.mxu0
      %v5607 = vadd.f32 0.0, %v5606
      %v5608 = vand.u32 %v3437, 4294901760
      %v5609 = vsub.f32 %v3437, %v5608
      %v5610 = vand.u32 %v5609, 4294901760
      %v5611 = vsub.f32 %v5609, %v5610
      %v5612 = vand.u32 %v5611, 4294901760
      %5613 = vmatmul.f32.gmra.mxu0 %v5612
      %v5614 = vpop.f32.mrf.mxu0
      %v5615 = vadd.f32 0.0, %v5614
      %5616 = vdwg.mxu0
      %5617 = vmatpush.msra.mxu0 0.0
      %5618 = vmatpush.msra.mxu0 0.0
      %5619 = vmatpush.msra.mxu0 0.0
      %5620 = vmatpush.msra.mxu0 0.0
      %5621 = vmatpush.msra.mxu0 0.0
      %5622 = vmatpush.msra.mxu0 0.0
      %5623 = vmatpush.msra.mxu0 0.0
      %5624 = vmatpush.msra.mxu0 0.0
      %5625 = vmatpush.msra.mxu0 0.0
      %5626 = vmatpush.msra.mxu0 0.0
      %5627 = vmatpush.msra.mxu0 0.0
      %5628 = vmatpush.msra.mxu0 0.0
      %v5629 = vand.u32 %v5285, 4294901760
      %v5630 = vsub.f32 %v5285, %v5629
      %v5631 = vand.u32 %v5630, 4294901760
      %v5632 = vsub.f32 %v5630, %v5631
      %v5633 = vand.u32 %v5632, 4294901760
      %5634 = vmatpush.msra.mxu0 %v5633
      %v5635 = vand.u32 %v5283, 4294901760
      %v5636 = vsub.f32 %v5283, %v5635
      %v5637 = vand.u32 %v5636, 4294901760
      %v5638 = vsub.f32 %v5636, %v5637
      %v5639 = vand.u32 %v5638, 4294901760
      %5640 = vmatpush.msra.mxu0 %v5639
      %v5641 = vand.u32 %v5281, 4294901760
      %v5642 = vsub.f32 %v5281, %v5641
      %v5643 = vand.u32 %v5642, 4294901760
      %v5644 = vsub.f32 %v5642, %v5643
      %v5645 = vand.u32 %v5644, 4294901760
      %5646 = vmatpush.msra.mxu0 %v5645
      %v5647 = vand.u32 %v5279, 4294901760
      %v5648 = vsub.f32 %v5279, %v5647
      %v5649 = vand.u32 %v5648, 4294901760
      %v5650 = vsub.f32 %v5648, %v5649
      %v5651 = vand.u32 %v5650, 4294901760
      %5652 = vmatpush.msra.mxu0 %v5651
      %v5653 = vand.u32 %v3428, 4294901760
      %5654 = vmatmul.f32.gmra.mxu0 %v5653
      %v5655 = vpop.f32.mrf.mxu0
      %v5656 = vadd.f32 %v5591, %v5655
      %v5657 = vand.u32 %v3431, 4294901760
      %5658 = vmatmul.f32.gmra.mxu0 %v5657
      %v5659 = vpop.f32.mrf.mxu0
      %v5660 = vadd.f32 %v5599, %v5659
      %v5661 = vand.u32 %v3434, 4294901760
      %5662 = vmatmul.f32.gmra.mxu0 %v5661
      %v5663 = vpop.f32.mrf.mxu0
      %v5664 = vadd.f32 %v5607, %v5663
      %v5665 = vand.u32 %v3437, 4294901760
      %5666 = vmatmul.f32.gmra.mxu0 %v5665
      %v5667 = vpop.f32.mrf.mxu0
      %v5668 = vadd.f32 %v5615, %v5667
      %5669 = vdwg.mxu0
      %5670 = vmatpush.msra.mxu0 0.0
      %5671 = vmatpush.msra.mxu0 0.0
      %5672 = vmatpush.msra.mxu0 0.0
      %5673 = vmatpush.msra.mxu0 0.0
      %5674 = vmatpush.msra.mxu0 0.0
      %5675 = vmatpush.msra.mxu0 0.0
      %5676 = vmatpush.msra.mxu0 0.0
      %5677 = vmatpush.msra.mxu0 0.0
      %5678 = vmatpush.msra.mxu0 0.0
      %5679 = vmatpush.msra.mxu0 0.0
      %5680 = vmatpush.msra.mxu0 0.0
      %5681 = vmatpush.msra.mxu0 0.0
      %v5682 = vand.u32 %v5285, 4294901760
      %v5683 = vsub.f32 %v5285, %v5682
      %5684 = vmatpush.msra.mxu0 %v5683
      %v5685 = vand.u32 %v5283, 4294901760
      %v5686 = vsub.f32 %v5283, %v5685
      %5687 = vmatpush.msra.mxu0 %v5686
      %v5688 = vand.u32 %v5281, 4294901760
      %v5689 = vsub.f32 %v5281, %v5688
      %5690 = vmatpush.msra.mxu0 %v5689
      %v5691 = vand.u32 %v5279, 4294901760
      %v5692 = vsub.f32 %v5279, %v5691
      %5693 = vmatpush.msra.mxu0 %v5692
      %v5694 = vand.u32 %v3428, 4294901760
      %v5695 = vsub.f32 %v3428, %v5694
      %5696 = vmatmul.f32.gmra.mxu0 %v5695
      %v5697 = vpop.f32.mrf.mxu0
      %v5698 = vadd.f32 %v5656, %v5697
      %v5699 = vand.u32 %v3431, 4294901760
      %v5700 = vsub.f32 %v3431, %v5699
      %5701 = vmatmul.f32.gmra.mxu0 %v5700
      %v5702 = vpop.f32.mrf.mxu0
      %v5703 = vadd.f32 %v5660, %v5702
      %v5704 = vand.u32 %v3434, 4294901760
      %v5705 = vsub.f32 %v3434, %v5704
      %5706 = vmatmul.f32.gmra.mxu0 %v5705
      %v5707 = vpop.f32.mrf.mxu0
      %v5708 = vadd.f32 %v5664, %v5707
      %v5709 = vand.u32 %v3437, 4294901760
      %v5710 = vsub.f32 %v3437, %v5709
      %5711 = vmatmul.f32.gmra.mxu0 %v5710
      %v5712 = vpop.f32.mrf.mxu0
      %v5713 = vadd.f32 %v5668, %v5712
      %5714 = vdwg.mxu0
      %5715 = vmatpush.msra.mxu0 0.0
      %5716 = vmatpush.msra.mxu0 0.0
      %5717 = vmatpush.msra.mxu0 0.0
      %5718 = vmatpush.msra.mxu0 0.0
      %5719 = vmatpush.msra.mxu0 0.0
      %5720 = vmatpush.msra.mxu0 0.0
      %5721 = vmatpush.msra.mxu0 0.0
      %5722 = vmatpush.msra.mxu0 0.0
      %5723 = vmatpush.msra.mxu0 0.0
      %5724 = vmatpush.msra.mxu0 0.0
      %5725 = vmatpush.msra.mxu0 0.0
      %5726 = vmatpush.msra.mxu0 0.0
      %v5727 = vand.u32 %v5285, 4294901760
      %5728 = vmatpush.msra.mxu0 %v5727
      %v5729 = vand.u32 %v5283, 4294901760
      %5730 = vmatpush.msra.mxu0 %v5729
      %v5731 = vand.u32 %v5281, 4294901760
      %5732 = vmatpush.msra.mxu0 %v5731
      %v5733 = vand.u32 %v5279, 4294901760
      %5734 = vmatpush.msra.mxu0 %v5733
      %v5735 = vand.u32 %v3428, 4294901760
      %v5736 = vsub.f32 %v3428, %v5735
      %v5737 = vand.u32 %v5736, 4294901760
      %5738 = vmatmul.f32.gmra.mxu0 %v5737
      %v5739 = vpop.f32.mrf.mxu0
      %v5740 = vadd.f32 %v5698, %v5739
      %v5741 = vand.u32 %v3431, 4294901760
      %v5742 = vsub.f32 %v3431, %v5741
      %v5743 = vand.u32 %v5742, 4294901760
      %5744 = vmatmul.f32.gmra.mxu0 %v5743
      %v5745 = vpop.f32.mrf.mxu0
      %v5746 = vadd.f32 %v5703, %v5745
      %v5747 = vand.u32 %v3434, 4294901760
      %v5748 = vsub.f32 %v3434, %v5747
      %v5749 = vand.u32 %v5748, 4294901760
      %5750 = vmatmul.f32.gmra.mxu0 %v5749
      %v5751 = vpop.f32.mrf.mxu0
      %v5752 = vadd.f32 %v5708, %v5751
      %v5753 = vand.u32 %v3437, 4294901760
      %v5754 = vsub.f32 %v3437, %v5753
      %v5755 = vand.u32 %v5754, 4294901760
      %5756 = vmatmul.f32.gmra.mxu0 %v5755
      %v5757 = vpop.f32.mrf.mxu0
      %v5758 = vadd.f32 %v5713, %v5757
      %5759 = vdwg.mxu0
      %5760 = vmatpush.msra.mxu0 0.0
      %5761 = vmatpush.msra.mxu0 0.0
      %5762 = vmatpush.msra.mxu0 0.0
      %5763 = vmatpush.msra.mxu0 0.0
      %5764 = vmatpush.msra.mxu0 0.0
      %5765 = vmatpush.msra.mxu0 0.0
      %5766 = vmatpush.msra.mxu0 0.0
      %5767 = vmatpush.msra.mxu0 0.0
      %5768 = vmatpush.msra.mxu0 0.0
      %5769 = vmatpush.msra.mxu0 0.0
      %5770 = vmatpush.msra.mxu0 0.0
      %5771 = vmatpush.msra.mxu0 0.0
      %v5772 = vand.u32 %v5285, 4294901760
      %v5773 = vsub.f32 %v5285, %v5772
      %v5774 = vand.u32 %v5773, 4294901760
      %5775 = vmatpush.msra.mxu0 %v5774
      %v5776 = vand.u32 %v5283, 4294901760
      %v5777 = vsub.f32 %v5283, %v5776
      %v5778 = vand.u32 %v5777, 4294901760
      %5779 = vmatpush.msra.mxu0 %v5778
      %v5780 = vand.u32 %v5281, 4294901760
      %v5781 = vsub.f32 %v5281, %v5780
      %v5782 = vand.u32 %v5781, 4294901760
      %5783 = vmatpush.msra.mxu0 %v5782
      %v5784 = vand.u32 %v5279, 4294901760
      %v5785 = vsub.f32 %v5279, %v5784
      %v5786 = vand.u32 %v5785, 4294901760
      %5787 = vmatpush.msra.mxu0 %v5786
      %v5788 = vand.u32 %v3428, 4294901760
      %5789 = vmatmul.f32.gmra.mxu0 %v5788
      %v5790 = vpop.f32.mrf.mxu0
      %v5791 = vadd.f32 %v5740, %v5790
      %v5792 = vand.u32 %v3431, 4294901760
      %5793 = vmatmul.f32.gmra.mxu0 %v5792
      %v5794 = vpop.f32.mrf.mxu0
      %v5795 = vadd.f32 %v5746, %v5794
      %v5796 = vand.u32 %v3434, 4294901760
      %5797 = vmatmul.f32.gmra.mxu0 %v5796
      %v5798 = vpop.f32.mrf.mxu0
      %v5799 = vadd.f32 %v5752, %v5798
      %v5800 = vand.u32 %v3437, 4294901760
      %5801 = vmatmul.f32.gmra.mxu0 %v5800
      %v5802 = vpop.f32.mrf.mxu0
      %v5803 = vadd.f32 %v5758, %v5802
      %5804 = vdwg.mxu0
      %5805 = vmatpush.msra.mxu0 0.0
      %5806 = vmatpush.msra.mxu0 0.0
      %5807 = vmatpush.msra.mxu0 0.0
      %5808 = vmatpush.msra.mxu0 0.0
      %5809 = vmatpush.msra.mxu0 0.0
      %5810 = vmatpush.msra.mxu0 0.0
      %5811 = vmatpush.msra.mxu0 0.0
      %5812 = vmatpush.msra.mxu0 0.0
      %5813 = vmatpush.msra.mxu0 0.0
      %5814 = vmatpush.msra.mxu0 0.0
      %5815 = vmatpush.msra.mxu0 0.0
      %5816 = vmatpush.msra.mxu0 0.0
      %v5817 = vand.u32 %v5285, 4294901760
      %5818 = vmatpush.msra.mxu0 %v5817
      %v5819 = vand.u32 %v5283, 4294901760
      %5820 = vmatpush.msra.mxu0 %v5819
      %v5821 = vand.u32 %v5281, 4294901760
      %5822 = vmatpush.msra.mxu0 %v5821
      %v5823 = vand.u32 %v5279, 4294901760
      %5824 = vmatpush.msra.mxu0 %v5823
      %v5825 = vand.u32 %v3428, 4294901760
      %5826 = vmatmul.f32.gmra.mxu0 %v5825
      %v5827 = vpop.f32.mrf.mxu0
      %v5828 = vadd.f32 %v5791, %v5827
      %v5829 = vand.u32 %v3431, 4294901760
      %5830 = vmatmul.f32.gmra.mxu0 %v5829
      %v5831 = vpop.f32.mrf.mxu0
      %v5832 = vadd.f32 %v5795, %v5831
      %v5833 = vand.u32 %v3434, 4294901760
      %5834 = vmatmul.f32.gmra.mxu0 %v5833
      %v5835 = vpop.f32.mrf.mxu0
      %v5836 = vadd.f32 %v5799, %v5835
      %v5837 = vand.u32 %v3437, 4294901760
      %5838 = vmatmul.f32.gmra.mxu0 %v5837
      %v5839 = vpop.f32.mrf.mxu0
      %v5840 = vadd.f32 %v5803, %v5839
      %5841 = vdwg.mxu0
      %v5842 = vadd.f32 %v4986, %v5264
      %5843 = vadd.xlane.f32.xlu0 %v5842
      %v5844 = vpop.xlane.xlu0 %5843
      %v5845 = vadd.f32 %v4990, %v5268
      %5846 = vadd.xlane.f32.xlu0 %v5845
      %v5847 = vpop.xlane.xlu0 %5846
      %v5848 = vadd.f32 %v4994, %v5272
      %5849 = vadd.xlane.f32.xlu0 %v5848
      %v5850 = vpop.xlane.xlu0 %5849
      %v5851 = vadd.f32 %v4998, %v5276
      %5852 = vadd.xlane.f32.xlu0 %v5851
      %v5853 = vpop.xlane.xlu0 %5852
      %v5854 = vmul.f32 %v5844, %v4577
      %v5855 = vmul.f32 %v5847, %v4577
      %v5856 = vmul.f32 %v5850, %v4577
      %v5857 = vmul.f32 %v5853, %v4577
      %v5858 = vadd.f32 %v5550, %v5828
      %5859 = vadd.xlane.f32.xlu0 %v5858
      %v5860 = vpop.xlane.xlu0 %5859
      %v5861 = vadd.f32 %v5554, %v5832
      %5862 = vadd.xlane.f32.xlu0 %v5861
      %v5863 = vpop.xlane.xlu0 %5862
      %v5864 = vadd.f32 %v5558, %v5836
      %5865 = vadd.xlane.f32.xlu0 %v5864
      %v5866 = vpop.xlane.xlu0 %5865
      %v5867 = vadd.f32 %v5562, %v5840
      %5868 = vadd.xlane.f32.xlu0 %v5867
      %v5869 = vpop.xlane.xlu0 %5868
      %v5870 = vmul.f32 %v5860, %v4577
      %v5871 = vmul.f32 %v5863, %v4577
      %v5872 = vmul.f32 %v5866, %v4577
      %v5873 = vmul.f32 %v5869, %v4577
      %v5874 = vmul.f32 %v5854, %v5854
      %v5875 = vmul.f32 %v5855, %v5855
      %v5876 = vmul.f32 %v5856, %v5856
      %v5877 = vmul.f32 %v5857, %v5857
      %v5878 = vsub.f32 %v5870, %v5874
      %v5879 = vsub.f32 %v5871, %v5875
      %v5880 = vsub.f32 %v5872, %v5876
      %v5881 = vsub.f32 %v5873, %v5877
      %v5882 = vmax.f32 %v5878, 0.0
      %v5883 = vmax.f32 %v5879, 0.0
      %v5884 = vmax.f32 %v5880, 0.0
      %v5885 = vmax.f32 %v5881, 0.0
      %v5886 = vadd.f32 %v5882, 1e-05
      %v5887 = vadd.f32 %v5883, 1e-05
      %v5888 = vadd.f32 %v5884, 1e-05
      %v5889 = vadd.f32 %v5885, 1e-05
      %v5890 = vrsqrt.pop %v5886
      %v5891 = vmul.f32 %v5890, %v5886
      %v5892 = vmul.f32 %v5891, %v5890
      %v5893 = vmul.f32 0.5, %v5892
      %v5894 = vsub.f32 1.5, %v5893
      %v5895 = vmul.f32 %v5890, %v5894
      %vm5896 = vweird.f32 %v5886
      %vm5897 = vweird.f32 %v5890
      %vm5898 = vmor %vm5896, %vm5897
      %v5899 = vsel %vm5898, %v5890, %v5895
      %v5900 = vrsqrt.pop %v5887
      %v5901 = vmul.f32 %v5900, %v5887
      %v5902 = vmul.f32 %v5901, %v5900
      %v5903 = vmul.f32 0.5, %v5902
      %v5904 = vsub.f32 1.5, %v5903
      %v5905 = vmul.f32 %v5900, %v5904
      %vm5906 = vweird.f32 %v5887
      %vm5907 = vweird.f32 %v5900
      %vm5908 = vmor %vm5906, %vm5907
      %v5909 = vsel %vm5908, %v5900, %v5905
      %v5910 = vrsqrt.pop %v5888
      %v5911 = vmul.f32 %v5910, %v5888
      %v5912 = vmul.f32 %v5911, %v5910
      %v5913 = vmul.f32 0.5, %v5912
      %v5914 = vsub.f32 1.5, %v5913
      %v5915 = vmul.f32 %v5910, %v5914
      %vm5916 = vweird.f32 %v5888
      %vm5917 = vweird.f32 %v5910
      %vm5918 = vmor %vm5916, %vm5917
      %v5919 = vsel %vm5918, %v5910, %v5915
      %v5920 = vrsqrt.pop %v5889
      %v5921 = vmul.f32 %v5920, %v5889
      %v5922 = vmul.f32 %v5921, %v5920
      %v5923 = vmul.f32 0.5, %v5922
      %v5924 = vsub.f32 1.5, %v5923
      %v5925 = vmul.f32 %v5920, %v5924
      %vm5926 = vweird.f32 %v5889
      %vm5927 = vweird.f32 %v5920
      %vm5928 = vmor %vm5926, %vm5927
      %v5929 = vsel %vm5928, %v5920, %v5925
      %v5930 = vsub.f32 %v3402, %v5854
      %v5931 = vsub.f32 %v3403, %v5854
      %v5932 = vsub.f32 %v3404, %v5855
      %v5933 = vsub.f32 %v3405, %v5855
      %v5934 = vsub.f32 %v3406, %v5856
      %v5935 = vsub.f32 %v3407, %v5856
      %v5936 = vsub.f32 %v3408, %v5857
      %v5937 = vsub.f32 %v3409, %v5857
      %v5938 = vmul.f32 %v5899, %v3410
      %v5939 = vmul.f32 %v5909, %v3411
      %v5940 = vmul.f32 %v5919, %v3412
      %v5941 = vmul.f32 %v5929, %v3413
      %5943 = vset.pattern.permute.xlu0 2
      %5944 = vperm.xlu0 %5943, %v5938
      %v5945 = vpop.permute.xlu0 %5944
      %5948 = vset.pattern.permute.xlu0 2
      %5949 = vperm.xlu0 %5948, %v5939
      %v5950 = vpop.permute.xlu0 %5949
      %5953 = vset.pattern.permute.xlu0 2
      %5954 = vperm.xlu0 %5953, %v5940
      %v5955 = vpop.permute.xlu0 %5954
      %5958 = vset.pattern.permute.xlu0 2
      %5959 = vperm.xlu0 %5958, %v5941
      %v5960 = vpop.permute.xlu0 %5959
      %v5962 = vmul.f32 %v5930, %v5945
      %v5963 = vmul.f32 %v5931, %v5945
      %v5964 = vmul.f32 %v5932, %v5950
      %v5965 = vmul.f32 %v5933, %v5950
      %v5966 = vmul.f32 %v5934, %v5955
      %v5967 = vmul.f32 %v5935, %v5955
      %v5968 = vmul.f32 %v5936, %v5960
      %v5969 = vmul.f32 %v5937, %v5960
      %5970 = vset.pattern.permute.xlu0 3
      %5971 = vperm.xlu0 %5970, %v3410
      %v5972 = vpop.permute.xlu0 %5971
      %5974 = vset.pattern.permute.xlu0 3
      %5975 = vperm.xlu0 %5974, %v3411
      %v5976 = vpop.permute.xlu0 %5975
      %5978 = vset.pattern.permute.xlu0 3
      %5979 = vperm.xlu0 %5978, %v3412
      %v5980 = vpop.permute.xlu0 %5979
      %5982 = vset.pattern.permute.xlu0 3
      %5983 = vperm.xlu0 %5982, %v3413
      %v5984 = vpop.permute.xlu0 %5983
      %v5986 = vadd.f32 %v5962, %v5972
      %v5987 = vadd.f32 %v5963, %v5972
      %v5988 = vadd.f32 %v5964, %v5976
      %v5989 = vadd.f32 %v5965, %v5976
      %v5990 = vadd.f32 %v5966, %v5980
      %v5991 = vadd.f32 %v5967, %v5980
      %v5992 = vadd.f32 %v5968, %v5984
      %v5993 = vadd.f32 %v5969, %v5984
      %v5994 = vadd.f32 %v4714, %v5986
      %v5995 = vadd.f32 %v4715, %v5987
      %v5996 = vadd.f32 %v4716, %v5988
      %v5997 = vadd.f32 %v4717, %v5989
      %v5998 = vadd.f32 %v4718, %v5990
      %v5999 = vadd.f32 %v4719, %v5991
      %v6000 = vadd.f32 %v4720, %v5992
      %v6001 = vadd.f32 %v4721, %v5993
      %v6002 = vld [vmem:[%s11] sm:$0xff]
      %v6003 = vld [vmem:[%s11 + $0x8] sm:$0xff]
      %v6004 = vld [vmem:[%s11 + $0x10] sm:$0x1]
      %v6005 = vld [vmem:[%s11 + $0x18] sm:$0x1]
      %v6006 = vld [vmem:[%s8] sm:$0xff]
      %v6007 = vld [vmem:[%s8 + $0x8] sm:$0xff]
      %v6008 = vld [vmem:[%s8 + $0x10] sm:$0xff]
      %v6009 = vld [vmem:[%s8 + $0x18] sm:$0xff]
      %v6010 = vld [vmem:[%s9] sm:$0xff]
      %v6011 = vld [vmem:[%s9 + $0x8] sm:$0xff]
      %v6012 = vld [vmem:[%s9 + $0x10] sm:$0xff]
      %v6013 = vld [vmem:[%s9 + $0x18] sm:$0xff]
      %6014 = vrot.lane.b32.xlu0 %v5994, 17
      %v6015 = vpop.permute.xlu0 %6014
      %6016 = vrot.lane.b32.xlu0 %v5996, 17
      %v6017 = vpop.permute.xlu0 %6016
      %6018 = vrot.lane.b32.xlu0 %v5998, 17
      %v6019 = vpop.permute.xlu0 %6018
      %6020 = vrot.lane.b32.xlu0 %v6000, 17
      %v6021 = vpop.permute.xlu0 %6020
      %6022 = vrot.lane.b32.xlu0 %v5995, 17
      %v6023 = vpop.permute.xlu0 %6022
      %6024 = vrot.lane.b32.xlu0 %v5997, 17
      %v6025 = vpop.permute.xlu0 %6024
      %6026 = vrot.lane.b32.xlu0 %v5999, 17
      %v6027 = vpop.permute.xlu0 %6026
      %6028 = vrot.lane.b32.xlu0 %v6001, 17
      %v6029 = vpop.permute.xlu0 %6028
      %v6030 = vlaneseq
      %v6031 = vand.u32 %v6030, 127
      %vm6032 = vcmp.lt.s32.totalorder %v6031, 17
      %v6033 = vsel %vm6032, %v6015, %v6023
      %v6034 = vsel %vm6032, %v6017, %v6025
      %v6035 = vsel %vm6032, %v6019, %v6027
      %v6036 = vsel %vm6032, %v6021, %v6029
      %v6037 = vsel %vm6032, %v6023, %v6015
      %v6038 = vsel %vm6032, %v6025, %v6017
      %v6039 = vsel %vm6032, %v6027, %v6019
      %v6040 = vsel %vm6032, %v6029, %v6021
      %v6041 = vperm.slane %v6002, 0
      %v6042 = vperm.slane %v6003, 0
      %v6043 = vmul.f32 %v6037, %v6041
      %v6044 = vmul.f32 %v6033, %v6042
      %v6045 = vmul.f32 %v6038, %v6041
      %v6046 = vmul.f32 %v6034, %v6042
      %v6047 = vmul.f32 %v6039, %v6041
      %v6048 = vmul.f32 %v6035, %v6042
      %v6049 = vmul.f32 %v6040, %v6041
      %v6050 = vmul.f32 %v6036, %v6042
      %v6051 = vpack.c.bf16 %v6044, %v6043
      %v6052 = vpack.c.bf16 %v6046, %v6045
      %v6053 = vpack.c.bf16 %v6048, %v6047
      %v6054 = vpack.c.bf16 %v6050, %v6049
      %6055 = vrot.lane.b32.xlu0 %v5994, 16
      %v6056 = vpop.permute.xlu0 %6055
      %6057 = vrot.lane.b32.xlu0 %v5996, 16
      %v6058 = vpop.permute.xlu0 %6057
      %6059 = vrot.lane.b32.xlu0 %v5998, 16
      %v6060 = vpop.permute.xlu0 %6059
      %6061 = vrot.lane.b32.xlu0 %v6000, 16
      %v6062 = vpop.permute.xlu0 %6061
      %6063 = vrot.lane.b32.xlu0 %v5995, 16
      %v6064 = vpop.permute.xlu0 %6063
      %6065 = vrot.lane.b32.xlu0 %v5997, 16
      %v6066 = vpop.permute.xlu0 %6065
      %6067 = vrot.lane.b32.xlu0 %v5999, 16
      %v6068 = vpop.permute.xlu0 %6067
      %6069 = vrot.lane.b32.xlu0 %v6001, 16
      %v6070 = vpop.permute.xlu0 %6069
      %vm6071 = vcmp.lt.s32.totalorder %v6031, 16
      %v6072 = vsel %vm6071, %v6056, %v6064
      %v6073 = vsel %vm6071, %v6058, %v6066
      %v6074 = vsel %vm6071, %v6060, %v6068
      %v6075 = vsel %vm6071, %v6062, %v6070
      %v6076 = vsel %vm6071, %v6064, %v6056
      %v6077 = vsel %vm6071, %v6066, %v6058
      %v6078 = vsel %vm6071, %v6068, %v6060
      %v6079 = vsel %vm6071, %v6070, %v6062
      %v6080 = vperm.slane %v6002, 1
      %v6081 = vperm.slane %v6003, 1
      %v6082 = vmul.f32 %v6076, %v6080
      %v6083 = vmul.f32 %v6072, %v6081
      %v6084 = vmul.f32 %v6077, %v6080
      %v6085 = vmul.f32 %v6073, %v6081
      %v6086 = vmul.f32 %v6078, %v6080
      %v6087 = vmul.f32 %v6074, %v6081
      %v6088 = vmul.f32 %v6079, %v6080
      %v6089 = vmul.f32 %v6075, %v6081
      %v6090 = vpack.c.bf16 %v6083, %v6082
      %v6091 = vpack.c.bf16 %v6085, %v6084
      %v6092 = vpack.c.bf16 %v6087, %v6086
      %v6093 = vpack.c.bf16 %v6089, %v6088
      %6094 = vrot.lane.b32.xlu0 %v5994, 15
      %v6095 = vpop.permute.xlu0 %6094
      %6096 = vrot.lane.b32.xlu0 %v5996, 15
      %v6097 = vpop.permute.xlu0 %6096
      %6098 = vrot.lane.b32.xlu0 %v5998, 15
      %v6099 = vpop.permute.xlu0 %6098
      %6100 = vrot.lane.b32.xlu0 %v6000, 15
      %v6101 = vpop.permute.xlu0 %6100
      %6102 = vrot.lane.b32.xlu0 %v5995, 15
      %v6103 = vpop.permute.xlu0 %6102
      %6104 = vrot.lane.b32.xlu0 %v5997, 15
      %v6105 = vpop.permute.xlu0 %6104
      %6106 = vrot.lane.b32.xlu0 %v5999, 15
      %v6107 = vpop.permute.xlu0 %6106
      %6108 = vrot.lane.b32.xlu0 %v6001, 15
      %v6109 = vpop.permute.xlu0 %6108
      %vm6110 = vcmp.lt.s32.totalorder %v6031, 15
      %v6111 = vsel %vm6110, %v6095, %v6103
      %v6112 = vsel %vm6110, %v6097, %v6105
      %v6113 = vsel %vm6110, %v6099, %v6107
      %v6114 = vsel %vm6110, %v6101, %v6109
      %v6115 = vsel %vm6110, %v6103, %v6095
      %v6116 = vsel %vm6110, %v6105, %v6097
      %v6117 = vsel %vm6110, %v6107, %v6099
      %v6118 = vsel %vm6110, %v6109, %v6101
      %v6119 = vperm.slane %v6002, 2
      %v6120 = vperm.slane %v6003, 2
      %v6121 = vmul.f32 %v6115, %v6119
      %v6122 = vmul.f32 %v6111, %v6120
      %v6123 = vmul.f32 %v6116, %v6119
      %v6124 = vmul.f32 %v6112, %v6120
      %v6125 = vmul.f32 %v6117, %v6119
      %v6126 = vmul.f32 %v6113, %v6120
      %v6127 = vmul.f32 %v6118, %v6119
      %v6128 = vmul.f32 %v6114, %v6120
      %v6129 = vpack.c.bf16 %v6122, %v6121
      %v6130 = vpack.c.bf16 %v6124, %v6123
      %v6131 = vpack.c.bf16 %v6126, %v6125
      %v6132 = vpack.c.bf16 %v6128, %v6127
      %6133 = vrot.lane.b32.xlu0 %v5994, 1
      %v6134 = vpop.permute.xlu0 %6133
      %6135 = vrot.lane.b32.xlu0 %v5996, 1
      %v6136 = vpop.permute.xlu0 %6135
      %6137 = vrot.lane.b32.xlu0 %v5998, 1
      %v6138 = vpop.permute.xlu0 %6137
      %6139 = vrot.lane.b32.xlu0 %v6000, 1
      %v6140 = vpop.permute.xlu0 %6139
      %6141 = vrot.lane.b32.xlu0 %v5995, 1
      %v6142 = vpop.permute.xlu0 %6141
      %6143 = vrot.lane.b32.xlu0 %v5997, 1
      %v6144 = vpop.permute.xlu0 %6143
      %6145 = vrot.lane.b32.xlu0 %v5999, 1
      %v6146 = vpop.permute.xlu0 %6145
      %6147 = vrot.lane.b32.xlu0 %v6001, 1
      %v6148 = vpop.permute.xlu0 %6147
      %vm6149 = vcmp.lt.s32.totalorder %v6031, 1
      %v6150 = vsel %vm6149, %v6134, %v6142
      %v6151 = vsel %vm6149, %v6136, %v6144
      %v6152 = vsel %vm6149, %v6138, %v6146
      %v6153 = vsel %vm6149, %v6140, %v6148
      %v6154 = vsel %vm6149, %v6142, %v6134
      %v6155 = vsel %vm6149, %v6144, %v6136
      %v6156 = vsel %vm6149, %v6146, %v6138
      %v6157 = vsel %vm6149, %v6148, %v6140
      %v6158 = vperm.slane %v6002, 3
      %v6159 = vperm.slane %v6003, 3
      %v6160 = vmul.f32 %v6154, %v6158
      %v6161 = vmul.f32 %v6150, %v6159
      %v6162 = vmul.f32 %v6155, %v6158
      %v6163 = vmul.f32 %v6151, %v6159
      %v6164 = vmul.f32 %v6156, %v6158
      %v6165 = vmul.f32 %v6152, %v6159
      %v6166 = vmul.f32 %v6157, %v6158
      %v6167 = vmul.f32 %v6153, %v6159
      %v6168 = vpack.c.bf16 %v6161, %v6160
      %v6169 = vpack.c.bf16 %v6163, %v6162
      %v6170 = vpack.c.bf16 %v6165, %v6164
      %v6171 = vpack.c.bf16 %v6167, %v6166
      %v6172 = vpack.c.bf16 %v5995, %v5994
      %v6173 = vpack.c.bf16 %v5997, %v5996
      %v6174 = vpack.c.bf16 %v5999, %v5998
      %v6175 = vpack.c.bf16 %v6001, %v6000
      %6176 = vrot.lane.b32.xlu0 %v5994, 127
      %v6177 = vpop.permute.xlu0 %6176
      %6178 = vrot.lane.b32.xlu0 %v5996, 127
      %v6179 = vpop.permute.xlu0 %6178
      %6180 = vrot.lane.b32.xlu0 %v5998, 127
      %v6181 = vpop.permute.xlu0 %6180
      %6182 = vrot.lane.b32.xlu0 %v6000, 127
      %v6183 = vpop.permute.xlu0 %6182
      %6184 = vrot.lane.b32.xlu0 %v5995, 127
      %v6185 = vpop.permute.xlu0 %6184
      %6186 = vrot.lane.b32.xlu0 %v5997, 127
      %v6187 = vpop.permute.xlu0 %6186
      %6188 = vrot.lane.b32.xlu0 %v5999, 127
      %v6189 = vpop.permute.xlu0 %6188
      %6190 = vrot.lane.b32.xlu0 %v6001, 127
      %v6191 = vpop.permute.xlu0 %6190
      %vm6192 = vcmp.lt.s32.totalorder %v6031, 127
      %v6193 = vsel %vm6192, %v6177, %v6185
      %v6194 = vsel %vm6192, %v6179, %v6187
      %v6195 = vsel %vm6192, %v6181, %v6189
      %v6196 = vsel %vm6192, %v6183, %v6191
      %v6197 = vsel %vm6192, %v6185, %v6177
      %v6198 = vsel %vm6192, %v6187, %v6179
      %v6199 = vsel %vm6192, %v6189, %v6181
      %v6200 = vsel %vm6192, %v6191, %v6183
      %v6201 = vperm.slane %v6002, 5
      %v6202 = vperm.slane %v6003, 5
      %v6203 = vmul.f32 %v6193, %v6201
      %v6204 = vmul.f32 %v6197, %v6202
      %v6205 = vmul.f32 %v6194, %v6201
      %v6206 = vmul.f32 %v6198, %v6202
      %v6207 = vmul.f32 %v6195, %v6201
      %v6208 = vmul.f32 %v6199, %v6202
      %v6209 = vmul.f32 %v6196, %v6201
      %v6210 = vmul.f32 %v6200, %v6202
      %v6211 = vpack.c.bf16 %v6204, %v6203
      %v6212 = vpack.c.bf16 %v6206, %v6205
      %v6213 = vpack.c.bf16 %v6208, %v6207
      %v6214 = vpack.c.bf16 %v6210, %v6209
      %6215 = vrot.lane.b32.xlu0 %v5994, 113
      %v6216 = vpop.permute.xlu0 %6215
      %6217 = vrot.lane.b32.xlu0 %v5996, 113
      %v6218 = vpop.permute.xlu0 %6217
      %6219 = vrot.lane.b32.xlu0 %v5998, 113
      %v6220 = vpop.permute.xlu0 %6219
      %6221 = vrot.lane.b32.xlu0 %v6000, 113
      %v6222 = vpop.permute.xlu0 %6221
      %6223 = vrot.lane.b32.xlu0 %v5995, 113
      %v6224 = vpop.permute.xlu0 %6223
      %6225 = vrot.lane.b32.xlu0 %v5997, 113
      %v6226 = vpop.permute.xlu0 %6225
      %6227 = vrot.lane.b32.xlu0 %v5999, 113
      %v6228 = vpop.permute.xlu0 %6227
      %6229 = vrot.lane.b32.xlu0 %v6001, 113
      %v6230 = vpop.permute.xlu0 %6229
      %vm6231 = vcmp.lt.s32.totalorder %v6031, 113
      %v6232 = vsel %vm6231, %v6216, %v6224
      %v6233 = vsel %vm6231, %v6218, %v6226
      %v6234 = vsel %vm6231, %v6220, %v6228
      %v6235 = vsel %vm6231, %v6222, %v6230
      %v6236 = vsel %vm6231, %v6224, %v6216
      %v6237 = vsel %vm6231, %v6226, %v6218
      %v6238 = vsel %vm6231, %v6228, %v6220
      %v6239 = vsel %vm6231, %v6230, %v6222
      %v6240 = vperm.slane %v6002, 6
      %v6241 = vperm.slane %v6003, 6
      %v6242 = vmul.f32 %v6232, %v6240
      %v6243 = vmul.f32 %v6236, %v6241
      %v6244 = vmul.f32 %v6233, %v6240
      %v6245 = vmul.f32 %v6237, %v6241
      %v6246 = vmul.f32 %v6234, %v6240
      %v6247 = vmul.f32 %v6238, %v6241
      %v6248 = vmul.f32 %v6235, %v6240
      %v6249 = vmul.f32 %v6239, %v6241
      %v6250 = vpack.c.bf16 %v6243, %v6242
      %v6251 = vpack.c.bf16 %v6245, %v6244
      %v6252 = vpack.c.bf16 %v6247, %v6246
      %v6253 = vpack.c.bf16 %v6249, %v6248
      %6254 = vrot.lane.b32.xlu0 %v5994, 112
      %v6255 = vpop.permute.xlu0 %6254
      %6256 = vrot.lane.b32.xlu0 %v5996, 112
      %v6257 = vpop.permute.xlu0 %6256
      %6258 = vrot.lane.b32.xlu0 %v5998, 112
      %v6259 = vpop.permute.xlu0 %6258
      %6260 = vrot.lane.b32.xlu0 %v6000, 112
      %v6261 = vpop.permute.xlu0 %6260
      %6262 = vrot.lane.b32.xlu0 %v5995, 112
      %v6263 = vpop.permute.xlu0 %6262
      %6264 = vrot.lane.b32.xlu0 %v5997, 112
      %v6265 = vpop.permute.xlu0 %6264
      %6266 = vrot.lane.b32.xlu0 %v5999, 112
      %v6267 = vpop.permute.xlu0 %6266
      %6268 = vrot.lane.b32.xlu0 %v6001, 112
      %v6269 = vpop.permute.xlu0 %6268
      %vm6270 = vcmp.lt.s32.totalorder %v6031, 112
      %v6271 = vsel %vm6270, %v6255, %v6263
      %v6272 = vsel %vm6270, %v6257, %v6265
      %v6273 = vsel %vm6270, %v6259, %v6267
      %v6274 = vsel %vm6270, %v6261, %v6269
      %v6275 = vsel %vm6270, %v6263, %v6255
      %v6276 = vsel %vm6270, %v6265, %v6257
      %v6277 = vsel %vm6270, %v6267, %v6259
      %v6278 = vsel %vm6270, %v6269, %v6261
      %v6279 = vperm.slane %v6002, 7
      %v6280 = vperm.slane %v6003, 7
      %v6281 = vmul.f32 %v6271, %v6279
      %v6282 = vmul.f32 %v6275, %v6280
      %v6283 = vmul.f32 %v6272, %v6279
      %v6284 = vmul.f32 %v6276, %v6280
      %v6285 = vmul.f32 %v6273, %v6279
      %v6286 = vmul.f32 %v6277, %v6280
      %v6287 = vmul.f32 %v6274, %v6279
      %v6288 = vmul.f32 %v6278, %v6280
      %v6289 = vpack.c.bf16 %v6282, %v6281
      %v6290 = vpack.c.bf16 %v6284, %v6283
      %v6291 = vpack.c.bf16 %v6286, %v6285
      %v6292 = vpack.c.bf16 %v6288, %v6287
      %6293 = vrot.lane.b32.xlu0 %v5994, 111
      %v6294 = vpop.permute.xlu0 %6293
      %6295 = vrot.lane.b32.xlu0 %v5996, 111
      %v6296 = vpop.permute.xlu0 %6295
      %6297 = vrot.lane.b32.xlu0 %v5998, 111
      %v6298 = vpop.permute.xlu0 %6297
      %6299 = vrot.lane.b32.xlu0 %v6000, 111
      %v6300 = vpop.permute.xlu0 %6299
      %6301 = vrot.lane.b32.xlu0 %v5995, 111
      %v6302 = vpop.permute.xlu0 %6301
      %6303 = vrot.lane.b32.xlu0 %v5997, 111
      %v6304 = vpop.permute.xlu0 %6303
      %6305 = vrot.lane.b32.xlu0 %v5999, 111
      %v6306 = vpop.permute.xlu0 %6305
      %6307 = vrot.lane.b32.xlu0 %v6001, 111
      %v6308 = vpop.permute.xlu0 %6307
      %vm6309 = vcmp.lt.s32.totalorder %v6031, 111
      %v6310 = vsel %vm6309, %v6294, %v6302
      %v6311 = vsel %vm6309, %v6296, %v6304
      %v6312 = vsel %vm6309, %v6298, %v6306
      %v6313 = vsel %vm6309, %v6300, %v6308
      %v6314 = vsel %vm6309, %v6302, %v6294
      %v6315 = vsel %vm6309, %v6304, %v6296
      %v6316 = vsel %vm6309, %v6306, %v6298
      %v6317 = vsel %vm6309, %v6308, %v6300
      %v6318 = vperm.slane %v6004, 0
      %v6319 = vperm.slane %v6005, 0
      %v6320 = vmul.f32 %v6310, %v6318
      %v6321 = vmul.f32 %v6314, %v6319
      %v6322 = vmul.f32 %v6311, %v6318
      %v6323 = vmul.f32 %v6315, %v6319
      %v6324 = vmul.f32 %v6312, %v6318
      %v6325 = vmul.f32 %v6316, %v6319
      %v6326 = vmul.f32 %v6313, %v6318
      %v6327 = vmul.f32 %v6317, %v6319
      %v6328 = vpack.c.bf16 %v6321, %v6320
      %v6329 = vpack.c.bf16 %v6323, %v6322
      %v6330 = vpack.c.bf16 %v6325, %v6324
      %v6331 = vpack.c.bf16 %v6327, %v6326
      %v6336 = vunpack.c.l.b16 %v6051
      %v6337 = vunpack.c.h.b16 %v6051
      %v6338 = vunpack.c.l.b16 %v6052
      %v6339 = vunpack.c.h.b16 %v6052
      %v6340 = vunpack.c.l.b16 %v6053
      %v6341 = vunpack.c.h.b16 %v6053
      %v6342 = vunpack.c.l.b16 %v6054
      %v6343 = vunpack.c.h.b16 %v6054
      %v6344 = vpack.c.b16 %v6338, %v6336
      %v6345 = vpack.c.b16 %v6339, %v6337
      %v6346 = vpack.c.b16 %v6342, %v6340
      %v6347 = vpack.c.b16 %v6343, %v6341
      %v6356 = vunpack.c.l.b16 %v6090
      %v6357 = vunpack.c.h.b16 %v6090
      %v6358 = vunpack.c.l.b16 %v6091
      %v6359 = vunpack.c.h.b16 %v6091
      %v6360 = vunpack.c.l.b16 %v6092
      %v6361 = vunpack.c.h.b16 %v6092
      %v6362 = vunpack.c.l.b16 %v6093
      %v6363 = vunpack.c.h.b16 %v6093
      %v6364 = vpack.c.b16 %v6358, %v6356
      %v6365 = vpack.c.b16 %v6359, %v6357
      %v6366 = vpack.c.b16 %v6362, %v6360
      %v6367 = vpack.c.b16 %v6363, %v6361
      %v6376 = vunpack.c.l.b16 %v6129
      %v6377 = vunpack.c.h.b16 %v6129
      %v6378 = vunpack.c.l.b16 %v6130
      %v6379 = vunpack.c.h.b16 %v6130
      %v6380 = vunpack.c.l.b16 %v6131
      %v6381 = vunpack.c.h.b16 %v6131
      %v6382 = vunpack.c.l.b16 %v6132
      %v6383 = vunpack.c.h.b16 %v6132
      %v6384 = vpack.c.b16 %v6378, %v6376
      %v6385 = vpack.c.b16 %v6379, %v6377
      %v6386 = vpack.c.b16 %v6382, %v6380
      %v6387 = vpack.c.b16 %v6383, %v6381
      %v6396 = vunpack.c.l.b16 %v6168
      %v6397 = vunpack.c.h.b16 %v6168
      %v6398 = vunpack.c.l.b16 %v6169
      %v6399 = vunpack.c.h.b16 %v6169
      %v6400 = vunpack.c.l.b16 %v6170
      %v6401 = vunpack.c.h.b16 %v6170
      %v6402 = vunpack.c.l.b16 %v6171
      %v6403 = vunpack.c.h.b16 %v6171
      %v6404 = vpack.c.b16 %v6398, %v6396
      %v6405 = vpack.c.b16 %v6399, %v6397
      %v6406 = vpack.c.b16 %v6402, %v6400
      %v6407 = vpack.c.b16 %v6403, %v6401
      %v6416 = vunpack.c.l.b16 %v6172
      %v6417 = vunpack.c.h.b16 %v6172
      %v6418 = vunpack.c.l.b16 %v6173
      %v6419 = vunpack.c.h.b16 %v6173
      %v6420 = vunpack.c.l.b16 %v6174
      %v6421 = vunpack.c.h.b16 %v6174
      %v6422 = vunpack.c.l.b16 %v6175
      %v6423 = vunpack.c.h.b16 %v6175
      %v6424 = vpack.c.b16 %v6418, %v6416
      %v6425 = vpack.c.b16 %v6419, %v6417
      %v6426 = vpack.c.b16 %v6422, %v6420
      %v6427 = vpack.c.b16 %v6423, %v6421
      %v6436 = vunpack.c.l.b16 %v6211
      %v6437 = vunpack.c.h.b16 %v6211
      %v6438 = vunpack.c.l.b16 %v6212
      %v6439 = vunpack.c.h.b16 %v6212
      %v6440 = vunpack.c.l.b16 %v6213
      %v6441 = vunpack.c.h.b16 %v6213
      %v6442 = vunpack.c.l.b16 %v6214
      %v6443 = vunpack.c.h.b16 %v6214
      %v6444 = vpack.c.b16 %v6438, %v6436
      %v6445 = vpack.c.b16 %v6439, %v6437
      %v6446 = vpack.c.b16 %v6442, %v6440
      %v6447 = vpack.c.b16 %v6443, %v6441
      %v6456 = vunpack.c.l.b16 %v6250
      %v6457 = vunpack.c.h.b16 %v6250
      %v6458 = vunpack.c.l.b16 %v6251
      %v6459 = vunpack.c.h.b16 %v6251
      %v6460 = vunpack.c.l.b16 %v6252
      %v6461 = vunpack.c.h.b16 %v6252
      %v6462 = vunpack.c.l.b16 %v6253
      %v6463 = vunpack.c.h.b16 %v6253
      %v6464 = vpack.c.b16 %v6458, %v6456
      %v6465 = vpack.c.b16 %v6459, %v6457
      %v6466 = vpack.c.b16 %v6462, %v6460
      %v6467 = vpack.c.b16 %v6463, %v6461
      %v6476 = vunpack.c.l.b16 %v6289
      %v6477 = vunpack.c.h.b16 %v6289
      %v6478 = vunpack.c.l.b16 %v6290
      %v6479 = vunpack.c.h.b16 %v6290
      %v6480 = vunpack.c.l.b16 %v6291
      %v6481 = vunpack.c.h.b16 %v6291
      %v6482 = vunpack.c.l.b16 %v6292
      %v6483 = vunpack.c.h.b16 %v6292
      %v6484 = vpack.c.b16 %v6478, %v6476
      %v6485 = vpack.c.b16 %v6479, %v6477
      %v6486 = vpack.c.b16 %v6482, %v6480
      %v6487 = vpack.c.b16 %v6483, %v6481
      %v6496 = vunpack.c.l.b16 %v6328
      %v6497 = vunpack.c.h.b16 %v6328
      %v6498 = vunpack.c.l.b16 %v6329
      %v6499 = vunpack.c.h.b16 %v6329
      %v6500 = vunpack.c.l.b16 %v6330
      %v6501 = vunpack.c.h.b16 %v6330
      %v6502 = vunpack.c.l.b16 %v6331
      %v6503 = vunpack.c.h.b16 %v6331
      %v6504 = vpack.c.b16 %v6498, %v6496
      %v6505 = vpack.c.b16 %v6499, %v6497
      %v6506 = vpack.c.b16 %v6502, %v6500
      %v6507 = vpack.c.b16 %v6503, %v6501
      %v6512 = vld [vmem:[%s7] sm:$0xff]
      %v6513 = vld [vmem:[%s7 + $0x8] sm:$0xf]
      %v6514 = vld [vmem:[%s7 + $0xc] sm:$0xff]
      %v6515 = vld [vmem:[%s7 + $0x14] sm:$0xf]
      %v6516 = vld [vmem:[%s7 + $0x18] sm:$0xff]
      %v6517 = vld [vmem:[%s7 + $0x20] sm:$0xf]
      %v6518 = vld [vmem:[%s7 + $0x24] sm:$0xff]
      %v6519 = vld [vmem:[%s7 + $0x2c] sm:$0xf]
      %v6528 = vunpack.c.l.b16 %v6512
      %v6529 = vunpack.c.h.b16 %v6512
      %v6530 = vunpack.c.l.b16 %v6513
      %v6531 = vunpack.c.l.b16 %v6514
      %v6532 = vunpack.c.h.b16 %v6514
      %v6533 = vunpack.c.l.b16 %v6515
      %v6534 = vunpack.c.l.b16 %v6516
      %v6535 = vunpack.c.h.b16 %v6516
      %v6536 = vunpack.c.l.b16 %v6517
      %v6537 = vunpack.c.l.b16 %v6518
      %v6538 = vunpack.c.h.b16 %v6518
      %v6539 = vunpack.c.l.b16 %v6519
      %v6540 = vpack.c.b16 %v6531, %v6528
      %v6541 = vpack.c.b16 %v6532, %v6529
      %v6542 = vpack.c.b16 %v6533, %v6530
      %v6543 = vpack.c.b16 %v6537, %v6534
      %v6544 = vpack.c.b16 %v6538, %v6535
      %v6545 = vpack.c.b16 %v6539, %v6536
      %v6551 = vsel %vm3426, %v6542, 0
      %v6554 = vsel %vm3426, %v6545, 0
      %6556 = vmatpush.bf16.msra.mxu0 %v6406
      %6557 = vmatpush.bf16.msra.mxu0 %v6404
      %6558 = vmatpush.bf16.msra.mxu0 %v6386
      %6559 = vmatpush.bf16.msra.mxu0 %v6384
      %6560 = vmatpush.bf16.msra.mxu0 %v6366
      %6561 = vmatpush.bf16.msra.mxu0 %v6364
      %6562 = vmatpush.bf16.msra.mxu0 %v6346
      %6563 = vmatpush.bf16.msra.mxu0 %v6344
      %6564 = vmatmul.bf16.gmra.mxu0 %v6540
      %v6565 = vpop.f32.mrf.mxu0
      %v6566 = vadd.f32 0.0, %v6565
      %v6567 = vpop.f32.mrf.mxu0
      %v6568 = vadd.f32 0.0, %v6567
      %6569 = vmatmul.bf16.gmra.mxu0 %v6543
      %v6570 = vpop.f32.mrf.mxu0
      %v6571 = vadd.f32 0.0, %v6570
      %v6572 = vpop.f32.mrf.mxu0
      %v6573 = vadd.f32 0.0, %v6572
      %6574 = vdwg.mxu0
      %6575 = vmatpush.bf16.msra.mxu0 %v6486
      %6576 = vmatpush.bf16.msra.mxu0 %v6484
      %6577 = vmatpush.bf16.msra.mxu0 %v6466
      %6578 = vmatpush.bf16.msra.mxu0 %v6464
      %6579 = vmatpush.bf16.msra.mxu0 %v6446
      %6580 = vmatpush.bf16.msra.mxu0 %v6444
      %6581 = vmatpush.bf16.msra.mxu0 %v6426
      %6582 = vmatpush.bf16.msra.mxu0 %v6424
      %6583 = vmatmul.bf16.gmra.mxu0 %v6541
      %v6584 = vpop.f32.mrf.mxu0
      %v6585 = vadd.f32 %v6566, %v6584
      %v6586 = vpop.f32.mrf.mxu0
      %v6587 = vadd.f32 %v6568, %v6586
      %6588 = vmatmul.bf16.gmra.mxu0 %v6544
      %v6589 = vpop.f32.mrf.mxu0
      %v6590 = vadd.f32 %v6571, %v6589
      %v6591 = vpop.f32.mrf.mxu0
      %v6592 = vadd.f32 %v6573, %v6591
      %6593 = vdwg.mxu0
      %6594 = vmatpush.bf16.msra.mxu0 0
      %6595 = vmatpush.bf16.msra.mxu0 0
      %6596 = vmatpush.bf16.msra.mxu0 0
      %6597 = vmatpush.bf16.msra.mxu0 0
      %6598 = vmatpush.bf16.msra.mxu0 0
      %6599 = vmatpush.bf16.msra.mxu0 0
      %6600 = vmatpush.bf16.msra.mxu0 %v6506
      %6601 = vmatpush.bf16.msra.mxu0 %v6504
      %6602 = vmatmul.bf16.gmra.mxu0 %v6551
      %v6603 = vpop.f32.mrf.mxu0
      %v6604 = vadd.f32 %v6585, %v6603
      %v6605 = vpop.f32.mrf.mxu0
      %v6606 = vadd.f32 %v6587, %v6605
      %6607 = vmatmul.bf16.gmra.mxu0 %v6554
      %v6608 = vpop.f32.mrf.mxu0
      %v6609 = vadd.f32 %v6590, %v6608
      %v6610 = vpop.f32.mrf.mxu0
      %v6611 = vadd.f32 %v6592, %v6610
      %6612 = vdwg.mxu0
      %6613 = vmatpush.bf16.msra.mxu0 %v6407
      %6614 = vmatpush.bf16.msra.mxu0 %v6405
      %6615 = vmatpush.bf16.msra.mxu0 %v6387
      %6616 = vmatpush.bf16.msra.mxu0 %v6385
      %6617 = vmatpush.bf16.msra.mxu0 %v6367
      %6618 = vmatpush.bf16.msra.mxu0 %v6365
      %6619 = vmatpush.bf16.msra.mxu0 %v6347
      %6620 = vmatpush.bf16.msra.mxu0 %v6345
      %6621 = vmatmul.bf16.gmra.mxu0 %v6540
      %v6622 = vpop.f32.mrf.mxu0
      %v6623 = vadd.f32 0.0, %v6622
      %v6624 = vpop.f32.mrf.mxu0
      %v6625 = vadd.f32 0.0, %v6624
      %6626 = vmatmul.bf16.gmra.mxu0 %v6543
      %v6627 = vpop.f32.mrf.mxu0
      %v6628 = vadd.f32 0.0, %v6627
      %v6629 = vpop.f32.mrf.mxu0
      %v6630 = vadd.f32 0.0, %v6629
      %6631 = vdwg.mxu0
      %6632 = vmatpush.bf16.msra.mxu0 %v6487
      %6633 = vmatpush.bf16.msra.mxu0 %v6485
      %6634 = vmatpush.bf16.msra.mxu0 %v6467
      %6635 = vmatpush.bf16.msra.mxu0 %v6465
      %6636 = vmatpush.bf16.msra.mxu0 %v6447
      %6637 = vmatpush.bf16.msra.mxu0 %v6445
      %6638 = vmatpush.bf16.msra.mxu0 %v6427
      %6639 = vmatpush.bf16.msra.mxu0 %v6425
      %6640 = vmatmul.bf16.gmra.mxu0 %v6541
      %v6641 = vpop.f32.mrf.mxu0
      %v6642 = vadd.f32 %v6623, %v6641
      %v6643 = vpop.f32.mrf.mxu0
      %v6644 = vadd.f32 %v6625, %v6643
      %6645 = vmatmul.bf16.gmra.mxu0 %v6544
      %v6646 = vpop.f32.mrf.mxu0
      %v6647 = vadd.f32 %v6628, %v6646
      %v6648 = vpop.f32.mrf.mxu0
      %v6649 = vadd.f32 %v6630, %v6648
      %6650 = vdwg.mxu0
      %6651 = vmatpush.bf16.msra.mxu0 0
      %6652 = vmatpush.bf16.msra.mxu0 0
      %6653 = vmatpush.bf16.msra.mxu0 0
      %6654 = vmatpush.bf16.msra.mxu0 0
      %6655 = vmatpush.bf16.msra.mxu0 0
      %6656 = vmatpush.bf16.msra.mxu0 0
      %6657 = vmatpush.bf16.msra.mxu0 %v6507
      %6658 = vmatpush.bf16.msra.mxu0 %v6505
      %6659 = vmatmul.bf16.gmra.mxu0 %v6551
      %v6660 = vpop.f32.mrf.mxu0
      %v6661 = vadd.f32 %v6642, %v6660
      %v6662 = vpop.f32.mrf.mxu0
      %v6663 = vadd.f32 %v6644, %v6662
      %6664 = vmatmul.bf16.gmra.mxu0 %v6554
      %v6665 = vpop.f32.mrf.mxu0
      %v6666 = vadd.f32 %v6647, %v6665
      %v6667 = vpop.f32.mrf.mxu0
      %v6668 = vadd.f32 %v6649, %v6667
      %6669 = vdwg.mxu0
      %v6671 = vsel %vm3426, %v6010, 0
      %v6674 = vsel %vm3426, %v6011, 0
      %v6677 = vsel %vm3426, %v6012, 0
      %v6680 = vsel %vm3426, %v6013, 0
      %6682 = vmatpush.msra.mxu0 0.0
      %6683 = vmatpush.msra.mxu0 0.0
      %6684 = vmatpush.msra.mxu0 0.0
      %6685 = vmatpush.msra.mxu0 0.0
      %6686 = vmatpush.msra.mxu0 0.0
      %6687 = vmatpush.msra.mxu0 0.0
      %6688 = vmatpush.msra.mxu0 0.0
      %6689 = vmatpush.msra.mxu0 0.0
      %6690 = vmatpush.msra.mxu0 0.0
      %6691 = vmatpush.msra.mxu0 0.0
      %6692 = vmatpush.msra.mxu0 0.0
      %6693 = vmatpush.msra.mxu0 0.0
      %v6694 = vand.u32 %v6611, 4294901760
      %6695 = vmatpush.msra.mxu0 %v6694
      %v6696 = vand.u32 %v6609, 4294901760
      %6697 = vmatpush.msra.mxu0 %v6696
      %v6698 = vand.u32 %v6606, 4294901760
      %6699 = vmatpush.msra.mxu0 %v6698
      %v6700 = vand.u32 %v6604, 4294901760
      %6701 = vmatpush.msra.mxu0 %v6700
      %v6702 = vand.u32 %v6671, 4294901760
      %v6703 = vsub.f32 %v6671, %v6702
      %v6704 = vand.u32 %v6703, 4294901760
      %v6705 = vsub.f32 %v6703, %v6704
      %v6706 = vand.u32 %v6705, 4294901760
      %6707 = vmatmul.f32.gmra.mxu0 %v6706
      %v6708 = vpop.f32.mrf.mxu0
      %v6709 = vadd.f32 0.0, %v6708
      %v6710 = vand.u32 %v6674, 4294901760
      %v6711 = vsub.f32 %v6674, %v6710
      %v6712 = vand.u32 %v6711, 4294901760
      %v6713 = vsub.f32 %v6711, %v6712
      %v6714 = vand.u32 %v6713, 4294901760
      %6715 = vmatmul.f32.gmra.mxu0 %v6714
      %v6716 = vpop.f32.mrf.mxu0
      %v6717 = vadd.f32 0.0, %v6716
      %v6718 = vand.u32 %v6677, 4294901760
      %v6719 = vsub.f32 %v6677, %v6718
      %v6720 = vand.u32 %v6719, 4294901760
      %v6721 = vsub.f32 %v6719, %v6720
      %v6722 = vand.u32 %v6721, 4294901760
      %6723 = vmatmul.f32.gmra.mxu0 %v6722
      %v6724 = vpop.f32.mrf.mxu0
      %v6725 = vadd.f32 0.0, %v6724
      %v6726 = vand.u32 %v6680, 4294901760
      %v6727 = vsub.f32 %v6680, %v6726
      %v6728 = vand.u32 %v6727, 4294901760
      %v6729 = vsub.f32 %v6727, %v6728
      %v6730 = vand.u32 %v6729, 4294901760
      %6731 = vmatmul.f32.gmra.mxu0 %v6730
      %v6732 = vpop.f32.mrf.mxu0
      %v6733 = vadd.f32 0.0, %v6732
      %6734 = vdwg.mxu0
      %6735 = vmatpush.msra.mxu0 0.0
      %6736 = vmatpush.msra.mxu0 0.0
      %6737 = vmatpush.msra.mxu0 0.0
      %6738 = vmatpush.msra.mxu0 0.0
      %6739 = vmatpush.msra.mxu0 0.0
      %6740 = vmatpush.msra.mxu0 0.0
      %6741 = vmatpush.msra.mxu0 0.0
      %6742 = vmatpush.msra.mxu0 0.0
      %6743 = vmatpush.msra.mxu0 0.0
      %6744 = vmatpush.msra.mxu0 0.0
      %6745 = vmatpush.msra.mxu0 0.0
      %6746 = vmatpush.msra.mxu0 0.0
      %v6747 = vand.u32 %v6611, 4294901760
      %v6748 = vsub.f32 %v6611, %v6747
      %v6749 = vand.u32 %v6748, 4294901760
      %v6750 = vsub.f32 %v6748, %v6749
      %v6751 = vand.u32 %v6750, 4294901760
      %6752 = vmatpush.msra.mxu0 %v6751
      %v6753 = vand.u32 %v6609, 4294901760
      %v6754 = vsub.f32 %v6609, %v6753
      %v6755 = vand.u32 %v6754, 4294901760
      %v6756 = vsub.f32 %v6754, %v6755
      %v6757 = vand.u32 %v6756, 4294901760
      %6758 = vmatpush.msra.mxu0 %v6757
      %v6759 = vand.u32 %v6606, 4294901760
      %v6760 = vsub.f32 %v6606, %v6759
      %v6761 = vand.u32 %v6760, 4294901760
      %v6762 = vsub.f32 %v6760, %v6761
      %v6763 = vand.u32 %v6762, 4294901760
      %6764 = vmatpush.msra.mxu0 %v6763
      %v6765 = vand.u32 %v6604, 4294901760
      %v6766 = vsub.f32 %v6604, %v6765
      %v6767 = vand.u32 %v6766, 4294901760
      %v6768 = vsub.f32 %v6766, %v6767
      %v6769 = vand.u32 %v6768, 4294901760
      %6770 = vmatpush.msra.mxu0 %v6769
      %v6771 = vand.u32 %v6671, 4294901760
      %6772 = vmatmul.f32.gmra.mxu0 %v6771
      %v6773 = vpop.f32.mrf.mxu0
      %v6774 = vadd.f32 %v6709, %v6773
      %v6775 = vand.u32 %v6674, 4294901760
      %6776 = vmatmul.f32.gmra.mxu0 %v6775
      %v6777 = vpop.f32.mrf.mxu0
      %v6778 = vadd.f32 %v6717, %v6777
      %v6779 = vand.u32 %v6677, 4294901760
      %6780 = vmatmul.f32.gmra.mxu0 %v6779
      %v6781 = vpop.f32.mrf.mxu0
      %v6782 = vadd.f32 %v6725, %v6781
      %v6783 = vand.u32 %v6680, 4294901760
      %6784 = vmatmul.f32.gmra.mxu0 %v6783
      %v6785 = vpop.f32.mrf.mxu0
      %v6786 = vadd.f32 %v6733, %v6785
      %6787 = vdwg.mxu0
      %6788 = vmatpush.msra.mxu0 0.0
      %6789 = vmatpush.msra.mxu0 0.0
      %6790 = vmatpush.msra.mxu0 0.0
      %6791 = vmatpush.msra.mxu0 0.0
      %6792 = vmatpush.msra.mxu0 0.0
      %6793 = vmatpush.msra.mxu0 0.0
      %6794 = vmatpush.msra.mxu0 0.0
      %6795 = vmatpush.msra.mxu0 0.0
      %6796 = vmatpush.msra.mxu0 0.0
      %6797 = vmatpush.msra.mxu0 0.0
      %6798 = vmatpush.msra.mxu0 0.0
      %6799 = vmatpush.msra.mxu0 0.0
      %v6800 = vand.u32 %v6611, 4294901760
      %v6801 = vsub.f32 %v6611, %v6800
      %6802 = vmatpush.msra.mxu0 %v6801
      %v6803 = vand.u32 %v6609, 4294901760
      %v6804 = vsub.f32 %v6609, %v6803
      %6805 = vmatpush.msra.mxu0 %v6804
      %v6806 = vand.u32 %v6606, 4294901760
      %v6807 = vsub.f32 %v6606, %v6806
      %6808 = vmatpush.msra.mxu0 %v6807
      %v6809 = vand.u32 %v6604, 4294901760
      %v6810 = vsub.f32 %v6604, %v6809
      %6811 = vmatpush.msra.mxu0 %v6810
      %v6812 = vand.u32 %v6671, 4294901760
      %v6813 = vsub.f32 %v6671, %v6812
      %6814 = vmatmul.f32.gmra.mxu0 %v6813
      %v6815 = vpop.f32.mrf.mxu0
      %v6816 = vadd.f32 %v6774, %v6815
      %v6817 = vand.u32 %v6674, 4294901760
      %v6818 = vsub.f32 %v6674, %v6817
      %6819 = vmatmul.f32.gmra.mxu0 %v6818
      %v6820 = vpop.f32.mrf.mxu0
      %v6821 = vadd.f32 %v6778, %v6820
      %v6822 = vand.u32 %v6677, 4294901760
      %v6823 = vsub.f32 %v6677, %v6822
      %6824 = vmatmul.f32.gmra.mxu0 %v6823
      %v6825 = vpop.f32.mrf.mxu0
      %v6826 = vadd.f32 %v6782, %v6825
      %v6827 = vand.u32 %v6680, 4294901760
      %v6828 = vsub.f32 %v6680, %v6827
      %6829 = vmatmul.f32.gmra.mxu0 %v6828
      %v6830 = vpop.f32.mrf.mxu0
      %v6831 = vadd.f32 %v6786, %v6830
      %6832 = vdwg.mxu0
      %6833 = vmatpush.msra.mxu0 0.0
      %6834 = vmatpush.msra.mxu0 0.0
      %6835 = vmatpush.msra.mxu0 0.0
      %6836 = vmatpush.msra.mxu0 0.0
      %6837 = vmatpush.msra.mxu0 0.0
      %6838 = vmatpush.msra.mxu0 0.0
      %6839 = vmatpush.msra.mxu0 0.0
      %6840 = vmatpush.msra.mxu0 0.0
      %6841 = vmatpush.msra.mxu0 0.0
      %6842 = vmatpush.msra.mxu0 0.0
      %6843 = vmatpush.msra.mxu0 0.0
      %6844 = vmatpush.msra.mxu0 0.0
      %v6845 = vand.u32 %v6611, 4294901760
      %6846 = vmatpush.msra.mxu0 %v6845
      %v6847 = vand.u32 %v6609, 4294901760
      %6848 = vmatpush.msra.mxu0 %v6847
      %v6849 = vand.u32 %v6606, 4294901760
      %6850 = vmatpush.msra.mxu0 %v6849
      %v6851 = vand.u32 %v6604, 4294901760
      %6852 = vmatpush.msra.mxu0 %v6851
      %v6853 = vand.u32 %v6671, 4294901760
      %v6854 = vsub.f32 %v6671, %v6853
      %v6855 = vand.u32 %v6854, 4294901760
      %6856 = vmatmul.f32.gmra.mxu0 %v6855
      %v6857 = vpop.f32.mrf.mxu0
      %v6858 = vadd.f32 %v6816, %v6857
      %v6859 = vand.u32 %v6674, 4294901760
      %v6860 = vsub.f32 %v6674, %v6859
      %v6861 = vand.u32 %v6860, 4294901760
      %6862 = vmatmul.f32.gmra.mxu0 %v6861
      %v6863 = vpop.f32.mrf.mxu0
      %v6864 = vadd.f32 %v6821, %v6863
      %v6865 = vand.u32 %v6677, 4294901760
      %v6866 = vsub.f32 %v6677, %v6865
      %v6867 = vand.u32 %v6866, 4294901760
      %6868 = vmatmul.f32.gmra.mxu0 %v6867
      %v6869 = vpop.f32.mrf.mxu0
      %v6870 = vadd.f32 %v6826, %v6869
      %v6871 = vand.u32 %v6680, 4294901760
      %v6872 = vsub.f32 %v6680, %v6871
      %v6873 = vand.u32 %v6872, 4294901760
      %6874 = vmatmul.f32.gmra.mxu0 %v6873
      %v6875 = vpop.f32.mrf.mxu0
      %v6876 = vadd.f32 %v6831, %v6875
      %6877 = vdwg.mxu0
      %6878 = vmatpush.msra.mxu0 0.0
      %6879 = vmatpush.msra.mxu0 0.0
      %6880 = vmatpush.msra.mxu0 0.0
      %6881 = vmatpush.msra.mxu0 0.0
      %6882 = vmatpush.msra.mxu0 0.0
      %6883 = vmatpush.msra.mxu0 0.0
      %6884 = vmatpush.msra.mxu0 0.0
      %6885 = vmatpush.msra.mxu0 0.0
      %6886 = vmatpush.msra.mxu0 0.0
      %6887 = vmatpush.msra.mxu0 0.0
      %6888 = vmatpush.msra.mxu0 0.0
      %6889 = vmatpush.msra.mxu0 0.0
      %v6890 = vand.u32 %v6611, 4294901760
      %v6891 = vsub.f32 %v6611, %v6890
      %v6892 = vand.u32 %v6891, 4294901760
      %6893 = vmatpush.msra.mxu0 %v6892
      %v6894 = vand.u32 %v6609, 4294901760
      %v6895 = vsub.f32 %v6609, %v6894
      %v6896 = vand.u32 %v6895, 4294901760
      %6897 = vmatpush.msra.mxu0 %v6896
      %v6898 = vand.u32 %v6606, 4294901760
      %v6899 = vsub.f32 %v6606, %v6898
      %v6900 = vand.u32 %v6899, 4294901760
      %6901 = vmatpush.msra.mxu0 %v6900
      %v6902 = vand.u32 %v6604, 4294901760
      %v6903 = vsub.f32 %v6604, %v6902
      %v6904 = vand.u32 %v6903, 4294901760
      %6905 = vmatpush.msra.mxu0 %v6904
      %v6906 = vand.u32 %v6671, 4294901760
      %6907 = vmatmul.f32.gmra.mxu0 %v6906
      %v6908 = vpop.f32.mrf.mxu0
      %v6909 = vadd.f32 %v6858, %v6908
      %v6910 = vand.u32 %v6674, 4294901760
      %6911 = vmatmul.f32.gmra.mxu0 %v6910
      %v6912 = vpop.f32.mrf.mxu0
      %v6913 = vadd.f32 %v6864, %v6912
      %v6914 = vand.u32 %v6677, 4294901760
      %6915 = vmatmul.f32.gmra.mxu0 %v6914
      %v6916 = vpop.f32.mrf.mxu0
      %v6917 = vadd.f32 %v6870, %v6916
      %v6918 = vand.u32 %v6680, 4294901760
      %6919 = vmatmul.f32.gmra.mxu0 %v6918
      %v6920 = vpop.f32.mrf.mxu0
      %v6921 = vadd.f32 %v6876, %v6920
      %6922 = vdwg.mxu0
      %6923 = vmatpush.msra.mxu0 0.0
      %6924 = vmatpush.msra.mxu0 0.0
      %6925 = vmatpush.msra.mxu0 0.0
      %6926 = vmatpush.msra.mxu0 0.0
      %6927 = vmatpush.msra.mxu0 0.0
      %6928 = vmatpush.msra.mxu0 0.0
      %6929 = vmatpush.msra.mxu0 0.0
      %6930 = vmatpush.msra.mxu0 0.0
      %6931 = vmatpush.msra.mxu0 0.0
      %6932 = vmatpush.msra.mxu0 0.0
      %6933 = vmatpush.msra.mxu0 0.0
      %6934 = vmatpush.msra.mxu0 0.0
      %v6935 = vand.u32 %v6611, 4294901760
      %6936 = vmatpush.msra.mxu0 %v6935
      %v6937 = vand.u32 %v6609, 4294901760
      %6938 = vmatpush.msra.mxu0 %v6937
      %v6939 = vand.u32 %v6606, 4294901760
      %6940 = vmatpush.msra.mxu0 %v6939
      %v6941 = vand.u32 %v6604, 4294901760
      %6942 = vmatpush.msra.mxu0 %v6941
      %v6943 = vand.u32 %v6671, 4294901760
      %6944 = vmatmul.f32.gmra.mxu0 %v6943
      %v6945 = vpop.f32.mrf.mxu0
      %v6946 = vadd.f32 %v6909, %v6945
      %v6947 = vand.u32 %v6674, 4294901760
      %6948 = vmatmul.f32.gmra.mxu0 %v6947
      %v6949 = vpop.f32.mrf.mxu0
      %v6950 = vadd.f32 %v6913, %v6949
      %v6951 = vand.u32 %v6677, 4294901760
      %6952 = vmatmul.f32.gmra.mxu0 %v6951
      %v6953 = vpop.f32.mrf.mxu0
      %v6954 = vadd.f32 %v6917, %v6953
      %v6955 = vand.u32 %v6680, 4294901760
      %6956 = vmatmul.f32.gmra.mxu0 %v6955
      %v6957 = vpop.f32.mrf.mxu0
      %v6958 = vadd.f32 %v6921, %v6957
      %6959 = vdwg.mxu0
      %6960 = vmatpush.msra.mxu0 0.0
      %6961 = vmatpush.msra.mxu0 0.0
      %6962 = vmatpush.msra.mxu0 0.0
      %6963 = vmatpush.msra.mxu0 0.0
      %6964 = vmatpush.msra.mxu0 0.0
      %6965 = vmatpush.msra.mxu0 0.0
      %6966 = vmatpush.msra.mxu0 0.0
      %6967 = vmatpush.msra.mxu0 0.0
      %6968 = vmatpush.msra.mxu0 0.0
      %6969 = vmatpush.msra.mxu0 0.0
      %6970 = vmatpush.msra.mxu0 0.0
      %6971 = vmatpush.msra.mxu0 0.0
      %v6972 = vand.u32 %v6668, 4294901760
      %6973 = vmatpush.msra.mxu0 %v6972
      %v6974 = vand.u32 %v6666, 4294901760
      %6975 = vmatpush.msra.mxu0 %v6974
      %v6976 = vand.u32 %v6663, 4294901760
      %6977 = vmatpush.msra.mxu0 %v6976
      %v6978 = vand.u32 %v6661, 4294901760
      %6979 = vmatpush.msra.mxu0 %v6978
      %v6980 = vand.u32 %v6671, 4294901760
      %v6981 = vsub.f32 %v6671, %v6980
      %v6982 = vand.u32 %v6981, 4294901760
      %v6983 = vsub.f32 %v6981, %v6982
      %v6984 = vand.u32 %v6983, 4294901760
      %6985 = vmatmul.f32.gmra.mxu0 %v6984
      %v6986 = vpop.f32.mrf.mxu0
      %v6987 = vadd.f32 0.0, %v6986
      %v6988 = vand.u32 %v6674, 4294901760
      %v6989 = vsub.f32 %v6674, %v6988
      %v6990 = vand.u32 %v6989, 4294901760
      %v6991 = vsub.f32 %v6989, %v6990
      %v6992 = vand.u32 %v6991, 4294901760
      %6993 = vmatmul.f32.gmra.mxu0 %v6992
      %v6994 = vpop.f32.mrf.mxu0
      %v6995 = vadd.f32 0.0, %v6994
      %v6996 = vand.u32 %v6677, 4294901760
      %v6997 = vsub.f32 %v6677, %v6996
      %v6998 = vand.u32 %v6997, 4294901760
      %v6999 = vsub.f32 %v6997, %v6998
      %v7000 = vand.u32 %v6999, 4294901760
      %7001 = vmatmul.f32.gmra.mxu0 %v7000
      %v7002 = vpop.f32.mrf.mxu0
      %v7003 = vadd.f32 0.0, %v7002
      %v7004 = vand.u32 %v6680, 4294901760
      %v7005 = vsub.f32 %v6680, %v7004
      %v7006 = vand.u32 %v7005, 4294901760
      %v7007 = vsub.f32 %v7005, %v7006
      %v7008 = vand.u32 %v7007, 4294901760
      %7009 = vmatmul.f32.gmra.mxu0 %v7008
      %v7010 = vpop.f32.mrf.mxu0
      %v7011 = vadd.f32 0.0, %v7010
      %7012 = vdwg.mxu0
      %7013 = vmatpush.msra.mxu0 0.0
      %7014 = vmatpush.msra.mxu0 0.0
      %7015 = vmatpush.msra.mxu0 0.0
      %7016 = vmatpush.msra.mxu0 0.0
      %7017 = vmatpush.msra.mxu0 0.0
      %7018 = vmatpush.msra.mxu0 0.0
      %7019 = vmatpush.msra.mxu0 0.0
      %7020 = vmatpush.msra.mxu0 0.0
      %7021 = vmatpush.msra.mxu0 0.0
      %7022 = vmatpush.msra.mxu0 0.0
      %7023 = vmatpush.msra.mxu0 0.0
      %7024 = vmatpush.msra.mxu0 0.0
      %v7025 = vand.u32 %v6668, 4294901760
      %v7026 = vsub.f32 %v6668, %v7025
      %v7027 = vand.u32 %v7026, 4294901760
      %v7028 = vsub.f32 %v7026, %v7027
      %v7029 = vand.u32 %v7028, 4294901760
      %7030 = vmatpush.msra.mxu0 %v7029
      %v7031 = vand.u32 %v6666, 4294901760
      %v7032 = vsub.f32 %v6666, %v7031
      %v7033 = vand.u32 %v7032, 4294901760
      %v7034 = vsub.f32 %v7032, %v7033
      %v7035 = vand.u32 %v7034, 4294901760
      %7036 = vmatpush.msra.mxu0 %v7035
      %v7037 = vand.u32 %v6663, 4294901760
      %v7038 = vsub.f32 %v6663, %v7037
      %v7039 = vand.u32 %v7038, 4294901760
      %v7040 = vsub.f32 %v7038, %v7039
      %v7041 = vand.u32 %v7040, 4294901760
      %7042 = vmatpush.msra.mxu0 %v7041
      %v7043 = vand.u32 %v6661, 4294901760
      %v7044 = vsub.f32 %v6661, %v7043
      %v7045 = vand.u32 %v7044, 4294901760
      %v7046 = vsub.f32 %v7044, %v7045
      %v7047 = vand.u32 %v7046, 4294901760
      %7048 = vmatpush.msra.mxu0 %v7047
      %v7049 = vand.u32 %v6671, 4294901760
      %7050 = vmatmul.f32.gmra.mxu0 %v7049
      %v7051 = vpop.f32.mrf.mxu0
      %v7052 = vadd.f32 %v6987, %v7051
      %v7053 = vand.u32 %v6674, 4294901760
      %7054 = vmatmul.f32.gmra.mxu0 %v7053
      %v7055 = vpop.f32.mrf.mxu0
      %v7056 = vadd.f32 %v6995, %v7055
      %v7057 = vand.u32 %v6677, 4294901760
      %7058 = vmatmul.f32.gmra.mxu0 %v7057
      %v7059 = vpop.f32.mrf.mxu0
      %v7060 = vadd.f32 %v7003, %v7059
      %v7061 = vand.u32 %v6680, 4294901760
      %7062 = vmatmul.f32.gmra.mxu0 %v7061
      %v7063 = vpop.f32.mrf.mxu0
      %v7064 = vadd.f32 %v7011, %v7063
      %7065 = vdwg.mxu0
      %7066 = vmatpush.msra.mxu0 0.0
      %7067 = vmatpush.msra.mxu0 0.0
      %7068 = vmatpush.msra.mxu0 0.0
      %7069 = vmatpush.msra.mxu0 0.0
      %7070 = vmatpush.msra.mxu0 0.0
      %7071 = vmatpush.msra.mxu0 0.0
      %7072 = vmatpush.msra.mxu0 0.0
      %7073 = vmatpush.msra.mxu0 0.0
      %7074 = vmatpush.msra.mxu0 0.0
      %7075 = vmatpush.msra.mxu0 0.0
      %7076 = vmatpush.msra.mxu0 0.0
      %7077 = vmatpush.msra.mxu0 0.0
      %v7078 = vand.u32 %v6668, 4294901760
      %v7079 = vsub.f32 %v6668, %v7078
      %7080 = vmatpush.msra.mxu0 %v7079
      %v7081 = vand.u32 %v6666, 4294901760
      %v7082 = vsub.f32 %v6666, %v7081
      %7083 = vmatpush.msra.mxu0 %v7082
      %v7084 = vand.u32 %v6663, 4294901760
      %v7085 = vsub.f32 %v6663, %v7084
      %7086 = vmatpush.msra.mxu0 %v7085
      %v7087 = vand.u32 %v6661, 4294901760
      %v7088 = vsub.f32 %v6661, %v7087
      %7089 = vmatpush.msra.mxu0 %v7088
      %v7090 = vand.u32 %v6671, 4294901760
      %v7091 = vsub.f32 %v6671, %v7090
      %7092 = vmatmul.f32.gmra.mxu0 %v7091
      %v7093 = vpop.f32.mrf.mxu0
      %v7094 = vadd.f32 %v7052, %v7093
      %v7095 = vand.u32 %v6674, 4294901760
      %v7096 = vsub.f32 %v6674, %v7095
      %7097 = vmatmul.f32.gmra.mxu0 %v7096
      %v7098 = vpop.f32.mrf.mxu0
      %v7099 = vadd.f32 %v7056, %v7098
      %v7100 = vand.u32 %v6677, 4294901760
      %v7101 = vsub.f32 %v6677, %v7100
      %7102 = vmatmul.f32.gmra.mxu0 %v7101
      %v7103 = vpop.f32.mrf.mxu0
      %v7104 = vadd.f32 %v7060, %v7103
      %v7105 = vand.u32 %v6680, 4294901760
      %v7106 = vsub.f32 %v6680, %v7105
      %7107 = vmatmul.f32.gmra.mxu0 %v7106
      %v7108 = vpop.f32.mrf.mxu0
      %v7109 = vadd.f32 %v7064, %v7108
      %7110 = vdwg.mxu0
      %7111 = vmatpush.msra.mxu0 0.0
      %7112 = vmatpush.msra.mxu0 0.0
      %7113 = vmatpush.msra.mxu0 0.0
      %7114 = vmatpush.msra.mxu0 0.0
      %7115 = vmatpush.msra.mxu0 0.0
      %7116 = vmatpush.msra.mxu0 0.0
      %7117 = vmatpush.msra.mxu0 0.0
      %7118 = vmatpush.msra.mxu0 0.0
      %7119 = vmatpush.msra.mxu0 0.0
      %7120 = vmatpush.msra.mxu0 0.0
      %7121 = vmatpush.msra.mxu0 0.0
      %7122 = vmatpush.msra.mxu0 0.0
      %v7123 = vand.u32 %v6668, 4294901760
      %7124 = vmatpush.msra.mxu0 %v7123
      %v7125 = vand.u32 %v6666, 4294901760
      %7126 = vmatpush.msra.mxu0 %v7125
      %v7127 = vand.u32 %v6663, 4294901760
      %7128 = vmatpush.msra.mxu0 %v7127
      %v7129 = vand.u32 %v6661, 4294901760
      %7130 = vmatpush.msra.mxu0 %v7129
      %v7131 = vand.u32 %v6671, 4294901760
      %v7132 = vsub.f32 %v6671, %v7131
      %v7133 = vand.u32 %v7132, 4294901760
      %7134 = vmatmul.f32.gmra.mxu0 %v7133
      %v7135 = vpop.f32.mrf.mxu0
      %v7136 = vadd.f32 %v7094, %v7135
      %v7137 = vand.u32 %v6674, 4294901760
      %v7138 = vsub.f32 %v6674, %v7137
      %v7139 = vand.u32 %v7138, 4294901760
      %7140 = vmatmul.f32.gmra.mxu0 %v7139
      %v7141 = vpop.f32.mrf.mxu0
      %v7142 = vadd.f32 %v7099, %v7141
      %v7143 = vand.u32 %v6677, 4294901760
      %v7144 = vsub.f32 %v6677, %v7143
      %v7145 = vand.u32 %v7144, 4294901760
      %7146 = vmatmul.f32.gmra.mxu0 %v7145
      %v7147 = vpop.f32.mrf.mxu0
      %v7148 = vadd.f32 %v7104, %v7147
      %v7149 = vand.u32 %v6680, 4294901760
      %v7150 = vsub.f32 %v6680, %v7149
      %v7151 = vand.u32 %v7150, 4294901760
      %7152 = vmatmul.f32.gmra.mxu0 %v7151
      %v7153 = vpop.f32.mrf.mxu0
      %v7154 = vadd.f32 %v7109, %v7153
      %7155 = vdwg.mxu0
      %7156 = vmatpush.msra.mxu0 0.0
      %7157 = vmatpush.msra.mxu0 0.0
      %7158 = vmatpush.msra.mxu0 0.0
      %7159 = vmatpush.msra.mxu0 0.0
      %7160 = vmatpush.msra.mxu0 0.0
      %7161 = vmatpush.msra.mxu0 0.0
      %7162 = vmatpush.msra.mxu0 0.0
      %7163 = vmatpush.msra.mxu0 0.0
      %7164 = vmatpush.msra.mxu0 0.0
      %7165 = vmatpush.msra.mxu0 0.0
      %7166 = vmatpush.msra.mxu0 0.0
      %7167 = vmatpush.msra.mxu0 0.0
      %v7168 = vand.u32 %v6668, 4294901760
      %v7169 = vsub.f32 %v6668, %v7168
      %v7170 = vand.u32 %v7169, 4294901760
      %7171 = vmatpush.msra.mxu0 %v7170
      %v7172 = vand.u32 %v6666, 4294901760
      %v7173 = vsub.f32 %v6666, %v7172
      %v7174 = vand.u32 %v7173, 4294901760
      %7175 = vmatpush.msra.mxu0 %v7174
      %v7176 = vand.u32 %v6663, 4294901760
      %v7177 = vsub.f32 %v6663, %v7176
      %v7178 = vand.u32 %v7177, 4294901760
      %7179 = vmatpush.msra.mxu0 %v7178
      %v7180 = vand.u32 %v6661, 4294901760
      %v7181 = vsub.f32 %v6661, %v7180
      %v7182 = vand.u32 %v7181, 4294901760
      %7183 = vmatpush.msra.mxu0 %v7182
      %v7184 = vand.u32 %v6671, 4294901760
      %7185 = vmatmul.f32.gmra.mxu0 %v7184
      %v7186 = vpop.f32.mrf.mxu0
      %v7187 = vadd.f32 %v7136, %v7186
      %v7188 = vand.u32 %v6674, 4294901760
      %7189 = vmatmul.f32.gmra.mxu0 %v7188
      %v7190 = vpop.f32.mrf.mxu0
      %v7191 = vadd.f32 %v7142, %v7190
      %v7192 = vand.u32 %v6677, 4294901760
      %7193 = vmatmul.f32.gmra.mxu0 %v7192
      %v7194 = vpop.f32.mrf.mxu0
      %v7195 = vadd.f32 %v7148, %v7194
      %v7196 = vand.u32 %v6680, 4294901760
      %7197 = vmatmul.f32.gmra.mxu0 %v7196
      %v7198 = vpop.f32.mrf.mxu0
      %v7199 = vadd.f32 %v7154, %v7198
      %7200 = vdwg.mxu0
      %7201 = vmatpush.msra.mxu0 0.0
      %7202 = vmatpush.msra.mxu0 0.0
      %7203 = vmatpush.msra.mxu0 0.0
      %7204 = vmatpush.msra.mxu0 0.0
      %7205 = vmatpush.msra.mxu0 0.0
      %7206 = vmatpush.msra.mxu0 0.0
      %7207 = vmatpush.msra.mxu0 0.0
      %7208 = vmatpush.msra.mxu0 0.0
      %7209 = vmatpush.msra.mxu0 0.0
      %7210 = vmatpush.msra.mxu0 0.0
      %7211 = vmatpush.msra.mxu0 0.0
      %7212 = vmatpush.msra.mxu0 0.0
      %v7213 = vand.u32 %v6668, 4294901760
      %7214 = vmatpush.msra.mxu0 %v7213
      %v7215 = vand.u32 %v6666, 4294901760
      %7216 = vmatpush.msra.mxu0 %v7215
      %v7217 = vand.u32 %v6663, 4294901760
      %7218 = vmatpush.msra.mxu0 %v7217
      %v7219 = vand.u32 %v6661, 4294901760
      %7220 = vmatpush.msra.mxu0 %v7219
      %v7221 = vand.u32 %v6671, 4294901760
      %7222 = vmatmul.f32.gmra.mxu0 %v7221
      %v7223 = vpop.f32.mrf.mxu0
      %v7224 = vadd.f32 %v7187, %v7223
      %v7225 = vand.u32 %v6674, 4294901760
      %7226 = vmatmul.f32.gmra.mxu0 %v7225
      %v7227 = vpop.f32.mrf.mxu0
      %v7228 = vadd.f32 %v7191, %v7227
      %v7229 = vand.u32 %v6677, 4294901760
      %7230 = vmatmul.f32.gmra.mxu0 %v7229
      %v7231 = vpop.f32.mrf.mxu0
      %v7232 = vadd.f32 %v7195, %v7231
      %v7233 = vand.u32 %v6680, 4294901760
      %7234 = vmatmul.f32.gmra.mxu0 %v7233
      %v7235 = vpop.f32.mrf.mxu0
      %v7236 = vadd.f32 %v7199, %v7235
      %7237 = vdwg.mxu0
      %v7238 = vmul.f32 %v6604, %v6604
      %v7239 = vmul.f32 %v6661, %v6661
      %v7240 = vmul.f32 %v6606, %v6606
      %v7241 = vmul.f32 %v6663, %v6663
      %v7242 = vmul.f32 %v6609, %v6609
      %v7243 = vmul.f32 %v6666, %v6666
      %v7244 = vmul.f32 %v6611, %v6611
      %v7245 = vmul.f32 %v6668, %v6668
      %7246 = vmatpush.msra.mxu0 0.0
      %7247 = vmatpush.msra.mxu0 0.0
      %7248 = vmatpush.msra.mxu0 0.0
      %7249 = vmatpush.msra.mxu0 0.0
      %7250 = vmatpush.msra.mxu0 0.0
      %7251 = vmatpush.msra.mxu0 0.0
      %7252 = vmatpush.msra.mxu0 0.0
      %7253 = vmatpush.msra.mxu0 0.0
      %7254 = vmatpush.msra.mxu0 0.0
      %7255 = vmatpush.msra.mxu0 0.0
      %7256 = vmatpush.msra.mxu0 0.0
      %7257 = vmatpush.msra.mxu0 0.0
      %v7258 = vand.u32 %v7244, 4294901760
      %7259 = vmatpush.msra.mxu0 %v7258
      %v7260 = vand.u32 %v7242, 4294901760
      %7261 = vmatpush.msra.mxu0 %v7260
      %v7262 = vand.u32 %v7240, 4294901760
      %7263 = vmatpush.msra.mxu0 %v7262
      %v7264 = vand.u32 %v7238, 4294901760
      %7265 = vmatpush.msra.mxu0 %v7264
      %v7266 = vand.u32 %v6671, 4294901760
      %v7267 = vsub.f32 %v6671, %v7266
      %v7268 = vand.u32 %v7267, 4294901760
      %v7269 = vsub.f32 %v7267, %v7268
      %v7270 = vand.u32 %v7269, 4294901760
      %7271 = vmatmul.f32.gmra.mxu0 %v7270
      %v7272 = vpop.f32.mrf.mxu0
      %v7273 = vadd.f32 0.0, %v7272
      %v7274 = vand.u32 %v6674, 4294901760
      %v7275 = vsub.f32 %v6674, %v7274
      %v7276 = vand.u32 %v7275, 4294901760
      %v7277 = vsub.f32 %v7275, %v7276
      %v7278 = vand.u32 %v7277, 4294901760
      %7279 = vmatmul.f32.gmra.mxu0 %v7278
      %v7280 = vpop.f32.mrf.mxu0
      %v7281 = vadd.f32 0.0, %v7280
      %v7282 = vand.u32 %v6677, 4294901760
      %v7283 = vsub.f32 %v6677, %v7282
      %v7284 = vand.u32 %v7283, 4294901760
      %v7285 = vsub.f32 %v7283, %v7284
      %v7286 = vand.u32 %v7285, 4294901760
      %7287 = vmatmul.f32.gmra.mxu0 %v7286
      %v7288 = vpop.f32.mrf.mxu0
      %v7289 = vadd.f32 0.0, %v7288
      %v7290 = vand.u32 %v6680, 4294901760
      %v7291 = vsub.f32 %v6680, %v7290
      %v7292 = vand.u32 %v7291, 4294901760
      %v7293 = vsub.f32 %v7291, %v7292
      %v7294 = vand.u32 %v7293, 4294901760
      %7295 = vmatmul.f32.gmra.mxu0 %v7294
      %v7296 = vpop.f32.mrf.mxu0
      %v7297 = vadd.f32 0.0, %v7296
      %7298 = vdwg.mxu0
      %7299 = vmatpush.msra.mxu0 0.0
      %7300 = vmatpush.msra.mxu0 0.0
      %7301 = vmatpush.msra.mxu0 0.0
      %7302 = vmatpush.msra.mxu0 0.0
      %7303 = vmatpush.msra.mxu0 0.0
      %7304 = vmatpush.msra.mxu0 0.0
      %7305 = vmatpush.msra.mxu0 0.0
      %7306 = vmatpush.msra.mxu0 0.0
      %7307 = vmatpush.msra.mxu0 0.0
      %7308 = vmatpush.msra.mxu0 0.0
      %7309 = vmatpush.msra.mxu0 0.0
      %7310 = vmatpush.msra.mxu0 0.0
      %v7311 = vand.u32 %v7244, 4294901760
      %v7312 = vsub.f32 %v7244, %v7311
      %v7313 = vand.u32 %v7312, 4294901760
      %v7314 = vsub.f32 %v7312, %v7313
      %v7315 = vand.u32 %v7314, 4294901760
      %7316 = vmatpush.msra.mxu0 %v7315
      %v7317 = vand.u32 %v7242, 4294901760
      %v7318 = vsub.f32 %v7242, %v7317
      %v7319 = vand.u32 %v7318, 4294901760
      %v7320 = vsub.f32 %v7318, %v7319
      %v7321 = vand.u32 %v7320, 4294901760
      %7322 = vmatpush.msra.mxu0 %v7321
      %v7323 = vand.u32 %v7240, 4294901760
      %v7324 = vsub.f32 %v7240, %v7323
      %v7325 = vand.u32 %v7324, 4294901760
      %v7326 = vsub.f32 %v7324, %v7325
      %v7327 = vand.u32 %v7326, 4294901760
      %7328 = vmatpush.msra.mxu0 %v7327
      %v7329 = vand.u32 %v7238, 4294901760
      %v7330 = vsub.f32 %v7238, %v7329
      %v7331 = vand.u32 %v7330, 4294901760
      %v7332 = vsub.f32 %v7330, %v7331
      %v7333 = vand.u32 %v7332, 4294901760
      %7334 = vmatpush.msra.mxu0 %v7333
      %v7335 = vand.u32 %v6671, 4294901760
      %7336 = vmatmul.f32.gmra.mxu0 %v7335
      %v7337 = vpop.f32.mrf.mxu0
      %v7338 = vadd.f32 %v7273, %v7337
      %v7339 = vand.u32 %v6674, 4294901760
      %7340 = vmatmul.f32.gmra.mxu0 %v7339
      %v7341 = vpop.f32.mrf.mxu0
      %v7342 = vadd.f32 %v7281, %v7341
      %v7343 = vand.u32 %v6677, 4294901760
      %7344 = vmatmul.f32.gmra.mxu0 %v7343
      %v7345 = vpop.f32.mrf.mxu0
      %v7346 = vadd.f32 %v7289, %v7345
      %v7347 = vand.u32 %v6680, 4294901760
      %7348 = vmatmul.f32.gmra.mxu0 %v7347
      %v7349 = vpop.f32.mrf.mxu0
      %v7350 = vadd.f32 %v7297, %v7349
      %7351 = vdwg.mxu0
      %7352 = vmatpush.msra.mxu0 0.0
      %7353 = vmatpush.msra.mxu0 0.0
      %7354 = vmatpush.msra.mxu0 0.0
      %7355 = vmatpush.msra.mxu0 0.0
      %7356 = vmatpush.msra.mxu0 0.0
      %7357 = vmatpush.msra.mxu0 0.0
      %7358 = vmatpush.msra.mxu0 0.0
      %7359 = vmatpush.msra.mxu0 0.0
      %7360 = vmatpush.msra.mxu0 0.0
      %7361 = vmatpush.msra.mxu0 0.0
      %7362 = vmatpush.msra.mxu0 0.0
      %7363 = vmatpush.msra.mxu0 0.0
      %v7364 = vand.u32 %v7244, 4294901760
      %v7365 = vsub.f32 %v7244, %v7364
      %7366 = vmatpush.msra.mxu0 %v7365
      %v7367 = vand.u32 %v7242, 4294901760
      %v7368 = vsub.f32 %v7242, %v7367
      %7369 = vmatpush.msra.mxu0 %v7368
      %v7370 = vand.u32 %v7240, 4294901760
      %v7371 = vsub.f32 %v7240, %v7370
      %7372 = vmatpush.msra.mxu0 %v7371
      %v7373 = vand.u32 %v7238, 4294901760
      %v7374 = vsub.f32 %v7238, %v7373
      %7375 = vmatpush.msra.mxu0 %v7374
      %v7376 = vand.u32 %v6671, 4294901760
      %v7377 = vsub.f32 %v6671, %v7376
      %7378 = vmatmul.f32.gmra.mxu0 %v7377
      %v7379 = vpop.f32.mrf.mxu0
      %v7380 = vadd.f32 %v7338, %v7379
      %v7381 = vand.u32 %v6674, 4294901760
      %v7382 = vsub.f32 %v6674, %v7381
      %7383 = vmatmul.f32.gmra.mxu0 %v7382
      %v7384 = vpop.f32.mrf.mxu0
      %v7385 = vadd.f32 %v7342, %v7384
      %v7386 = vand.u32 %v6677, 4294901760
      %v7387 = vsub.f32 %v6677, %v7386
      %7388 = vmatmul.f32.gmra.mxu0 %v7387
      %v7389 = vpop.f32.mrf.mxu0
      %v7390 = vadd.f32 %v7346, %v7389
      %v7391 = vand.u32 %v6680, 4294901760
      %v7392 = vsub.f32 %v6680, %v7391
      %7393 = vmatmul.f32.gmra.mxu0 %v7392
      %v7394 = vpop.f32.mrf.mxu0
      %v7395 = vadd.f32 %v7350, %v7394
      %7396 = vdwg.mxu0
      %7397 = vmatpush.msra.mxu0 0.0
      %7398 = vmatpush.msra.mxu0 0.0
      %7399 = vmatpush.msra.mxu0 0.0
      %7400 = vmatpush.msra.mxu0 0.0
      %7401 = vmatpush.msra.mxu0 0.0
      %7402 = vmatpush.msra.mxu0 0.0
      %7403 = vmatpush.msra.mxu0 0.0
      %7404 = vmatpush.msra.mxu0 0.0
      %7405 = vmatpush.msra.mxu0 0.0
      %7406 = vmatpush.msra.mxu0 0.0
      %7407 = vmatpush.msra.mxu0 0.0
      %7408 = vmatpush.msra.mxu0 0.0
      %v7409 = vand.u32 %v7244, 4294901760
      %7410 = vmatpush.msra.mxu0 %v7409
      %v7411 = vand.u32 %v7242, 4294901760
      %7412 = vmatpush.msra.mxu0 %v7411
      %v7413 = vand.u32 %v7240, 4294901760
      %7414 = vmatpush.msra.mxu0 %v7413
      %v7415 = vand.u32 %v7238, 4294901760
      %7416 = vmatpush.msra.mxu0 %v7415
      %v7417 = vand.u32 %v6671, 4294901760
      %v7418 = vsub.f32 %v6671, %v7417
      %v7419 = vand.u32 %v7418, 4294901760
      %7420 = vmatmul.f32.gmra.mxu0 %v7419
      %v7421 = vpop.f32.mrf.mxu0
      %v7422 = vadd.f32 %v7380, %v7421
      %v7423 = vand.u32 %v6674, 4294901760
      %v7424 = vsub.f32 %v6674, %v7423
      %v7425 = vand.u32 %v7424, 4294901760
      %7426 = vmatmul.f32.gmra.mxu0 %v7425
      %v7427 = vpop.f32.mrf.mxu0
      %v7428 = vadd.f32 %v7385, %v7427
      %v7429 = vand.u32 %v6677, 4294901760
      %v7430 = vsub.f32 %v6677, %v7429
      %v7431 = vand.u32 %v7430, 4294901760
      %7432 = vmatmul.f32.gmra.mxu0 %v7431
      %v7433 = vpop.f32.mrf.mxu0
      %v7434 = vadd.f32 %v7390, %v7433
      %v7435 = vand.u32 %v6680, 4294901760
      %v7436 = vsub.f32 %v6680, %v7435
      %v7437 = vand.u32 %v7436, 4294901760
      %7438 = vmatmul.f32.gmra.mxu0 %v7437
      %v7439 = vpop.f32.mrf.mxu0
      %v7440 = vadd.f32 %v7395, %v7439
      %7441 = vdwg.mxu0
      %7442 = vmatpush.msra.mxu0 0.0
      %7443 = vmatpush.msra.mxu0 0.0
      %7444 = vmatpush.msra.mxu0 0.0
      %7445 = vmatpush.msra.mxu0 0.0
      %7446 = vmatpush.msra.mxu0 0.0
      %7447 = vmatpush.msra.mxu0 0.0
      %7448 = vmatpush.msra.mxu0 0.0
      %7449 = vmatpush.msra.mxu0 0.0
      %7450 = vmatpush.msra.mxu0 0.0
      %7451 = vmatpush.msra.mxu0 0.0
      %7452 = vmatpush.msra.mxu0 0.0
      %7453 = vmatpush.msra.mxu0 0.0
      %v7454 = vand.u32 %v7244, 4294901760
      %v7455 = vsub.f32 %v7244, %v7454
      %v7456 = vand.u32 %v7455, 4294901760
      %7457 = vmatpush.msra.mxu0 %v7456
      %v7458 = vand.u32 %v7242, 4294901760
      %v7459 = vsub.f32 %v7242, %v7458
      %v7460 = vand.u32 %v7459, 4294901760
      %7461 = vmatpush.msra.mxu0 %v7460
      %v7462 = vand.u32 %v7240, 4294901760
      %v7463 = vsub.f32 %v7240, %v7462
      %v7464 = vand.u32 %v7463, 4294901760
      %7465 = vmatpush.msra.mxu0 %v7464
      %v7466 = vand.u32 %v7238, 4294901760
      %v7467 = vsub.f32 %v7238, %v7466
      %v7468 = vand.u32 %v7467, 4294901760
      %7469 = vmatpush.msra.mxu0 %v7468
      %v7470 = vand.u32 %v6671, 4294901760
      %7471 = vmatmul.f32.gmra.mxu0 %v7470
      %v7472 = vpop.f32.mrf.mxu0
      %v7473 = vadd.f32 %v7422, %v7472
      %v7474 = vand.u32 %v6674, 4294901760
      %7475 = vmatmul.f32.gmra.mxu0 %v7474
      %v7476 = vpop.f32.mrf.mxu0
      %v7477 = vadd.f32 %v7428, %v7476
      %v7478 = vand.u32 %v6677, 4294901760
      %7479 = vmatmul.f32.gmra.mxu0 %v7478
      %v7480 = vpop.f32.mrf.mxu0
      %v7481 = vadd.f32 %v7434, %v7480
      %v7482 = vand.u32 %v6680, 4294901760
      %7483 = vmatmul.f32.gmra.mxu0 %v7482
      %v7484 = vpop.f32.mrf.mxu0
      %v7485 = vadd.f32 %v7440, %v7484
      %7486 = vdwg.mxu0
      %7487 = vmatpush.msra.mxu0 0.0
      %7488 = vmatpush.msra.mxu0 0.0
      %7489 = vmatpush.msra.mxu0 0.0
      %7490 = vmatpush.msra.mxu0 0.0
      %7491 = vmatpush.msra.mxu0 0.0
      %7492 = vmatpush.msra.mxu0 0.0
      %7493 = vmatpush.msra.mxu0 0.0
      %7494 = vmatpush.msra.mxu0 0.0
      %7495 = vmatpush.msra.mxu0 0.0
      %7496 = vmatpush.msra.mxu0 0.0
      %7497 = vmatpush.msra.mxu0 0.0
      %7498 = vmatpush.msra.mxu0 0.0
      %v7499 = vand.u32 %v7244, 4294901760
      %7500 = vmatpush.msra.mxu0 %v7499
      %v7501 = vand.u32 %v7242, 4294901760
      %7502 = vmatpush.msra.mxu0 %v7501
      %v7503 = vand.u32 %v7240, 4294901760
      %7504 = vmatpush.msra.mxu0 %v7503
      %v7505 = vand.u32 %v7238, 4294901760
      %7506 = vmatpush.msra.mxu0 %v7505
      %v7507 = vand.u32 %v6671, 4294901760
      %7508 = vmatmul.f32.gmra.mxu0 %v7507
      %v7509 = vpop.f32.mrf.mxu0
      %v7510 = vadd.f32 %v7473, %v7509
      %v7511 = vand.u32 %v6674, 4294901760
      %7512 = vmatmul.f32.gmra.mxu0 %v7511
      %v7513 = vpop.f32.mrf.mxu0
      %v7514 = vadd.f32 %v7477, %v7513
      %v7515 = vand.u32 %v6677, 4294901760
      %7516 = vmatmul.f32.gmra.mxu0 %v7515
      %v7517 = vpop.f32.mrf.mxu0
      %v7518 = vadd.f32 %v7481, %v7517
      %v7519 = vand.u32 %v6680, 4294901760
      %7520 = vmatmul.f32.gmra.mxu0 %v7519
      %v7521 = vpop.f32.mrf.mxu0
      %v7522 = vadd.f32 %v7485, %v7521
      %7523 = vdwg.mxu0
      %7524 = vmatpush.msra.mxu0 0.0
      %7525 = vmatpush.msra.mxu0 0.0
      %7526 = vmatpush.msra.mxu0 0.0
      %7527 = vmatpush.msra.mxu0 0.0
      %7528 = vmatpush.msra.mxu0 0.0
      %7529 = vmatpush.msra.mxu0 0.0
      %7530 = vmatpush.msra.mxu0 0.0
      %7531 = vmatpush.msra.mxu0 0.0
      %7532 = vmatpush.msra.mxu0 0.0
      %7533 = vmatpush.msra.mxu0 0.0
      %7534 = vmatpush.msra.mxu0 0.0
      %7535 = vmatpush.msra.mxu0 0.0
      %v7536 = vand.u32 %v7245, 4294901760
      %7537 = vmatpush.msra.mxu0 %v7536
      %v7538 = vand.u32 %v7243, 4294901760
      %7539 = vmatpush.msra.mxu0 %v7538
      %v7540 = vand.u32 %v7241, 4294901760
      %7541 = vmatpush.msra.mxu0 %v7540
      %v7542 = vand.u32 %v7239, 4294901760
      %7543 = vmatpush.msra.mxu0 %v7542
      %v7544 = vand.u32 %v6671, 4294901760
      %v7545 = vsub.f32 %v6671, %v7544
      %v7546 = vand.u32 %v7545, 4294901760
      %v7547 = vsub.f32 %v7545, %v7546
      %v7548 = vand.u32 %v7547, 4294901760
      %7549 = vmatmul.f32.gmra.mxu0 %v7548
      %v7550 = vpop.f32.mrf.mxu0
      %v7551 = vadd.f32 0.0, %v7550
      %v7552 = vand.u32 %v6674, 4294901760
      %v7553 = vsub.f32 %v6674, %v7552
      %v7554 = vand.u32 %v7553, 4294901760
      %v7555 = vsub.f32 %v7553, %v7554
      %v7556 = vand.u32 %v7555, 4294901760
      %7557 = vmatmul.f32.gmra.mxu0 %v7556
      %v7558 = vpop.f32.mrf.mxu0
      %v7559 = vadd.f32 0.0, %v7558
      %v7560 = vand.u32 %v6677, 4294901760
      %v7561 = vsub.f32 %v6677, %v7560
      %v7562 = vand.u32 %v7561, 4294901760
      %v7563 = vsub.f32 %v7561, %v7562
      %v7564 = vand.u32 %v7563, 4294901760
      %7565 = vmatmul.f32.gmra.mxu0 %v7564
      %v7566 = vpop.f32.mrf.mxu0
      %v7567 = vadd.f32 0.0, %v7566
      %v7568 = vand.u32 %v6680, 4294901760
      %v7569 = vsub.f32 %v6680, %v7568
      %v7570 = vand.u32 %v7569, 4294901760
      %v7571 = vsub.f32 %v7569, %v7570
      %v7572 = vand.u32 %v7571, 4294901760
      %7573 = vmatmul.f32.gmra.mxu0 %v7572
      %v7574 = vpop.f32.mrf.mxu0
      %v7575 = vadd.f32 0.0, %v7574
      %7576 = vdwg.mxu0
      %7577 = vmatpush.msra.mxu0 0.0
      %7578 = vmatpush.msra.mxu0 0.0
      %7579 = vmatpush.msra.mxu0 0.0
      %7580 = vmatpush.msra.mxu0 0.0
      %7581 = vmatpush.msra.mxu0 0.0
      %7582 = vmatpush.msra.mxu0 0.0
      %7583 = vmatpush.msra.mxu0 0.0
      %7584 = vmatpush.msra.mxu0 0.0
      %7585 = vmatpush.msra.mxu0 0.0
      %7586 = vmatpush.msra.mxu0 0.0
      %7587 = vmatpush.msra.mxu0 0.0
      %7588 = vmatpush.msra.mxu0 0.0
      %v7589 = vand.u32 %v7245, 4294901760
      %v7590 = vsub.f32 %v7245, %v7589
      %v7591 = vand.u32 %v7590, 4294901760
      %v7592 = vsub.f32 %v7590, %v7591
      %v7593 = vand.u32 %v7592, 4294901760
      %7594 = vmatpush.msra.mxu0 %v7593
      %v7595 = vand.u32 %v7243, 4294901760
      %v7596 = vsub.f32 %v7243, %v7595
      %v7597 = vand.u32 %v7596, 4294901760
      %v7598 = vsub.f32 %v7596, %v7597
      %v7599 = vand.u32 %v7598, 4294901760
      %7600 = vmatpush.msra.mxu0 %v7599
      %v7601 = vand.u32 %v7241, 4294901760
      %v7602 = vsub.f32 %v7241, %v7601
      %v7603 = vand.u32 %v7602, 4294901760
      %v7604 = vsub.f32 %v7602, %v7603
      %v7605 = vand.u32 %v7604, 4294901760
      %7606 = vmatpush.msra.mxu0 %v7605
      %v7607 = vand.u32 %v7239, 4294901760
      %v7608 = vsub.f32 %v7239, %v7607
      %v7609 = vand.u32 %v7608, 4294901760
      %v7610 = vsub.f32 %v7608, %v7609
      %v7611 = vand.u32 %v7610, 4294901760
      %7612 = vmatpush.msra.mxu0 %v7611
      %v7613 = vand.u32 %v6671, 4294901760
      %7614 = vmatmul.f32.gmra.mxu0 %v7613
      %v7615 = vpop.f32.mrf.mxu0
      %v7616 = vadd.f32 %v7551, %v7615
      %v7617 = vand.u32 %v6674, 4294901760
      %7618 = vmatmul.f32.gmra.mxu0 %v7617
      %v7619 = vpop.f32.mrf.mxu0
      %v7620 = vadd.f32 %v7559, %v7619
      %v7621 = vand.u32 %v6677, 4294901760
      %7622 = vmatmul.f32.gmra.mxu0 %v7621
      %v7623 = vpop.f32.mrf.mxu0
      %v7624 = vadd.f32 %v7567, %v7623
      %v7625 = vand.u32 %v6680, 4294901760
      %7626 = vmatmul.f32.gmra.mxu0 %v7625
      %v7627 = vpop.f32.mrf.mxu0
      %v7628 = vadd.f32 %v7575, %v7627
      %7629 = vdwg.mxu0
      %7630 = vmatpush.msra.mxu0 0.0
      %7631 = vmatpush.msra.mxu0 0.0
      %7632 = vmatpush.msra.mxu0 0.0
      %7633 = vmatpush.msra.mxu0 0.0
      %7634 = vmatpush.msra.mxu0 0.0
      %7635 = vmatpush.msra.mxu0 0.0
      %7636 = vmatpush.msra.mxu0 0.0
      %7637 = vmatpush.msra.mxu0 0.0
      %7638 = vmatpush.msra.mxu0 0.0
      %7639 = vmatpush.msra.mxu0 0.0
      %7640 = vmatpush.msra.mxu0 0.0
      %7641 = vmatpush.msra.mxu0 0.0
      %v7642 = vand.u32 %v7245, 4294901760
      %v7643 = vsub.f32 %v7245, %v7642
      %7644 = vmatpush.msra.mxu0 %v7643
      %v7645 = vand.u32 %v7243, 4294901760
      %v7646 = vsub.f32 %v7243, %v7645
      %7647 = vmatpush.msra.mxu0 %v7646
      %v7648 = vand.u32 %v7241, 4294901760
      %v7649 = vsub.f32 %v7241, %v7648
      %7650 = vmatpush.msra.mxu0 %v7649
      %v7651 = vand.u32 %v7239, 4294901760
      %v7652 = vsub.f32 %v7239, %v7651
      %7653 = vmatpush.msra.mxu0 %v7652
      %v7654 = vand.u32 %v6671, 4294901760
      %v7655 = vsub.f32 %v6671, %v7654
      %7656 = vmatmul.f32.gmra.mxu0 %v7655
      %v7657 = vpop.f32.mrf.mxu0
      %v7658 = vadd.f32 %v7616, %v7657
      %v7659 = vand.u32 %v6674, 4294901760
      %v7660 = vsub.f32 %v6674, %v7659
      %7661 = vmatmul.f32.gmra.mxu0 %v7660
      %v7662 = vpop.f32.mrf.mxu0
      %v7663 = vadd.f32 %v7620, %v7662
      %v7664 = vand.u32 %v6677, 4294901760
      %v7665 = vsub.f32 %v6677, %v7664
      %7666 = vmatmul.f32.gmra.mxu0 %v7665
      %v7667 = vpop.f32.mrf.mxu0
      %v7668 = vadd.f32 %v7624, %v7667
      %v7669 = vand.u32 %v6680, 4294901760
      %v7670 = vsub.f32 %v6680, %v7669
      %7671 = vmatmul.f32.gmra.mxu0 %v7670
      %v7672 = vpop.f32.mrf.mxu0
      %v7673 = vadd.f32 %v7628, %v7672
      %7674 = vdwg.mxu0
      %7675 = vmatpush.msra.mxu0 0.0
      %7676 = vmatpush.msra.mxu0 0.0
      %7677 = vmatpush.msra.mxu0 0.0
      %7678 = vmatpush.msra.mxu0 0.0
      %7679 = vmatpush.msra.mxu0 0.0
      %7680 = vmatpush.msra.mxu0 0.0
      %7681 = vmatpush.msra.mxu0 0.0
      %7682 = vmatpush.msra.mxu0 0.0
      %7683 = vmatpush.msra.mxu0 0.0
      %7684 = vmatpush.msra.mxu0 0.0
      %7685 = vmatpush.msra.mxu0 0.0
      %7686 = vmatpush.msra.mxu0 0.0
      %v7687 = vand.u32 %v7245, 4294901760
      %7688 = vmatpush.msra.mxu0 %v7687
      %v7689 = vand.u32 %v7243, 4294901760
      %7690 = vmatpush.msra.mxu0 %v7689
      %v7691 = vand.u32 %v7241, 4294901760
      %7692 = vmatpush.msra.mxu0 %v7691
      %v7693 = vand.u32 %v7239, 4294901760
      %7694 = vmatpush.msra.mxu0 %v7693
      %v7695 = vand.u32 %v6671, 4294901760
      %v7696 = vsub.f32 %v6671, %v7695
      %v7697 = vand.u32 %v7696, 4294901760
      %7698 = vmatmul.f32.gmra.mxu0 %v7697
      %v7699 = vpop.f32.mrf.mxu0
      %v7700 = vadd.f32 %v7658, %v7699
      %v7701 = vand.u32 %v6674, 4294901760
      %v7702 = vsub.f32 %v6674, %v7701
      %v7703 = vand.u32 %v7702, 4294901760
      %7704 = vmatmul.f32.gmra.mxu0 %v7703
      %v7705 = vpop.f32.mrf.mxu0
      %v7706 = vadd.f32 %v7663, %v7705
      %v7707 = vand.u32 %v6677, 4294901760
      %v7708 = vsub.f32 %v6677, %v7707
      %v7709 = vand.u32 %v7708, 4294901760
      %7710 = vmatmul.f32.gmra.mxu0 %v7709
      %v7711 = vpop.f32.mrf.mxu0
      %v7712 = vadd.f32 %v7668, %v7711
      %v7713 = vand.u32 %v6680, 4294901760
      %v7714 = vsub.f32 %v6680, %v7713
      %v7715 = vand.u32 %v7714, 4294901760
      %7716 = vmatmul.f32.gmra.mxu0 %v7715
      %v7717 = vpop.f32.mrf.mxu0
      %v7718 = vadd.f32 %v7673, %v7717
      %7719 = vdwg.mxu0
      %7720 = vmatpush.msra.mxu0 0.0
      %7721 = vmatpush.msra.mxu0 0.0
      %7722 = vmatpush.msra.mxu0 0.0
      %7723 = vmatpush.msra.mxu0 0.0
      %7724 = vmatpush.msra.mxu0 0.0
      %7725 = vmatpush.msra.mxu0 0.0
      %7726 = vmatpush.msra.mxu0 0.0
      %7727 = vmatpush.msra.mxu0 0.0
      %7728 = vmatpush.msra.mxu0 0.0
      %7729 = vmatpush.msra.mxu0 0.0
      %7730 = vmatpush.msra.mxu0 0.0
      %7731 = vmatpush.msra.mxu0 0.0
      %v7732 = vand.u32 %v7245, 4294901760
      %v7733 = vsub.f32 %v7245, %v7732
      %v7734 = vand.u32 %v7733, 4294901760
      %7735 = vmatpush.msra.mxu0 %v7734
      %v7736 = vand.u32 %v7243, 4294901760
      %v7737 = vsub.f32 %v7243, %v7736
      %v7738 = vand.u32 %v7737, 4294901760
      %7739 = vmatpush.msra.mxu0 %v7738
      %v7740 = vand.u32 %v7241, 4294901760
      %v7741 = vsub.f32 %v7241, %v7740
      %v7742 = vand.u32 %v7741, 4294901760
      %7743 = vmatpush.msra.mxu0 %v7742
      %v7744 = vand.u32 %v7239, 4294901760
      %v7745 = vsub.f32 %v7239, %v7744
      %v7746 = vand.u32 %v7745, 4294901760
      %7747 = vmatpush.msra.mxu0 %v7746
      %v7748 = vand.u32 %v6671, 4294901760
      %7749 = vmatmul.f32.gmra.mxu0 %v7748
      %v7750 = vpop.f32.mrf.mxu0
      %v7751 = vadd.f32 %v7700, %v7750
      %v7752 = vand.u32 %v6674, 4294901760
      %7753 = vmatmul.f32.gmra.mxu0 %v7752
      %v7754 = vpop.f32.mrf.mxu0
      %v7755 = vadd.f32 %v7706, %v7754
      %v7756 = vand.u32 %v6677, 4294901760
      %7757 = vmatmul.f32.gmra.mxu0 %v7756
      %v7758 = vpop.f32.mrf.mxu0
      %v7759 = vadd.f32 %v7712, %v7758
      %v7760 = vand.u32 %v6680, 4294901760
      %7761 = vmatmul.f32.gmra.mxu0 %v7760
      %v7762 = vpop.f32.mrf.mxu0
      %v7763 = vadd.f32 %v7718, %v7762
      %7764 = vdwg.mxu0
      %7765 = vmatpush.msra.mxu0 0.0
      %7766 = vmatpush.msra.mxu0 0.0
      %7767 = vmatpush.msra.mxu0 0.0
      %7768 = vmatpush.msra.mxu0 0.0
      %7769 = vmatpush.msra.mxu0 0.0
      %7770 = vmatpush.msra.mxu0 0.0
      %7771 = vmatpush.msra.mxu0 0.0
      %7772 = vmatpush.msra.mxu0 0.0
      %7773 = vmatpush.msra.mxu0 0.0
      %7774 = vmatpush.msra.mxu0 0.0
      %7775 = vmatpush.msra.mxu0 0.0
      %7776 = vmatpush.msra.mxu0 0.0
      %v7777 = vand.u32 %v7245, 4294901760
      %7778 = vmatpush.msra.mxu0 %v7777
      %v7779 = vand.u32 %v7243, 4294901760
      %7780 = vmatpush.msra.mxu0 %v7779
      %v7781 = vand.u32 %v7241, 4294901760
      %7782 = vmatpush.msra.mxu0 %v7781
      %v7783 = vand.u32 %v7239, 4294901760
      %7784 = vmatpush.msra.mxu0 %v7783
      %v7785 = vand.u32 %v6671, 4294901760
      %7786 = vmatmul.f32.gmra.mxu0 %v7785
      %v7787 = vpop.f32.mrf.mxu0
      %v7788 = vadd.f32 %v7751, %v7787
      %v7789 = vand.u32 %v6674, 4294901760
      %7790 = vmatmul.f32.gmra.mxu0 %v7789
      %v7791 = vpop.f32.mrf.mxu0
      %v7792 = vadd.f32 %v7755, %v7791
      %v7793 = vand.u32 %v6677, 4294901760
      %7794 = vmatmul.f32.gmra.mxu0 %v7793
      %v7795 = vpop.f32.mrf.mxu0
      %v7796 = vadd.f32 %v7759, %v7795
      %v7797 = vand.u32 %v6680, 4294901760
      %7798 = vmatmul.f32.gmra.mxu0 %v7797
      %v7799 = vpop.f32.mrf.mxu0
      %v7800 = vadd.f32 %v7763, %v7799
      %7801 = vdwg.mxu0
      %v7802 = vadd.f32 %v6946, %v7224
      %7803 = vadd.xlane.f32.xlu0 %v7802
      %v7804 = vpop.xlane.xlu0 %7803
      %v7805 = vadd.f32 %v6950, %v7228
      %7806 = vadd.xlane.f32.xlu0 %v7805
      %v7807 = vpop.xlane.xlu0 %7806
      %v7808 = vadd.f32 %v6954, %v7232
      %7809 = vadd.xlane.f32.xlu0 %v7808
      %v7810 = vpop.xlane.xlu0 %7809
      %v7811 = vadd.f32 %v6958, %v7236
      %7812 = vadd.xlane.f32.xlu0 %v7811
      %v7813 = vpop.xlane.xlu0 %7812
      %v7814 = vrcp.pop 512.0
      %v7815 = vmul.f32 512.0, %v7814
      %v7816 = vsub.f32 1.0, %v7815
      %v7817 = vmul.f32 %v7814, %v7816
      %v7818 = vadd.f32 %v7814, %v7817
      %vm7819 = vweird.f32 %v7814
      %v7820 = vsel %vm7819, %v7814, %v7818
      %v7821 = vmul.f32 %v7804, %v7820
      %v7822 = vmul.f32 %v7807, %v7820
      %v7823 = vmul.f32 %v7810, %v7820
      %v7824 = vmul.f32 %v7813, %v7820
      %v7825 = vadd.f32 %v7510, %v7788
      %7826 = vadd.xlane.f32.xlu0 %v7825
      %v7827 = vpop.xlane.xlu0 %7826
      %v7828 = vadd.f32 %v7514, %v7792
      %7829 = vadd.xlane.f32.xlu0 %v7828
      %v7830 = vpop.xlane.xlu0 %7829
      %v7831 = vadd.f32 %v7518, %v7796
      %7832 = vadd.xlane.f32.xlu0 %v7831
      %v7833 = vpop.xlane.xlu0 %7832
      %v7834 = vadd.f32 %v7522, %v7800
      %7835 = vadd.xlane.f32.xlu0 %v7834
      %v7836 = vpop.xlane.xlu0 %7835
      %v7837 = vmul.f32 %v7827, %v7820
      %v7838 = vmul.f32 %v7830, %v7820
      %v7839 = vmul.f32 %v7833, %v7820
      %v7840 = vmul.f32 %v7836, %v7820
      %v7841 = vmul.f32 %v7821, %v7821
      %v7842 = vmul.f32 %v7822, %v7822
      %v7843 = vmul.f32 %v7823, %v7823
      %v7844 = vmul.f32 %v7824, %v7824
      %v7845 = vsub.f32 %v7837, %v7841
      %v7846 = vsub.f32 %v7838, %v7842
      %v7847 = vsub.f32 %v7839, %v7843
      %v7848 = vsub.f32 %v7840, %v7844
      %v7849 = vmax.f32 %v7845, 0.0
      %v7850 = vmax.f32 %v7846, 0.0
      %v7851 = vmax.f32 %v7847, 0.0
      %v7852 = vmax.f32 %v7848, 0.0
      %v7853 = vadd.f32 %v7849, 1e-05
      %v7854 = vadd.f32 %v7850, 1e-05
      %v7855 = vadd.f32 %v7851, 1e-05
      %v7856 = vadd.f32 %v7852, 1e-05
      %v7857 = vrsqrt.pop %v7853
      %v7858 = vmul.f32 %v7857, %v7853
      %v7859 = vmul.f32 %v7858, %v7857
      %v7860 = vmul.f32 0.5, %v7859
      %v7861 = vsub.f32 1.5, %v7860
      %v7862 = vmul.f32 %v7857, %v7861
      %vm7863 = vweird.f32 %v7853
      %vm7864 = vweird.f32 %v7857
      %vm7865 = vmor %vm7863, %vm7864
      %v7866 = vsel %vm7865, %v7857, %v7862
      %v7867 = vrsqrt.pop %v7854
      %v7868 = vmul.f32 %v7867, %v7854
      %v7869 = vmul.f32 %v7868, %v7867
      %v7870 = vmul.f32 0.5, %v7869
      %v7871 = vsub.f32 1.5, %v7870
      %v7872 = vmul.f32 %v7867, %v7871
      %vm7873 = vweird.f32 %v7854
      %vm7874 = vweird.f32 %v7867
      %vm7875 = vmor %vm7873, %vm7874
      %v7876 = vsel %vm7875, %v7867, %v7872
      %v7877 = vrsqrt.pop %v7855
      %v7878 = vmul.f32 %v7877, %v7855
      %v7879 = vmul.f32 %v7878, %v7877
      %v7880 = vmul.f32 0.5, %v7879
      %v7881 = vsub.f32 1.5, %v7880
      %v7882 = vmul.f32 %v7877, %v7881
      %vm7883 = vweird.f32 %v7855
      %vm7884 = vweird.f32 %v7877
      %vm7885 = vmor %vm7883, %vm7884
      %v7886 = vsel %vm7885, %v7877, %v7882
      %v7887 = vrsqrt.pop %v7856
      %v7888 = vmul.f32 %v7887, %v7856
      %v7889 = vmul.f32 %v7888, %v7887
      %v7890 = vmul.f32 0.5, %v7889
      %v7891 = vsub.f32 1.5, %v7890
      %v7892 = vmul.f32 %v7887, %v7891
      %vm7893 = vweird.f32 %v7856
      %vm7894 = vweird.f32 %v7887
      %vm7895 = vmor %vm7893, %vm7894
      %v7896 = vsel %vm7895, %v7887, %v7892
      %v7897 = vsub.f32 %v6604, %v7821
      %v7898 = vsub.f32 %v6661, %v7821
      %v7899 = vsub.f32 %v6606, %v7822
      %v7900 = vsub.f32 %v6663, %v7822
      %v7901 = vsub.f32 %v6609, %v7823
      %v7902 = vsub.f32 %v6666, %v7823
      %v7903 = vsub.f32 %v6611, %v7824
      %v7904 = vsub.f32 %v6668, %v7824
      %v7905 = vmul.f32 %v7866, %v6006
      %v7906 = vmul.f32 %v7876, %v6007
      %v7907 = vmul.f32 %v7886, %v6008
      %v7908 = vmul.f32 %v7896, %v6009
      %7910 = vset.pattern.permute.xlu0 0
      %7911 = vperm.xlu0 %7910, %v7905
      %v7912 = vpop.permute.xlu0 %7911
      %7915 = vset.pattern.permute.xlu0 0
      %7916 = vperm.xlu0 %7915, %v7906
      %v7917 = vpop.permute.xlu0 %7916
      %7920 = vset.pattern.permute.xlu0 0
      %7921 = vperm.xlu0 %7920, %v7907
      %v7922 = vpop.permute.xlu0 %7921
      %7925 = vset.pattern.permute.xlu0 0
      %7926 = vperm.xlu0 %7925, %v7908
      %v7927 = vpop.permute.xlu0 %7926
      %v7929 = vmul.f32 %v7897, %v7912
      %v7930 = vmul.f32 %v7898, %v7912
      %v7931 = vmul.f32 %v7899, %v7917
      %v7932 = vmul.f32 %v7900, %v7917
      %v7933 = vmul.f32 %v7901, %v7922
      %v7934 = vmul.f32 %v7902, %v7922
      %v7935 = vmul.f32 %v7903, %v7927
      %v7936 = vmul.f32 %v7904, %v7927
      %7938 = vset.pattern.permute.xlu0 1
      %7939 = vperm.xlu0 %7938, %v6006
      %v7940 = vpop.permute.xlu0 %7939
      %7943 = vset.pattern.permute.xlu0 1
      %7944 = vperm.xlu0 %7943, %v6007
      %v7945 = vpop.permute.xlu0 %7944
      %7948 = vset.pattern.permute.xlu0 1
      %7949 = vperm.xlu0 %7948, %v6008
      %v7950 = vpop.permute.xlu0 %7949
      %7953 = vset.pattern.permute.xlu0 1
      %7954 = vperm.xlu0 %7953, %v6009
      %v7955 = vpop.permute.xlu0 %7954
      %v7957 = vadd.f32 %v7929, %v7940
      %v7958 = vadd.f32 %v7930, %v7940
      %v7959 = vadd.f32 %v7931, %v7945
      %v7960 = vadd.f32 %v7932, %v7945
      %v7961 = vadd.f32 %v7933, %v7950
      %v7962 = vadd.f32 %v7934, %v7950
      %v7963 = vadd.f32 %v7935, %v7955
      %v7964 = vadd.f32 %v7936, %v7955
      %v7965 = vmax.f32 %v7957, 0.0
      %v7966 = vmax.f32 %v7958, 0.0
      %v7967 = vmax.f32 %v7959, 0.0
      %v7968 = vmax.f32 %v7960, 0.0
      %v7969 = vmax.f32 %v7961, 0.0
      %v7970 = vmax.f32 %v7962, 0.0
      %v7971 = vmax.f32 %v7963, 0.0
      %v7972 = vmax.f32 %v7964, 0.0
      %7973 = vrot.lane.b32.xlu0 %v7965, 17
      %v7974 = vpop.permute.xlu0 %7973
      %7975 = vrot.lane.b32.xlu0 %v7967, 17
      %v7976 = vpop.permute.xlu0 %7975
      %7977 = vrot.lane.b32.xlu0 %v7969, 17
      %v7978 = vpop.permute.xlu0 %7977
      %7979 = vrot.lane.b32.xlu0 %v7971, 17
      %v7980 = vpop.permute.xlu0 %7979
      %7981 = vrot.lane.b32.xlu0 %v7966, 17
      %v7982 = vpop.permute.xlu0 %7981
      %7983 = vrot.lane.b32.xlu0 %v7968, 17
      %v7984 = vpop.permute.xlu0 %7983
      %7985 = vrot.lane.b32.xlu0 %v7970, 17
      %v7986 = vpop.permute.xlu0 %7985
      %7987 = vrot.lane.b32.xlu0 %v7972, 17
      %v7988 = vpop.permute.xlu0 %7987
      %v7989 = vsel %vm6032, %v7974, %v7982
      %v7990 = vsel %vm6032, %v7976, %v7984
      %v7991 = vsel %vm6032, %v7978, %v7986
      %v7992 = vsel %vm6032, %v7980, %v7988
      %v7993 = vsel %vm6032, %v7982, %v7974
      %v7994 = vsel %vm6032, %v7984, %v7976
      %v7995 = vsel %vm6032, %v7986, %v7978
      %v7996 = vsel %vm6032, %v7988, %v7980
      %v7997 = vmul.f32 %v7993, %v6041
      %v7998 = vmul.f32 %v7989, %v6042
      %v7999 = vmul.f32 %v7994, %v6041
      %v8000 = vmul.f32 %v7990, %v6042
      %v8001 = vmul.f32 %v7995, %v6041
      %v8002 = vmul.f32 %v7991, %v6042
      %v8003 = vmul.f32 %v7996, %v6041
      %v8004 = vmul.f32 %v7992, %v6042
      %v8005 = vpack.c.bf16 %v7998, %v7997
      %v8006 = vpack.c.bf16 %v8000, %v7999
      %v8007 = vpack.c.bf16 %v8002, %v8001
      %v8008 = vpack.c.bf16 %v8004, %v8003
      %8009 = vrot.lane.b32.xlu0 %v7965, 16
      %v8010 = vpop.permute.xlu0 %8009
      %8011 = vrot.lane.b32.xlu0 %v7967, 16
      %v8012 = vpop.permute.xlu0 %8011
      %8013 = vrot.lane.b32.xlu0 %v7969, 16
      %v8014 = vpop.permute.xlu0 %8013
      %8015 = vrot.lane.b32.xlu0 %v7971, 16
      %v8016 = vpop.permute.xlu0 %8015
      %8017 = vrot.lane.b32.xlu0 %v7966, 16
      %v8018 = vpop.permute.xlu0 %8017
      %8019 = vrot.lane.b32.xlu0 %v7968, 16
      %v8020 = vpop.permute.xlu0 %8019
      %8021 = vrot.lane.b32.xlu0 %v7970, 16
      %v8022 = vpop.permute.xlu0 %8021
      %8023 = vrot.lane.b32.xlu0 %v7972, 16
      %v8024 = vpop.permute.xlu0 %8023
      %v8025 = vsel %vm6071, %v8010, %v8018
      %v8026 = vsel %vm6071, %v8012, %v8020
      %v8027 = vsel %vm6071, %v8014, %v8022
      %v8028 = vsel %vm6071, %v8016, %v8024
      %v8029 = vsel %vm6071, %v8018, %v8010
      %v8030 = vsel %vm6071, %v8020, %v8012
      %v8031 = vsel %vm6071, %v8022, %v8014
      %v8032 = vsel %vm6071, %v8024, %v8016
      %v8033 = vmul.f32 %v8029, %v6080
      %v8034 = vmul.f32 %v8025, %v6081
      %v8035 = vmul.f32 %v8030, %v6080
      %v8036 = vmul.f32 %v8026, %v6081
      %v8037 = vmul.f32 %v8031, %v6080
      %v8038 = vmul.f32 %v8027, %v6081
      %v8039 = vmul.f32 %v8032, %v6080
      %v8040 = vmul.f32 %v8028, %v6081
      %v8041 = vpack.c.bf16 %v8034, %v8033
      %v8042 = vpack.c.bf16 %v8036, %v8035
      %v8043 = vpack.c.bf16 %v8038, %v8037
      %v8044 = vpack.c.bf16 %v8040, %v8039
      %8045 = vrot.lane.b32.xlu0 %v7965, 15
      %v8046 = vpop.permute.xlu0 %8045
      %8047 = vrot.lane.b32.xlu0 %v7967, 15
      %v8048 = vpop.permute.xlu0 %8047
      %8049 = vrot.lane.b32.xlu0 %v7969, 15
      %v8050 = vpop.permute.xlu0 %8049
      %8051 = vrot.lane.b32.xlu0 %v7971, 15
      %v8052 = vpop.permute.xlu0 %8051
      %8053 = vrot.lane.b32.xlu0 %v7966, 15
      %v8054 = vpop.permute.xlu0 %8053
      %8055 = vrot.lane.b32.xlu0 %v7968, 15
      %v8056 = vpop.permute.xlu0 %8055
      %8057 = vrot.lane.b32.xlu0 %v7970, 15
      %v8058 = vpop.permute.xlu0 %8057
      %8059 = vrot.lane.b32.xlu0 %v7972, 15
      %v8060 = vpop.permute.xlu0 %8059
      %v8061 = vsel %vm6110, %v8046, %v8054
      %v8062 = vsel %vm6110, %v8048, %v8056
      %v8063 = vsel %vm6110, %v8050, %v8058
      %v8064 = vsel %vm6110, %v8052, %v8060
      %v8065 = vsel %vm6110, %v8054, %v8046
      %v8066 = vsel %vm6110, %v8056, %v8048
      %v8067 = vsel %vm6110, %v8058, %v8050
      %v8068 = vsel %vm6110, %v8060, %v8052
      %v8069 = vmul.f32 %v8065, %v6119
      %v8070 = vmul.f32 %v8061, %v6120
      %v8071 = vmul.f32 %v8066, %v6119
      %v8072 = vmul.f32 %v8062, %v6120
      %v8073 = vmul.f32 %v8067, %v6119
      %v8074 = vmul.f32 %v8063, %v6120
      %v8075 = vmul.f32 %v8068, %v6119
      %v8076 = vmul.f32 %v8064, %v6120
      %v8077 = vpack.c.bf16 %v8070, %v8069
      %v8078 = vpack.c.bf16 %v8072, %v8071
      %v8079 = vpack.c.bf16 %v8074, %v8073
      %v8080 = vpack.c.bf16 %v8076, %v8075
      %8081 = vrot.lane.b32.xlu0 %v7965, 1
      %v8082 = vpop.permute.xlu0 %8081
      %8083 = vrot.lane.b32.xlu0 %v7967, 1
      %v8084 = vpop.permute.xlu0 %8083
      %8085 = vrot.lane.b32.xlu0 %v7969, 1
      %v8086 = vpop.permute.xlu0 %8085
      %8087 = vrot.lane.b32.xlu0 %v7971, 1
      %v8088 = vpop.permute.xlu0 %8087
      %8089 = vrot.lane.b32.xlu0 %v7966, 1
      %v8090 = vpop.permute.xlu0 %8089
      %8091 = vrot.lane.b32.xlu0 %v7968, 1
      %v8092 = vpop.permute.xlu0 %8091
      %8093 = vrot.lane.b32.xlu0 %v7970, 1
      %v8094 = vpop.permute.xlu0 %8093
      %8095 = vrot.lane.b32.xlu0 %v7972, 1
      %v8096 = vpop.permute.xlu0 %8095
      %v8097 = vsel %vm6149, %v8082, %v8090
      %v8098 = vsel %vm6149, %v8084, %v8092
      %v8099 = vsel %vm6149, %v8086, %v8094
      %v8100 = vsel %vm6149, %v8088, %v8096
      %v8101 = vsel %vm6149, %v8090, %v8082
      %v8102 = vsel %vm6149, %v8092, %v8084
      %v8103 = vsel %vm6149, %v8094, %v8086
      %v8104 = vsel %vm6149, %v8096, %v8088
      %v8105 = vmul.f32 %v8101, %v6158
      %v8106 = vmul.f32 %v8097, %v6159
      %v8107 = vmul.f32 %v8102, %v6158
      %v8108 = vmul.f32 %v8098, %v6159
      %v8109 = vmul.f32 %v8103, %v6158
      %v8110 = vmul.f32 %v8099, %v6159
      %v8111 = vmul.f32 %v8104, %v6158
      %v8112 = vmul.f32 %v8100, %v6159
      %v8113 = vpack.c.bf16 %v8106, %v8105
      %v8114 = vpack.c.bf16 %v8108, %v8107
      %v8115 = vpack.c.bf16 %v8110, %v8109
      %v8116 = vpack.c.bf16 %v8112, %v8111
      %v8117 = vpack.c.bf16 %v7966, %v7965
      %v8118 = vpack.c.bf16 %v7968, %v7967
      %v8119 = vpack.c.bf16 %v7970, %v7969
      %v8120 = vpack.c.bf16 %v7972, %v7971
      %8121 = vrot.lane.b32.xlu0 %v7965, 127
      %v8122 = vpop.permute.xlu0 %8121
      %8123 = vrot.lane.b32.xlu0 %v7967, 127
      %v8124 = vpop.permute.xlu0 %8123
      %8125 = vrot.lane.b32.xlu0 %v7969, 127
      %v8126 = vpop.permute.xlu0 %8125
      %8127 = vrot.lane.b32.xlu0 %v7971, 127
      %v8128 = vpop.permute.xlu0 %8127
      %8129 = vrot.lane.b32.xlu0 %v7966, 127
      %v8130 = vpop.permute.xlu0 %8129
      %8131 = vrot.lane.b32.xlu0 %v7968, 127
      %v8132 = vpop.permute.xlu0 %8131
      %8133 = vrot.lane.b32.xlu0 %v7970, 127
      %v8134 = vpop.permute.xlu0 %8133
      %8135 = vrot.lane.b32.xlu0 %v7972, 127
      %v8136 = vpop.permute.xlu0 %8135
      %v8137 = vsel %vm6192, %v8122, %v8130
      %v8138 = vsel %vm6192, %v8124, %v8132
      %v8139 = vsel %vm6192, %v8126, %v8134
      %v8140 = vsel %vm6192, %v8128, %v8136
      %v8141 = vsel %vm6192, %v8130, %v8122
      %v8142 = vsel %vm6192, %v8132, %v8124
      %v8143 = vsel %vm6192, %v8134, %v8126
      %v8144 = vsel %vm6192, %v8136, %v8128
      %v8145 = vmul.f32 %v8137, %v6201
      %v8146 = vmul.f32 %v8141, %v6202
      %v8147 = vmul.f32 %v8138, %v6201
      %v8148 = vmul.f32 %v8142, %v6202
      %v8149 = vmul.f32 %v8139, %v6201
      %v8150 = vmul.f32 %v8143, %v6202
      %v8151 = vmul.f32 %v8140, %v6201
      %v8152 = vmul.f32 %v8144, %v6202
      %v8153 = vpack.c.bf16 %v8146, %v8145
      %v8154 = vpack.c.bf16 %v8148, %v8147
      %v8155 = vpack.c.bf16 %v8150, %v8149
      %v8156 = vpack.c.bf16 %v8152, %v8151
      %8157 = vrot.lane.b32.xlu0 %v7965, 113
      %v8158 = vpop.permute.xlu0 %8157
      %8159 = vrot.lane.b32.xlu0 %v7967, 113
      %v8160 = vpop.permute.xlu0 %8159
      %8161 = vrot.lane.b32.xlu0 %v7969, 113
      %v8162 = vpop.permute.xlu0 %8161
      %8163 = vrot.lane.b32.xlu0 %v7971, 113
      %v8164 = vpop.permute.xlu0 %8163
      %8165 = vrot.lane.b32.xlu0 %v7966, 113
      %v8166 = vpop.permute.xlu0 %8165
      %8167 = vrot.lane.b32.xlu0 %v7968, 113
      %v8168 = vpop.permute.xlu0 %8167
      %8169 = vrot.lane.b32.xlu0 %v7970, 113
      %v8170 = vpop.permute.xlu0 %8169
      %8171 = vrot.lane.b32.xlu0 %v7972, 113
      %v8172 = vpop.permute.xlu0 %8171
      %v8173 = vsel %vm6231, %v8158, %v8166
      %v8174 = vsel %vm6231, %v8160, %v8168
      %v8175 = vsel %vm6231, %v8162, %v8170
      %v8176 = vsel %vm6231, %v8164, %v8172
      %v8177 = vsel %vm6231, %v8166, %v8158
      %v8178 = vsel %vm6231, %v8168, %v8160
      %v8179 = vsel %vm6231, %v8170, %v8162
      %v8180 = vsel %vm6231, %v8172, %v8164
      %v8181 = vmul.f32 %v8173, %v6240
      %v8182 = vmul.f32 %v8177, %v6241
      %v8183 = vmul.f32 %v8174, %v6240
      %v8184 = vmul.f32 %v8178, %v6241
      %v8185 = vmul.f32 %v8175, %v6240
      %v8186 = vmul.f32 %v8179, %v6241
      %v8187 = vmul.f32 %v8176, %v6240
      %v8188 = vmul.f32 %v8180, %v6241
      %v8189 = vpack.c.bf16 %v8182, %v8181
      %v8190 = vpack.c.bf16 %v8184, %v8183
      %v8191 = vpack.c.bf16 %v8186, %v8185
      %v8192 = vpack.c.bf16 %v8188, %v8187
      %8193 = vrot.lane.b32.xlu0 %v7965, 112
      %v8194 = vpop.permute.xlu0 %8193
      %8195 = vrot.lane.b32.xlu0 %v7967, 112
      %v8196 = vpop.permute.xlu0 %8195
      %8197 = vrot.lane.b32.xlu0 %v7969, 112
      %v8198 = vpop.permute.xlu0 %8197
      %8199 = vrot.lane.b32.xlu0 %v7971, 112
      %v8200 = vpop.permute.xlu0 %8199
      %8201 = vrot.lane.b32.xlu0 %v7966, 112
      %v8202 = vpop.permute.xlu0 %8201
      %8203 = vrot.lane.b32.xlu0 %v7968, 112
      %v8204 = vpop.permute.xlu0 %8203
      %8205 = vrot.lane.b32.xlu0 %v7970, 112
      %v8206 = vpop.permute.xlu0 %8205
      %8207 = vrot.lane.b32.xlu0 %v7972, 112
      %v8208 = vpop.permute.xlu0 %8207
      %v8209 = vsel %vm6270, %v8194, %v8202
      %v8210 = vsel %vm6270, %v8196, %v8204
      %v8211 = vsel %vm6270, %v8198, %v8206
      %v8212 = vsel %vm6270, %v8200, %v8208
      %v8213 = vsel %vm6270, %v8202, %v8194
      %v8214 = vsel %vm6270, %v8204, %v8196
      %v8215 = vsel %vm6270, %v8206, %v8198
      %v8216 = vsel %vm6270, %v8208, %v8200
      %v8217 = vmul.f32 %v8209, %v6279
      %v8218 = vmul.f32 %v8213, %v6280
      %v8219 = vmul.f32 %v8210, %v6279
      %v8220 = vmul.f32 %v8214, %v6280
      %v8221 = vmul.f32 %v8211, %v6279
      %v8222 = vmul.f32 %v8215, %v6280
      %v8223 = vmul.f32 %v8212, %v6279
      %v8224 = vmul.f32 %v8216, %v6280
      %v8225 = vpack.c.bf16 %v8218, %v8217
      %v8226 = vpack.c.bf16 %v8220, %v8219
      %v8227 = vpack.c.bf16 %v8222, %v8221
      %v8228 = vpack.c.bf16 %v8224, %v8223
      %8229 = vrot.lane.b32.xlu0 %v7965, 111
      %v8230 = vpop.permute.xlu0 %8229
      %8231 = vrot.lane.b32.xlu0 %v7967, 111
      %v8232 = vpop.permute.xlu0 %8231
      %8233 = vrot.lane.b32.xlu0 %v7969, 111
      %v8234 = vpop.permute.xlu0 %8233
      %8235 = vrot.lane.b32.xlu0 %v7971, 111
      %v8236 = vpop.permute.xlu0 %8235
      %8237 = vrot.lane.b32.xlu0 %v7966, 111
      %v8238 = vpop.permute.xlu0 %8237
      %8239 = vrot.lane.b32.xlu0 %v7968, 111
      %v8240 = vpop.permute.xlu0 %8239
      %8241 = vrot.lane.b32.xlu0 %v7970, 111
      %v8242 = vpop.permute.xlu0 %8241
      %8243 = vrot.lane.b32.xlu0 %v7972, 111
      %v8244 = vpop.permute.xlu0 %8243
      %v8245 = vsel %vm6309, %v8230, %v8238
      %v8246 = vsel %vm6309, %v8232, %v8240
      %v8247 = vsel %vm6309, %v8234, %v8242
      %v8248 = vsel %vm6309, %v8236, %v8244
      %v8249 = vsel %vm6309, %v8238, %v8230
      %v8250 = vsel %vm6309, %v8240, %v8232
      %v8251 = vsel %vm6309, %v8242, %v8234
      %v8252 = vsel %vm6309, %v8244, %v8236
      %v8253 = vmul.f32 %v8245, %v6318
      %v8254 = vmul.f32 %v8249, %v6319
      %v8255 = vmul.f32 %v8246, %v6318
      %v8256 = vmul.f32 %v8250, %v6319
      %v8257 = vmul.f32 %v8247, %v6318
      %v8258 = vmul.f32 %v8251, %v6319
      %v8259 = vmul.f32 %v8248, %v6318
      %v8260 = vmul.f32 %v8252, %v6319
      %v8261 = vpack.c.bf16 %v8254, %v8253
      %v8262 = vpack.c.bf16 %v8256, %v8255
      %v8263 = vpack.c.bf16 %v8258, %v8257
      %v8264 = vpack.c.bf16 %v8260, %v8259
      %v8269 = vunpack.c.l.b16 %v8005
      %v8270 = vunpack.c.h.b16 %v8005
      %v8271 = vunpack.c.l.b16 %v8006
      %v8272 = vunpack.c.h.b16 %v8006
      %v8273 = vunpack.c.l.b16 %v8007
      %v8274 = vunpack.c.h.b16 %v8007
      %v8275 = vunpack.c.l.b16 %v8008
      %v8276 = vunpack.c.h.b16 %v8008
      %v8277 = vpack.c.b16 %v8271, %v8269
      %v8278 = vpack.c.b16 %v8272, %v8270
      %v8279 = vpack.c.b16 %v8275, %v8273
      %v8280 = vpack.c.b16 %v8276, %v8274
      %v8289 = vunpack.c.l.b16 %v8041
      %v8290 = vunpack.c.h.b16 %v8041
      %v8291 = vunpack.c.l.b16 %v8042
      %v8292 = vunpack.c.h.b16 %v8042
      %v8293 = vunpack.c.l.b16 %v8043
      %v8294 = vunpack.c.h.b16 %v8043
      %v8295 = vunpack.c.l.b16 %v8044
      %v8296 = vunpack.c.h.b16 %v8044
      %v8297 = vpack.c.b16 %v8291, %v8289
      %v8298 = vpack.c.b16 %v8292, %v8290
      %v8299 = vpack.c.b16 %v8295, %v8293
      %v8300 = vpack.c.b16 %v8296, %v8294
      %v8309 = vunpack.c.l.b16 %v8077
      %v8310 = vunpack.c.h.b16 %v8077
      %v8311 = vunpack.c.l.b16 %v8078
      %v8312 = vunpack.c.h.b16 %v8078
      %v8313 = vunpack.c.l.b16 %v8079
      %v8314 = vunpack.c.h.b16 %v8079
      %v8315 = vunpack.c.l.b16 %v8080
      %v8316 = vunpack.c.h.b16 %v8080
      %v8317 = vpack.c.b16 %v8311, %v8309
      %v8318 = vpack.c.b16 %v8312, %v8310
      %v8319 = vpack.c.b16 %v8315, %v8313
      %v8320 = vpack.c.b16 %v8316, %v8314
      %v8329 = vunpack.c.l.b16 %v8113
      %v8330 = vunpack.c.h.b16 %v8113
      %v8331 = vunpack.c.l.b16 %v8114
      %v8332 = vunpack.c.h.b16 %v8114
      %v8333 = vunpack.c.l.b16 %v8115
      %v8334 = vunpack.c.h.b16 %v8115
      %v8335 = vunpack.c.l.b16 %v8116
      %v8336 = vunpack.c.h.b16 %v8116
      %v8337 = vpack.c.b16 %v8331, %v8329
      %v8338 = vpack.c.b16 %v8332, %v8330
      %v8339 = vpack.c.b16 %v8335, %v8333
      %v8340 = vpack.c.b16 %v8336, %v8334
      %v8349 = vunpack.c.l.b16 %v8117
      %v8350 = vunpack.c.h.b16 %v8117
      %v8351 = vunpack.c.l.b16 %v8118
      %v8352 = vunpack.c.h.b16 %v8118
      %v8353 = vunpack.c.l.b16 %v8119
      %v8354 = vunpack.c.h.b16 %v8119
      %v8355 = vunpack.c.l.b16 %v8120
      %v8356 = vunpack.c.h.b16 %v8120
      %v8357 = vpack.c.b16 %v8351, %v8349
      %v8358 = vpack.c.b16 %v8352, %v8350
      %v8359 = vpack.c.b16 %v8355, %v8353
      %v8360 = vpack.c.b16 %v8356, %v8354
      %v8369 = vunpack.c.l.b16 %v8153
      %v8370 = vunpack.c.h.b16 %v8153
      %v8371 = vunpack.c.l.b16 %v8154
      %v8372 = vunpack.c.h.b16 %v8154
      %v8373 = vunpack.c.l.b16 %v8155
      %v8374 = vunpack.c.h.b16 %v8155
      %v8375 = vunpack.c.l.b16 %v8156
      %v8376 = vunpack.c.h.b16 %v8156
      %v8377 = vpack.c.b16 %v8371, %v8369
      %v8378 = vpack.c.b16 %v8372, %v8370
      %v8379 = vpack.c.b16 %v8375, %v8373
      %v8380 = vpack.c.b16 %v8376, %v8374
      %v8389 = vunpack.c.l.b16 %v8189
      %v8390 = vunpack.c.h.b16 %v8189
      %v8391 = vunpack.c.l.b16 %v8190
      %v8392 = vunpack.c.h.b16 %v8190
      %v8393 = vunpack.c.l.b16 %v8191
      %v8394 = vunpack.c.h.b16 %v8191
      %v8395 = vunpack.c.l.b16 %v8192
      %v8396 = vunpack.c.h.b16 %v8192
      %v8397 = vpack.c.b16 %v8391, %v8389
      %v8398 = vpack.c.b16 %v8392, %v8390
      %v8399 = vpack.c.b16 %v8395, %v8393
      %v8400 = vpack.c.b16 %v8396, %v8394
      %v8409 = vunpack.c.l.b16 %v8225
      %v8410 = vunpack.c.h.b16 %v8225
      %v8411 = vunpack.c.l.b16 %v8226
      %v8412 = vunpack.c.h.b16 %v8226
      %v8413 = vunpack.c.l.b16 %v8227
      %v8414 = vunpack.c.h.b16 %v8227
      %v8415 = vunpack.c.l.b16 %v8228
      %v8416 = vunpack.c.h.b16 %v8228
      %v8417 = vpack.c.b16 %v8411, %v8409
      %v8418 = vpack.c.b16 %v8412, %v8410
      %v8419 = vpack.c.b16 %v8415, %v8413
      %v8420 = vpack.c.b16 %v8416, %v8414
      %v8429 = vunpack.c.l.b16 %v8261
      %v8430 = vunpack.c.h.b16 %v8261
      %v8431 = vunpack.c.l.b16 %v8262
      %v8432 = vunpack.c.h.b16 %v8262
      %v8433 = vunpack.c.l.b16 %v8263
      %v8434 = vunpack.c.h.b16 %v8263
      %v8435 = vunpack.c.l.b16 %v8264
      %v8436 = vunpack.c.h.b16 %v8264
      %v8437 = vpack.c.b16 %v8431, %v8429
      %v8438 = vpack.c.b16 %v8432, %v8430
      %v8439 = vpack.c.b16 %v8435, %v8433
      %v8440 = vpack.c.b16 %v8436, %v8434
      %v8445 = vld [vmem:[%s10] sm:$0xff]
      %v8446 = vld [vmem:[%s10 + $0x8] sm:$0xf]
      %v8447 = vld [vmem:[%s10 + $0xc] sm:$0xff]
      %v8448 = vld [vmem:[%s10 + $0x14] sm:$0xf]
      %v8449 = vld [vmem:[%s10 + $0x18] sm:$0xff]
      %v8450 = vld [vmem:[%s10 + $0x20] sm:$0xf]
      %v8451 = vld [vmem:[%s10 + $0x24] sm:$0xff]
      %v8452 = vld [vmem:[%s10 + $0x2c] sm:$0xf]
      %v8461 = vunpack.c.l.b16 %v8445
      %v8462 = vunpack.c.h.b16 %v8445
      %v8463 = vunpack.c.l.b16 %v8446
      %v8464 = vunpack.c.l.b16 %v8447
      %v8465 = vunpack.c.h.b16 %v8447
      %v8466 = vunpack.c.l.b16 %v8448
      %v8467 = vunpack.c.l.b16 %v8449
      %v8468 = vunpack.c.h.b16 %v8449
      %v8469 = vunpack.c.l.b16 %v8450
      %v8470 = vunpack.c.l.b16 %v8451
      %v8471 = vunpack.c.h.b16 %v8451
      %v8472 = vunpack.c.l.b16 %v8452
      %v8473 = vpack.c.b16 %v8464, %v8461
      %v8474 = vpack.c.b16 %v8465, %v8462
      %v8475 = vpack.c.b16 %v8466, %v8463
      %v8476 = vpack.c.b16 %v8470, %v8467
      %v8477 = vpack.c.b16 %v8471, %v8468
      %v8478 = vpack.c.b16 %v8472, %v8469
      %v8484 = vsel %vm3426, %v8475, 0
      %v8487 = vsel %vm3426, %v8478, 0
      %8489 = vmatpush.bf16.msra.mxu0 %v8339
      %8490 = vmatpush.bf16.msra.mxu0 %v8337
      %8491 = vmatpush.bf16.msra.mxu0 %v8319
      %8492 = vmatpush.bf16.msra.mxu0 %v8317
      %8493 = vmatpush.bf16.msra.mxu0 %v8299
      %8494 = vmatpush.bf16.msra.mxu0 %v8297
      %8495 = vmatpush.bf16.msra.mxu0 %v8279
      %8496 = vmatpush.bf16.msra.mxu0 %v8277
      %8497 = vmatmul.bf16.gmra.mxu0 %v8473
      %v8498 = vpop.f32.mrf.mxu0
      %v8499 = vadd.f32 0.0, %v8498
      %v8500 = vpop.f32.mrf.mxu0
      %v8501 = vadd.f32 0.0, %v8500
      %8502 = vmatmul.bf16.gmra.mxu0 %v8476
      %v8503 = vpop.f32.mrf.mxu0
      %v8504 = vadd.f32 0.0, %v8503
      %v8505 = vpop.f32.mrf.mxu0
      %v8506 = vadd.f32 0.0, %v8505
      %8507 = vdwg.mxu0
      %8508 = vmatpush.bf16.msra.mxu0 %v8419
      %8509 = vmatpush.bf16.msra.mxu0 %v8417
      %8510 = vmatpush.bf16.msra.mxu0 %v8399
      %8511 = vmatpush.bf16.msra.mxu0 %v8397
      %8512 = vmatpush.bf16.msra.mxu0 %v8379
      %8513 = vmatpush.bf16.msra.mxu0 %v8377
      %8514 = vmatpush.bf16.msra.mxu0 %v8359
      %8515 = vmatpush.bf16.msra.mxu0 %v8357
      %8516 = vmatmul.bf16.gmra.mxu0 %v8474
      %v8517 = vpop.f32.mrf.mxu0
      %v8518 = vadd.f32 %v8499, %v8517
      %v8519 = vpop.f32.mrf.mxu0
      %v8520 = vadd.f32 %v8501, %v8519
      %8521 = vmatmul.bf16.gmra.mxu0 %v8477
      %v8522 = vpop.f32.mrf.mxu0
      %v8523 = vadd.f32 %v8504, %v8522
      %v8524 = vpop.f32.mrf.mxu0
      %v8525 = vadd.f32 %v8506, %v8524
      %8526 = vdwg.mxu0
      %8527 = vmatpush.bf16.msra.mxu0 0
      %8528 = vmatpush.bf16.msra.mxu0 0
      %8529 = vmatpush.bf16.msra.mxu0 0
      %8530 = vmatpush.bf16.msra.mxu0 0
      %8531 = vmatpush.bf16.msra.mxu0 0
      %8532 = vmatpush.bf16.msra.mxu0 0
      %8533 = vmatpush.bf16.msra.mxu0 %v8439
      %8534 = vmatpush.bf16.msra.mxu0 %v8437
      %8535 = vmatmul.bf16.gmra.mxu0 %v8484
      %v8536 = vpop.f32.mrf.mxu0
      %v8537 = vadd.f32 %v8518, %v8536
      %v8538 = vpop.f32.mrf.mxu0
      %v8539 = vadd.f32 %v8520, %v8538
      %8540 = vmatmul.bf16.gmra.mxu0 %v8487
      %v8541 = vpop.f32.mrf.mxu0
      %v8542 = vadd.f32 %v8523, %v8541
      %v8543 = vpop.f32.mrf.mxu0
      %v8544 = vadd.f32 %v8525, %v8543
      %8545 = vdwg.mxu0
      %8546 = vmatpush.bf16.msra.mxu0 %v8340
      %8547 = vmatpush.bf16.msra.mxu0 %v8338
      %8548 = vmatpush.bf16.msra.mxu0 %v8320
      %8549 = vmatpush.bf16.msra.mxu0 %v8318
      %8550 = vmatpush.bf16.msra.mxu0 %v8300
      %8551 = vmatpush.bf16.msra.mxu0 %v8298
      %8552 = vmatpush.bf16.msra.mxu0 %v8280
      %8553 = vmatpush.bf16.msra.mxu0 %v8278
      %8554 = vmatmul.bf16.gmra.mxu0 %v8473
      %v8555 = vpop.f32.mrf.mxu0
      %v8556 = vadd.f32 0.0, %v8555
      %v8557 = vpop.f32.mrf.mxu0
      %v8558 = vadd.f32 0.0, %v8557
      %8559 = vmatmul.bf16.gmra.mxu0 %v8476
      %v8560 = vpop.f32.mrf.mxu0
      %v8561 = vadd.f32 0.0, %v8560
      %v8562 = vpop.f32.mrf.mxu0
      %v8563 = vadd.f32 0.0, %v8562
      %8564 = vdwg.mxu0
      %8565 = vmatpush.bf16.msra.mxu0 %v8420
      %8566 = vmatpush.bf16.msra.mxu0 %v8418
      %8567 = vmatpush.bf16.msra.mxu0 %v8400
      %8568 = vmatpush.bf16.msra.mxu0 %v8398
      %8569 = vmatpush.bf16.msra.mxu0 %v8380
      %8570 = vmatpush.bf16.msra.mxu0 %v8378
      %8571 = vmatpush.bf16.msra.mxu0 %v8360
      %8572 = vmatpush.bf16.msra.mxu0 %v8358
      %8573 = vmatmul.bf16.gmra.mxu0 %v8474
      %v8574 = vpop.f32.mrf.mxu0
      %v8575 = vadd.f32 %v8556, %v8574
      %v8576 = vpop.f32.mrf.mxu0
      %v8577 = vadd.f32 %v8558, %v8576
      %8578 = vmatmul.bf16.gmra.mxu0 %v8477
      %v8579 = vpop.f32.mrf.mxu0
      %v8580 = vadd.f32 %v8561, %v8579
      %v8581 = vpop.f32.mrf.mxu0
      %v8582 = vadd.f32 %v8563, %v8581
      %8583 = vdwg.mxu0
      %8584 = vmatpush.bf16.msra.mxu0 0
      %8585 = vmatpush.bf16.msra.mxu0 0
      %8586 = vmatpush.bf16.msra.mxu0 0
      %8587 = vmatpush.bf16.msra.mxu0 0
      %8588 = vmatpush.bf16.msra.mxu0 0
      %8589 = vmatpush.bf16.msra.mxu0 0
      %8590 = vmatpush.bf16.msra.mxu0 %v8440
      %8591 = vmatpush.bf16.msra.mxu0 %v8438
      %8592 = vmatmul.bf16.gmra.mxu0 %v8484
      %v8593 = vpop.f32.mrf.mxu0
      %v8594 = vadd.f32 %v8575, %v8593
      %v8595 = vpop.f32.mrf.mxu0
      %v8596 = vadd.f32 %v8577, %v8595
      %8597 = vmatmul.bf16.gmra.mxu0 %v8487
      %v8598 = vpop.f32.mrf.mxu0
      %v8599 = vadd.f32 %v8580, %v8598
      %v8600 = vpop.f32.mrf.mxu0
      %v8601 = vadd.f32 %v8582, %v8600
      %8602 = vdwg.mxu0
      %8603 = vmatpush.msra.mxu0 0.0
      %8604 = vmatpush.msra.mxu0 0.0
      %8605 = vmatpush.msra.mxu0 0.0
      %8606 = vmatpush.msra.mxu0 0.0
      %8607 = vmatpush.msra.mxu0 0.0
      %8608 = vmatpush.msra.mxu0 0.0
      %8609 = vmatpush.msra.mxu0 0.0
      %8610 = vmatpush.msra.mxu0 0.0
      %8611 = vmatpush.msra.mxu0 0.0
      %8612 = vmatpush.msra.mxu0 0.0
      %8613 = vmatpush.msra.mxu0 0.0
      %8614 = vmatpush.msra.mxu0 0.0
      %v8615 = vand.u32 %v8544, 4294901760
      %8616 = vmatpush.msra.mxu0 %v8615
      %v8617 = vand.u32 %v8542, 4294901760
      %8618 = vmatpush.msra.mxu0 %v8617
      %v8619 = vand.u32 %v8539, 4294901760
      %8620 = vmatpush.msra.mxu0 %v8619
      %v8621 = vand.u32 %v8537, 4294901760
      %8622 = vmatpush.msra.mxu0 %v8621
      %v8623 = vand.u32 %v6671, 4294901760
      %v8624 = vsub.f32 %v6671, %v8623
      %v8625 = vand.u32 %v8624, 4294901760
      %v8626 = vsub.f32 %v8624, %v8625
      %v8627 = vand.u32 %v8626, 4294901760
      %8628 = vmatmul.f32.gmra.mxu0 %v8627
      %v8629 = vpop.f32.mrf.mxu0
      %v8630 = vadd.f32 0.0, %v8629
      %v8631 = vand.u32 %v6674, 4294901760
      %v8632 = vsub.f32 %v6674, %v8631
      %v8633 = vand.u32 %v8632, 4294901760
      %v8634 = vsub.f32 %v8632, %v8633
      %v8635 = vand.u32 %v8634, 4294901760
      %8636 = vmatmul.f32.gmra.mxu0 %v8635
      %v8637 = vpop.f32.mrf.mxu0
      %v8638 = vadd.f32 0.0, %v8637
      %v8639 = vand.u32 %v6677, 4294901760
      %v8640 = vsub.f32 %v6677, %v8639
      %v8641 = vand.u32 %v8640, 4294901760
      %v8642 = vsub.f32 %v8640, %v8641
      %v8643 = vand.u32 %v8642, 4294901760
      %8644 = vmatmul.f32.gmra.mxu0 %v8643
      %v8645 = vpop.f32.mrf.mxu0
      %v8646 = vadd.f32 0.0, %v8645
      %v8647 = vand.u32 %v6680, 4294901760
      %v8648 = vsub.f32 %v6680, %v8647
      %v8649 = vand.u32 %v8648, 4294901760
      %v8650 = vsub.f32 %v8648, %v8649
      %v8651 = vand.u32 %v8650, 4294901760
      %8652 = vmatmul.f32.gmra.mxu0 %v8651
      %v8653 = vpop.f32.mrf.mxu0
      %v8654 = vadd.f32 0.0, %v8653
      %8655 = vdwg.mxu0
      %8656 = vmatpush.msra.mxu0 0.0
      %8657 = vmatpush.msra.mxu0 0.0
      %8658 = vmatpush.msra.mxu0 0.0
      %8659 = vmatpush.msra.mxu0 0.0
      %8660 = vmatpush.msra.mxu0 0.0
      %8661 = vmatpush.msra.mxu0 0.0
      %8662 = vmatpush.msra.mxu0 0.0
      %8663 = vmatpush.msra.mxu0 0.0
      %8664 = vmatpush.msra.mxu0 0.0
      %8665 = vmatpush.msra.mxu0 0.0
      %8666 = vmatpush.msra.mxu0 0.0
      %8667 = vmatpush.msra.mxu0 0.0
      %v8668 = vand.u32 %v8544, 4294901760
      %v8669 = vsub.f32 %v8544, %v8668
      %v8670 = vand.u32 %v8669, 4294901760
      %v8671 = vsub.f32 %v8669, %v8670
      %v8672 = vand.u32 %v8671, 4294901760
      %8673 = vmatpush.msra.mxu0 %v8672
      %v8674 = vand.u32 %v8542, 4294901760
      %v8675 = vsub.f32 %v8542, %v8674
      %v8676 = vand.u32 %v8675, 4294901760
      %v8677 = vsub.f32 %v8675, %v8676
      %v8678 = vand.u32 %v8677, 4294901760
      %8679 = vmatpush.msra.mxu0 %v8678
      %v8680 = vand.u32 %v8539, 4294901760
      %v8681 = vsub.f32 %v8539, %v8680
      %v8682 = vand.u32 %v8681, 4294901760
      %v8683 = vsub.f32 %v8681, %v8682
      %v8684 = vand.u32 %v8683, 4294901760
      %8685 = vmatpush.msra.mxu0 %v8684
      %v8686 = vand.u32 %v8537, 4294901760
      %v8687 = vsub.f32 %v8537, %v8686
      %v8688 = vand.u32 %v8687, 4294901760
      %v8689 = vsub.f32 %v8687, %v8688
      %v8690 = vand.u32 %v8689, 4294901760
      %8691 = vmatpush.msra.mxu0 %v8690
      %v8692 = vand.u32 %v6671, 4294901760
      %8693 = vmatmul.f32.gmra.mxu0 %v8692
      %v8694 = vpop.f32.mrf.mxu0
      %v8695 = vadd.f32 %v8630, %v8694
      %v8696 = vand.u32 %v6674, 4294901760
      %8697 = vmatmul.f32.gmra.mxu0 %v8696
      %v8698 = vpop.f32.mrf.mxu0
      %v8699 = vadd.f32 %v8638, %v8698
      %v8700 = vand.u32 %v6677, 4294901760
      %8701 = vmatmul.f32.gmra.mxu0 %v8700
      %v8702 = vpop.f32.mrf.mxu0
      %v8703 = vadd.f32 %v8646, %v8702
      %v8704 = vand.u32 %v6680, 4294901760
      %8705 = vmatmul.f32.gmra.mxu0 %v8704
      %v8706 = vpop.f32.mrf.mxu0
      %v8707 = vadd.f32 %v8654, %v8706
      %8708 = vdwg.mxu0
      %8709 = vmatpush.msra.mxu0 0.0
      %8710 = vmatpush.msra.mxu0 0.0
      %8711 = vmatpush.msra.mxu0 0.0
      %8712 = vmatpush.msra.mxu0 0.0
      %8713 = vmatpush.msra.mxu0 0.0
      %8714 = vmatpush.msra.mxu0 0.0
      %8715 = vmatpush.msra.mxu0 0.0
      %8716 = vmatpush.msra.mxu0 0.0
      %8717 = vmatpush.msra.mxu0 0.0
      %8718 = vmatpush.msra.mxu0 0.0
      %8719 = vmatpush.msra.mxu0 0.0
      %8720 = vmatpush.msra.mxu0 0.0
      %v8721 = vand.u32 %v8544, 4294901760
      %v8722 = vsub.f32 %v8544, %v8721
      %8723 = vmatpush.msra.mxu0 %v8722
      %v8724 = vand.u32 %v8542, 4294901760
      %v8725 = vsub.f32 %v8542, %v8724
      %8726 = vmatpush.msra.mxu0 %v8725
      %v8727 = vand.u32 %v8539, 4294901760
      %v8728 = vsub.f32 %v8539, %v8727
      %8729 = vmatpush.msra.mxu0 %v8728
      %v8730 = vand.u32 %v8537, 4294901760
      %v8731 = vsub.f32 %v8537, %v8730
      %8732 = vmatpush.msra.mxu0 %v8731
      %v8733 = vand.u32 %v6671, 4294901760
      %v8734 = vsub.f32 %v6671, %v8733
      %8735 = vmatmul.f32.gmra.mxu0 %v8734
      %v8736 = vpop.f32.mrf.mxu0
      %v8737 = vadd.f32 %v8695, %v8736
      %v8738 = vand.u32 %v6674, 4294901760
      %v8739 = vsub.f32 %v6674, %v8738
      %8740 = vmatmul.f32.gmra.mxu0 %v8739
      %v8741 = vpop.f32.mrf.mxu0
      %v8742 = vadd.f32 %v8699, %v8741
      %v8743 = vand.u32 %v6677, 4294901760
      %v8744 = vsub.f32 %v6677, %v8743
      %8745 = vmatmul.f32.gmra.mxu0 %v8744
      %v8746 = vpop.f32.mrf.mxu0
      %v8747 = vadd.f32 %v8703, %v8746
      %v8748 = vand.u32 %v6680, 4294901760
      %v8749 = vsub.f32 %v6680, %v8748
      %8750 = vmatmul.f32.gmra.mxu0 %v8749
      %v8751 = vpop.f32.mrf.mxu0
      %v8752 = vadd.f32 %v8707, %v8751
      %8753 = vdwg.mxu0
      %8754 = vmatpush.msra.mxu0 0.0
      %8755 = vmatpush.msra.mxu0 0.0
      %8756 = vmatpush.msra.mxu0 0.0
      %8757 = vmatpush.msra.mxu0 0.0
      %8758 = vmatpush.msra.mxu0 0.0
      %8759 = vmatpush.msra.mxu0 0.0
      %8760 = vmatpush.msra.mxu0 0.0
      %8761 = vmatpush.msra.mxu0 0.0
      %8762 = vmatpush.msra.mxu0 0.0
      %8763 = vmatpush.msra.mxu0 0.0
      %8764 = vmatpush.msra.mxu0 0.0
      %8765 = vmatpush.msra.mxu0 0.0
      %v8766 = vand.u32 %v8544, 4294901760
      %8767 = vmatpush.msra.mxu0 %v8766
      %v8768 = vand.u32 %v8542, 4294901760
      %8769 = vmatpush.msra.mxu0 %v8768
      %v8770 = vand.u32 %v8539, 4294901760
      %8771 = vmatpush.msra.mxu0 %v8770
      %v8772 = vand.u32 %v8537, 4294901760
      %8773 = vmatpush.msra.mxu0 %v8772
      %v8774 = vand.u32 %v6671, 4294901760
      %v8775 = vsub.f32 %v6671, %v8774
      %v8776 = vand.u32 %v8775, 4294901760
      %8777 = vmatmul.f32.gmra.mxu0 %v8776
      %v8778 = vpop.f32.mrf.mxu0
      %v8779 = vadd.f32 %v8737, %v8778
      %v8780 = vand.u32 %v6674, 4294901760
      %v8781 = vsub.f32 %v6674, %v8780
      %v8782 = vand.u32 %v8781, 4294901760
      %8783 = vmatmul.f32.gmra.mxu0 %v8782
      %v8784 = vpop.f32.mrf.mxu0
      %v8785 = vadd.f32 %v8742, %v8784
      %v8786 = vand.u32 %v6677, 4294901760
      %v8787 = vsub.f32 %v6677, %v8786
      %v8788 = vand.u32 %v8787, 4294901760
      %8789 = vmatmul.f32.gmra.mxu0 %v8788
      %v8790 = vpop.f32.mrf.mxu0
      %v8791 = vadd.f32 %v8747, %v8790
      %v8792 = vand.u32 %v6680, 4294901760
      %v8793 = vsub.f32 %v6680, %v8792
      %v8794 = vand.u32 %v8793, 4294901760
      %8795 = vmatmul.f32.gmra.mxu0 %v8794
      %v8796 = vpop.f32.mrf.mxu0
      %v8797 = vadd.f32 %v8752, %v8796
      %8798 = vdwg.mxu0
      %8799 = vmatpush.msra.mxu0 0.0
      %8800 = vmatpush.msra.mxu0 0.0
      %8801 = vmatpush.msra.mxu0 0.0
      %8802 = vmatpush.msra.mxu0 0.0
      %8803 = vmatpush.msra.mxu0 0.0
      %8804 = vmatpush.msra.mxu0 0.0
      %8805 = vmatpush.msra.mxu0 0.0
      %8806 = vmatpush.msra.mxu0 0.0
      %8807 = vmatpush.msra.mxu0 0.0
      %8808 = vmatpush.msra.mxu0 0.0
      %8809 = vmatpush.msra.mxu0 0.0
      %8810 = vmatpush.msra.mxu0 0.0
      %v8811 = vand.u32 %v8544, 4294901760
      %v8812 = vsub.f32 %v8544, %v8811
      %v8813 = vand.u32 %v8812, 4294901760
      %8814 = vmatpush.msra.mxu0 %v8813
      %v8815 = vand.u32 %v8542, 4294901760
      %v8816 = vsub.f32 %v8542, %v8815
      %v8817 = vand.u32 %v8816, 4294901760
      %8818 = vmatpush.msra.mxu0 %v8817
      %v8819 = vand.u32 %v8539, 4294901760
      %v8820 = vsub.f32 %v8539, %v8819
      %v8821 = vand.u32 %v8820, 4294901760
      %8822 = vmatpush.msra.mxu0 %v8821
      %v8823 = vand.u32 %v8537, 4294901760
      %v8824 = vsub.f32 %v8537, %v8823
      %v8825 = vand.u32 %v8824, 4294901760
      %8826 = vmatpush.msra.mxu0 %v8825
      %v8827 = vand.u32 %v6671, 4294901760
      %8828 = vmatmul.f32.gmra.mxu0 %v8827
      %v8829 = vpop.f32.mrf.mxu0
      %v8830 = vadd.f32 %v8779, %v8829
      %v8831 = vand.u32 %v6674, 4294901760
      %8832 = vmatmul.f32.gmra.mxu0 %v8831
      %v8833 = vpop.f32.mrf.mxu0
      %v8834 = vadd.f32 %v8785, %v8833
      %v8835 = vand.u32 %v6677, 4294901760
      %8836 = vmatmul.f32.gmra.mxu0 %v8835
      %v8837 = vpop.f32.mrf.mxu0
      %v8838 = vadd.f32 %v8791, %v8837
      %v8839 = vand.u32 %v6680, 4294901760
      %8840 = vmatmul.f32.gmra.mxu0 %v8839
      %v8841 = vpop.f32.mrf.mxu0
      %v8842 = vadd.f32 %v8797, %v8841
      %8843 = vdwg.mxu0
      %8844 = vmatpush.msra.mxu0 0.0
      %8845 = vmatpush.msra.mxu0 0.0
      %8846 = vmatpush.msra.mxu0 0.0
      %8847 = vmatpush.msra.mxu0 0.0
      %8848 = vmatpush.msra.mxu0 0.0
      %8849 = vmatpush.msra.mxu0 0.0
      %8850 = vmatpush.msra.mxu0 0.0
      %8851 = vmatpush.msra.mxu0 0.0
      %8852 = vmatpush.msra.mxu0 0.0
      %8853 = vmatpush.msra.mxu0 0.0
      %8854 = vmatpush.msra.mxu0 0.0
      %8855 = vmatpush.msra.mxu0 0.0
      %v8856 = vand.u32 %v8544, 4294901760
      %8857 = vmatpush.msra.mxu0 %v8856
      %v8858 = vand.u32 %v8542, 4294901760
      %8859 = vmatpush.msra.mxu0 %v8858
      %v8860 = vand.u32 %v8539, 4294901760
      %8861 = vmatpush.msra.mxu0 %v8860
      %v8862 = vand.u32 %v8537, 4294901760
      %8863 = vmatpush.msra.mxu0 %v8862
      %v8864 = vand.u32 %v6671, 4294901760
      %8865 = vmatmul.f32.gmra.mxu0 %v8864
      %v8866 = vpop.f32.mrf.mxu0
      %v8867 = vadd.f32 %v8830, %v8866
      %v8868 = vand.u32 %v6674, 4294901760
      %8869 = vmatmul.f32.gmra.mxu0 %v8868
      %v8870 = vpop.f32.mrf.mxu0
      %v8871 = vadd.f32 %v8834, %v8870
      %v8872 = vand.u32 %v6677, 4294901760
      %8873 = vmatmul.f32.gmra.mxu0 %v8872
      %v8874 = vpop.f32.mrf.mxu0
      %v8875 = vadd.f32 %v8838, %v8874
      %v8876 = vand.u32 %v6680, 4294901760
      %8877 = vmatmul.f32.gmra.mxu0 %v8876
      %v8878 = vpop.f32.mrf.mxu0
      %v8879 = vadd.f32 %v8842, %v8878
      %8880 = vdwg.mxu0
      %8881 = vmatpush.msra.mxu0 0.0
      %8882 = vmatpush.msra.mxu0 0.0
      %8883 = vmatpush.msra.mxu0 0.0
      %8884 = vmatpush.msra.mxu0 0.0
      %8885 = vmatpush.msra.mxu0 0.0
      %8886 = vmatpush.msra.mxu0 0.0
      %8887 = vmatpush.msra.mxu0 0.0
      %8888 = vmatpush.msra.mxu0 0.0
      %8889 = vmatpush.msra.mxu0 0.0
      %8890 = vmatpush.msra.mxu0 0.0
      %8891 = vmatpush.msra.mxu0 0.0
      %8892 = vmatpush.msra.mxu0 0.0
      %v8893 = vand.u32 %v8601, 4294901760
      %8894 = vmatpush.msra.mxu0 %v8893
      %v8895 = vand.u32 %v8599, 4294901760
      %8896 = vmatpush.msra.mxu0 %v8895
      %v8897 = vand.u32 %v8596, 4294901760
      %8898 = vmatpush.msra.mxu0 %v8897
      %v8899 = vand.u32 %v8594, 4294901760
      %8900 = vmatpush.msra.mxu0 %v8899
      %v8901 = vand.u32 %v6671, 4294901760
      %v8902 = vsub.f32 %v6671, %v8901
      %v8903 = vand.u32 %v8902, 4294901760
      %v8904 = vsub.f32 %v8902, %v8903
      %v8905 = vand.u32 %v8904, 4294901760
      %8906 = vmatmul.f32.gmra.mxu0 %v8905
      %v8907 = vpop.f32.mrf.mxu0
      %v8908 = vadd.f32 0.0, %v8907
      %v8909 = vand.u32 %v6674, 4294901760
      %v8910 = vsub.f32 %v6674, %v8909
      %v8911 = vand.u32 %v8910, 4294901760
      %v8912 = vsub.f32 %v8910, %v8911
      %v8913 = vand.u32 %v8912, 4294901760
      %8914 = vmatmul.f32.gmra.mxu0 %v8913
      %v8915 = vpop.f32.mrf.mxu0
      %v8916 = vadd.f32 0.0, %v8915
      %v8917 = vand.u32 %v6677, 4294901760
      %v8918 = vsub.f32 %v6677, %v8917
      %v8919 = vand.u32 %v8918, 4294901760
      %v8920 = vsub.f32 %v8918, %v8919
      %v8921 = vand.u32 %v8920, 4294901760
      %8922 = vmatmul.f32.gmra.mxu0 %v8921
      %v8923 = vpop.f32.mrf.mxu0
      %v8924 = vadd.f32 0.0, %v8923
      %v8925 = vand.u32 %v6680, 4294901760
      %v8926 = vsub.f32 %v6680, %v8925
      %v8927 = vand.u32 %v8926, 4294901760
      %v8928 = vsub.f32 %v8926, %v8927
      %v8929 = vand.u32 %v8928, 4294901760
      %8930 = vmatmul.f32.gmra.mxu0 %v8929
      %v8931 = vpop.f32.mrf.mxu0
      %v8932 = vadd.f32 0.0, %v8931
      %8933 = vdwg.mxu0
      %8934 = vmatpush.msra.mxu0 0.0
      %8935 = vmatpush.msra.mxu0 0.0
      %8936 = vmatpush.msra.mxu0 0.0
      %8937 = vmatpush.msra.mxu0 0.0
      %8938 = vmatpush.msra.mxu0 0.0
      %8939 = vmatpush.msra.mxu0 0.0
      %8940 = vmatpush.msra.mxu0 0.0
      %8941 = vmatpush.msra.mxu0 0.0
      %8942 = vmatpush.msra.mxu0 0.0
      %8943 = vmatpush.msra.mxu0 0.0
      %8944 = vmatpush.msra.mxu0 0.0
      %8945 = vmatpush.msra.mxu0 0.0
      %v8946 = vand.u32 %v8601, 4294901760
      %v8947 = vsub.f32 %v8601, %v8946
      %v8948 = vand.u32 %v8947, 4294901760
      %v8949 = vsub.f32 %v8947, %v8948
      %v8950 = vand.u32 %v8949, 4294901760
      %8951 = vmatpush.msra.mxu0 %v8950
      %v8952 = vand.u32 %v8599, 4294901760
      %v8953 = vsub.f32 %v8599, %v8952
      %v8954 = vand.u32 %v8953, 4294901760
      %v8955 = vsub.f32 %v8953, %v8954
      %v8956 = vand.u32 %v8955, 4294901760
      %8957 = vmatpush.msra.mxu0 %v8956
      %v8958 = vand.u32 %v8596, 4294901760
      %v8959 = vsub.f32 %v8596, %v8958
      %v8960 = vand.u32 %v8959, 4294901760
      %v8961 = vsub.f32 %v8959, %v8960
      %v8962 = vand.u32 %v8961, 4294901760
      %8963 = vmatpush.msra.mxu0 %v8962
      %v8964 = vand.u32 %v8594, 4294901760
      %v8965 = vsub.f32 %v8594, %v8964
      %v8966 = vand.u32 %v8965, 4294901760
      %v8967 = vsub.f32 %v8965, %v8966
      %v8968 = vand.u32 %v8967, 4294901760
      %8969 = vmatpush.msra.mxu0 %v8968
      %v8970 = vand.u32 %v6671, 4294901760
      %8971 = vmatmul.f32.gmra.mxu0 %v8970
      %v8972 = vpop.f32.mrf.mxu0
      %v8973 = vadd.f32 %v8908, %v8972
      %v8974 = vand.u32 %v6674, 4294901760
      %8975 = vmatmul.f32.gmra.mxu0 %v8974
      %v8976 = vpop.f32.mrf.mxu0
      %v8977 = vadd.f32 %v8916, %v8976
      %v8978 = vand.u32 %v6677, 4294901760
      %8979 = vmatmul.f32.gmra.mxu0 %v8978
      %v8980 = vpop.f32.mrf.mxu0
      %v8981 = vadd.f32 %v8924, %v8980
      %v8982 = vand.u32 %v6680, 4294901760
      %8983 = vmatmul.f32.gmra.mxu0 %v8982
      %v8984 = vpop.f32.mrf.mxu0
      %v8985 = vadd.f32 %v8932, %v8984
      %8986 = vdwg.mxu0
      %8987 = vmatpush.msra.mxu0 0.0
      %8988 = vmatpush.msra.mxu0 0.0
      %8989 = vmatpush.msra.mxu0 0.0
      %8990 = vmatpush.msra.mxu0 0.0
      %8991 = vmatpush.msra.mxu0 0.0
      %8992 = vmatpush.msra.mxu0 0.0
      %8993 = vmatpush.msra.mxu0 0.0
      %8994 = vmatpush.msra.mxu0 0.0
      %8995 = vmatpush.msra.mxu0 0.0
      %8996 = vmatpush.msra.mxu0 0.0
      %8997 = vmatpush.msra.mxu0 0.0
      %8998 = vmatpush.msra.mxu0 0.0
      %v8999 = vand.u32 %v8601, 4294901760
      %v9000 = vsub.f32 %v8601, %v8999
      %9001 = vmatpush.msra.mxu0 %v9000
      %v9002 = vand.u32 %v8599, 4294901760
      %v9003 = vsub.f32 %v8599, %v9002
      %9004 = vmatpush.msra.mxu0 %v9003
      %v9005 = vand.u32 %v8596, 4294901760
      %v9006 = vsub.f32 %v8596, %v9005
      %9007 = vmatpush.msra.mxu0 %v9006
      %v9008 = vand.u32 %v8594, 4294901760
      %v9009 = vsub.f32 %v8594, %v9008
      %9010 = vmatpush.msra.mxu0 %v9009
      %v9011 = vand.u32 %v6671, 4294901760
      %v9012 = vsub.f32 %v6671, %v9011
      %9013 = vmatmul.f32.gmra.mxu0 %v9012
      %v9014 = vpop.f32.mrf.mxu0
      %v9015 = vadd.f32 %v8973, %v9014
      %v9016 = vand.u32 %v6674, 4294901760
      %v9017 = vsub.f32 %v6674, %v9016
      %9018 = vmatmul.f32.gmra.mxu0 %v9017
      %v9019 = vpop.f32.mrf.mxu0
      %v9020 = vadd.f32 %v8977, %v9019
      %v9021 = vand.u32 %v6677, 4294901760
      %v9022 = vsub.f32 %v6677, %v9021
      %9023 = vmatmul.f32.gmra.mxu0 %v9022
      %v9024 = vpop.f32.mrf.mxu0
      %v9025 = vadd.f32 %v8981, %v9024
      %v9026 = vand.u32 %v6680, 4294901760
      %v9027 = vsub.f32 %v6680, %v9026
      %9028 = vmatmul.f32.gmra.mxu0 %v9027
      %v9029 = vpop.f32.mrf.mxu0
      %v9030 = vadd.f32 %v8985, %v9029
      %9031 = vdwg.mxu0
      %9032 = vmatpush.msra.mxu0 0.0
      %9033 = vmatpush.msra.mxu0 0.0
      %9034 = vmatpush.msra.mxu0 0.0
      %9035 = vmatpush.msra.mxu0 0.0
      %9036 = vmatpush.msra.mxu0 0.0
      %9037 = vmatpush.msra.mxu0 0.0
      %9038 = vmatpush.msra.mxu0 0.0
      %9039 = vmatpush.msra.mxu0 0.0
      %9040 = vmatpush.msra.mxu0 0.0
      %9041 = vmatpush.msra.mxu0 0.0
      %9042 = vmatpush.msra.mxu0 0.0
      %9043 = vmatpush.msra.mxu0 0.0
      %v9044 = vand.u32 %v8601, 4294901760
      %9045 = vmatpush.msra.mxu0 %v9044
      %v9046 = vand.u32 %v8599, 4294901760
      %9047 = vmatpush.msra.mxu0 %v9046
      %v9048 = vand.u32 %v8596, 4294901760
      %9049 = vmatpush.msra.mxu0 %v9048
      %v9050 = vand.u32 %v8594, 4294901760
      %9051 = vmatpush.msra.mxu0 %v9050
      %v9052 = vand.u32 %v6671, 4294901760
      %v9053 = vsub.f32 %v6671, %v9052
      %v9054 = vand.u32 %v9053, 4294901760
      %9055 = vmatmul.f32.gmra.mxu0 %v9054
      %v9056 = vpop.f32.mrf.mxu0
      %v9057 = vadd.f32 %v9015, %v9056
      %v9058 = vand.u32 %v6674, 4294901760
      %v9059 = vsub.f32 %v6674, %v9058
      %v9060 = vand.u32 %v9059, 4294901760
      %9061 = vmatmul.f32.gmra.mxu0 %v9060
      %v9062 = vpop.f32.mrf.mxu0
      %v9063 = vadd.f32 %v9020, %v9062
      %v9064 = vand.u32 %v6677, 4294901760
      %v9065 = vsub.f32 %v6677, %v9064
      %v9066 = vand.u32 %v9065, 4294901760
      %9067 = vmatmul.f32.gmra.mxu0 %v9066
      %v9068 = vpop.f32.mrf.mxu0
      %v9069 = vadd.f32 %v9025, %v9068
      %v9070 = vand.u32 %v6680, 4294901760
      %v9071 = vsub.f32 %v6680, %v9070
      %v9072 = vand.u32 %v9071, 4294901760
      %9073 = vmatmul.f32.gmra.mxu0 %v9072
      %v9074 = vpop.f32.mrf.mxu0
      %v9075 = vadd.f32 %v9030, %v9074
      %9076 = vdwg.mxu0
      %9077 = vmatpush.msra.mxu0 0.0
      %9078 = vmatpush.msra.mxu0 0.0
      %9079 = vmatpush.msra.mxu0 0.0
      %9080 = vmatpush.msra.mxu0 0.0
      %9081 = vmatpush.msra.mxu0 0.0
      %9082 = vmatpush.msra.mxu0 0.0
      %9083 = vmatpush.msra.mxu0 0.0
      %9084 = vmatpush.msra.mxu0 0.0
      %9085 = vmatpush.msra.mxu0 0.0
      %9086 = vmatpush.msra.mxu0 0.0
      %9087 = vmatpush.msra.mxu0 0.0
      %9088 = vmatpush.msra.mxu0 0.0
      %v9089 = vand.u32 %v8601, 4294901760
      %v9090 = vsub.f32 %v8601, %v9089
      %v9091 = vand.u32 %v9090, 4294901760
      %9092 = vmatpush.msra.mxu0 %v9091
      %v9093 = vand.u32 %v8599, 4294901760
      %v9094 = vsub.f32 %v8599, %v9093
      %v9095 = vand.u32 %v9094, 4294901760
      %9096 = vmatpush.msra.mxu0 %v9095
      %v9097 = vand.u32 %v8596, 4294901760
      %v9098 = vsub.f32 %v8596, %v9097
      %v9099 = vand.u32 %v9098, 4294901760
      %9100 = vmatpush.msra.mxu0 %v9099
      %v9101 = vand.u32 %v8594, 4294901760
      %v9102 = vsub.f32 %v8594, %v9101
      %v9103 = vand.u32 %v9102, 4294901760
      %9104 = vmatpush.msra.mxu0 %v9103
      %v9105 = vand.u32 %v6671, 4294901760
      %9106 = vmatmul.f32.gmra.mxu0 %v9105
      %v9107 = vpop.f32.mrf.mxu0
      %v9108 = vadd.f32 %v9057, %v9107
      %v9109 = vand.u32 %v6674, 4294901760
      %9110 = vmatmul.f32.gmra.mxu0 %v9109
      %v9111 = vpop.f32.mrf.mxu0
      %v9112 = vadd.f32 %v9063, %v9111
      %v9113 = vand.u32 %v6677, 4294901760
      %9114 = vmatmul.f32.gmra.mxu0 %v9113
      %v9115 = vpop.f32.mrf.mxu0
      %v9116 = vadd.f32 %v9069, %v9115
      %v9117 = vand.u32 %v6680, 4294901760
      %9118 = vmatmul.f32.gmra.mxu0 %v9117
      %v9119 = vpop.f32.mrf.mxu0
      %v9120 = vadd.f32 %v9075, %v9119
      %9121 = vdwg.mxu0
      %9122 = vmatpush.msra.mxu0 0.0
      %9123 = vmatpush.msra.mxu0 0.0
      %9124 = vmatpush.msra.mxu0 0.0
      %9125 = vmatpush.msra.mxu0 0.0
      %9126 = vmatpush.msra.mxu0 0.0
      %9127 = vmatpush.msra.mxu0 0.0
      %9128 = vmatpush.msra.mxu0 0.0
      %9129 = vmatpush.msra.mxu0 0.0
      %9130 = vmatpush.msra.mxu0 0.0
      %9131 = vmatpush.msra.mxu0 0.0
      %9132 = vmatpush.msra.mxu0 0.0
      %9133 = vmatpush.msra.mxu0 0.0
      %v9134 = vand.u32 %v8601, 4294901760
      %9135 = vmatpush.msra.mxu0 %v9134
      %v9136 = vand.u32 %v8599, 4294901760
      %9137 = vmatpush.msra.mxu0 %v9136
      %v9138 = vand.u32 %v8596, 4294901760
      %9139 = vmatpush.msra.mxu0 %v9138
      %v9140 = vand.u32 %v8594, 4294901760
      %9141 = vmatpush.msra.mxu0 %v9140
      %v9142 = vand.u32 %v6671, 4294901760
      %9143 = vmatmul.f32.gmra.mxu0 %v9142
      %v9144 = vpop.f32.mrf.mxu0
      %v9145 = vadd.f32 %v9108, %v9144
      %v9146 = vand.u32 %v6674, 4294901760
      %9147 = vmatmul.f32.gmra.mxu0 %v9146
      %v9148 = vpop.f32.mrf.mxu0
      %v9149 = vadd.f32 %v9112, %v9148
      %v9150 = vand.u32 %v6677, 4294901760
      %9151 = vmatmul.f32.gmra.mxu0 %v9150
      %v9152 = vpop.f32.mrf.mxu0
      %v9153 = vadd.f32 %v9116, %v9152
      %v9154 = vand.u32 %v6680, 4294901760
      %9155 = vmatmul.f32.gmra.mxu0 %v9154
      %v9156 = vpop.f32.mrf.mxu0
      %v9157 = vadd.f32 %v9120, %v9156
      %9158 = vdwg.mxu0
      %v9159 = vmul.f32 %v8537, %v8537
      %v9160 = vmul.f32 %v8594, %v8594
      %v9161 = vmul.f32 %v8539, %v8539
      %v9162 = vmul.f32 %v8596, %v8596
      %v9163 = vmul.f32 %v8542, %v8542
      %v9164 = vmul.f32 %v8599, %v8599
      %v9165 = vmul.f32 %v8544, %v8544
      %v9166 = vmul.f32 %v8601, %v8601
      %9167 = vmatpush.msra.mxu0 0.0
      %9168 = vmatpush.msra.mxu0 0.0
      %9169 = vmatpush.msra.mxu0 0.0
      %9170 = vmatpush.msra.mxu0 0.0
      %9171 = vmatpush.msra.mxu0 0.0
      %9172 = vmatpush.msra.mxu0 0.0
      %9173 = vmatpush.msra.mxu0 0.0
      %9174 = vmatpush.msra.mxu0 0.0
      %9175 = vmatpush.msra.mxu0 0.0
      %9176 = vmatpush.msra.mxu0 0.0
      %9177 = vmatpush.msra.mxu0 0.0
      %9178 = vmatpush.msra.mxu0 0.0
      %v9179 = vand.u32 %v9165, 4294901760
      %9180 = vmatpush.msra.mxu0 %v9179
      %v9181 = vand.u32 %v9163, 4294901760
      %9182 = vmatpush.msra.mxu0 %v9181
      %v9183 = vand.u32 %v9161, 4294901760
      %9184 = vmatpush.msra.mxu0 %v9183
      %v9185 = vand.u32 %v9159, 4294901760
      %9186 = vmatpush.msra.mxu0 %v9185
      %v9187 = vand.u32 %v6671, 4294901760
      %v9188 = vsub.f32 %v6671, %v9187
      %v9189 = vand.u32 %v9188, 4294901760
      %v9190 = vsub.f32 %v9188, %v9189
      %v9191 = vand.u32 %v9190, 4294901760
      %9192 = vmatmul.f32.gmra.mxu0 %v9191
      %v9193 = vpop.f32.mrf.mxu0
      %v9194 = vadd.f32 0.0, %v9193
      %v9195 = vand.u32 %v6674, 4294901760
      %v9196 = vsub.f32 %v6674, %v9195
      %v9197 = vand.u32 %v9196, 4294901760
      %v9198 = vsub.f32 %v9196, %v9197
      %v9199 = vand.u32 %v9198, 4294901760
      %9200 = vmatmul.f32.gmra.mxu0 %v9199
      %v9201 = vpop.f32.mrf.mxu0
      %v9202 = vadd.f32 0.0, %v9201
      %v9203 = vand.u32 %v6677, 4294901760
      %v9204 = vsub.f32 %v6677, %v9203
      %v9205 = vand.u32 %v9204, 4294901760
      %v9206 = vsub.f32 %v9204, %v9205
      %v9207 = vand.u32 %v9206, 4294901760
      %9208 = vmatmul.f32.gmra.mxu0 %v9207
      %v9209 = vpop.f32.mrf.mxu0
      %v9210 = vadd.f32 0.0, %v9209
      %v9211 = vand.u32 %v6680, 4294901760
      %v9212 = vsub.f32 %v6680, %v9211
      %v9213 = vand.u32 %v9212, 4294901760
      %v9214 = vsub.f32 %v9212, %v9213
      %v9215 = vand.u32 %v9214, 4294901760
      %9216 = vmatmul.f32.gmra.mxu0 %v9215
      %v9217 = vpop.f32.mrf.mxu0
      %v9218 = vadd.f32 0.0, %v9217
      %9219 = vdwg.mxu0
      %9220 = vmatpush.msra.mxu0 0.0
      %9221 = vmatpush.msra.mxu0 0.0
      %9222 = vmatpush.msra.mxu0 0.0
      %9223 = vmatpush.msra.mxu0 0.0
      %9224 = vmatpush.msra.mxu0 0.0
      %9225 = vmatpush.msra.mxu0 0.0
      %9226 = vmatpush.msra.mxu0 0.0
      %9227 = vmatpush.msra.mxu0 0.0
      %9228 = vmatpush.msra.mxu0 0.0
      %9229 = vmatpush.msra.mxu0 0.0
      %9230 = vmatpush.msra.mxu0 0.0
      %9231 = vmatpush.msra.mxu0 0.0
      %v9232 = vand.u32 %v9165, 4294901760
      %v9233 = vsub.f32 %v9165, %v9232
      %v9234 = vand.u32 %v9233, 4294901760
      %v9235 = vsub.f32 %v9233, %v9234
      %v9236 = vand.u32 %v9235, 4294901760
      %9237 = vmatpush.msra.mxu0 %v9236
      %v9238 = vand.u32 %v9163, 4294901760
      %v9239 = vsub.f32 %v9163, %v9238
      %v9240 = vand.u32 %v9239, 4294901760
      %v9241 = vsub.f32 %v9239, %v9240
      %v9242 = vand.u32 %v9241, 4294901760
      %9243 = vmatpush.msra.mxu0 %v9242
      %v9244 = vand.u32 %v9161, 4294901760
      %v9245 = vsub.f32 %v9161, %v9244
      %v9246 = vand.u32 %v9245, 4294901760
      %v9247 = vsub.f32 %v9245, %v9246
      %v9248 = vand.u32 %v9247, 4294901760
      %9249 = vmatpush.msra.mxu0 %v9248
      %v9250 = vand.u32 %v9159, 4294901760
      %v9251 = vsub.f32 %v9159, %v9250
      %v9252 = vand.u32 %v9251, 4294901760
      %v9253 = vsub.f32 %v9251, %v9252
      %v9254 = vand.u32 %v9253, 4294901760
      %9255 = vmatpush.msra.mxu0 %v9254
      %v9256 = vand.u32 %v6671, 4294901760
      %9257 = vmatmul.f32.gmra.mxu0 %v9256
      %v9258 = vpop.f32.mrf.mxu0
      %v9259 = vadd.f32 %v9194, %v9258
      %v9260 = vand.u32 %v6674, 4294901760
      %9261 = vmatmul.f32.gmra.mxu0 %v9260
      %v9262 = vpop.f32.mrf.mxu0
      %v9263 = vadd.f32 %v9202, %v9262
      %v9264 = vand.u32 %v6677, 4294901760
      %9265 = vmatmul.f32.gmra.mxu0 %v9264
      %v9266 = vpop.f32.mrf.mxu0
      %v9267 = vadd.f32 %v9210, %v9266
      %v9268 = vand.u32 %v6680, 4294901760
      %9269 = vmatmul.f32.gmra.mxu0 %v9268
      %v9270 = vpop.f32.mrf.mxu0
      %v9271 = vadd.f32 %v9218, %v9270
      %9272 = vdwg.mxu0
      %9273 = vmatpush.msra.mxu0 0.0
      %9274 = vmatpush.msra.mxu0 0.0
      %9275 = vmatpush.msra.mxu0 0.0
      %9276 = vmatpush.msra.mxu0 0.0
      %9277 = vmatpush.msra.mxu0 0.0
      %9278 = vmatpush.msra.mxu0 0.0
      %9279 = vmatpush.msra.mxu0 0.0
      %9280 = vmatpush.msra.mxu0 0.0
      %9281 = vmatpush.msra.mxu0 0.0
      %9282 = vmatpush.msra.mxu0 0.0
      %9283 = vmatpush.msra.mxu0 0.0
      %9284 = vmatpush.msra.mxu0 0.0
      %v9285 = vand.u32 %v9165, 4294901760
      %v9286 = vsub.f32 %v9165, %v9285
      %9287 = vmatpush.msra.mxu0 %v9286
      %v9288 = vand.u32 %v9163, 4294901760
      %v9289 = vsub.f32 %v9163, %v9288
      %9290 = vmatpush.msra.mxu0 %v9289
      %v9291 = vand.u32 %v9161, 4294901760
      %v9292 = vsub.f32 %v9161, %v9291
      %9293 = vmatpush.msra.mxu0 %v9292
      %v9294 = vand.u32 %v9159, 4294901760
      %v9295 = vsub.f32 %v9159, %v9294
      %9296 = vmatpush.msra.mxu0 %v9295
      %v9297 = vand.u32 %v6671, 4294901760
      %v9298 = vsub.f32 %v6671, %v9297
      %9299 = vmatmul.f32.gmra.mxu0 %v9298
      %v9300 = vpop.f32.mrf.mxu0
      %v9301 = vadd.f32 %v9259, %v9300
      %v9302 = vand.u32 %v6674, 4294901760
      %v9303 = vsub.f32 %v6674, %v9302
      %9304 = vmatmul.f32.gmra.mxu0 %v9303
      %v9305 = vpop.f32.mrf.mxu0
      %v9306 = vadd.f32 %v9263, %v9305
      %v9307 = vand.u32 %v6677, 4294901760
      %v9308 = vsub.f32 %v6677, %v9307
      %9309 = vmatmul.f32.gmra.mxu0 %v9308
      %v9310 = vpop.f32.mrf.mxu0
      %v9311 = vadd.f32 %v9267, %v9310
      %v9312 = vand.u32 %v6680, 4294901760
      %v9313 = vsub.f32 %v6680, %v9312
      %9314 = vmatmul.f32.gmra.mxu0 %v9313
      %v9315 = vpop.f32.mrf.mxu0
      %v9316 = vadd.f32 %v9271, %v9315
      %9317 = vdwg.mxu0
      %9318 = vmatpush.msra.mxu0 0.0
      %9319 = vmatpush.msra.mxu0 0.0
      %9320 = vmatpush.msra.mxu0 0.0
      %9321 = vmatpush.msra.mxu0 0.0
      %9322 = vmatpush.msra.mxu0 0.0
      %9323 = vmatpush.msra.mxu0 0.0
      %9324 = vmatpush.msra.mxu0 0.0
      %9325 = vmatpush.msra.mxu0 0.0
      %9326 = vmatpush.msra.mxu0 0.0
      %9327 = vmatpush.msra.mxu0 0.0
      %9328 = vmatpush.msra.mxu0 0.0
      %9329 = vmatpush.msra.mxu0 0.0
      %v9330 = vand.u32 %v9165, 4294901760
      %9331 = vmatpush.msra.mxu0 %v9330
      %v9332 = vand.u32 %v9163, 4294901760
      %9333 = vmatpush.msra.mxu0 %v9332
      %v9334 = vand.u32 %v9161, 4294901760
      %9335 = vmatpush.msra.mxu0 %v9334
      %v9336 = vand.u32 %v9159, 4294901760
      %9337 = vmatpush.msra.mxu0 %v9336
      %v9338 = vand.u32 %v6671, 4294901760
      %v9339 = vsub.f32 %v6671, %v9338
      %v9340 = vand.u32 %v9339, 4294901760
      %9341 = vmatmul.f32.gmra.mxu0 %v9340
      %v9342 = vpop.f32.mrf.mxu0
      %v9343 = vadd.f32 %v9301, %v9342
      %v9344 = vand.u32 %v6674, 4294901760
      %v9345 = vsub.f32 %v6674, %v9344
      %v9346 = vand.u32 %v9345, 4294901760
      %9347 = vmatmul.f32.gmra.mxu0 %v9346
      %v9348 = vpop.f32.mrf.mxu0
      %v9349 = vadd.f32 %v9306, %v9348
      %v9350 = vand.u32 %v6677, 4294901760
      %v9351 = vsub.f32 %v6677, %v9350
      %v9352 = vand.u32 %v9351, 4294901760
      %9353 = vmatmul.f32.gmra.mxu0 %v9352
      %v9354 = vpop.f32.mrf.mxu0
      %v9355 = vadd.f32 %v9311, %v9354
      %v9356 = vand.u32 %v6680, 4294901760
      %v9357 = vsub.f32 %v6680, %v9356
      %v9358 = vand.u32 %v9357, 4294901760
      %9359 = vmatmul.f32.gmra.mxu0 %v9358
      %v9360 = vpop.f32.mrf.mxu0
      %v9361 = vadd.f32 %v9316, %v9360
      %9362 = vdwg.mxu0
      %9363 = vmatpush.msra.mxu0 0.0
      %9364 = vmatpush.msra.mxu0 0.0
      %9365 = vmatpush.msra.mxu0 0.0
      %9366 = vmatpush.msra.mxu0 0.0
      %9367 = vmatpush.msra.mxu0 0.0
      %9368 = vmatpush.msra.mxu0 0.0
      %9369 = vmatpush.msra.mxu0 0.0
      %9370 = vmatpush.msra.mxu0 0.0
      %9371 = vmatpush.msra.mxu0 0.0
      %9372 = vmatpush.msra.mxu0 0.0
      %9373 = vmatpush.msra.mxu0 0.0
      %9374 = vmatpush.msra.mxu0 0.0
      %v9375 = vand.u32 %v9165, 4294901760
      %v9376 = vsub.f32 %v9165, %v9375
      %v9377 = vand.u32 %v9376, 4294901760
      %9378 = vmatpush.msra.mxu0 %v9377
      %v9379 = vand.u32 %v9163, 4294901760
      %v9380 = vsub.f32 %v9163, %v9379
      %v9381 = vand.u32 %v9380, 4294901760
      %9382 = vmatpush.msra.mxu0 %v9381
      %v9383 = vand.u32 %v9161, 4294901760
      %v9384 = vsub.f32 %v9161, %v9383
      %v9385 = vand.u32 %v9384, 4294901760
      %9386 = vmatpush.msra.mxu0 %v9385
      %v9387 = vand.u32 %v9159, 4294901760
      %v9388 = vsub.f32 %v9159, %v9387
      %v9389 = vand.u32 %v9388, 4294901760
      %9390 = vmatpush.msra.mxu0 %v9389
      %v9391 = vand.u32 %v6671, 4294901760
      %9392 = vmatmul.f32.gmra.mxu0 %v9391
      %v9393 = vpop.f32.mrf.mxu0
      %v9394 = vadd.f32 %v9343, %v9393
      %v9395 = vand.u32 %v6674, 4294901760
      %9396 = vmatmul.f32.gmra.mxu0 %v9395
      %v9397 = vpop.f32.mrf.mxu0
      %v9398 = vadd.f32 %v9349, %v9397
      %v9399 = vand.u32 %v6677, 4294901760
      %9400 = vmatmul.f32.gmra.mxu0 %v9399
      %v9401 = vpop.f32.mrf.mxu0
      %v9402 = vadd.f32 %v9355, %v9401
      %v9403 = vand.u32 %v6680, 4294901760
      %9404 = vmatmul.f32.gmra.mxu0 %v9403
      %v9405 = vpop.f32.mrf.mxu0
      %v9406 = vadd.f32 %v9361, %v9405
      %9407 = vdwg.mxu0
      %9408 = vmatpush.msra.mxu0 0.0
      %9409 = vmatpush.msra.mxu0 0.0
      %9410 = vmatpush.msra.mxu0 0.0
      %9411 = vmatpush.msra.mxu0 0.0
      %9412 = vmatpush.msra.mxu0 0.0
      %9413 = vmatpush.msra.mxu0 0.0
      %9414 = vmatpush.msra.mxu0 0.0
      %9415 = vmatpush.msra.mxu0 0.0
      %9416 = vmatpush.msra.mxu0 0.0
      %9417 = vmatpush.msra.mxu0 0.0
      %9418 = vmatpush.msra.mxu0 0.0
      %9419 = vmatpush.msra.mxu0 0.0
      %v9420 = vand.u32 %v9165, 4294901760
      %9421 = vmatpush.msra.mxu0 %v9420
      %v9422 = vand.u32 %v9163, 4294901760
      %9423 = vmatpush.msra.mxu0 %v9422
      %v9424 = vand.u32 %v9161, 4294901760
      %9425 = vmatpush.msra.mxu0 %v9424
      %v9426 = vand.u32 %v9159, 4294901760
      %9427 = vmatpush.msra.mxu0 %v9426
      %v9428 = vand.u32 %v6671, 4294901760
      %9429 = vmatmul.f32.gmra.mxu0 %v9428
      %v9430 = vpop.f32.mrf.mxu0
      %v9431 = vadd.f32 %v9394, %v9430
      %v9432 = vand.u32 %v6674, 4294901760
      %9433 = vmatmul.f32.gmra.mxu0 %v9432
      %v9434 = vpop.f32.mrf.mxu0
      %v9435 = vadd.f32 %v9398, %v9434
      %v9436 = vand.u32 %v6677, 4294901760
      %9437 = vmatmul.f32.gmra.mxu0 %v9436
      %v9438 = vpop.f32.mrf.mxu0
      %v9439 = vadd.f32 %v9402, %v9438
      %v9440 = vand.u32 %v6680, 4294901760
      %9441 = vmatmul.f32.gmra.mxu0 %v9440
      %v9442 = vpop.f32.mrf.mxu0
      %v9443 = vadd.f32 %v9406, %v9442
      %9444 = vdwg.mxu0
      %9445 = vmatpush.msra.mxu0 0.0
      %9446 = vmatpush.msra.mxu0 0.0
      %9447 = vmatpush.msra.mxu0 0.0
      %9448 = vmatpush.msra.mxu0 0.0
      %9449 = vmatpush.msra.mxu0 0.0
      %9450 = vmatpush.msra.mxu0 0.0
      %9451 = vmatpush.msra.mxu0 0.0
      %9452 = vmatpush.msra.mxu0 0.0
      %9453 = vmatpush.msra.mxu0 0.0
      %9454 = vmatpush.msra.mxu0 0.0
      %9455 = vmatpush.msra.mxu0 0.0
      %9456 = vmatpush.msra.mxu0 0.0
      %v9457 = vand.u32 %v9166, 4294901760
      %9458 = vmatpush.msra.mxu0 %v9457
      %v9459 = vand.u32 %v9164, 4294901760
      %9460 = vmatpush.msra.mxu0 %v9459
      %v9461 = vand.u32 %v9162, 4294901760
      %9462 = vmatpush.msra.mxu0 %v9461
      %v9463 = vand.u32 %v9160, 4294901760
      %9464 = vmatpush.msra.mxu0 %v9463
      %v9465 = vand.u32 %v6671, 4294901760
      %v9466 = vsub.f32 %v6671, %v9465
      %v9467 = vand.u32 %v9466, 4294901760
      %v9468 = vsub.f32 %v9466, %v9467
      %v9469 = vand.u32 %v9468, 4294901760
      %9470 = vmatmul.f32.gmra.mxu0 %v9469
      %v9471 = vpop.f32.mrf.mxu0
      %v9472 = vadd.f32 0.0, %v9471
      %v9473 = vand.u32 %v6674, 4294901760
      %v9474 = vsub.f32 %v6674, %v9473
      %v9475 = vand.u32 %v9474, 4294901760
      %v9476 = vsub.f32 %v9474, %v9475
      %v9477 = vand.u32 %v9476, 4294901760
      %9478 = vmatmul.f32.gmra.mxu0 %v9477
      %v9479 = vpop.f32.mrf.mxu0
      %v9480 = vadd.f32 0.0, %v9479
      %v9481 = vand.u32 %v6677, 4294901760
      %v9482 = vsub.f32 %v6677, %v9481
      %v9483 = vand.u32 %v9482, 4294901760
      %v9484 = vsub.f32 %v9482, %v9483
      %v9485 = vand.u32 %v9484, 4294901760
      %9486 = vmatmul.f32.gmra.mxu0 %v9485
      %v9487 = vpop.f32.mrf.mxu0
      %v9488 = vadd.f32 0.0, %v9487
      %v9489 = vand.u32 %v6680, 4294901760
      %v9490 = vsub.f32 %v6680, %v9489
      %v9491 = vand.u32 %v9490, 4294901760
      %v9492 = vsub.f32 %v9490, %v9491
      %v9493 = vand.u32 %v9492, 4294901760
      %9494 = vmatmul.f32.gmra.mxu0 %v9493
      %v9495 = vpop.f32.mrf.mxu0
      %v9496 = vadd.f32 0.0, %v9495
      %9497 = vdwg.mxu0
      %9498 = vmatpush.msra.mxu0 0.0
      %9499 = vmatpush.msra.mxu0 0.0
      %9500 = vmatpush.msra.mxu0 0.0
      %9501 = vmatpush.msra.mxu0 0.0
      %9502 = vmatpush.msra.mxu0 0.0
      %9503 = vmatpush.msra.mxu0 0.0
      %9504 = vmatpush.msra.mxu0 0.0
      %9505 = vmatpush.msra.mxu0 0.0
      %9506 = vmatpush.msra.mxu0 0.0
      %9507 = vmatpush.msra.mxu0 0.0
      %9508 = vmatpush.msra.mxu0 0.0
      %9509 = vmatpush.msra.mxu0 0.0
      %v9510 = vand.u32 %v9166, 4294901760
      %v9511 = vsub.f32 %v9166, %v9510
      %v9512 = vand.u32 %v9511, 4294901760
      %v9513 = vsub.f32 %v9511, %v9512
      %v9514 = vand.u32 %v9513, 4294901760
      %9515 = vmatpush.msra.mxu0 %v9514
      %v9516 = vand.u32 %v9164, 4294901760
      %v9517 = vsub.f32 %v9164, %v9516
      %v9518 = vand.u32 %v9517, 4294901760
      %v9519 = vsub.f32 %v9517, %v9518
      %v9520 = vand.u32 %v9519, 4294901760
      %9521 = vmatpush.msra.mxu0 %v9520
      %v9522 = vand.u32 %v9162, 4294901760
      %v9523 = vsub.f32 %v9162, %v9522
      %v9524 = vand.u32 %v9523, 4294901760
      %v9525 = vsub.f32 %v9523, %v9524
      %v9526 = vand.u32 %v9525, 4294901760
      %9527 = vmatpush.msra.mxu0 %v9526
      %v9528 = vand.u32 %v9160, 4294901760
      %v9529 = vsub.f32 %v9160, %v9528
      %v9530 = vand.u32 %v9529, 4294901760
      %v9531 = vsub.f32 %v9529, %v9530
      %v9532 = vand.u32 %v9531, 4294901760
      %9533 = vmatpush.msra.mxu0 %v9532
      %v9534 = vand.u32 %v6671, 4294901760
      %9535 = vmatmul.f32.gmra.mxu0 %v9534
      %v9536 = vpop.f32.mrf.mxu0
      %v9537 = vadd.f32 %v9472, %v9536
      %v9538 = vand.u32 %v6674, 4294901760
      %9539 = vmatmul.f32.gmra.mxu0 %v9538
      %v9540 = vpop.f32.mrf.mxu0
      %v9541 = vadd.f32 %v9480, %v9540
      %v9542 = vand.u32 %v6677, 4294901760
      %9543 = vmatmul.f32.gmra.mxu0 %v9542
      %v9544 = vpop.f32.mrf.mxu0
      %v9545 = vadd.f32 %v9488, %v9544
      %v9546 = vand.u32 %v6680, 4294901760
      %9547 = vmatmul.f32.gmra.mxu0 %v9546
      %v9548 = vpop.f32.mrf.mxu0
      %v9549 = vadd.f32 %v9496, %v9548
      %9550 = vdwg.mxu0
      %9551 = vmatpush.msra.mxu0 0.0
      %9552 = vmatpush.msra.mxu0 0.0
      %9553 = vmatpush.msra.mxu0 0.0
      %9554 = vmatpush.msra.mxu0 0.0
      %9555 = vmatpush.msra.mxu0 0.0
      %9556 = vmatpush.msra.mxu0 0.0
      %9557 = vmatpush.msra.mxu0 0.0
      %9558 = vmatpush.msra.mxu0 0.0
      %9559 = vmatpush.msra.mxu0 0.0
      %9560 = vmatpush.msra.mxu0 0.0
      %9561 = vmatpush.msra.mxu0 0.0
      %9562 = vmatpush.msra.mxu0 0.0
      %v9563 = vand.u32 %v9166, 4294901760
      %v9564 = vsub.f32 %v9166, %v9563
      %9565 = vmatpush.msra.mxu0 %v9564
      %v9566 = vand.u32 %v9164, 4294901760
      %v9567 = vsub.f32 %v9164, %v9566
      %9568 = vmatpush.msra.mxu0 %v9567
      %v9569 = vand.u32 %v9162, 4294901760
      %v9570 = vsub.f32 %v9162, %v9569
      %9571 = vmatpush.msra.mxu0 %v9570
      %v9572 = vand.u32 %v9160, 4294901760
      %v9573 = vsub.f32 %v9160, %v9572
      %9574 = vmatpush.msra.mxu0 %v9573
      %v9575 = vand.u32 %v6671, 4294901760
      %v9576 = vsub.f32 %v6671, %v9575
      %9577 = vmatmul.f32.gmra.mxu0 %v9576
      %v9578 = vpop.f32.mrf.mxu0
      %v9579 = vadd.f32 %v9537, %v9578
      %v9580 = vand.u32 %v6674, 4294901760
      %v9581 = vsub.f32 %v6674, %v9580
      %9582 = vmatmul.f32.gmra.mxu0 %v9581
      %v9583 = vpop.f32.mrf.mxu0
      %v9584 = vadd.f32 %v9541, %v9583
      %v9585 = vand.u32 %v6677, 4294901760
      %v9586 = vsub.f32 %v6677, %v9585
      %9587 = vmatmul.f32.gmra.mxu0 %v9586
      %v9588 = vpop.f32.mrf.mxu0
      %v9589 = vadd.f32 %v9545, %v9588
      %v9590 = vand.u32 %v6680, 4294901760
      %v9591 = vsub.f32 %v6680, %v9590
      %9592 = vmatmul.f32.gmra.mxu0 %v9591
      %v9593 = vpop.f32.mrf.mxu0
      %v9594 = vadd.f32 %v9549, %v9593
      %9595 = vdwg.mxu0
      %9596 = vmatpush.msra.mxu0 0.0
      %9597 = vmatpush.msra.mxu0 0.0
      %9598 = vmatpush.msra.mxu0 0.0
      %9599 = vmatpush.msra.mxu0 0.0
      %9600 = vmatpush.msra.mxu0 0.0
      %9601 = vmatpush.msra.mxu0 0.0
      %9602 = vmatpush.msra.mxu0 0.0
      %9603 = vmatpush.msra.mxu0 0.0
      %9604 = vmatpush.msra.mxu0 0.0
      %9605 = vmatpush.msra.mxu0 0.0
      %9606 = vmatpush.msra.mxu0 0.0
      %9607 = vmatpush.msra.mxu0 0.0
      %v9608 = vand.u32 %v9166, 4294901760
      %9609 = vmatpush.msra.mxu0 %v9608
      %v9610 = vand.u32 %v9164, 4294901760
      %9611 = vmatpush.msra.mxu0 %v9610
      %v9612 = vand.u32 %v9162, 4294901760
      %9613 = vmatpush.msra.mxu0 %v9612
      %v9614 = vand.u32 %v9160, 4294901760
      %9615 = vmatpush.msra.mxu0 %v9614
      %v9616 = vand.u32 %v6671, 4294901760
      %v9617 = vsub.f32 %v6671, %v9616
      %v9618 = vand.u32 %v9617, 4294901760
      %9619 = vmatmul.f32.gmra.mxu0 %v9618
      %v9620 = vpop.f32.mrf.mxu0
      %v9621 = vadd.f32 %v9579, %v9620
      %v9622 = vand.u32 %v6674, 4294901760
      %v9623 = vsub.f32 %v6674, %v9622
      %v9624 = vand.u32 %v9623, 4294901760
      %9625 = vmatmul.f32.gmra.mxu0 %v9624
      %v9626 = vpop.f32.mrf.mxu0
      %v9627 = vadd.f32 %v9584, %v9626
      %v9628 = vand.u32 %v6677, 4294901760
      %v9629 = vsub.f32 %v6677, %v9628
      %v9630 = vand.u32 %v9629, 4294901760
      %9631 = vmatmul.f32.gmra.mxu0 %v9630
      %v9632 = vpop.f32.mrf.mxu0
      %v9633 = vadd.f32 %v9589, %v9632
      %v9634 = vand.u32 %v6680, 4294901760
      %v9635 = vsub.f32 %v6680, %v9634
      %v9636 = vand.u32 %v9635, 4294901760
      %9637 = vmatmul.f32.gmra.mxu0 %v9636
      %v9638 = vpop.f32.mrf.mxu0
      %v9639 = vadd.f32 %v9594, %v9638
      %9640 = vdwg.mxu0
      %9641 = vmatpush.msra.mxu0 0.0
      %9642 = vmatpush.msra.mxu0 0.0
      %9643 = vmatpush.msra.mxu0 0.0
      %9644 = vmatpush.msra.mxu0 0.0
      %9645 = vmatpush.msra.mxu0 0.0
      %9646 = vmatpush.msra.mxu0 0.0
      %9647 = vmatpush.msra.mxu0 0.0
      %9648 = vmatpush.msra.mxu0 0.0
      %9649 = vmatpush.msra.mxu0 0.0
      %9650 = vmatpush.msra.mxu0 0.0
      %9651 = vmatpush.msra.mxu0 0.0
      %9652 = vmatpush.msra.mxu0 0.0
      %v9653 = vand.u32 %v9166, 4294901760
      %v9654 = vsub.f32 %v9166, %v9653
      %v9655 = vand.u32 %v9654, 4294901760
      %9656 = vmatpush.msra.mxu0 %v9655
      %v9657 = vand.u32 %v9164, 4294901760
      %v9658 = vsub.f32 %v9164, %v9657
      %v9659 = vand.u32 %v9658, 4294901760
      %9660 = vmatpush.msra.mxu0 %v9659
      %v9661 = vand.u32 %v9162, 4294901760
      %v9662 = vsub.f32 %v9162, %v9661
      %v9663 = vand.u32 %v9662, 4294901760
      %9664 = vmatpush.msra.mxu0 %v9663
      %v9665 = vand.u32 %v9160, 4294901760
      %v9666 = vsub.f32 %v9160, %v9665
      %v9667 = vand.u32 %v9666, 4294901760
      %9668 = vmatpush.msra.mxu0 %v9667
      %v9669 = vand.u32 %v6671, 4294901760
      %9670 = vmatmul.f32.gmra.mxu0 %v9669
      %v9671 = vpop.f32.mrf.mxu0
      %v9672 = vadd.f32 %v9621, %v9671
      %v9673 = vand.u32 %v6674, 4294901760
      %9674 = vmatmul.f32.gmra.mxu0 %v9673
      %v9675 = vpop.f32.mrf.mxu0
      %v9676 = vadd.f32 %v9627, %v9675
      %v9677 = vand.u32 %v6677, 4294901760
      %9678 = vmatmul.f32.gmra.mxu0 %v9677
      %v9679 = vpop.f32.mrf.mxu0
      %v9680 = vadd.f32 %v9633, %v9679
      %v9681 = vand.u32 %v6680, 4294901760
      %9682 = vmatmul.f32.gmra.mxu0 %v9681
      %v9683 = vpop.f32.mrf.mxu0
      %v9684 = vadd.f32 %v9639, %v9683
      %9685 = vdwg.mxu0
      %9686 = vmatpush.msra.mxu0 0.0
      %9687 = vmatpush.msra.mxu0 0.0
      %9688 = vmatpush.msra.mxu0 0.0
      %9689 = vmatpush.msra.mxu0 0.0
      %9690 = vmatpush.msra.mxu0 0.0
      %9691 = vmatpush.msra.mxu0 0.0
      %9692 = vmatpush.msra.mxu0 0.0
      %9693 = vmatpush.msra.mxu0 0.0
      %9694 = vmatpush.msra.mxu0 0.0
      %9695 = vmatpush.msra.mxu0 0.0
      %9696 = vmatpush.msra.mxu0 0.0
      %9697 = vmatpush.msra.mxu0 0.0
      %v9698 = vand.u32 %v9166, 4294901760
      %9699 = vmatpush.msra.mxu0 %v9698
      %v9700 = vand.u32 %v9164, 4294901760
      %9701 = vmatpush.msra.mxu0 %v9700
      %v9702 = vand.u32 %v9162, 4294901760
      %9703 = vmatpush.msra.mxu0 %v9702
      %v9704 = vand.u32 %v9160, 4294901760
      %9705 = vmatpush.msra.mxu0 %v9704
      %v9706 = vand.u32 %v6671, 4294901760
      %9707 = vmatmul.f32.gmra.mxu0 %v9706
      %v9708 = vpop.f32.mrf.mxu0
      %v9709 = vadd.f32 %v9672, %v9708
      %v9710 = vand.u32 %v6674, 4294901760
      %9711 = vmatmul.f32.gmra.mxu0 %v9710
      %v9712 = vpop.f32.mrf.mxu0
      %v9713 = vadd.f32 %v9676, %v9712
      %v9714 = vand.u32 %v6677, 4294901760
      %9715 = vmatmul.f32.gmra.mxu0 %v9714
      %v9716 = vpop.f32.mrf.mxu0
      %v9717 = vadd.f32 %v9680, %v9716
      %v9718 = vand.u32 %v6680, 4294901760
      %9719 = vmatmul.f32.gmra.mxu0 %v9718
      %v9720 = vpop.f32.mrf.mxu0
      %v9721 = vadd.f32 %v9684, %v9720
      %9722 = vdwg.mxu0
      %v9723 = vadd.f32 %v8867, %v9145
      %9724 = vadd.xlane.f32.xlu0 %v9723
      %v9725 = vpop.xlane.xlu0 %9724
      %v9726 = vadd.f32 %v8871, %v9149
      %9727 = vadd.xlane.f32.xlu0 %v9726
      %v9728 = vpop.xlane.xlu0 %9727
      %v9729 = vadd.f32 %v8875, %v9153
      %9730 = vadd.xlane.f32.xlu0 %v9729
      %v9731 = vpop.xlane.xlu0 %9730
      %v9732 = vadd.f32 %v8879, %v9157
      %9733 = vadd.xlane.f32.xlu0 %v9732
      %v9734 = vpop.xlane.xlu0 %9733
      %v9735 = vmul.f32 %v9725, %v7820
      %v9736 = vmul.f32 %v9728, %v7820
      %v9737 = vmul.f32 %v9731, %v7820
      %v9738 = vmul.f32 %v9734, %v7820
      %v9739 = vadd.f32 %v9431, %v9709
      %9740 = vadd.xlane.f32.xlu0 %v9739
      %v9741 = vpop.xlane.xlu0 %9740
      %v9742 = vadd.f32 %v9435, %v9713
      %9743 = vadd.xlane.f32.xlu0 %v9742
      %v9744 = vpop.xlane.xlu0 %9743
      %v9745 = vadd.f32 %v9439, %v9717
      %9746 = vadd.xlane.f32.xlu0 %v9745
      %v9747 = vpop.xlane.xlu0 %9746
      %v9748 = vadd.f32 %v9443, %v9721
      %9749 = vadd.xlane.f32.xlu0 %v9748
      %v9750 = vpop.xlane.xlu0 %9749
      %v9751 = vmul.f32 %v9741, %v7820
      %v9752 = vmul.f32 %v9744, %v7820
      %v9753 = vmul.f32 %v9747, %v7820
      %v9754 = vmul.f32 %v9750, %v7820
      %v9755 = vmul.f32 %v9735, %v9735
      %v9756 = vmul.f32 %v9736, %v9736
      %v9757 = vmul.f32 %v9737, %v9737
      %v9758 = vmul.f32 %v9738, %v9738
      %v9759 = vsub.f32 %v9751, %v9755
      %v9760 = vsub.f32 %v9752, %v9756
      %v9761 = vsub.f32 %v9753, %v9757
      %v9762 = vsub.f32 %v9754, %v9758
      %v9763 = vmax.f32 %v9759, 0.0
      %v9764 = vmax.f32 %v9760, 0.0
      %v9765 = vmax.f32 %v9761, 0.0
      %v9766 = vmax.f32 %v9762, 0.0
      %v9767 = vadd.f32 %v9763, 1e-05
      %v9768 = vadd.f32 %v9764, 1e-05
      %v9769 = vadd.f32 %v9765, 1e-05
      %v9770 = vadd.f32 %v9766, 1e-05
      %v9771 = vrsqrt.pop %v9767
      %v9772 = vmul.f32 %v9771, %v9767
      %v9773 = vmul.f32 %v9772, %v9771
      %v9774 = vmul.f32 0.5, %v9773
      %v9775 = vsub.f32 1.5, %v9774
      %v9776 = vmul.f32 %v9771, %v9775
      %vm9777 = vweird.f32 %v9767
      %vm9778 = vweird.f32 %v9771
      %vm9779 = vmor %vm9777, %vm9778
      %v9780 = vsel %vm9779, %v9771, %v9776
      %v9781 = vrsqrt.pop %v9768
      %v9782 = vmul.f32 %v9781, %v9768
      %v9783 = vmul.f32 %v9782, %v9781
      %v9784 = vmul.f32 0.5, %v9783
      %v9785 = vsub.f32 1.5, %v9784
      %v9786 = vmul.f32 %v9781, %v9785
      %vm9787 = vweird.f32 %v9768
      %vm9788 = vweird.f32 %v9781
      %vm9789 = vmor %vm9787, %vm9788
      %v9790 = vsel %vm9789, %v9781, %v9786
      %v9791 = vrsqrt.pop %v9769
      %v9792 = vmul.f32 %v9791, %v9769
      %v9793 = vmul.f32 %v9792, %v9791
      %v9794 = vmul.f32 0.5, %v9793
      %v9795 = vsub.f32 1.5, %v9794
      %v9796 = vmul.f32 %v9791, %v9795
      %vm9797 = vweird.f32 %v9769
      %vm9798 = vweird.f32 %v9791
      %vm9799 = vmor %vm9797, %vm9798
      %v9800 = vsel %vm9799, %v9791, %v9796
      %v9801 = vrsqrt.pop %v9770
      %v9802 = vmul.f32 %v9801, %v9770
      %v9803 = vmul.f32 %v9802, %v9801
      %v9804 = vmul.f32 0.5, %v9803
      %v9805 = vsub.f32 1.5, %v9804
      %v9806 = vmul.f32 %v9801, %v9805
      %vm9807 = vweird.f32 %v9770
      %vm9808 = vweird.f32 %v9801
      %vm9809 = vmor %vm9807, %vm9808
      %v9810 = vsel %vm9809, %v9801, %v9806
      %v9811 = vsub.f32 %v8537, %v9735
      %v9812 = vsub.f32 %v8594, %v9735
      %v9813 = vsub.f32 %v8539, %v9736
      %v9814 = vsub.f32 %v8596, %v9736
      %v9815 = vsub.f32 %v8542, %v9737
      %v9816 = vsub.f32 %v8599, %v9737
      %v9817 = vsub.f32 %v8544, %v9738
      %v9818 = vsub.f32 %v8601, %v9738
      %v9819 = vmul.f32 %v9780, %v6006
      %v9820 = vmul.f32 %v9790, %v6007
      %v9821 = vmul.f32 %v9800, %v6008
      %v9822 = vmul.f32 %v9810, %v6009
      %9824 = vset.pattern.permute.xlu0 2
      %9825 = vperm.xlu0 %9824, %v9819
      %v9826 = vpop.permute.xlu0 %9825
      %9829 = vset.pattern.permute.xlu0 2
      %9830 = vperm.xlu0 %9829, %v9820
      %v9831 = vpop.permute.xlu0 %9830
      %9834 = vset.pattern.permute.xlu0 2
      %9835 = vperm.xlu0 %9834, %v9821
      %v9836 = vpop.permute.xlu0 %9835
      %9839 = vset.pattern.permute.xlu0 2
      %9840 = vperm.xlu0 %9839, %v9822
      %v9841 = vpop.permute.xlu0 %9840
      %v9843 = vmul.f32 %v9811, %v9826
      %v9844 = vmul.f32 %v9812, %v9826
      %v9845 = vmul.f32 %v9813, %v9831
      %v9846 = vmul.f32 %v9814, %v9831
      %v9847 = vmul.f32 %v9815, %v9836
      %v9848 = vmul.f32 %v9816, %v9836
      %v9849 = vmul.f32 %v9817, %v9841
      %v9850 = vmul.f32 %v9818, %v9841
      %9851 = vset.pattern.permute.xlu0 3
      %9852 = vperm.xlu0 %9851, %v6006
      %v9853 = vpop.permute.xlu0 %9852
      %9855 = vset.pattern.permute.xlu0 3
      %9856 = vperm.xlu0 %9855, %v6007
      %v9857 = vpop.permute.xlu0 %9856
      %9859 = vset.pattern.permute.xlu0 3
      %9860 = vperm.xlu0 %9859, %v6008
      %v9861 = vpop.permute.xlu0 %9860
      %9863 = vset.pattern.permute.xlu0 3
      %9864 = vperm.xlu0 %9863, %v6009
      %v9865 = vpop.permute.xlu0 %9864
      %v9867 = vadd.f32 %v9843, %v9853
      %v9868 = vadd.f32 %v9844, %v9853
      %v9869 = vadd.f32 %v9845, %v9857
      %v9870 = vadd.f32 %v9846, %v9857
      %v9871 = vadd.f32 %v9847, %v9861
      %v9872 = vadd.f32 %v9848, %v9861
      %v9873 = vadd.f32 %v9849, %v9865
      %v9874 = vadd.f32 %v9850, %v9865
      %v9875 = vmax.f32 %v9867, 0.0
      %v9876 = vmax.f32 %v9868, 0.0
      %v9877 = vmax.f32 %v9869, 0.0
      %v9878 = vmax.f32 %v9870, 0.0
      %v9879 = vmax.f32 %v9871, 0.0
      %v9880 = vmax.f32 %v9872, 0.0
      %v9881 = vmax.f32 %v9873, 0.0
      %v9882 = vmax.f32 %v9874, 0.0
      %9883 = vst [vmem:[%s433] sm:$0xff] %v9875
      %9884 = vst [vmem:[%s433 + $0x8] sm:$0xff] %v9876
      %9885 = vst [vmem:[%s433 + $0x10] sm:$0xff] %v9877
      %9886 = vst [vmem:[%s433 + $0x18] sm:$0xff] %v9878
      %9887 = vst [vmem:[%s433 + $0x20] sm:$0xff] %v9879
      %9888 = vst [vmem:[%s433 + $0x28] sm:$0xff] %v9880
      %9889 = vst [vmem:[%s433 + $0x30] sm:$0xff] %v9881
      %9890 = vst [vmem:[%s433 + $0x38] sm:$0xff] %v9882
      %p9891 = scmp.lt.s32.totalorder %s23, 1
      %s9892 = scalar_select %p9891, %s23, 1
      %s9893 = smul.addr %s9892, 8
      %s9894 = smul.addr %s9893, 8
      %s9895 = scalar_lea.vmem %s12, %s9894
      // Predicated region
      $region69: #{up_forward.1} parent=67 // pred_check
        %p9896 = pneg %p303
      $region70: #{up_forward.1} parent=67 // pred_check_branch
        %9898 = sbr.rel (%p9896) target = $region72
      $region71: #{up_forward.1} parent=67 // pred_region
        _
      $region72: #{up_forward.1} parent=67 // pred_fallthru
        _
    $region68: #{up_forward.1} parent=5 // pred_fallthru
      _
    %p9899 = scmp.le.s32.totalorder 2, %s18
    // Predicated region
    $region73: #{up_forward.1} parent=5 // pred_check
      %p9900 = pneg %p9899
    $region74: #{up_forward.1} parent=5 // pred_check_branch
      %9902 = sbr.rel (%p9900) target = $region76
    $region75: #{up_forward.1} parent=5 // pred_region
      %s9903 = ssub.s32 %s18, 2
      // Predicated region
      $region77: #{up_forward.1} parent=75 // pred_check
        %p9904 = pneg %p309
      $region78: #{up_forward.1} parent=75 // pred_check_branch
        %9906 = sbr.rel (%p9904) target = $region80
      $region79: #{up_forward.1} parent=75 // pred_region
        %p9907 = scmp.lt.s32.totalorder %s24, 1
        %s9908 = scalar_select %p9907, %s24, 1
        %s9909 = smul.addr %s9908, 8
        %s9910 = smul.addr %s9909, 8
        %s9911 = scalar_lea.vmem %s12, %s9910
      $region80: #{up_forward.1} parent=75 // pred_fallthru
        _
    $region76: #{up_forward.1} parent=5 // pred_fallthru
      _
  $region6: #{up_forward.1} parent=0 // loop_footer
    %s22 = sadd.s32 1, %s18
  $region7: #{up_forward.1} parent=0 // loop_footer_branch
    %17 = sbr.rel target = $region3
  $region8: #{up_forward.1} parent=0 // loop_exit
    _

</llo_original>
